<compile_context>
chip_gen: v7x
topology: tpu7x:2x2x1
jax: 0.10.0
libtpu: 0.0.40
codegen_flags: <defaults>
</compile_context>

<pallas_src>
import jax
import jax.numpy as jnp
from jax.experimental import pallas as pl
from jax.experimental.pallas import tpu as pltpu


_VMEM_SPEC = pl.BlockSpec(memory_space=pltpu.MemorySpace.VMEM)


# --------------------------- fused encoder+decoder kernel ---------------------------
def _nmt_kernel(src_emb_ref, tgt_emb_ref, len_ref,
                enc_wih_ref, enc_whh_ref, enc_b_ref,
                dec_we_ref, dec_wf_ref, dec_whh_ref, dec_b_ref,
                dec_woh_ref, dec_woc_ref, dec_bo_ref,
                out_ref, attn_ref, hfin_ref, feedfin_ref,
                ctx_sc, yw_sc):
    f32 = jnp.float32
    bf16 = jnp.bfloat16
    S, B, E = src_emb_ref.shape
    T = tgt_emb_ref.shape[0]
    H = enc_whh_ref.shape[1]

    len_b = len_ref[...]                                        # (B, 1) int32

    # ------------------------------ encoder ------------------------------
    # Hoisted non-recurrent projection: one (S*B, E) @ (E, H) bf16 MXU matmul,
    # f32 accumulation, bias folded in.
    xw = (jnp.dot(src_emb_ref[...].reshape(S * B, E), enc_wih_ref[...],
                  preferred_element_type=f32).reshape(S, B, H)
          + enc_b_ref[...])

    h = jnp.zeros((B, H), f32)
    for t in range(S):                                          # static unrolled recurrence
        h_new = jnp.tanh(xw[t] + jnp.dot(h.astype(bf16), enc_whh_ref[...],
                                         preferred_element_type=f32))
        valid = t < len_b                                       # (B, 1) bool
        h = jnp.where(valid, h_new, h)                          # freeze hidden at length
        # context in (S, B, H): one contiguous lane-dense (B, H) store per step;
        # padded positions stored as zeros (pad_packed_sequence semantics).
        ctx_sc[t] = jnp.where(valid, h_new, 0.0).astype(ctx_sc.dtype)
    enc_h = h                                                   # decoder initial hidden

    # ------------------------------ decoder ------------------------------
    # Non-recurrent input projection for ALL target steps in one MXU matmul,
    # parked in VMEM scratch so it isn't live across the unrolled T-loop.
    yw_sc[...] = (jnp.dot(tgt_emb_ref[...].reshape(T * B, E), dec_we_ref[...],
                          preferred_element_type=f32).reshape(T, B, H)
                  + dec_b_ref[...])

    # Additive source-length mask, built in-kernel, (S, B, 1) sublane/major layout.
    s_iota = jax.lax.broadcasted_iota(jnp.int32, (S, B, 1), 0)
    mask3 = jnp.where(s_iota >= len_b[None], -1e9, 0.0).astype(f32)

    h = enc_h
    feed = jnp.zeros((B, H), f32)                               # init_input_feed: zeros
    for t in range(T):                                          # static unrolled recurrence
        # recurrent projection: two K=128 MXU dots summed in f32 (no runtime concat)
        pre = (yw_sc[t]
               + jnp.dot(feed.astype(bf16), dec_wf_ref[...], preferred_element_type=f32)
               + jnp.dot(h.astype(bf16), dec_whh_ref[...], preferred_element_type=f32))
        h = jnp.tanh(pre)

        # Luong dot attention; ctx re-read (bf16) + upcast per step to bound live range.
        ctx = ctx_sc[...].astype(f32)                           # (S, B, H)
        scores = jnp.sum(ctx * h[None], axis=-1, keepdims=True) + mask3     # (S, B, 1)
        m = jnp.max(scores, axis=0, keepdims=True)              # cross-vreg VPU max
        p = jnp.exp(scores - m)
        attn = p / jnp.sum(p, axis=0, keepdims=True)            # exact; rows sum to 1
        ctx_vec = jnp.sum(attn * ctx, axis=0)                   # (B, H) cross-vreg VPU adds

        # output projection (also the next input feed)
        o = jnp.tanh(jnp.dot(h.astype(bf16), dec_woh_ref[...], preferred_element_type=f32)
                     + jnp.dot(ctx_vec.astype(bf16), dec_woc_ref[...],
                               preferred_element_type=f32)
                     + dec_bo_ref[...])
        feed = o
        out_ref[t] = o                                          # lane-dense (B, H) store
        attn_ref[t] = attn                                      # natural (S, B, 1) store

    hfin_ref[...] = h
    feedfin_ref[...] = feed


def run_nmt(src_emb, tgt_emb, lengths_col, p):
    S, B, _ = src_emb.shape
    T = tgt_emb.shape[0]
    H = p["enc_whh"].shape[1]
    return pl.pallas_call(
        _nmt_kernel,
        out_shape=(
            jax.ShapeDtypeStruct((T, B, H), jnp.float32),       # decoder outputs
            jax.ShapeDtypeStruct((T, S, B, 1), jnp.float32),    # attention (natural layout)
            jax.ShapeDtypeStruct((B, H), jnp.float32),          # final hidden
            jax.ShapeDtypeStruct((B, H), jnp.float32),          # final input feed
        ),
        in_specs=[_VMEM_SPEC] * 13,
        out_specs=(_VMEM_SPEC,) * 4,
        scratch_shapes=[
            pltpu.VMEM((S, B, H), jnp.bfloat16),                # context (never hits HBM)
            pltpu.VMEM((T, B, H), jnp.float32),                 # hoisted tgt projection
        ],
    )(src_emb, tgt_emb, lengths_col,
      p["enc_wih"], p["enc_whh"], p["enc_b"],
      p["dec_we"], p["dec_wf"], p["dec_whh"], p["dec_b"],
      p["dec_woh"], p["dec_woc"], p["dec_bo"])


# ----------------------------------- model glue -----------------------------------
def init_params(key, vocab_src, vocab_tgt, emb_dim, hidden):
    ks = jax.random.split(key, 9)
    s = 0.08

    def bf16(k, shape):
        return (s * jax.random.normal(k, shape, jnp.float32)).astype(jnp.bfloat16)

    return {
        "src_emb": bf16(ks[0], (vocab_src, emb_dim)),
        "tgt_emb": bf16(ks[1], (vocab_tgt, emb_dim)),
        "enc_wih": bf16(ks[2], (emb_dim, hidden)),
        "enc_whh": bf16(ks[3], (hidden, hidden)),
        "enc_b":   jnp.zeros((1, hidden), jnp.float32),
        "dec_we":  bf16(ks[4], (emb_dim, hidden)),
        "dec_wf":  bf16(ks[5], (hidden, hidden)),
        "dec_whh": bf16(ks[6], (hidden, hidden)),
        "dec_b":   jnp.zeros((1, hidden), jnp.float32),
        "dec_woh": bf16(ks[7], (hidden, hidden)),
        "dec_woc": bf16(ks[8], (hidden, hidden)),
        "dec_bo":  jnp.zeros((1, hidden), jnp.float32),
    }


@jax.jit
def nmt_forward(src, tgt, lengths, params):
    """Mirrors Decoder.forward (input-feed path): returns (outputs, attns, dec_state)."""
    tgt_in = tgt[:-1]                                           # teacher-forced input

    # Embedding lookups (glue, plain JAX), bf16.
    src_emb = jnp.take(params["src_emb"], src, axis=0)          # (S, B, E)
    tgt_emb = jnp.take(params["tgt_emb"], tgt_in, axis=0)       # (T, B, E)
    len_col = lengths.astype(jnp.int32).reshape(-1, 1)          # (B, 1)

    out, attn_raw, h_fin, feed_fin = run_nmt(src_emb, tgt_emb, len_col, params)

    # (T, S, B, 1) -> (T, B, S): tiny wrapper-side transpose (kernel stores attention
    # in its natural layout so the serial chain never pays a relayout).
    attn_std = jnp.transpose(attn_raw[..., 0], (0, 2, 1))

    attns = {"std": attn_std}                                   # (T, B, S)
    dec_state = {                                               # RNNDecoderState
        "hidden": (h_fin[None],),                               # (1, B, H)
        "input_feed": feed_fin[None],                           # (1, B, H)
    }
    return out, attns, dec_state


# ------------------------- pure-JAX reference (same casts) -------------------------
def nmt_forward_ref(src, tgt, lengths, p):
    f32, bf16 = jnp.float32, jnp.bfloat16
    tgt_in = tgt[:-1]
    src_emb = jnp.take(p["src_emb"], src, axis=0)
    tgt_emb = jnp.take(p["tgt_emb"], tgt_in, axis=0)
    S, B, E = src_emb.shape
    T = tgt_emb.shape[0]
    H = p["enc_whh"].shape[1]

    xw = jnp.dot(src_emb.reshape(S * B, E), p["enc_wih"],
                 preferred_element_type=f32).reshape(S, B, H) + p["enc_b"]
    h = jnp.zeros((B, H), f32)
    ctx = []
    for t in range(S):
        h_new = jnp.tanh(xw[t] + jnp.dot(h.astype(bf16), p["enc_whh"],
                                         preferred_element_type=f32))
        valid = (t < lengths)[:, None]
        h = jnp.where(valid, h_new, h)
        ctx.append(jnp.where(valid, h_new, 0.0).astype(bf16))
    ctx = jnp.stack(ctx).astype(f32)                            # (S, B, H)

    yw = jnp.dot(tgt_emb.reshape(T * B, E), p["dec_we"],
                 preferred_element_type=f32).reshape(T, B, H) + p["dec_b"]
    mask = jnp.where(jnp.arange(S)[:, None] >= lengths[None, :], -1e9, 0.0)  # (S, B)

    feed = jnp.zeros((B, H), f32)
    outs, attns = [], []
    for t in range(T):
        pre = (yw[t]
               + jnp.dot(feed.astype(bf16), p["dec_wf"], preferred_element_type=f32)
               + jnp.dot(h.astype(bf16), p["dec_whh"], preferred_element_type=f32))
        h = jnp.tanh(pre)
        scores = jnp.sum(ctx * h[None], axis=-1) + mask
        m = jnp.max(scores, axis=0, keepdims=True)
        pp = jnp.exp(scores - m)
        attn = pp / jnp.sum(pp, axis=0, keepdims=True)          # (S, B)
        ctx_vec = jnp.sum(attn[:, :, None] * ctx, axis=0)
        o = jnp.tanh(jnp.dot(h.astype(bf16), p["dec_woh"], preferred_element_type=f32)
                     + jnp.dot(ctx_vec.astype(bf16), p["dec_woc"], preferred_element_type=f32)
                     + p["dec_bo"])
        feed = o
        outs.append(o)
        attns.append(attn.T)
    return jnp.stack(outs), jnp.stack(attns), h, feed


if __name__ == "__main__":
    # Small, TPU-tile-friendly shapes.
    SRC_LEN, TGT_LEN, BATCH = 8, 9, 8
    EMB, HIDDEN = 128, 128
    VOCAB_SRC, VOCAB_TGT = 32, 32

    key = jax.random.PRNGKey(0)
    k_p, k_s, k_t = jax.random.split(key, 3)
    params = init_params(k_p, VOCAB_SRC, VOCAB_TGT, EMB, HIDDEN)

    src = jax.random.randint(k_s, (SRC_LEN, BATCH), 0, VOCAB_SRC, jnp.int32)
    tgt = jax.random.randint(k_t, (TGT_LEN, BATCH), 0, VOCAB_TGT, jnp.int32)
    lengths = jnp.array([8, 8, 7, 6, 8, 5, 8, 4], dtype=jnp.int32)   # exercise masking

    out, attns, dec_state = nmt_forward(src, tgt, lengths, params)
    jax.block_until_ready((out, attns, dec_state))

    # Shapes / finiteness.
    assert out.shape == (TGT_LEN - 1, BATCH, HIDDEN)
    assert attns["std"].shape == (TGT_LEN - 1, BATCH, SRC_LEN)
    assert dec_state["hidden"][0].shape == (1, BATCH, HIDDEN)
    assert dec_state["input_feed"].shape == (1, BATCH, HIDDEN)
    assert bool(jnp.all(jnp.isfinite(out)))

    # Attention rows sum to 1 (exact divide) and padded source positions get ~0 weight.
    assert bool(jnp.allclose(jnp.sum(attns["std"], axis=-1), 1.0, atol=1e-3))
    pad_mask = jnp.arange(SRC_LEN)[None, :] >= lengths[:, None]          # (B, S)
    assert float(jnp.max(jnp.where(pad_mask[None], attns["std"], 0.0))) < 1e-6

    # Cross-check against a pure-JAX reference with identical bf16 cast points.
    out_r, attn_r, h_r, feed_r = nmt_forward_ref(src, tgt, lengths, params)
    assert bool(jnp.allclose(out, out_r, atol=1e-2))
    assert bool(jnp.allclose(attns["std"], attn_r, atol=1e-2))
    assert bool(jnp.allclose(dec_state["hidden"][0][0], h_r, atol=1e-2))
    assert bool(jnp.allclose(dec_state["input_feed"][0], feed_r, atol=1e-2))

    print("KERNEL_OK")
</pallas_src>

<mosaic_0001>
module attributes {stable_mosaic.version = 11 : i64} {
  func.func @_nmt_kernel(%arg0: memref<8x8x128xbf16, #tpu.memory_space<vmem>>, %arg1: memref<8x8x128xbf16, #tpu.memory_space<vmem>>, %arg2: memref<8x1xi32, #tpu.memory_space<vmem>>, %arg3: memref<128x128xbf16, #tpu.memory_space<vmem>>, %arg4: memref<128x128xbf16, #tpu.memory_space<vmem>>, %arg5: memref<1x128xf32, #tpu.memory_space<vmem>>, %arg6: memref<128x128xbf16, #tpu.memory_space<vmem>>, %arg7: memref<128x128xbf16, #tpu.memory_space<vmem>>, %arg8: memref<128x128xbf16, #tpu.memory_space<vmem>>, %arg9: memref<1x128xf32, #tpu.memory_space<vmem>>, %arg10: memref<128x128xbf16, #tpu.memory_space<vmem>>, %arg11: memref<128x128xbf16, #tpu.memory_space<vmem>>, %arg12: memref<1x128xf32, #tpu.memory_space<vmem>>, %arg13: memref<8x8x128xf32, #tpu.memory_space<vmem>>, %arg14: memref<8x8x8x1xf32, #tpu.memory_space<vmem>>, %arg15: memref<8x128xf32, #tpu.memory_space<vmem>>, %arg16: memref<8x128xf32, #tpu.memory_space<vmem>>, %arg17: memref<8x8x128xbf16, #tpu.memory_space<vmem>>, %arg18: memref<8x8x128xf32, #tpu.memory_space<vmem>>) attributes {dimension_semantics = [], scalar_prefetch = 0 : i64, scratch_operands = 2 : i64, tpu.core_type = #tpu.core_type<tc>} {
    %c0 = arith.constant 0 : index
    %c0_0 = arith.constant 0 : index
    %0 = vector.load %arg2[%c0, %c0_0] : memref<8x1xi32, #tpu.memory_space<vmem>>, vector<8x1xi32>
    %c0_1 = arith.constant 0 : index
    %c0_2 = arith.constant 0 : index
    %c0_3 = arith.constant 0 : index
    %1 = vector.load %arg0[%c0_1, %c0_2, %c0_3] : memref<8x8x128xbf16, #tpu.memory_space<vmem>>, vector<8x8x128xbf16>
    %2 = vector.shape_cast %1 : vector<8x8x128xbf16> to vector<64x128xbf16>
    %c0_4 = arith.constant 0 : index
    %c0_5 = arith.constant 0 : index
    %3 = vector.load %arg3[%c0_4, %c0_5] : memref<128x128xbf16, #tpu.memory_space<vmem>>, vector<128x128xbf16>
    %cst = arith.constant dense<0.000000e+00> : vector<64x128xf32>
    %4 = tpu.matmul %2, %3, %cst {dimension_numbers = #tpu.dot_dimension_numbers<[1], [0], [0], [1], [0, 0, 1, 1], [], []>} : vector<64x128xbf16>, vector<128x128xbf16>, vector<64x128xf32> -> vector<64x128xf32>
    %5 = vector.shape_cast %4 : vector<64x128xf32> to vector<8x8x128xf32>
    %c0_6 = arith.constant 0 : index
    %c0_7 = arith.constant 0 : index
    %6 = vector.load %arg5[%c0_6, %c0_7] : memref<1x128xf32, #tpu.memory_space<vmem>>, vector<1x128xf32>
    %7 = vector.shape_cast %6 : vector<1x128xf32> to vector<1x1x128xf32>
    %8 = vector.broadcast %7 : vector<1x1x128xf32> to vector<8x8x128xf32>
    %9 = arith.addf %5, %8 : vector<8x8x128xf32>
    %cst_8 = arith.constant 0.000000e+00 : f32
    %10 = vector.broadcast %cst_8 : f32 to vector<8x128xf32>
    %11 = vector.extract_strided_slice %9 {offsets = [0, 0, 0], sizes = [1, 8, 128], strides = [1, 1, 1]} : vector<8x8x128xf32> to vector<1x8x128xf32>
    %12 = vector.shape_cast %11 : vector<1x8x128xf32> to vector<8x128xf32>
    %13 = arith.truncf %10 : vector<8x128xf32> to vector<8x128xbf16>
    %c0_9 = arith.constant 0 : index
    %c0_10 = arith.constant 0 : index
    %14 = vector.load %arg4[%c0_9, %c0_10] : memref<128x128xbf16, #tpu.memory_space<vmem>>, vector<128x128xbf16>
    %cst_11 = arith.constant dense<0.000000e+00> : vector<8x128xf32>
    %15 = tpu.matmul %13, %14, %cst_11 {dimension_numbers = #tpu.dot_dimension_numbers<[1], [0], [0], [1], [0, 0, 1, 1], [], []>} : vector<8x128xbf16>, vector<128x128xbf16>, vector<8x128xf32> -> vector<8x128xf32>
    %16 = arith.addf %12, %15 : vector<8x128xf32>
    %17 = math.tanh %16 : vector<8x128xf32>
    %c0_i32 = arith.constant 0 : i32
    %18 = vector.broadcast %c0_i32 : i32 to vector<8x1xi32>
    %19 = arith.cmpi sgt, %0, %18 : vector<8x1xi32>
    %20 = vector.shape_cast %19 : vector<8x1xi1> to vector<8x1xi1>
    %21 = vector.broadcast %20 : vector<8x1xi1> to vector<8x128xi1>
    %22 = arith.select %21, %17, %10 : vector<8x128xi1>, vector<8x128xf32>
    %cst_12 = arith.constant 0.000000e+00 : f32
    %23 = vector.shape_cast %19 : vector<8x1xi1> to vector<8x1xi1>
    %24 = vector.broadcast %23 : vector<8x1xi1> to vector<8x128xi1>
    %25 = vector.broadcast %cst_12 : f32 to vector<8x128xf32>
    %26 = arith.select %24, %17, %25 : vector<8x128xi1>, vector<8x128xf32>
    %27 = arith.truncf %26 : vector<8x128xf32> to vector<8x128xbf16>
    %c0_13 = arith.constant 0 : index
    %c0_14 = arith.constant 0 : index
    %c0_15 = arith.constant 0 : index
    %28 = vector.load %arg17[%c0_13, %c0_14, %c0_15] : memref<8x8x128xbf16, #tpu.memory_space<vmem>>, vector<1x8x128xbf16>
    %29 = vector.shape_cast %28 : vector<1x8x128xbf16> to vector<8x128xbf16>
    %30 = vector.shape_cast %27 : vector<8x128xbf16> to vector<1x8x128xbf16>
    tpu.vector_store %arg17[%c0_13, %c0_14, %c0_15], %30 {strides = array<i32>} : memref<8x8x128xbf16, #tpu.memory_space<vmem>>, vector<1x8x128xbf16>,
    %31 = vector.extract_strided_slice %9 {offsets = [1, 0, 0], sizes = [1, 8, 128], strides = [1, 1, 1]} : vector<8x8x128xf32> to vector<1x8x128xf32>
    %32 = vector.shape_cast %31 : vector<1x8x128xf32> to vector<8x128xf32>
    %33 = arith.truncf %22 : vector<8x128xf32> to vector<8x128xbf16>
    %c0_16 = arith.constant 0 : index
    %c0_17 = arith.constant 0 : index
    %34 = vector.load %arg4[%c0_16, %c0_17] : memref<128x128xbf16, #tpu.memory_space<vmem>>, vector<128x128xbf16>
    %cst_18 = arith.constant dense<0.000000e+00> : vector<8x128xf32>
    %35 = tpu.matmul %33, %34, %cst_18 {dimension_numbers = #tpu.dot_dimension_numbers<[1], [0], [0], [1], [0, 0, 1, 1], [], []>} : vector<8x128xbf16>, vector<128x128xbf16>, vector<8x128xf32> -> vector<8x128xf32>
    %36 = arith.addf %32, %35 : vector<8x128xf32>
    %37 = math.tanh %36 : vector<8x128xf32>
    %c1_i32 = arith.constant 1 : i32
    %38 = vector.broadcast %c1_i32 : i32 to vector<8x1xi32>
    %39 = arith.cmpi sgt, %0, %38 : vector<8x1xi32>
    %40 = vector.shape_cast %39 : vector<8x1xi1> to vector<8x1xi1>
    %41 = vector.broadcast %40 : vector<8x1xi1> to vector<8x128xi1>
    %42 = arith.select %41, %37, %22 : vector<8x128xi1>, vector<8x128xf32>
    %cst_19 = arith.constant 0.000000e+00 : f32
    %43 = vector.shape_cast %39 : vector<8x1xi1> to vector<8x1xi1>
    %44 = vector.broadcast %43 : vector<8x1xi1> to vector<8x128xi1>
    %45 = vector.broadcast %cst_19 : f32 to vector<8x128xf32>
    %46 = arith.select %44, %37, %45 : vector<8x128xi1>, vector<8x128xf32>
    %47 = arith.truncf %46 : vector<8x128xf32> to vector<8x128xbf16>
    %c1 = arith.constant 1 : index
    %c0_20 = arith.constant 0 : index
    %c0_21 = arith.constant 0 : index
    %48 = vector.load %arg17[%c1, %c0_20, %c0_21] : memref<8x8x128xbf16, #tpu.memory_space<vmem>>, vector<1x8x128xbf16>
    %49 = vector.shape_cast %48 : vector<1x8x128xbf16> to vector<8x128xbf16>
    %50 = vector.shape_cast %47 : vector<8x128xbf16> to vector<1x8x128xbf16>
    tpu.vector_store %arg17[%c1, %c0_20, %c0_21], %50 {strides = array<i32>} : memref<8x8x128xbf16, #tpu.memory_space<vmem>>, vector<1x8x128xbf16>,
    %51 = vector.extract_strided_slice %9 {offsets = [2, 0, 0], sizes = [1, 8, 128], strides = [1, 1, 1]} : vector<8x8x128xf32> to vector<1x8x128xf32>
    %52 = vector.shape_cast %51 : vector<1x8x128xf32> to vector<8x128xf32>
    %53 = arith.truncf %42 : vector<8x128xf32> to vector<8x128xbf16>
    %c0_22 = arith.constant 0 : index
    %c0_23 = arith.constant 0 : index
    %54 = vector.load %arg4[%c0_22, %c0_23] : memref<128x128xbf16, #tpu.memory_space<vmem>>, vector<128x128xbf16>
    %cst_24 = arith.constant dense<0.000000e+00> : vector<8x128xf32>
    %55 = tpu.matmul %53, %54, %cst_24 {dimension_numbers = #tpu.dot_dimension_numbers<[1], [0], [0], [1], [0, 0, 1, 1], [], []>} : vector<8x128xbf16>, vector<128x128xbf16>, vector<8x128xf32> -> vector<8x128xf32>
    %56 = arith.addf %52, %55 : vector<8x128xf32>
    %57 = math.tanh %56 : vector<8x128xf32>
    %c2_i32 = arith.constant 2 : i32
    %58 = vector.broadcast %c2_i32 : i32 to vector<8x1xi32>
    %59 = arith.cmpi sgt, %0, %58 : vector<8x1xi32>
    %60 = vector.shape_cast %59 : vector<8x1xi1> to vector<8x1xi1>
    %61 = vector.broadcast %60 : vector<8x1xi1> to vector<8x128xi1>
    %62 = arith.select %61, %57, %42 : vector<8x128xi1>, vector<8x128xf32>
    %cst_25 = arith.constant 0.000000e+00 : f32
    %63 = vector.shape_cast %59 : vector<8x1xi1> to vector<8x1xi1>
    %64 = vector.broadcast %63 : vector<8x1xi1> to vector<8x128xi1>
    %65 = vector.broadcast %cst_25 : f32 to vector<8x128xf32>
    %66 = arith.select %64, %57, %65 : vector<8x128xi1>, vector<8x128xf32>
    %67 = arith.truncf %66 : vector<8x128xf32> to vector<8x128xbf16>
    %c2 = arith.constant 2 : index
    %c0_26 = arith.constant 0 : index
    %c0_27 = arith.constant 0 : index
    %68 = vector.load %arg17[%c2, %c0_26, %c0_27] : memref<8x8x128xbf16, #tpu.memory_space<vmem>>, vector<1x8x128xbf16>
    %69 = vector.shape_cast %68 : vector<1x8x128xbf16> to vector<8x128xbf16>
    %70 = vector.shape_cast %67 : vector<8x128xbf16> to vector<1x8x128xbf16>
    tpu.vector_store %arg17[%c2, %c0_26, %c0_27], %70 {strides = array<i32>} : memref<8x8x128xbf16, #tpu.memory_space<vmem>>, vector<1x8x128xbf16>,
    %71 = vector.extract_strided_slice %9 {offsets = [3, 0, 0], sizes = [1, 8, 128], strides = [1, 1, 1]} : vector<8x8x128xf32> to vector<1x8x128xf32>
    %72 = vector.shape_cast %71 : vector<1x8x128xf32> to vector<8x128xf32>
    %73 = arith.truncf %62 : vector<8x128xf32> to vector<8x128xbf16>
    %c0_28 = arith.constant 0 : index
    %c0_29 = arith.constant 0 : index
    %74 = vector.load %arg4[%c0_28, %c0_29] : memref<128x128xbf16, #tpu.memory_space<vmem>>, vector<128x128xbf16>
    %cst_30 = arith.constant dense<0.000000e+00> : vector<8x128xf32>
    %75 = tpu.matmul %73, %74, %cst_30 {dimension_numbers = #tpu.dot_dimension_numbers<[1], [0], [0], [1], [0, 0, 1, 1], [], []>} : vector<8x128xbf16>, vector<128x128xbf16>, vector<8x128xf32> -> vector<8x128xf32>
    %76 = arith.addf %72, %75 : vector<8x128xf32>
    %77 = math.tanh %76 : vector<8x128xf32>
    %c3_i32 = arith.constant 3 : i32
    %78 = vector.broadcast %c3_i32 : i32 to vector<8x1xi32>
    %79 = arith.cmpi sgt, %0, %78 : vector<8x1xi32>
    %80 = vector.shape_cast %79 : vector<8x1xi1> to vector<8x1xi1>
    %81 = vector.broadcast %80 : vector<8x1xi1> to vector<8x128xi1>
    %82 = arith.select %81, %77, %62 : vector<8x128xi1>, vector<8x128xf32>
    %cst_31 = arith.constant 0.000000e+00 : f32
    %83 = vector.shape_cast %79 : vector<8x1xi1> to vector<8x1xi1>
    %84 = vector.broadcast %83 : vector<8x1xi1> to vector<8x128xi1>
    %85 = vector.broadcast %cst_31 : f32 to vector<8x128xf32>
    %86 = arith.select %84, %77, %85 : vector<8x128xi1>, vector<8x128xf32>
    %87 = arith.truncf %86 : vector<8x128xf32> to vector<8x128xbf16>
    %c3 = arith.constant 3 : index
    %c0_32 = arith.constant 0 : index
    %c0_33 = arith.constant 0 : index
    %88 = vector.load %arg17[%c3, %c0_32, %c0_33] : memref<8x8x128xbf16, #tpu.memory_space<vmem>>, vector<1x8x128xbf16>
    %89 = vector.shape_cast %88 : vector<1x8x128xbf16> to vector<8x128xbf16>
    %90 = vector.shape_cast %87 : vector<8x128xbf16> to vector<1x8x128xbf16>
    tpu.vector_store %arg17[%c3, %c0_32, %c0_33], %90 {strides = array<i32>} : memref<8x8x128xbf16, #tpu.memory_space<vmem>>, vector<1x8x128xbf16>,
    %91 = vector.extract_strided_slice %9 {offsets = [4, 0, 0], sizes = [1, 8, 128], strides = [1, 1, 1]} : vector<8x8x128xf32> to vector<1x8x128xf32>
    %92 = vector.shape_cast %91 : vector<1x8x128xf32> to vector<8x128xf32>
    %93 = arith.truncf %82 : vector<8x128xf32> to vector<8x128xbf16>
    %c0_34 = arith.constant 0 : index
    %c0_35 = arith.constant 0 : index
    %94 = vector.load %arg4[%c0_34, %c0_35] : memref<128x128xbf16, #tpu.memory_space<vmem>>, vector<128x128xbf16>
    %cst_36 = arith.constant dense<0.000000e+00> : vector<8x128xf32>
    %95 = tpu.matmul %93, %94, %cst_36 {dimension_numbers = #tpu.dot_dimension_numbers<[1], [0], [0], [1], [0, 0, 1, 1], [], []>} : vector<8x128xbf16>, vector<128x128xbf16>, vector<8x128xf32> -> vector<8x128xf32>
    %96 = arith.addf %92, %95 : vector<8x128xf32>
    %97 = math.tanh %96 : vector<8x128xf32>
    %c4_i32 = arith.constant 4 : i32
    %98 = vector.broadcast %c4_i32 : i32 to vector<8x1xi32>
    %99 = arith.cmpi sgt, %0, %98 : vector<8x1xi32>
    %100 = vector.shape_cast %99 : vector<8x1xi1> to vector<8x1xi1>
    %101 = vector.broadcast %100 : vector<8x1xi1> to vector<8x128xi1>
    %102 = arith.select %101, %97, %82 : vector<8x128xi1>, vector<8x128xf32>
    %cst_37 = arith.constant 0.000000e+00 : f32
    %103 = vector.shape_cast %99 : vector<8x1xi1> to vector<8x1xi1>
    %104 = vector.broadcast %103 : vector<8x1xi1> to vector<8x128xi1>
    %105 = vector.broadcast %cst_37 : f32 to vector<8x128xf32>
    %106 = arith.select %104, %97, %105 : vector<8x128xi1>, vector<8x128xf32>
    %107 = arith.truncf %106 : vector<8x128xf32> to vector<8x128xbf16>
    %c4 = arith.constant 4 : index
    %c0_38 = arith.constant 0 : index
    %c0_39 = arith.constant 0 : index
    %108 = vector.load %arg17[%c4, %c0_38, %c0_39] : memref<8x8x128xbf16, #tpu.memory_space<vmem>>, vector<1x8x128xbf16>
    %109 = vector.shape_cast %108 : vector<1x8x128xbf16> to vector<8x128xbf16>
    %110 = vector.shape_cast %107 : vector<8x128xbf16> to vector<1x8x128xbf16>
    tpu.vector_store %arg17[%c4, %c0_38, %c0_39], %110 {strides = array<i32>} : memref<8x8x128xbf16, #tpu.memory_space<vmem>>, vector<1x8x128xbf16>,
    %111 = vector.extract_strided_slice %9 {offsets = [5, 0, 0], sizes = [1, 8, 128], strides = [1, 1, 1]} : vector<8x8x128xf32> to vector<1x8x128xf32>
    %112 = vector.shape_cast %111 : vector<1x8x128xf32> to vector<8x128xf32>
    %113 = arith.truncf %102 : vector<8x128xf32> to vector<8x128xbf16>
    %c0_40 = arith.constant 0 : index
    %c0_41 = arith.constant 0 : index
    %114 = vector.load %arg4[%c0_40, %c0_41] : memref<128x128xbf16, #tpu.memory_space<vmem>>, vector<128x128xbf16>
    %cst_42 = arith.constant dense<0.000000e+00> : vector<8x128xf32>
    %115 = tpu.matmul %113, %114, %cst_42 {dimension_numbers = #tpu.dot_dimension_numbers<[1], [0], [0], [1], [0, 0, 1, 1], [], []>} : vector<8x128xbf16>, vector<128x128xbf16>, vector<8x128xf32> -> vector<8x128xf32>
    %116 = arith.addf %112, %115 : vector<8x128xf32>
    %117 = math.tanh %116 : vector<8x128xf32>
    %c5_i32 = arith.constant 5 : i32
    %118 = vector.broadcast %c5_i32 : i32 to vector<8x1xi32>
    %119 = arith.cmpi sgt, %0, %118 : vector<8x1xi32>
    %120 = vector.shape_cast %119 : vector<8x1xi1> to vector<8x1xi1>
    %121 = vector.broadcast %120 : vector<8x1xi1> to vector<8x128xi1>
    %122 = arith.select %121, %117, %102 : vector<8x128xi1>, vector<8x128xf32>
    %cst_43 = arith.constant 0.000000e+00 : f32
    %123 = vector.shape_cast %119 : vector<8x1xi1> to vector<8x1xi1>
    %124 = vector.broadcast %123 : vector<8x1xi1> to vector<8x128xi1>
    %125 = vector.broadcast %cst_43 : f32 to vector<8x128xf32>
    %126 = arith.select %124, %117, %125 : vector<8x128xi1>, vector<8x128xf32>
    %127 = arith.truncf %126 : vector<8x128xf32> to vector<8x128xbf16>
    %c5 = arith.constant 5 : index
    %c0_44 = arith.constant 0 : index
    %c0_45 = arith.constant 0 : index
    %128 = vector.load %arg17[%c5, %c0_44, %c0_45] : memref<8x8x128xbf16, #tpu.memory_space<vmem>>, vector<1x8x128xbf16>
    %129 = vector.shape_cast %128 : vector<1x8x128xbf16> to vector<8x128xbf16>
    %130 = vector.shape_cast %127 : vector<8x128xbf16> to vector<1x8x128xbf16>
    tpu.vector_store %arg17[%c5, %c0_44, %c0_45], %130 {strides = array<i32>} : memref<8x8x128xbf16, #tpu.memory_space<vmem>>, vector<1x8x128xbf16>,
    %131 = vector.extract_strided_slice %9 {offsets = [6, 0, 0], sizes = [1, 8, 128], strides = [1, 1, 1]} : vector<8x8x128xf32> to vector<1x8x128xf32>
    %132 = vector.shape_cast %131 : vector<1x8x128xf32> to vector<8x128xf32>
    %133 = arith.truncf %122 : vector<8x128xf32> to vector<8x128xbf16>
    %c0_46 = arith.constant 0 : index
    %c0_47 = arith.constant 0 : index
    %134 = vector.load %arg4[%c0_46, %c0_47] : memref<128x128xbf16, #tpu.memory_space<vmem>>, vector<128x128xbf16>
    %cst_48 = arith.constant dense<0.000000e+00> : vector<8x128xf32>
    %135 = tpu.matmul %133, %134, %cst_48 {dimension_numbers = #tpu.dot_dimension_numbers<[1], [0], [0], [1], [0, 0, 1, 1], [], []>} : vector<8x128xbf16>, vector<128x128xbf16>, vector<8x128xf32> -> vector<8x128xf32>
    %136 = arith.addf %132, %135 : vector<8x128xf32>
    %137 = math.tanh %136 : vector<8x128xf32>
    %c6_i32 = arith.constant 6 : i32
    %138 = vector.broadcast %c6_i32 : i32 to vector<8x1xi32>
    %139 = arith.cmpi sgt, %0, %138 : vector<8x1xi32>
    %140 = vector.shape_cast %139 : vector<8x1xi1> to vector<8x1xi1>
    %141 = vector.broadcast %140 : vector<8x1xi1> to vector<8x128xi1>
    %142 = arith.select %141, %137, %122 : vector<8x128xi1>, vector<8x128xf32>
    %cst_49 = arith.constant 0.000000e+00 : f32
    %143 = vector.shape_cast %139 : vector<8x1xi1> to vector<8x1xi1>
    %144 = vector.broadcast %143 : vector<8x1xi1> to vector<8x128xi1>
    %145 = vector.broadcast %cst_49 : f32 to vector<8x128xf32>
    %146 = arith.select %144, %137, %145 : vector<8x128xi1>, vector<8x128xf32>
    %147 = arith.truncf %146 : vector<8x128xf32> to vector<8x128xbf16>
    %c6 = arith.constant 6 : index
    %c0_50 = arith.constant 0 : index
    %c0_51 = arith.constant 0 : index
    %148 = vector.load %arg17[%c6, %c0_50, %c0_51] : memref<8x8x128xbf16, #tpu.memory_space<vmem>>, vector<1x8x128xbf16>
    %149 = vector.shape_cast %148 : vector<1x8x128xbf16> to vector<8x128xbf16>
    %150 = vector.shape_cast %147 : vector<8x128xbf16> to vector<1x8x128xbf16>
    tpu.vector_store %arg17[%c6, %c0_50, %c0_51], %150 {strides = array<i32>} : memref<8x8x128xbf16, #tpu.memory_space<vmem>>, vector<1x8x128xbf16>,
    %151 = vector.extract_strided_slice %9 {offsets = [7, 0, 0], sizes = [1, 8, 128], strides = [1, 1, 1]} : vector<8x8x128xf32> to vector<1x8x128xf32>
    %152 = vector.shape_cast %151 : vector<1x8x128xf32> to vector<8x128xf32>
    %153 = arith.truncf %142 : vector<8x128xf32> to vector<8x128xbf16>
    %c0_52 = arith.constant 0 : index
    %c0_53 = arith.constant 0 : index
    %154 = vector.load %arg4[%c0_52, %c0_53] : memref<128x128xbf16, #tpu.memory_space<vmem>>, vector<128x128xbf16>
    %cst_54 = arith.constant dense<0.000000e+00> : vector<8x128xf32>
    %155 = tpu.matmul %153, %154, %cst_54 {dimension_numbers = #tpu.dot_dimension_numbers<[1], [0], [0], [1], [0, 0, 1, 1], [], []>} : vector<8x128xbf16>, vector<128x128xbf16>, vector<8x128xf32> -> vector<8x128xf32>
    %156 = arith.addf %152, %155 : vector<8x128xf32>
    %157 = math.tanh %156 : vector<8x128xf32>
    %c7_i32 = arith.constant 7 : i32
    %158 = vector.broadcast %c7_i32 : i32 to vector<8x1xi32>
    %159 = arith.cmpi sgt, %0, %158 : vector<8x1xi32>
    %160 = vector.shape_cast %159 : vector<8x1xi1> to vector<8x1xi1>
    %161 = vector.broadcast %160 : vector<8x1xi1> to vector<8x128xi1>
    %162 = arith.select %161, %157, %142 : vector<8x128xi1>, vector<8x128xf32>
    %cst_55 = arith.constant 0.000000e+00 : f32
    %163 = vector.shape_cast %159 : vector<8x1xi1> to vector<8x1xi1>
    %164 = vector.broadcast %163 : vector<8x1xi1> to vector<8x128xi1>
    %165 = vector.broadcast %cst_55 : f32 to vector<8x128xf32>
    %166 = arith.select %164, %157, %165 : vector<8x128xi1>, vector<8x128xf32>
    %167 = arith.truncf %166 : vector<8x128xf32> to vector<8x128xbf16>
    %c7 = arith.constant 7 : index
    %c0_56 = arith.constant 0 : index
    %c0_57 = arith.constant 0 : index
    %168 = vector.load %arg17[%c7, %c0_56, %c0_57] : memref<8x8x128xbf16, #tpu.memory_space<vmem>>, vector<1x8x128xbf16>
    %169 = vector.shape_cast %168 : vector<1x8x128xbf16> to vector<8x128xbf16>
    %170 = vector.shape_cast %167 : vector<8x128xbf16> to vector<1x8x128xbf16>
    tpu.vector_store %arg17[%c7, %c0_56, %c0_57], %170 {strides = array<i32>} : memref<8x8x128xbf16, #tpu.memory_space<vmem>>, vector<1x8x128xbf16>,
    %c0_58 = arith.constant 0 : index
    %c0_59 = arith.constant 0 : index
    %c0_60 = arith.constant 0 : index
    %171 = vector.load %arg1[%c0_58, %c0_59, %c0_60] : memref<8x8x128xbf16, #tpu.memory_space<vmem>>, vector<8x8x128xbf16>
    %172 = vector.shape_cast %171 : vector<8x8x128xbf16> to vector<64x128xbf16>
    %c0_61 = arith.constant 0 : index
    %c0_62 = arith.constant 0 : index
    %173 = vector.load %arg6[%c0_61, %c0_62] : memref<128x128xbf16, #tpu.memory_space<vmem>>, vector<128x128xbf16>
    %cst_63 = arith.constant dense<0.000000e+00> : vector<64x128xf32>
    %174 = tpu.matmul %172, %173, %cst_63 {dimension_numbers = #tpu.dot_dimension_numbers<[1], [0], [0], [1], [0, 0, 1, 1], [], []>} : vector<64x128xbf16>, vector<128x128xbf16>, vector<64x128xf32> -> vector<64x128xf32>
    %175 = vector.shape_cast %174 : vector<64x128xf32> to vector<8x8x128xf32>
    %c0_64 = arith.constant 0 : index
    %c0_65 = arith.constant 0 : index
    %176 = vector.load %arg9[%c0_64, %c0_65] : memref<1x128xf32, #tpu.memory_space<vmem>>, vector<1x128xf32>
    %177 = vector.shape_cast %176 : vector<1x128xf32> to vector<1x1x128xf32>
    %178 = vector.broadcast %177 : vector<1x1x128xf32> to vector<8x8x128xf32>
    %179 = arith.addf %175, %178 : vector<8x8x128xf32>
    %c0_66 = arith.constant 0 : index
    %c0_67 = arith.constant 0 : index
    %c0_68 = arith.constant 0 : index
    %180 = vector.load %arg18[%c0_66, %c0_67, %c0_68] : memref<8x8x128xf32, #tpu.memory_space<vmem>>, vector<8x8x128xf32>
    tpu.vector_store %arg18[%c0_66, %c0_67, %c0_68], %179 {strides = array<i32>} : memref<8x8x128xf32, #tpu.memory_space<vmem>>, vector<8x8x128xf32>,
    %181 = tpu.iota {dimensions = array<i32: 0>} : vector<8x8x1xi32>
    %182 = vector.shape_cast %0 : vector<8x1xi32> to vector<1x8x1xi32>
    %183 = vector.broadcast %182 : vector<1x8x1xi32> to vector<8x8x1xi32>
    %184 = arith.cmpi sge, %181, %183 : vector<8x8x1xi32>
    %cst_69 = arith.constant -1.000000e+09 : f32
    %cst_70 = arith.constant 0.000000e+00 : f32
    %185 = vector.broadcast %cst_69 : f32 to vector<8x8x1xf32>
    %186 = vector.broadcast %cst_70 : f32 to vector<8x8x1xf32>
    %187 = arith.select %184, %185, %186 : vector<8x8x1xi1>, vector<8x8x1xf32>
    %cst_71 = arith.constant 0.000000e+00 : f32
    %188 = vector.broadcast %cst_71 : f32 to vector<8x128xf32>
    %c0_72 = arith.constant 0 : index
    %c0_73 = arith.constant 0 : index
    %c0_74 = arith.constant 0 : index
    %189 = vector.load %arg18[%c0_72, %c0_73, %c0_74] : memref<8x8x128xf32, #tpu.memory_space<vmem>>, vector<1x8x128xf32>
    %190 = vector.shape_cast %189 : vector<1x8x128xf32> to vector<8x128xf32>
    %191 = arith.truncf %188 : vector<8x128xf32> to vector<8x128xbf16>
    %c0_75 = arith.constant 0 : index
    %c0_76 = arith.constant 0 : index
    %192 = vector.load %arg7[%c0_75, %c0_76] : memref<128x128xbf16, #tpu.memory_space<vmem>>, vector<128x128xbf16>
    %cst_77 = arith.constant dense<0.000000e+00> : vector<8x128xf32>
    %193 = tpu.matmul %191, %192, %cst_77 {dimension_numbers = #tpu.dot_dimension_numbers<[1], [0], [0], [1], [0, 0, 1, 1], [], []>} : vector<8x128xbf16>, vector<128x128xbf16>, vector<8x128xf32> -> vector<8x128xf32>
    %194 = arith.addf %190, %193 : vector<8x128xf32>
    %195 = arith.truncf %162 : vector<8x128xf32> to vector<8x128xbf16>
    %c0_78 = arith.constant 0 : index
    %c0_79 = arith.constant 0 : index
    %196 = vector.load %arg8[%c0_78, %c0_79] : memref<128x128xbf16, #tpu.memory_space<vmem>>, vector<128x128xbf16>
    %cst_80 = arith.constant dense<0.000000e+00> : vector<8x128xf32>
    %197 = tpu.matmul %195, %196, %cst_80 {dimension_numbers = #tpu.dot_dimension_numbers<[1], [0], [0], [1], [0, 0, 1, 1], [], []>} : vector<8x128xbf16>, vector<128x128xbf16>, vector<8x128xf32> -> vector<8x128xf32>
    %198 = arith.addf %194, %197 : vector<8x128xf32>
    %199 = math.tanh %198 : vector<8x128xf32>
    %c0_81 = arith.constant 0 : index
    %c0_82 = arith.constant 0 : index
    %c0_83 = arith.constant 0 : index
    %200 = vector.load %arg17[%c0_81, %c0_82, %c0_83] : memref<8x8x128xbf16, #tpu.memory_space<vmem>>, vector<8x8x128xbf16>
    %201 = arith.extf %200 : vector<8x8x128xbf16> to vector<8x8x128xf32>
    %202 = vector.shape_cast %199 : vector<8x128xf32> to vector<1x8x128xf32>
    %203 = vector.broadcast %202 : vector<1x8x128xf32> to vector<8x8x128xf32>
    %204 = arith.mulf %201, %203 : vector<8x8x128xf32>
    %cst_84 = arith.constant dense<0.000000e+00> : vector<8x8xf32>
    %205 = vector.multi_reduction <add>, %204, %cst_84 [2] : vector<8x8x128xf32> to vector<8x8xf32>
    %206 = vector.shape_cast %205 : vector<8x8xf32> to vector<8x8x1xf32>
    %207 = arith.addf %206, %187 : vector<8x8x1xf32>
    %cst_85 = arith.constant dense<0xFF800000> : vector<8x1xf32>
    %208 = vector.multi_reduction <maximumf>, %207, %cst_85 [0] : vector<8x8x1xf32> to vector<8x1xf32>
    %209 = vector.shape_cast %208 : vector<8x1xf32> to vector<1x8x1xf32>
    %210 = vector.broadcast %209 : vector<1x8x1xf32> to vector<8x8x1xf32>
    %211 = arith.subf %207, %210 : vector<8x8x1xf32>
    %212 = math.exp %211 : vector<8x8x1xf32>
    %cst_86 = arith.constant dense<0.000000e+00> : vector<8x1xf32>
    %213 = vector.multi_reduction <add>, %212, %cst_86 [0] : vector<8x8x1xf32> to vector<8x1xf32>
    %214 = vector.shape_cast %213 : vector<8x1xf32> to vector<1x8x1xf32>
    %215 = vector.broadcast %214 : vector<1x8x1xf32> to vector<8x8x1xf32>
    %216 = arith.divf %212, %215 : vector<8x8x1xf32>
    %217 = vector.broadcast %216 : vector<8x8x1xf32> to vector<8x8x128xf32>
    %218 = arith.mulf %217, %201 : vector<8x8x128xf32>
    %cst_87 = arith.constant dense<0.000000e+00> : vector<8x128xf32>
    %219 = vector.multi_reduction <add>, %218, %cst_87 [0] : vector<8x8x128xf32> to vector<8x128xf32>
    %220 = arith.truncf %199 : vector<8x128xf32> to vector<8x128xbf16>
    %c0_88 = arith.constant 0 : index
    %c0_89 = arith.constant 0 : index
    %221 = vector.load %arg10[%c0_88, %c0_89] : memref<128x128xbf16, #tpu.memory_space<vmem>>, vector<128x128xbf16>
    %cst_90 = arith.constant dense<0.000000e+00> : vector<8x128xf32>
    %222 = tpu.matmul %220, %221, %cst_90 {dimension_numbers = #tpu.dot_dimension_numbers<[1], [0], [0], [1], [0, 0, 1, 1], [], []>} : vector<8x128xbf16>, vector<128x128xbf16>, vector<8x128xf32> -> vector<8x128xf32>
    %223 = arith.truncf %219 : vector<8x128xf32> to vector<8x128xbf16>
    %c0_91 = arith.constant 0 : index
    %c0_92 = arith.constant 0 : index
    %224 = vector.load %arg11[%c0_91, %c0_92] : memref<128x128xbf16, #tpu.memory_space<vmem>>, vector<128x128xbf16>
    %cst_93 = arith.constant dense<0.000000e+00> : vector<8x128xf32>
    %225 = tpu.matmul %223, %224, %cst_93 {dimension_numbers = #tpu.dot_dimension_numbers<[1], [0], [0], [1], [0, 0, 1, 1], [], []>} : vector<8x128xbf16>, vector<128x128xbf16>, vector<8x128xf32> -> vector<8x128xf32>
    %226 = arith.addf %222, %225 : vector<8x128xf32>
    %c0_94 = arith.constant 0 : index
    %c0_95 = arith.constant 0 : index
    %227 = vector.load %arg12[%c0_94, %c0_95] : memref<1x128xf32, #tpu.memory_space<vmem>>, vector<1x128xf32>
    %228 = vector.broadcast %227 : vector<1x128xf32> to vector<8x128xf32>
    %229 = arith.addf %226, %228 : vector<8x128xf32>
    %230 = math.tanh %229 : vector<8x128xf32>
    %c0_96 = arith.constant 0 : index
    %c0_97 = arith.constant 0 : index
    %c0_98 = arith.constant 0 : index
    %231 = vector.load %arg13[%c0_96, %c0_97, %c0_98] : memref<8x8x128xf32, #tpu.memory_space<vmem>>, vector<1x8x128xf32>
    %232 = vector.shape_cast %231 : vector<1x8x128xf32> to vector<8x128xf32>
    %233 = vector.shape_cast %230 : vector<8x128xf32> to vector<1x8x128xf32>
    tpu.vector_store %arg13[%c0_96, %c0_97, %c0_98], %233 {strides = array<i32>} : memref<8x8x128xf32, #tpu.memory_space<vmem>>, vector<1x8x128xf32>,
    %c0_99 = arith.constant 0 : index
    %c0_100 = arith.constant 0 : index
    %c0_101 = arith.constant 0 : index
    %c0_102 = arith.constant 0 : index
    %234 = vector.load %arg14[%c0_99, %c0_100, %c0_101, %c0_102] : memref<8x8x8x1xf32, #tpu.memory_space<vmem>>, vector<1x8x8x1xf32>
    %235 = vector.shape_cast %234 : vector<1x8x8x1xf32> to vector<8x8x1xf32>
    %236 = vector.shape_cast %216 : vector<8x8x1xf32> to vector<1x8x8x1xf32>
    tpu.vector_store %arg14[%c0_99, %c0_100, %c0_101, %c0_102], %236 {strides = array<i32>} : memref<8x8x8x1xf32, #tpu.memory_space<vmem>>, vector<1x8x8x1xf32>,
    %c1_103 = arith.constant 1 : index
    %c0_104 = arith.constant 0 : index
    %c0_105 = arith.constant 0 : index
    %237 = vector.load %arg18[%c1_103, %c0_104, %c0_105] : memref<8x8x128xf32, #tpu.memory_space<vmem>>, vector<1x8x128xf32>
    %238 = vector.shape_cast %237 : vector<1x8x128xf32> to vector<8x128xf32>
    %239 = arith.truncf %230 : vector<8x128xf32> to vector<8x128xbf16>
    %c0_106 = arith.constant 0 : index
    %c0_107 = arith.constant 0 : index
    %240 = vector.load %arg7[%c0_106, %c0_107] : memref<128x128xbf16, #tpu.memory_space<vmem>>, vector<128x128xbf16>
    %cst_108 = arith.constant dense<0.000000e+00> : vector<8x128xf32>
    %241 = tpu.matmul %239, %240, %cst_108 {dimension_numbers = #tpu.dot_dimension_numbers<[1], [0], [0], [1], [0, 0, 1, 1], [], []>} : vector<8x128xbf16>, vector<128x128xbf16>, vector<8x128xf32> -> vector<8x128xf32>
    %242 = arith.addf %238, %241 : vector<8x128xf32>
    %243 = arith.truncf %199 : vector<8x128xf32> to vector<8x128xbf16>
    %c0_109 = arith.constant 0 : index
    %c0_110 = arith.constant 0 : index
    %244 = vector.load %arg8[%c0_109, %c0_110] : memref<128x128xbf16, #tpu.memory_space<vmem>>, vector<128x128xbf16>
    %cst_111 = arith.constant dense<0.000000e+00> : vector<8x128xf32>
    %245 = tpu.matmul %243, %244, %cst_111 {dimension_numbers = #tpu.dot_dimension_numbers<[1], [0], [0], [1], [0, 0, 1, 1], [], []>} : vector<8x128xbf16>, vector<128x128xbf16>, vector<8x128xf32> -> vector<8x128xf32>
    %246 = arith.addf %242, %245 : vector<8x128xf32>
    %247 = math.tanh %246 : vector<8x128xf32>
    %c0_112 = arith.constant 0 : index
    %c0_113 = arith.constant 0 : index
    %c0_114 = arith.constant 0 : index
    %248 = vector.load %arg17[%c0_112, %c0_113, %c0_114] : memref<8x8x128xbf16, #tpu.memory_space<vmem>>, vector<8x8x128xbf16>
    %249 = arith.extf %248 : vector<8x8x128xbf16> to vector<8x8x128xf32>
    %250 = vector.shape_cast %247 : vector<8x128xf32> to vector<1x8x128xf32>
    %251 = vector.broadcast %250 : vector<1x8x128xf32> to vector<8x8x128xf32>
    %252 = arith.mulf %249, %251 : vector<8x8x128xf32>
    %cst_115 = arith.constant dense<0.000000e+00> : vector<8x8xf32>
    %253 = vector.multi_reduction <add>, %252, %cst_115 [2] : vector<8x8x128xf32> to vector<8x8xf32>
    %254 = vector.shape_cast %253 : vector<8x8xf32> to vector<8x8x1xf32>
    %255 = arith.addf %254, %187 : vector<8x8x1xf32>
    %cst_116 = arith.constant dense<0xFF800000> : vector<8x1xf32>
    %256 = vector.multi_reduction <maximumf>, %255, %cst_116 [0] : vector<8x8x1xf32> to vector<8x1xf32>
    %257 = vector.shape_cast %256 : vector<8x1xf32> to vector<1x8x1xf32>
    %258 = vector.broadcast %257 : vector<1x8x1xf32> to vector<8x8x1xf32>
    %259 = arith.subf %255, %258 : vector<8x8x1xf32>
    %260 = math.exp %259 : vector<8x8x1xf32>
    %cst_117 = arith.constant dense<0.000000e+00> : vector<8x1xf32>
    %261 = vector.multi_reduction <add>, %260, %cst_117 [0] : vector<8x8x1xf32> to vector<8x1xf32>
    %262 = vector.shape_cast %261 : vector<8x1xf32> to vector<1x8x1xf32>
    %263 = vector.broadcast %262 : vector<1x8x1xf32> to vector<8x8x1xf32>
    %264 = arith.divf %260, %263 : vector<8x8x1xf32>
    %265 = vector.broadcast %264 : vector<8x8x1xf32> to vector<8x8x128xf32>
    %266 = arith.mulf %265, %249 : vector<8x8x128xf32>
    %cst_118 = arith.constant dense<0.000000e+00> : vector<8x128xf32>
    %267 = vector.multi_reduction <add>, %266, %cst_118 [0] : vector<8x8x128xf32> to vector<8x128xf32>
    %268 = arith.truncf %247 : vector<8x128xf32> to vector<8x128xbf16>
    %c0_119 = arith.constant 0 : index
    %c0_120 = arith.constant 0 : index
    %269 = vector.load %arg10[%c0_119, %c0_120] : memref<128x128xbf16, #tpu.memory_space<vmem>>, vector<128x128xbf16>
    %cst_121 = arith.constant dense<0.000000e+00> : vector<8x128xf32>
    %270 = tpu.matmul %268, %269, %cst_121 {dimension_numbers = #tpu.dot_dimension_numbers<[1], [0], [0], [1], [0, 0, 1, 1], [], []>} : vector<8x128xbf16>, vector<128x128xbf16>, vector<8x128xf32> -> vector<8x128xf32>
    %271 = arith.truncf %267 : vector<8x128xf32> to vector<8x128xbf16>
    %c0_122 = arith.constant 0 : index
    %c0_123 = arith.constant 0 : index
    %272 = vector.load %arg11[%c0_122, %c0_123] : memref<128x128xbf16, #tpu.memory_space<vmem>>, vector<128x128xbf16>
    %cst_124 = arith.constant dense<0.000000e+00> : vector<8x128xf32>
    %273 = tpu.matmul %271, %272, %cst_124 {dimension_numbers = #tpu.dot_dimension_numbers<[1], [0], [0], [1], [0, 0, 1, 1], [], []>} : vector<8x128xbf16>, vector<128x128xbf16>, vector<8x128xf32> -> vector<8x128xf32>
    %274 = arith.addf %270, %273 : vector<8x128xf32>
    %c0_125 = arith.constant 0 : index
    %c0_126 = arith.constant 0 : index
    %275 = vector.load %arg12[%c0_125, %c0_126] : memref<1x128xf32, #tpu.memory_space<vmem>>, vector<1x128xf32>
    %276 = vector.broadcast %275 : vector<1x128xf32> to vector<8x128xf32>
    %277 = arith.addf %274, %276 : vector<8x128xf32>
    %278 = math.tanh %277 : vector<8x128xf32>
    %c1_127 = arith.constant 1 : index
    %c0_128 = arith.constant 0 : index
    %c0_129 = arith.constant 0 : index
    %279 = vector.load %arg13[%c1_127, %c0_128, %c0_129] : memref<8x8x128xf32, #tpu.memory_space<vmem>>, vector<1x8x128xf32>
    %280 = vector.shape_cast %279 : vector<1x8x128xf32> to vector<8x128xf32>
    %281 = vector.shape_cast %278 : vector<8x128xf32> to vector<1x8x128xf32>
    tpu.vector_store %arg13[%c1_127, %c0_128, %c0_129], %281 {strides = array<i32>} : memref<8x8x128xf32, #tpu.memory_space<vmem>>, vector<1x8x128xf32>,
    %c1_130 = arith.constant 1 : index
    %c0_131 = arith.constant 0 : index
    %c0_132 = arith.constant 0 : index
    %c0_133 = arith.constant 0 : index
    %282 = vector.load %arg14[%c1_130, %c0_131, %c0_132, %c0_133] : memref<8x8x8x1xf32, #tpu.memory_space<vmem>>, vector<1x8x8x1xf32>
    %283 = vector.shape_cast %282 : vector<1x8x8x1xf32> to vector<8x8x1xf32>
    %284 = vector.shape_cast %264 : vector<8x8x1xf32> to vector<1x8x8x1xf32>
    tpu.vector_store %arg14[%c1_130, %c0_131, %c0_132, %c0_133], %284 {strides = array<i32>} : memref<8x8x8x1xf32, #tpu.memory_space<vmem>>, vector<1x8x8x1xf32>,
    %c2_134 = arith.constant 2 : index
    %c0_135 = arith.constant 0 : index
    %c0_136 = arith.constant 0 : index
    %285 = vector.load %arg18[%c2_134, %c0_135, %c0_136] : memref<8x8x128xf32, #tpu.memory_space<vmem>>, vector<1x8x128xf32>
    %286 = vector.shape_cast %285 : vector<1x8x128xf32> to vector<8x128xf32>
    %287 = arith.truncf %278 : vector<8x128xf32> to vector<8x128xbf16>
    %c0_137 = arith.constant 0 : index
    %c0_138 = arith.constant 0 : index
    %288 = vector.load %arg7[%c0_137, %c0_138] : memref<128x128xbf16, #tpu.memory_space<vmem>>, vector<128x128xbf16>
    %cst_139 = arith.constant dense<0.000000e+00> : vector<8x128xf32>
    %289 = tpu.matmul %287, %288, %cst_139 {dimension_numbers = #tpu.dot_dimension_numbers<[1], [0], [0], [1], [0, 0, 1, 1], [], []>} : vector<8x128xbf16>, vector<128x128xbf16>, vector<8x128xf32> -> vector<8x128xf32>
    %290 = arith.addf %286, %289 : vector<8x128xf32>
    %291 = arith.truncf %247 : vector<8x128xf32> to vector<8x128xbf16>
    %c0_140 = arith.constant 0 : index
    %c0_141 = arith.constant 0 : index
    %292 = vector.load %arg8[%c0_140, %c0_141] : memref<128x128xbf16, #tpu.memory_space<vmem>>, vector<128x128xbf16>
    %cst_142 = arith.constant dense<0.000000e+00> : vector<8x128xf32>
    %293 = tpu.matmul %291, %292, %cst_142 {dimension_numbers = #tpu.dot_dimension_numbers<[1], [0], [0], [1], [0, 0, 1, 1], [], []>} : vector<8x128xbf16>, vector<128x128xbf16>, vector<8x128xf32> -> vector<8x128xf32>
    %294 = arith.addf %290, %293 : vector<8x128xf32>
    %295 = math.tanh %294 : vector<8x128xf32>
    %c0_143 = arith.constant 0 : index
    %c0_144 = arith.constant 0 : index
    %c0_145 = arith.constant 0 : index
    %296 = vector.load %arg17[%c0_143, %c0_144, %c0_145] : memref<8x8x128xbf16, #tpu.memory_space<vmem>>, vector<8x8x128xbf16>
    %297 = arith.extf %296 : vector<8x8x128xbf16> to vector<8x8x128xf32>
    %298 = vector.shape_cast %295 : vector<8x128xf32> to vector<1x8x128xf32>
    %299 = vector.broadcast %298 : vector<1x8x128xf32> to vector<8x8x128xf32>
    %300 = arith.mulf %297, %299 : vector<8x8x128xf32>
    %cst_146 = arith.constant dense<0.000000e+00> : vector<8x8xf32>
    %301 = vector.multi_reduction <add>, %300, %cst_146 [2] : vector<8x8x128xf32> to vector<8x8xf32>
    %302 = vector.shape_cast %301 : vector<8x8xf32> to vector<8x8x1xf32>
    %303 = arith.addf %302, %187 : vector<8x8x1xf32>
    %cst_147 = arith.constant dense<0xFF800000> : vector<8x1xf32>
    %304 = vector.multi_reduction <maximumf>, %303, %cst_147 [0] : vector<8x8x1xf32> to vector<8x1xf32>
    %305 = vector.shape_cast %304 : vector<8x1xf32> to vector<1x8x1xf32>
    %306 = vector.broadcast %305 : vector<1x8x1xf32> to vector<8x8x1xf32>
    %307 = arith.subf %303, %306 : vector<8x8x1xf32>
    %308 = math.exp %307 : vector<8x8x1xf32>
    %cst_148 = arith.constant dense<0.000000e+00> : vector<8x1xf32>
    %309 = vector.multi_reduction <add>, %308, %cst_148 [0] : vector<8x8x1xf32> to vector<8x1xf32>
    %310 = vector.shape_cast %309 : vector<8x1xf32> to vector<1x8x1xf32>
    %311 = vector.broadcast %310 : vector<1x8x1xf32> to vector<8x8x1xf32>
    %312 = arith.divf %308, %311 : vector<8x8x1xf32>
    %313 = vector.broadcast %312 : vector<8x8x1xf32> to vector<8x8x128xf32>
    %314 = arith.mulf %313, %297 : vector<8x8x128xf32>
    %cst_149 = arith.constant dense<0.000000e+00> : vector<8x128xf32>
    %315 = vector.multi_reduction <add>, %314, %cst_149 [0] : vector<8x8x128xf32> to vector<8x128xf32>
    %316 = arith.truncf %295 : vector<8x128xf32> to vector<8x128xbf16>
    %c0_150 = arith.constant 0 : index
    %c0_151 = arith.constant 0 : index
    %317 = vector.load %arg10[%c0_150, %c0_151] : memref<128x128xbf16, #tpu.memory_space<vmem>>, vector<128x128xbf16>
    %cst_152 = arith.constant dense<0.000000e+00> : vector<8x128xf32>
    %318 = tpu.matmul %316, %317, %cst_152 {dimension_numbers = #tpu.dot_dimension_numbers<[1], [0], [0], [1], [0, 0, 1, 1], [], []>} : vector<8x128xbf16>, vector<128x128xbf16>, vector<8x128xf32> -> vector<8x128xf32>
    %319 = arith.truncf %315 : vector<8x128xf32> to vector<8x128xbf16>
    %c0_153 = arith.constant 0 : index
    %c0_154 = arith.constant 0 : index
    %320 = vector.load %arg11[%c0_153, %c0_154] : memref<128x128xbf16, #tpu.memory_space<vmem>>, vector<128x128xbf16>
    %cst_155 = arith.constant dense<0.000000e+00> : vector<8x128xf32>
    %321 = tpu.matmul %319, %320, %cst_155 {dimension_numbers = #tpu.dot_dimension_numbers<[1], [0], [0], [1], [0, 0, 1, 1], [], []>} : vector<8x128xbf16>, vector<128x128xbf16>, vector<8x128xf32> -> vector<8x128xf32>
    %322 = arith.addf %318, %321 : vector<8x128xf32>
    %c0_156 = arith.constant 0 : index
    %c0_157 = arith.constant 0 : index
    %323 = vector.load %arg12[%c0_156, %c0_157] : memref<1x128xf32, #tpu.memory_space<vmem>>, vector<1x128xf32>
    %324 = vector.broadcast %323 : vector<1x128xf32> to vector<8x128xf32>
    %325 = arith.addf %322, %324 : vector<8x128xf32>
    %326 = math.tanh %325 : vector<8x128xf32>
    %c2_158 = arith.constant 2 : index
    %c0_159 = arith.constant 0 : index
    %c0_160 = arith.constant 0 : index
    %327 = vector.load %arg13[%c2_158, %c0_159, %c0_160] : memref<8x8x128xf32, #tpu.memory_space<vmem>>, vector<1x8x128xf32>
    %328 = vector.shape_cast %327 : vector<1x8x128xf32> to vector<8x128xf32>
    %329 = vector.shape_cast %326 : vector<8x128xf32> to vector<1x8x128xf32>
    tpu.vector_store %arg13[%c2_158, %c0_159, %c0_160], %329 {strides = array<i32>} : memref<8x8x128xf32, #tpu.memory_space<vmem>>, vector<1x8x128xf32>,
    %c2_161 = arith.constant 2 : index
    %c0_162 = arith.constant 0 : index
    %c0_163 = arith.constant 0 : index
    %c0_164 = arith.constant 0 : index
    %330 = vector.load %arg14[%c2_161, %c0_162, %c0_163, %c0_164] : memref<8x8x8x1xf32, #tpu.memory_space<vmem>>, vector<1x8x8x1xf32>
    %331 = vector.shape_cast %330 : vector<1x8x8x1xf32> to vector<8x8x1xf32>
    %332 = vector.shape_cast %312 : vector<8x8x1xf32> to vector<1x8x8x1xf32>
    tpu.vector_store %arg14[%c2_161, %c0_162, %c0_163, %c0_164], %332 {strides = array<i32>} : memref<8x8x8x1xf32, #tpu.memory_space<vmem>>, vector<1x8x8x1xf32>,
    %c3_165 = arith.constant 3 : index
    %c0_166 = arith.constant 0 : index
    %c0_167 = arith.constant 0 : index
    %333 = vector.load %arg18[%c3_165, %c0_166, %c0_167] : memref<8x8x128xf32, #tpu.memory_space<vmem>>, vector<1x8x128xf32>
    %334 = vector.shape_cast %333 : vector<1x8x128xf32> to vector<8x128xf32>
    %335 = arith.truncf %326 : vector<8x128xf32> to vector<8x128xbf16>
    %c0_168 = arith.constant 0 : index
    %c0_169 = arith.constant 0 : index
    %336 = vector.load %arg7[%c0_168, %c0_169] : memref<128x128xbf16, #tpu.memory_space<vmem>>, vector<128x128xbf16>
    %cst_170 = arith.constant dense<0.000000e+00> : vector<8x128xf32>
    %337 = tpu.matmul %335, %336, %cst_170 {dimension_numbers = #tpu.dot_dimension_numbers<[1], [0], [0], [1], [0, 0, 1, 1], [], []>} : vector<8x128xbf16>, vector<128x128xbf16>, vector<8x128xf32> -> vector<8x128xf32>
    %338 = arith.addf %334, %337 : vector<8x128xf32>
    %339 = arith.truncf %295 : vector<8x128xf32> to vector<8x128xbf16>
    %c0_171 = arith.constant 0 : index
    %c0_172 = arith.constant 0 : index
    %340 = vector.load %arg8[%c0_171, %c0_172] : memref<128x128xbf16, #tpu.memory_space<vmem>>, vector<128x128xbf16>
    %cst_173 = arith.constant dense<0.000000e+00> : vector<8x128xf32>
    %341 = tpu.matmul %339, %340, %cst_173 {dimension_numbers = #tpu.dot_dimension_numbers<[1], [0], [0], [1], [0, 0, 1, 1], [], []>} : vector<8x128xbf16>, vector<128x128xbf16>, vector<8x128xf32> -> vector<8x128xf32>
    %342 = arith.addf %338, %341 : vector<8x128xf32>
    %343 = math.tanh %342 : vector<8x128xf32>
    %c0_174 = arith.constant 0 : index
    %c0_175 = arith.constant 0 : index
    %c0_176 = arith.constant 0 : index
    %344 = vector.load %arg17[%c0_174, %c0_175, %c0_176] : memref<8x8x128xbf16, #tpu.memory_space<vmem>>, vector<8x8x128xbf16>
    %345 = arith.extf %344 : vector<8x8x128xbf16> to vector<8x8x128xf32>
    %346 = vector.shape_cast %343 : vector<8x128xf32> to vector<1x8x128xf32>
    %347 = vector.broadcast %346 : vector<1x8x128xf32> to vector<8x8x128xf32>
    %348 = arith.mulf %345, %347 : vector<8x8x128xf32>
    %cst_177 = arith.constant dense<0.000000e+00> : vector<8x8xf32>
    %349 = vector.multi_reduction <add>, %348, %cst_177 [2] : vector<8x8x128xf32> to vector<8x8xf32>
    %350 = vector.shape_cast %349 : vector<8x8xf32> to vector<8x8x1xf32>
    %351 = arith.addf %350, %187 : vector<8x8x1xf32>
    %cst_178 = arith.constant dense<0xFF800000> : vector<8x1xf32>
    %352 = vector.multi_reduction <maximumf>, %351, %cst_178 [0] : vector<8x8x1xf32> to vector<8x1xf32>
    %353 = vector.shape_cast %352 : vector<8x1xf32> to vector<1x8x1xf32>
    %354 = vector.broadcast %353 : vector<1x8x1xf32> to vector<8x8x1xf32>
    %355 = arith.subf %351, %354 : vector<8x8x1xf32>
    %356 = math.exp %355 : vector<8x8x1xf32>
    %cst_179 = arith.constant dense<0.000000e+00> : vector<8x1xf32>
    %357 = vector.multi_reduction <add>, %356, %cst_179 [0] : vector<8x8x1xf32> to vector<8x1xf32>
    %358 = vector.shape_cast %357 : vector<8x1xf32> to vector<1x8x1xf32>
    %359 = vector.broadcast %358 : vector<1x8x1xf32> to vector<8x8x1xf32>
    %360 = arith.divf %356, %359 : vector<8x8x1xf32>
    %361 = vector.broadcast %360 : vector<8x8x1xf32> to vector<8x8x128xf32>
    %362 = arith.mulf %361, %345 : vector<8x8x128xf32>
    %cst_180 = arith.constant dense<0.000000e+00> : vector<8x128xf32>
    %363 = vector.multi_reduction <add>, %362, %cst_180 [0] : vector<8x8x128xf32> to vector<8x128xf32>
    %364 = arith.truncf %343 : vector<8x128xf32> to vector<8x128xbf16>
    %c0_181 = arith.constant 0 : index
    %c0_182 = arith.constant 0 : index
    %365 = vector.load %arg10[%c0_181, %c0_182] : memref<128x128xbf16, #tpu.memory_space<vmem>>, vector<128x128xbf16>
    %cst_183 = arith.constant dense<0.000000e+00> : vector<8x128xf32>
    %366 = tpu.matmul %364, %365, %cst_183 {dimension_numbers = #tpu.dot_dimension_numbers<[1], [0], [0], [1], [0, 0, 1, 1], [], []>} : vector<8x128xbf16>, vector<128x128xbf16>, vector<8x128xf32> -> vector<8x128xf32>
    %367 = arith.truncf %363 : vector<8x128xf32> to vector<8x128xbf16>
    %c0_184 = arith.constant 0 : index
    %c0_185 = arith.constant 0 : index
    %368 = vector.load %arg11[%c0_184, %c0_185] : memref<128x128xbf16, #tpu.memory_space<vmem>>, vector<128x128xbf16>
    %cst_186 = arith.constant dense<0.000000e+00> : vector<8x128xf32>
    %369 = tpu.matmul %367, %368, %cst_186 {dimension_numbers = #tpu.dot_dimension_numbers<[1], [0], [0], [1], [0, 0, 1, 1], [], []>} : vector<8x128xbf16>, vector<128x128xbf16>, vector<8x128xf32> -> vector<8x128xf32>
    %370 = arith.addf %366, %369 : vector<8x128xf32>
    %c0_187 = arith.constant 0 : index
    %c0_188 = arith.constant 0 : index
    %371 = vector.load %arg12[%c0_187, %c0_188] : memref<1x128xf32, #tpu.memory_space<vmem>>, vector<1x128xf32>
    %372 = vector.broadcast %371 : vector<1x128xf32> to vector<8x128xf32>
    %373 = arith.addf %370, %372 : vector<8x128xf32>
    %374 = math.tanh %373 : vector<8x128xf32>
    %c3_189 = arith.constant 3 : index
    %c0_190 = arith.constant 0 : index
    %c0_191 = arith.constant 0 : index
    %375 = vector.load %arg13[%c3_189, %c0_190, %c0_191] : memref<8x8x128xf32, #tpu.memory_space<vmem>>, vector<1x8x128xf32>
    %376 = vector.shape_cast %375 : vector<1x8x128xf32> to vector<8x128xf32>
    %377 = vector.shape_cast %374 : vector<8x128xf32> to vector<1x8x128xf32>
    tpu.vector_store %arg13[%c3_189, %c0_190, %c0_191], %377 {strides = array<i32>} : memref<8x8x128xf32, #tpu.memory_space<vmem>>, vector<1x8x128xf32>,
    %c3_192 = arith.constant 3 : index
    %c0_193 = arith.constant 0 : index
    %c0_194 = arith.constant 0 : index
    %c0_195 = arith.constant 0 : index
    %378 = vector.load %arg14[%c3_192, %c0_193, %c0_194, %c0_195] : memref<8x8x8x1xf32, #tpu.memory_space<vmem>>, vector<1x8x8x1xf32>
    %379 = vector.shape_cast %378 : vector<1x8x8x1xf32> to vector<8x8x1xf32>
    %380 = vector.shape_cast %360 : vector<8x8x1xf32> to vector<1x8x8x1xf32>
    tpu.vector_store %arg14[%c3_192, %c0_193, %c0_194, %c0_195], %380 {strides = array<i32>} : memref<8x8x8x1xf32, #tpu.memory_space<vmem>>, vector<1x8x8x1xf32>,
    %c4_196 = arith.constant 4 : index
    %c0_197 = arith.constant 0 : index
    %c0_198 = arith.constant 0 : index
    %381 = vector.load %arg18[%c4_196, %c0_197, %c0_198] : memref<8x8x128xf32, #tpu.memory_space<vmem>>, vector<1x8x128xf32>
    %382 = vector.shape_cast %381 : vector<1x8x128xf32> to vector<8x128xf32>
    %383 = arith.truncf %374 : vector<8x128xf32> to vector<8x128xbf16>
    %c0_199 = arith.constant 0 : index
    %c0_200 = arith.constant 0 : index
    %384 = vector.load %arg7[%c0_199, %c0_200] : memref<128x128xbf16, #tpu.memory_space<vmem>>, vector<128x128xbf16>
    %cst_201 = arith.constant dense<0.000000e+00> : vector<8x128xf32>
    %385 = tpu.matmul %383, %384, %cst_201 {dimension_numbers = #tpu.dot_dimension_numbers<[1], [0], [0], [1], [0, 0, 1, 1], [], []>} : vector<8x128xbf16>, vector<128x128xbf16>, vector<8x128xf32> -> vector<8x128xf32>
    %386 = arith.addf %382, %385 : vector<8x128xf32>
    %387 = arith.truncf %343 : vector<8x128xf32> to vector<8x128xbf16>
    %c0_202 = arith.constant 0 : index
    %c0_203 = arith.constant 0 : index
    %388 = vector.load %arg8[%c0_202, %c0_203] : memref<128x128xbf16, #tpu.memory_space<vmem>>, vector<128x128xbf16>
    %cst_204 = arith.constant dense<0.000000e+00> : vector<8x128xf32>
    %389 = tpu.matmul %387, %388, %cst_204 {dimension_numbers = #tpu.dot_dimension_numbers<[1], [0], [0], [1], [0, 0, 1, 1], [], []>} : vector<8x128xbf16>, vector<128x128xbf16>, vector<8x128xf32> -> vector<8x128xf32>
    %390 = arith.addf %386, %389 : vector<8x128xf32>
    %391 = math.tanh %390 : vector<8x128xf32>
    %c0_205 = arith.constant 0 : index
    %c0_206 = arith.constant 0 : index
    %c0_207 = arith.constant 0 : index
    %392 = vector.load %arg17[%c0_205, %c0_206, %c0_207] : memref<8x8x128xbf16, #tpu.memory_space<vmem>>, vector<8x8x128xbf16>
    %393 = arith.extf %392 : vector<8x8x128xbf16> to vector<8x8x128xf32>
    %394 = vector.shape_cast %391 : vector<8x128xf32> to vector<1x8x128xf32>
    %395 = vector.broadcast %394 : vector<1x8x128xf32> to vector<8x8x128xf32>
    %396 = arith.mulf %393, %395 : vector<8x8x128xf32>
    %cst_208 = arith.constant dense<0.000000e+00> : vector<8x8xf32>
    %397 = vector.multi_reduction <add>, %396, %cst_208 [2] : vector<8x8x128xf32> to vector<8x8xf32>
    %398 = vector.shape_cast %397 : vector<8x8xf32> to vector<8x8x1xf32>
    %399 = arith.addf %398, %187 : vector<8x8x1xf32>
    %cst_209 = arith.constant dense<0xFF800000> : vector<8x1xf32>
    %400 = vector.multi_reduction <maximumf>, %399, %cst_209 [0] : vector<8x8x1xf32> to vector<8x1xf32>
    %401 = vector.shape_cast %400 : vector<8x1xf32> to vector<1x8x1xf32>
    %402 = vector.broadcast %401 : vector<1x8x1xf32> to vector<8x8x1xf32>
    %403 = arith.subf %399, %402 : vector<8x8x1xf32>
    %404 = math.exp %403 : vector<8x8x1xf32>
    %cst_210 = arith.constant dense<0.000000e+00> : vector<8x1xf32>
    %405 = vector.multi_reduction <add>, %404, %cst_210 [0] : vector<8x8x1xf32> to vector<8x1xf32>
    %406 = vector.shape_cast %405 : vector<8x1xf32> to vector<1x8x1xf32>
    %407 = vector.broadcast %406 : vector<1x8x1xf32> to vector<8x8x1xf32>
    %408 = arith.divf %404, %407 : vector<8x8x1xf32>
    %409 = vector.broadcast %408 : vector<8x8x1xf32> to vector<8x8x128xf32>
    %410 = arith.mulf %409, %393 : vector<8x8x128xf32>
    %cst_211 = arith.constant dense<0.000000e+00> : vector<8x128xf32>
    %411 = vector.multi_reduction <add>, %410, %cst_211 [0] : vector<8x8x128xf32> to vector<8x128xf32>
    %412 = arith.truncf %391 : vector<8x128xf32> to vector<8x128xbf16>
    %c0_212 = arith.constant 0 : index
    %c0_213 = arith.constant 0 : index
    %413 = vector.load %arg10[%c0_212, %c0_213] : memref<128x128xbf16, #tpu.memory_space<vmem>>, vector<128x128xbf16>
    %cst_214 = arith.constant dense<0.000000e+00> : vector<8x128xf32>
    %414 = tpu.matmul %412, %413, %cst_214 {dimension_numbers = #tpu.dot_dimension_numbers<[1], [0], [0], [1], [0, 0, 1, 1], [], []>} : vector<8x128xbf16>, vector<128x128xbf16>, vector<8x128xf32> -> vector<8x128xf32>
    %415 = arith.truncf %411 : vector<8x128xf32> to vector<8x128xbf16>
    %c0_215 = arith.constant 0 : index
    %c0_216 = arith.constant 0 : index
    %416 = vector.load %arg11[%c0_215, %c0_216] : memref<128x128xbf16, #tpu.memory_space<vmem>>, vector<128x128xbf16>
    %cst_217 = arith.constant dense<0.000000e+00> : vector<8x128xf32>
    %417 = tpu.matmul %415, %416, %cst_217 {dimension_numbers = #tpu.dot_dimension_numbers<[1], [0], [0], [1], [0, 0, 1, 1], [], []>} : vector<8x128xbf16>, vector<128x128xbf16>, vector<8x128xf32> -> vector<8x128xf32>
    %418 = arith.addf %414, %417 : vector<8x128xf32>
    %c0_218 = arith.constant 0 : index
    %c0_219 = arith.constant 0 : index
    %419 = vector.load %arg12[%c0_218, %c0_219] : memref<1x128xf32, #tpu.memory_space<vmem>>, vector<1x128xf32>
    %420 = vector.broadcast %419 : vector<1x128xf32> to vector<8x128xf32>
    %421 = arith.addf %418, %420 : vector<8x128xf32>
    %422 = math.tanh %421 : vector<8x128xf32>
    %c4_220 = arith.constant 4 : index
    %c0_221 = arith.constant 0 : index
    %c0_222 = arith.constant 0 : index
    %423 = vector.load %arg13[%c4_220, %c0_221, %c0_222] : memref<8x8x128xf32, #tpu.memory_space<vmem>>, vector<1x8x128xf32>
    %424 = vector.shape_cast %423 : vector<1x8x128xf32> to vector<8x128xf32>
    %425 = vector.shape_cast %422 : vector<8x128xf32> to vector<1x8x128xf32>
    tpu.vector_store %arg13[%c4_220, %c0_221, %c0_222], %425 {strides = array<i32>} : memref<8x8x128xf32, #tpu.memory_space<vmem>>, vector<1x8x128xf32>,
    %c4_223 = arith.constant 4 : index
    %c0_224 = arith.constant 0 : index
    %c0_225 = arith.constant 0 : index
    %c0_226 = arith.constant 0 : index
    %426 = vector.load %arg14[%c4_223, %c0_224, %c0_225, %c0_226] : memref<8x8x8x1xf32, #tpu.memory_space<vmem>>, vector<1x8x8x1xf32>
    %427 = vector.shape_cast %426 : vector<1x8x8x1xf32> to vector<8x8x1xf32>
    %428 = vector.shape_cast %408 : vector<8x8x1xf32> to vector<1x8x8x1xf32>
    tpu.vector_store %arg14[%c4_223, %c0_224, %c0_225, %c0_226], %428 {strides = array<i32>} : memref<8x8x8x1xf32, #tpu.memory_space<vmem>>, vector<1x8x8x1xf32>,
    %c5_227 = arith.constant 5 : index
    %c0_228 = arith.constant 0 : index
    %c0_229 = arith.constant 0 : index
    %429 = vector.load %arg18[%c5_227, %c0_228, %c0_229] : memref<8x8x128xf32, #tpu.memory_space<vmem>>, vector<1x8x128xf32>
    %430 = vector.shape_cast %429 : vector<1x8x128xf32> to vector<8x128xf32>
    %431 = arith.truncf %422 : vector<8x128xf32> to vector<8x128xbf16>
    %c0_230 = arith.constant 0 : index
    %c0_231 = arith.constant 0 : index
    %432 = vector.load %arg7[%c0_230, %c0_231] : memref<128x128xbf16, #tpu.memory_space<vmem>>, vector<128x128xbf16>
    %cst_232 = arith.constant dense<0.000000e+00> : vector<8x128xf32>
    %433 = tpu.matmul %431, %432, %cst_232 {dimension_numbers = #tpu.dot_dimension_numbers<[1], [0], [0], [1], [0, 0, 1, 1], [], []>} : vector<8x128xbf16>, vector<128x128xbf16>, vector<8x128xf32> -> vector<8x128xf32>
    %434 = arith.addf %430, %433 : vector<8x128xf32>
    %435 = arith.truncf %391 : vector<8x128xf32> to vector<8x128xbf16>
    %c0_233 = arith.constant 0 : index
    %c0_234 = arith.constant 0 : index
    %436 = vector.load %arg8[%c0_233, %c0_234] : memref<128x128xbf16, #tpu.memory_space<vmem>>, vector<128x128xbf16>
    %cst_235 = arith.constant dense<0.000000e+00> : vector<8x128xf32>
    %437 = tpu.matmul %435, %436, %cst_235 {dimension_numbers = #tpu.dot_dimension_numbers<[1], [0], [0], [1], [0, 0, 1, 1], [], []>} : vector<8x128xbf16>, vector<128x128xbf16>, vector<8x128xf32> -> vector<8x128xf32>
    %438 = arith.addf %434, %437 : vector<8x128xf32>
    %439 = math.tanh %438 : vector<8x128xf32>
    %c0_236 = arith.constant 0 : index
    %c0_237 = arith.constant 0 : index
    %c0_238 = arith.constant 0 : index
    %440 = vector.load %arg17[%c0_236, %c0_237, %c0_238] : memref<8x8x128xbf16, #tpu.memory_space<vmem>>, vector<8x8x128xbf16>
    %441 = arith.extf %440 : vector<8x8x128xbf16> to vector<8x8x128xf32>
    %442 = vector.shape_cast %439 : vector<8x128xf32> to vector<1x8x128xf32>
    %443 = vector.broadcast %442 : vector<1x8x128xf32> to vector<8x8x128xf32>
    %444 = arith.mulf %441, %443 : vector<8x8x128xf32>
    %cst_239 = arith.constant dense<0.000000e+00> : vector<8x8xf32>
    %445 = vector.multi_reduction <add>, %444, %cst_239 [2] : vector<8x8x128xf32> to vector<8x8xf32>
    %446 = vector.shape_cast %445 : vector<8x8xf32> to vector<8x8x1xf32>
    %447 = arith.addf %446, %187 : vector<8x8x1xf32>
    %cst_240 = arith.constant dense<0xFF800000> : vector<8x1xf32>
    %448 = vector.multi_reduction <maximumf>, %447, %cst_240 [0] : vector<8x8x1xf32> to vector<8x1xf32>
    %449 = vector.shape_cast %448 : vector<8x1xf32> to vector<1x8x1xf32>
    %450 = vector.broadcast %449 : vector<1x8x1xf32> to vector<8x8x1xf32>
    %451 = arith.subf %447, %450 : vector<8x8x1xf32>
    %452 = math.exp %451 : vector<8x8x1xf32>
    %cst_241 = arith.constant dense<0.000000e+00> : vector<8x1xf32>
    %453 = vector.multi_reduction <add>, %452, %cst_241 [0] : vector<8x8x1xf32> to vector<8x1xf32>
    %454 = vector.shape_cast %453 : vector<8x1xf32> to vector<1x8x1xf32>
    %455 = vector.broadcast %454 : vector<1x8x1xf32> to vector<8x8x1xf32>
    %456 = arith.divf %452, %455 : vector<8x8x1xf32>
    %457 = vector.broadcast %456 : vector<8x8x1xf32> to vector<8x8x128xf32>
    %458 = arith.mulf %457, %441 : vector<8x8x128xf32>
    %cst_242 = arith.constant dense<0.000000e+00> : vector<8x128xf32>
    %459 = vector.multi_reduction <add>, %458, %cst_242 [0] : vector<8x8x128xf32> to vector<8x128xf32>
    %460 = arith.truncf %439 : vector<8x128xf32> to vector<8x128xbf16>
    %c0_243 = arith.constant 0 : index
    %c0_244 = arith.constant 0 : index
    %461 = vector.load %arg10[%c0_243, %c0_244] : memref<128x128xbf16, #tpu.memory_space<vmem>>, vector<128x128xbf16>
    %cst_245 = arith.constant dense<0.000000e+00> : vector<8x128xf32>
    %462 = tpu.matmul %460, %461, %cst_245 {dimension_numbers = #tpu.dot_dimension_numbers<[1], [0], [0], [1], [0, 0, 1, 1], [], []>} : vector<8x128xbf16>, vector<128x128xbf16>, vector<8x128xf32> -> vector<8x128xf32>
    %463 = arith.truncf %459 : vector<8x128xf32> to vector<8x128xbf16>
    %c0_246 = arith.constant 0 : index
    %c0_247 = arith.constant 0 : index
    %464 = vector.load %arg11[%c0_246, %c0_247] : memref<128x128xbf16, #tpu.memory_space<vmem>>, vector<128x128xbf16>
    %cst_248 = arith.constant dense<0.000000e+00> : vector<8x128xf32>
    %465 = tpu.matmul %463, %464, %cst_248 {dimension_numbers = #tpu.dot_dimension_numbers<[1], [0], [0], [1], [0, 0, 1, 1], [], []>} : vector<8x128xbf16>, vector<128x128xbf16>, vector<8x128xf32> -> vector<8x128xf32>
    %466 = arith.addf %462, %465 : vector<8x128xf32>
    %c0_249 = arith.constant 0 : index
    %c0_250 = arith.constant 0 : index
    %467 = vector.load %arg12[%c0_249, %c0_250] : memref<1x128xf32, #tpu.memory_space<vmem>>, vector<1x128xf32>
    %468 = vector.broadcast %467 : vector<1x128xf32> to vector<8x128xf32>
    %469 = arith.addf %466, %468 : vector<8x128xf32>
    %470 = math.tanh %469 : vector<8x128xf32>
    %c5_251 = arith.constant 5 : index
    %c0_252 = arith.constant 0 : index
    %c0_253 = arith.constant 0 : index
    %471 = vector.load %arg13[%c5_251, %c0_252, %c0_253] : memref<8x8x128xf32, #tpu.memory_space<vmem>>, vector<1x8x128xf32>
    %472 = vector.shape_cast %471 : vector<1x8x128xf32> to vector<8x128xf32>
    %473 = vector.shape_cast %470 : vector<8x128xf32> to vector<1x8x128xf32>
    tpu.vector_store %arg13[%c5_251, %c0_252, %c0_253], %473 {strides = array<i32>} : memref<8x8x128xf32, #tpu.memory_space<vmem>>, vector<1x8x128xf32>,
    %c5_254 = arith.constant 5 : index
    %c0_255 = arith.constant 0 : index
    %c0_256 = arith.constant 0 : index
    %c0_257 = arith.constant 0 : index
    %474 = vector.load %arg14[%c5_254, %c0_255, %c0_256, %c0_257] : memref<8x8x8x1xf32, #tpu.memory_space<vmem>>, vector<1x8x8x1xf32>
    %475 = vector.shape_cast %474 : vector<1x8x8x1xf32> to vector<8x8x1xf32>
    %476 = vector.shape_cast %456 : vector<8x8x1xf32> to vector<1x8x8x1xf32>
    tpu.vector_store %arg14[%c5_254, %c0_255, %c0_256, %c0_257], %476 {strides = array<i32>} : memref<8x8x8x1xf32, #tpu.memory_space<vmem>>, vector<1x8x8x1xf32>,
    %c6_258 = arith.constant 6 : index
    %c0_259 = arith.constant 0 : index
    %c0_260 = arith.constant 0 : index
    %477 = vector.load %arg18[%c6_258, %c0_259, %c0_260] : memref<8x8x128xf32, #tpu.memory_space<vmem>>, vector<1x8x128xf32>
    %478 = vector.shape_cast %477 : vector<1x8x128xf32> to vector<8x128xf32>
    %479 = arith.truncf %470 : vector<8x128xf32> to vector<8x128xbf16>
    %c0_261 = arith.constant 0 : index
    %c0_262 = arith.constant 0 : index
    %480 = vector.load %arg7[%c0_261, %c0_262] : memref<128x128xbf16, #tpu.memory_space<vmem>>, vector<128x128xbf16>
    %cst_263 = arith.constant dense<0.000000e+00> : vector<8x128xf32>
    %481 = tpu.matmul %479, %480, %cst_263 {dimension_numbers = #tpu.dot_dimension_numbers<[1], [0], [0], [1], [0, 0, 1, 1], [], []>} : vector<8x128xbf16>, vector<128x128xbf16>, vector<8x128xf32> -> vector<8x128xf32>
    %482 = arith.addf %478, %481 : vector<8x128xf32>
    %483 = arith.truncf %439 : vector<8x128xf32> to vector<8x128xbf16>
    %c0_264 = arith.constant 0 : index
    %c0_265 = arith.constant 0 : index
    %484 = vector.load %arg8[%c0_264, %c0_265] : memref<128x128xbf16, #tpu.memory_space<vmem>>, vector<128x128xbf16>
    %cst_266 = arith.constant dense<0.000000e+00> : vector<8x128xf32>
    %485 = tpu.matmul %483, %484, %cst_266 {dimension_numbers = #tpu.dot_dimension_numbers<[1], [0], [0], [1], [0, 0, 1, 1], [], []>} : vector<8x128xbf16>, vector<128x128xbf16>, vector<8x128xf32> -> vector<8x128xf32>
    %486 = arith.addf %482, %485 : vector<8x128xf32>
    %487 = math.tanh %486 : vector<8x128xf32>
    %c0_267 = arith.constant 0 : index
    %c0_268 = arith.constant 0 : index
    %c0_269 = arith.constant 0 : index
    %488 = vector.load %arg17[%c0_267, %c0_268, %c0_269] : memref<8x8x128xbf16, #tpu.memory_space<vmem>>, vector<8x8x128xbf16>
    %489 = arith.extf %488 : vector<8x8x128xbf16> to vector<8x8x128xf32>
    %490 = vector.shape_cast %487 : vector<8x128xf32> to vector<1x8x128xf32>
    %491 = vector.broadcast %490 : vector<1x8x128xf32> to vector<8x8x128xf32>
    %492 = arith.mulf %489, %491 : vector<8x8x128xf32>
    %cst_270 = arith.constant dense<0.000000e+00> : vector<8x8xf32>
    %493 = vector.multi_reduction <add>, %492, %cst_270 [2] : vector<8x8x128xf32> to vector<8x8xf32>
    %494 = vector.shape_cast %493 : vector<8x8xf32> to vector<8x8x1xf32>
    %495 = arith.addf %494, %187 : vector<8x8x1xf32>
    %cst_271 = arith.constant dense<0xFF800000> : vector<8x1xf32>
    %496 = vector.multi_reduction <maximumf>, %495, %cst_271 [0] : vector<8x8x1xf32> to vector<8x1xf32>
    %497 = vector.shape_cast %496 : vector<8x1xf32> to vector<1x8x1xf32>
    %498 = vector.broadcast %497 : vector<1x8x1xf32> to vector<8x8x1xf32>
    %499 = arith.subf %495, %498 : vector<8x8x1xf32>
    %500 = math.exp %499 : vector<8x8x1xf32>
    %cst_272 = arith.constant dense<0.000000e+00> : vector<8x1xf32>
    %501 = vector.multi_reduction <add>, %500, %cst_272 [0] : vector<8x8x1xf32> to vector<8x1xf32>
    %502 = vector.shape_cast %501 : vector<8x1xf32> to vector<1x8x1xf32>
    %503 = vector.broadcast %502 : vector<1x8x1xf32> to vector<8x8x1xf32>
    %504 = arith.divf %500, %503 : vector<8x8x1xf32>
    %505 = vector.broadcast %504 : vector<8x8x1xf32> to vector<8x8x128xf32>
    %506 = arith.mulf %505, %489 : vector<8x8x128xf32>
    %cst_273 = arith.constant dense<0.000000e+00> : vector<8x128xf32>
    %507 = vector.multi_reduction <add>, %506, %cst_273 [0] : vector<8x8x128xf32> to vector<8x128xf32>
    %508 = arith.truncf %487 : vector<8x128xf32> to vector<8x128xbf16>
    %c0_274 = arith.constant 0 : index
    %c0_275 = arith.constant 0 : index
    %509 = vector.load %arg10[%c0_274, %c0_275] : memref<128x128xbf16, #tpu.memory_space<vmem>>, vector<128x128xbf16>
    %cst_276 = arith.constant dense<0.000000e+00> : vector<8x128xf32>
    %510 = tpu.matmul %508, %509, %cst_276 {dimension_numbers = #tpu.dot_dimension_numbers<[1], [0], [0], [1], [0, 0, 1, 1], [], []>} : vector<8x128xbf16>, vector<128x128xbf16>, vector<8x128xf32> -> vector<8x128xf32>
    %511 = arith.truncf %507 : vector<8x128xf32> to vector<8x128xbf16>
    %c0_277 = arith.constant 0 : index
    %c0_278 = arith.constant 0 : index
    %512 = vector.load %arg11[%c0_277, %c0_278] : memref<128x128xbf16, #tpu.memory_space<vmem>>, vector<128x128xbf16>
    %cst_279 = arith.constant dense<0.000000e+00> : vector<8x128xf32>
    %513 = tpu.matmul %511, %512, %cst_279 {dimension_numbers = #tpu.dot_dimension_numbers<[1], [0], [0], [1], [0, 0, 1, 1], [], []>} : vector<8x128xbf16>, vector<128x128xbf16>, vector<8x128xf32> -> vector<8x128xf32>
    %514 = arith.addf %510, %513 : vector<8x128xf32>
    %c0_280 = arith.constant 0 : index
    %c0_281 = arith.constant 0 : index
    %515 = vector.load %arg12[%c0_280, %c0_281] : memref<1x128xf32, #tpu.memory_space<vmem>>, vector<1x128xf32>
    %516 = vector.broadcast %515 : vector<1x128xf32> to vector<8x128xf32>
    %517 = arith.addf %514, %516 : vector<8x128xf32>
    %518 = math.tanh %517 : vector<8x128xf32>
    %c6_282 = arith.constant 6 : index
    %c0_283 = arith.constant 0 : index
    %c0_284 = arith.constant 0 : index
    %519 = vector.load %arg13[%c6_282, %c0_283, %c0_284] : memref<8x8x128xf32, #tpu.memory_space<vmem>>, vector<1x8x128xf32>
    %520 = vector.shape_cast %519 : vector<1x8x128xf32> to vector<8x128xf32>
    %521 = vector.shape_cast %518 : vector<8x128xf32> to vector<1x8x128xf32>
    tpu.vector_store %arg13[%c6_282, %c0_283, %c0_284], %521 {strides = array<i32>} : memref<8x8x128xf32, #tpu.memory_space<vmem>>, vector<1x8x128xf32>,
    %c6_285 = arith.constant 6 : index
    %c0_286 = arith.constant 0 : index
    %c0_287 = arith.constant 0 : index
    %c0_288 = arith.constant 0 : index
    %522 = vector.load %arg14[%c6_285, %c0_286, %c0_287, %c0_288] : memref<8x8x8x1xf32, #tpu.memory_space<vmem>>, vector<1x8x8x1xf32>
    %523 = vector.shape_cast %522 : vector<1x8x8x1xf32> to vector<8x8x1xf32>
    %524 = vector.shape_cast %504 : vector<8x8x1xf32> to vector<1x8x8x1xf32>
    tpu.vector_store %arg14[%c6_285, %c0_286, %c0_287, %c0_288], %524 {strides = array<i32>} : memref<8x8x8x1xf32, #tpu.memory_space<vmem>>, vector<1x8x8x1xf32>,
    %c7_289 = arith.constant 7 : index
    %c0_290 = arith.constant 0 : index
    %c0_291 = arith.constant 0 : index
    %525 = vector.load %arg18[%c7_289, %c0_290, %c0_291] : memref<8x8x128xf32, #tpu.memory_space<vmem>>, vector<1x8x128xf32>
    %526 = vector.shape_cast %525 : vector<1x8x128xf32> to vector<8x128xf32>
    %527 = arith.truncf %518 : vector<8x128xf32> to vector<8x128xbf16>
    %c0_292 = arith.constant 0 : index
    %c0_293 = arith.constant 0 : index
    %528 = vector.load %arg7[%c0_292, %c0_293] : memref<128x128xbf16, #tpu.memory_space<vmem>>, vector<128x128xbf16>
    %cst_294 = arith.constant dense<0.000000e+00> : vector<8x128xf32>
    %529 = tpu.matmul %527, %528, %cst_294 {dimension_numbers = #tpu.dot_dimension_numbers<[1], [0], [0], [1], [0, 0, 1, 1], [], []>} : vector<8x128xbf16>, vector<128x128xbf16>, vector<8x128xf32> -> vector<8x128xf32>
    %530 = arith.addf %526, %529 : vector<8x128xf32>
    %531 = arith.truncf %487 : vector<8x128xf32> to vector<8x128xbf16>
    %c0_295 = arith.constant 0 : index
    %c0_296 = arith.constant 0 : index
    %532 = vector.load %arg8[%c0_295, %c0_296] : memref<128x128xbf16, #tpu.memory_space<vmem>>, vector<128x128xbf16>
    %cst_297 = arith.constant dense<0.000000e+00> : vector<8x128xf32>
    %533 = tpu.matmul %531, %532, %cst_297 {dimension_numbers = #tpu.dot_dimension_numbers<[1], [0], [0], [1], [0, 0, 1, 1], [], []>} : vector<8x128xbf16>, vector<128x128xbf16>, vector<8x128xf32> -> vector<8x128xf32>
    %534 = arith.addf %530, %533 : vector<8x128xf32>
    %535 = math.tanh %534 : vector<8x128xf32>
    %c0_298 = arith.constant 0 : index
    %c0_299 = arith.constant 0 : index
    %c0_300 = arith.constant 0 : index
    %536 = vector.load %arg17[%c0_298, %c0_299, %c0_300] : memref<8x8x128xbf16, #tpu.memory_space<vmem>>, vector<8x8x128xbf16>
    %537 = arith.extf %536 : vector<8x8x128xbf16> to vector<8x8x128xf32>
    %538 = vector.shape_cast %535 : vector<8x128xf32> to vector<1x8x128xf32>
    %539 = vector.broadcast %538 : vector<1x8x128xf32> to vector<8x8x128xf32>
    %540 = arith.mulf %537, %539 : vector<8x8x128xf32>
    %cst_301 = arith.constant dense<0.000000e+00> : vector<8x8xf32>
    %541 = vector.multi_reduction <add>, %540, %cst_301 [2] : vector<8x8x128xf32> to vector<8x8xf32>
    %542 = vector.shape_cast %541 : vector<8x8xf32> to vector<8x8x1xf32>
    %543 = arith.addf %542, %187 : vector<8x8x1xf32>
    %cst_302 = arith.constant dense<0xFF800000> : vector<8x1xf32>
    %544 = vector.multi_reduction <maximumf>, %543, %cst_302 [0] : vector<8x8x1xf32> to vector<8x1xf32>
    %545 = vector.shape_cast %544 : vector<8x1xf32> to vector<1x8x1xf32>
    %546 = vector.broadcast %545 : vector<1x8x1xf32> to vector<8x8x1xf32>
    %547 = arith.subf %543, %546 : vector<8x8x1xf32>
    %548 = math.exp %547 : vector<8x8x1xf32>
    %cst_303 = arith.constant dense<0.000000e+00> : vector<8x1xf32>
    %549 = vector.multi_reduction <add>, %548, %cst_303 [0] : vector<8x8x1xf32> to vector<8x1xf32>
    %550 = vector.shape_cast %549 : vector<8x1xf32> to vector<1x8x1xf32>
    %551 = vector.broadcast %550 : vector<1x8x1xf32> to vector<8x8x1xf32>
    %552 = arith.divf %548, %551 : vector<8x8x1xf32>
    %553 = vector.broadcast %552 : vector<8x8x1xf32> to vector<8x8x128xf32>
    %554 = arith.mulf %553, %537 : vector<8x8x128xf32>
    %cst_304 = arith.constant dense<0.000000e+00> : vector<8x128xf32>
    %555 = vector.multi_reduction <add>, %554, %cst_304 [0] : vector<8x8x128xf32> to vector<8x128xf32>
    %556 = arith.truncf %535 : vector<8x128xf32> to vector<8x128xbf16>
    %c0_305 = arith.constant 0 : index
    %c0_306 = arith.constant 0 : index
    %557 = vector.load %arg10[%c0_305, %c0_306] : memref<128x128xbf16, #tpu.memory_space<vmem>>, vector<128x128xbf16>
    %cst_307 = arith.constant dense<0.000000e+00> : vector<8x128xf32>
    %558 = tpu.matmul %556, %557, %cst_307 {dimension_numbers = #tpu.dot_dimension_numbers<[1], [0], [0], [1], [0, 0, 1, 1], [], []>} : vector<8x128xbf16>, vector<128x128xbf16>, vector<8x128xf32> -> vector<8x128xf32>
    %559 = arith.truncf %555 : vector<8x128xf32> to vector<8x128xbf16>
    %c0_308 = arith.constant 0 : index
    %c0_309 = arith.constant 0 : index
    %560 = vector.load %arg11[%c0_308, %c0_309] : memref<128x128xbf16, #tpu.memory_space<vmem>>, vector<128x128xbf16>
    %cst_310 = arith.constant dense<0.000000e+00> : vector<8x128xf32>
    %561 = tpu.matmul %559, %560, %cst_310 {dimension_numbers = #tpu.dot_dimension_numbers<[1], [0], [0], [1], [0, 0, 1, 1], [], []>} : vector<8x128xbf16>, vector<128x128xbf16>, vector<8x128xf32> -> vector<8x128xf32>
    %562 = arith.addf %558, %561 : vector<8x128xf32>
    %c0_311 = arith.constant 0 : index
    %c0_312 = arith.constant 0 : index
    %563 = vector.load %arg12[%c0_311, %c0_312] : memref<1x128xf32, #tpu.memory_space<vmem>>, vector<1x128xf32>
    %564 = vector.broadcast %563 : vector<1x128xf32> to vector<8x128xf32>
    %565 = arith.addf %562, %564 : vector<8x128xf32>
    %566 = math.tanh %565 : vector<8x128xf32>
    %c7_313 = arith.constant 7 : index
    %c0_314 = arith.constant 0 : index
    %c0_315 = arith.constant 0 : index
    %567 = vector.load %arg13[%c7_313, %c0_314, %c0_315] : memref<8x8x128xf32, #tpu.memory_space<vmem>>, vector<1x8x128xf32>
    %568 = vector.shape_cast %567 : vector<1x8x128xf32> to vector<8x128xf32>
    %569 = vector.shape_cast %566 : vector<8x128xf32> to vector<1x8x128xf32>
    tpu.vector_store %arg13[%c7_313, %c0_314, %c0_315], %569 {strides = array<i32>} : memref<8x8x128xf32, #tpu.memory_space<vmem>>, vector<1x8x128xf32>,
    %c7_316 = arith.constant 7 : index
    %c0_317 = arith.constant 0 : index
    %c0_318 = arith.constant 0 : index
    %c0_319 = arith.constant 0 : index
    %570 = vector.load %arg14[%c7_316, %c0_317, %c0_318, %c0_319] : memref<8x8x8x1xf32, #tpu.memory_space<vmem>>, vector<1x8x8x1xf32>
    %571 = vector.shape_cast %570 : vector<1x8x8x1xf32> to vector<8x8x1xf32>
    %572 = vector.shape_cast %552 : vector<8x8x1xf32> to vector<1x8x8x1xf32>
    tpu.vector_store %arg14[%c7_316, %c0_317, %c0_318, %c0_319], %572 {strides = array<i32>} : memref<8x8x8x1xf32, #tpu.memory_space<vmem>>, vector<1x8x8x1xf32>,
    %c0_320 = arith.constant 0 : index
    %c0_321 = arith.constant 0 : index
    %573 = vector.load %arg15[%c0_320, %c0_321] : memref<8x128xf32, #tpu.memory_space<vmem>>, vector<8x128xf32>
    tpu.vector_store %arg15[%c0_320, %c0_321], %535 {strides = array<i32>} : memref<8x128xf32, #tpu.memory_space<vmem>>, vector<8x128xf32>,
    %c0_322 = arith.constant 0 : index
    %c0_323 = arith.constant 0 : index
    %574 = vector.load %arg16[%c0_322, %c0_323] : memref<8x128xf32, #tpu.memory_space<vmem>>, vector<8x128xf32>
    tpu.vector_store %arg16[%c0_322, %c0_323], %566 {strides = array<i32>} : memref<8x128xf32, #tpu.memory_space<vmem>>, vector<8x128xf32>,
    return
  }
}

</mosaic_0001>

<llo_original>
// kernel: nmt_forward.1
$region0: #{nmt_forward.1}
  #allocation0 [shape = 'u32[]', space=smem, size = 0x4, offset = 0x4, fixed_abs, tag = 'smem constant byte address 0x4 - core index']
  #allocation1 [shape = 'u32[144,128]{1,0:T(1,128)}', space=vmem, size = 0x12000, scoped, tag = 'internal scratch']
  #allocation2 [shape = 'bf16[8,8,128]{2,1,0:T(8,128)(2,1)}', space=vmem, size = 0x4000, scoped, tag = 'scratch operand']
  #allocation3 [shape = 'f32[8,8,128]{2,1,0:T(8,128)}', space=vmem, size = 0x8000, scoped, tag = 'scratch operand']
  %s0 = inlined_call_operand.vmem [shape: bf16[8,8,128], index: 0, kind: input, shape index: {}]
  %s1 = inlined_call_operand.vmem [shape: bf16[8,8,128], index: 1, kind: input, shape index: {}]
  %s2 = inlined_call_operand.vmem [shape: s32[8,1], index: 2, kind: input, shape index: {}]
  %s3 = inlined_call_operand.vmem [shape: bf16[128,128], index: 3, kind: input, shape index: {}]
  %s4 = inlined_call_operand.vmem [shape: bf16[128,128], index: 4, kind: input, shape index: {}]
  %s5 = inlined_call_operand.vmem [shape: f32[1,128], index: 5, kind: input, shape index: {}]
  %s6 = inlined_call_operand.vmem [shape: bf16[128,128], index: 6, kind: input, shape index: {}]
  %s7 = inlined_call_operand.vmem [shape: bf16[128,128], index: 7, kind: input, shape index: {}]
  %s8 = inlined_call_operand.vmem [shape: bf16[128,128], index: 8, kind: input, shape index: {}]
  %s9 = inlined_call_operand.vmem [shape: f32[1,128], index: 9, kind: input, shape index: {}]
  %s10 = inlined_call_operand.vmem [shape: bf16[128,128], index: 10, kind: input, shape index: {}]
  %s11 = inlined_call_operand.vmem [shape: bf16[128,128], index: 11, kind: input, shape index: {}]
  %s12 = inlined_call_operand.vmem [shape: f32[1,128], index: 12, kind: input, shape index: {}]
  %s13 = inlined_call_operand.hbm [shape: f32[8,8,128], index: 13, kind: output, shape index: {0}]
  %s14 = inlined_call_operand.vmem [shape: f32[8,8,8,1], index: 14, kind: output, shape index: {1}]
  %s15 = inlined_call_operand.hbm [shape: f32[8,128], index: 15, kind: output, shape index: {2}]
  %s16 = inlined_call_operand.hbm [shape: f32[8,128], index: 16, kind: output, shape index: {3}]
  %17 = xla_tuple %s13, %s14, %s15, %s16
  %s18 = sld [smem:[#allocation0]]
  $region86: #{nmt_forward.1} parent=0
    _
  %s20 = ssub.s32 1, %s18
  %s21 = scalar_select 0, %s20, %s18
  $region1: #{nmt_forward.1} parent=0
    #allocation4 [shape = 'u8[32768]{0}', space=vmem, size = 0x8000, scoped, tag = 'output window, operand 0, single buffered']
    #allocation5 [shape = 's32[1]{0}', space=sflag, size = 0x4, scoped, tag = 'scoped memory for nmt_forward.1']
    #allocation6 [shape = 'u8[4096]{0}', space=vmem, size = 0x1000, scoped, tag = 'output window, operand 2, single buffered']
    #allocation7 [shape = 's32[1]{0}', space=sflag, size = 0x4, scoped, tag = 'scoped memory for nmt_forward.1']
    #allocation8 [shape = 'u8[4096]{0}', space=vmem, size = 0x1000, scoped, tag = 'output window, operand 3, single buffered']
    %22 = vsyncpa [#allocation5], 0
    %23 = vsyncpa [#allocation7], 0
    // Predicated region
    $region2: #{nmt_forward.1} parent=1 // pred_check
      _
    $region3: #{nmt_forward.1} parent=1 // pred_check_branch
      %25 = sbr.rel (0) target = $region5
    $region4: #{nmt_forward.1} parent=1 // pred_region
      _
    $region5: #{nmt_forward.1} parent=1 // pred_fallthru
      _
    // Predicated region
    $region6: #{nmt_forward.1} parent=1 // pred_check
      _
    $region7: #{nmt_forward.1} parent=1 // pred_check_branch
      %27 = sbr.rel (0) target = $region9
    $region8: #{nmt_forward.1} parent=1 // pred_region
      _
    $region9: #{nmt_forward.1} parent=1 // pred_fallthru
      _
    // Predicated region
    $region10: #{nmt_forward.1} parent=1 // pred_check
      _
    $region11: #{nmt_forward.1} parent=1 // pred_check_branch
      %29 = sbr.rel (0) target = $region13
    $region12: #{nmt_forward.1} parent=1 // pred_region
      _
    $region13: #{nmt_forward.1} parent=1 // pred_fallthru
      _
    // Predicated region
    $region14: #{nmt_forward.1} parent=1 // pred_check
      _
    $region15: #{nmt_forward.1} parent=1 // pred_check_branch
      %31 = sbr.rel (0) target = $region17
    $region16: #{nmt_forward.1} parent=1 // pred_region
      _
    $region17: #{nmt_forward.1} parent=1 // pred_fallthru
      _
    // Predicated region
    $region18: #{nmt_forward.1} parent=1 // pred_check
      _
    $region19: #{nmt_forward.1} parent=1 // pred_check_branch
      %33 = sbr.rel (0) target = $region21
    $region20: #{nmt_forward.1} parent=1 // pred_region
      _
    $region21: #{nmt_forward.1} parent=1 // pred_fallthru
      _
    // Predicated region
    $region22: #{nmt_forward.1} parent=1 // pred_check
      _
    $region23: #{nmt_forward.1} parent=1 // pred_check_branch
      %35 = sbr.rel (0) target = $region25
    $region24: #{nmt_forward.1} parent=1 // pred_region
      _
    $region25: #{nmt_forward.1} parent=1 // pred_fallthru
      _
    // Predicated region
    $region26: #{nmt_forward.1} parent=1 // pred_check
      _
    $region27: #{nmt_forward.1} parent=1 // pred_check_branch
      %37 = sbr.rel (0) target = $region29
    $region28: #{nmt_forward.1} parent=1 // pred_region
      _
    $region29: #{nmt_forward.1} parent=1 // pred_fallthru
      _
    // Predicated region
    $region30: #{nmt_forward.1} parent=1 // pred_check
      _
    $region31: #{nmt_forward.1} parent=1 // pred_check_branch
      %39 = sbr.rel (0) target = $region33
    $region32: #{nmt_forward.1} parent=1 // pred_region
      _
    $region33: #{nmt_forward.1} parent=1 // pred_fallthru
      _
    // Predicated region
    $region34: #{nmt_forward.1} parent=1 // pred_check
      _
    $region35: #{nmt_forward.1} parent=1 // pred_check_branch
      %41 = sbr.rel (0) target = $region37
    $region36: #{nmt_forward.1} parent=1 // pred_region
      _
    $region37: #{nmt_forward.1} parent=1 // pred_fallthru
      _
    // Predicated region
    $region38: #{nmt_forward.1} parent=1 // pred_check
      _
    $region39: #{nmt_forward.1} parent=1 // pred_check_branch
      %43 = sbr.rel (0) target = $region41
    $region40: #{nmt_forward.1} parent=1 // pred_region
      _
    $region41: #{nmt_forward.1} parent=1 // pred_fallthru
      _
    // Predicated region
    $region42: #{nmt_forward.1} parent=1 // pred_check
      _
    $region43: #{nmt_forward.1} parent=1 // pred_check_branch
      %45 = sbr.rel (0) target = $region45
    $region44: #{nmt_forward.1} parent=1 // pred_region
      _
    $region45: #{nmt_forward.1} parent=1 // pred_fallthru
      _
    // Predicated region
    $region46: #{nmt_forward.1} parent=1 // pred_check
      _
    $region47: #{nmt_forward.1} parent=1 // pred_check_branch
      %47 = sbr.rel (0) target = $region49
    $region48: #{nmt_forward.1} parent=1 // pred_region
      _
    $region49: #{nmt_forward.1} parent=1 // pred_fallthru
      _
    // Predicated region
    $region50: #{nmt_forward.1} parent=1 // pred_check
      _
    $region51: #{nmt_forward.1} parent=1 // pred_check_branch
      %49 = sbr.rel (0) target = $region53
    $region52: #{nmt_forward.1} parent=1 // pred_region
      _
    $region53: #{nmt_forward.1} parent=1 // pred_fallthru
      _
    %v51 = vld [vmem:[%s2] sm:$0xff]
    %v52 = vld [vmem:[%s0] sm:$0xf]
    %v53 = vld [vmem:[%s0 + $0x4] sm:$0xf]
    %v54 = vld [vmem:[%s0 + $0x8] sm:$0xf]
    %v55 = vld [vmem:[%s0 + $0xc] sm:$0xf]
    %v56 = vld [vmem:[%s0 + $0x10] sm:$0xf]
    %v57 = vld [vmem:[%s0 + $0x14] sm:$0xf]
    %v58 = vld [vmem:[%s0 + $0x18] sm:$0xf]
    %v59 = vld [vmem:[%s0 + $0x1c] sm:$0xf]
    %v60 = vld [vmem:[%s3] sm:$0xf]
    %v61 = vld [vmem:[%s3 + $0x4] sm:$0xf]
    %v62 = vld [vmem:[%s3 + $0x8] sm:$0xf]
    %v63 = vld [vmem:[%s3 + $0xc] sm:$0xf]
    %v64 = vld [vmem:[%s3 + $0x10] sm:$0xf]
    %v65 = vld [vmem:[%s3 + $0x14] sm:$0xf]
    %v66 = vld [vmem:[%s3 + $0x18] sm:$0xf]
    %v67 = vld [vmem:[%s3 + $0x1c] sm:$0xf]
    %v68 = vld [vmem:[%s3 + $0x20] sm:$0xf]
    %v69 = vld [vmem:[%s3 + $0x24] sm:$0xf]
    %v70 = vld [vmem:[%s3 + $0x28] sm:$0xf]
    %v71 = vld [vmem:[%s3 + $0x2c] sm:$0xf]
    %v72 = vld [vmem:[%s3 + $0x30] sm:$0xf]
    %v73 = vld [vmem:[%s3 + $0x34] sm:$0xf]
    %v74 = vld [vmem:[%s3 + $0x38] sm:$0xf]
    %v75 = vld [vmem:[%s3 + $0x3c] sm:$0xf]
    %v84 = vunpack.c.l.b16 %v52
    %v85 = vunpack.c.l.b16 %v53
    %v86 = vunpack.c.l.b16 %v54
    %v87 = vunpack.c.l.b16 %v55
    %v88 = vunpack.c.l.b16 %v56
    %v89 = vunpack.c.l.b16 %v57
    %v90 = vunpack.c.l.b16 %v58
    %v91 = vunpack.c.l.b16 %v59
    %v92 = vpack.c.b16 %v85, %v84
    %v93 = vpack.c.b16 %v87, %v86
    %v94 = vpack.c.b16 %v89, %v88
    %v95 = vpack.c.b16 %v91, %v90
    %v116 = vunpack.c.l.b16 %v60
    %v117 = vunpack.c.l.b16 %v61
    %v118 = vunpack.c.l.b16 %v62
    %v119 = vunpack.c.l.b16 %v63
    %v120 = vunpack.c.l.b16 %v64
    %v121 = vunpack.c.l.b16 %v65
    %v122 = vunpack.c.l.b16 %v66
    %v123 = vunpack.c.l.b16 %v67
    %v124 = vunpack.c.l.b16 %v68
    %v125 = vunpack.c.l.b16 %v69
    %v126 = vunpack.c.l.b16 %v70
    %v127 = vunpack.c.l.b16 %v71
    %v128 = vunpack.c.l.b16 %v72
    %v129 = vunpack.c.l.b16 %v73
    %v130 = vunpack.c.l.b16 %v74
    %v131 = vunpack.c.l.b16 %v75
    %v132 = vpack.c.b16 %v117, %v116
    %v133 = vpack.c.b16 %v119, %v118
    %v134 = vpack.c.b16 %v121, %v120
    %v135 = vpack.c.b16 %v123, %v122
    %v136 = vpack.c.b16 %v125, %v124
    %v137 = vpack.c.b16 %v127, %v126
    %v138 = vpack.c.b16 %v129, %v128
    %v139 = vpack.c.b16 %v131, %v130
    %148 = vmatprep.subr.bf16.mxu0 0
    %149 = vmatpush1.bf16.msra.mxu0 %v132
    %150 = vmatprep.subr.bf16.mxu0 0
    %151 = vmatpush1.bf16.msra.mxu0 %v133
    %152 = vmatprep.subr.bf16.mxu0 0
    %153 = vmatpush1.bf16.msra.mxu0 %v134
    %154 = vmatprep.subr.bf16.mxu0 0
    %155 = vmatpush1.bf16.msra.mxu0 %v135
    %156 = vmatprep.subr.bf16.mxu0 0
    %157 = vmatpush1.bf16.msra.mxu0 %v136
    %158 = vmatprep.subr.bf16.mxu0 0
    %159 = vmatpush1.bf16.msra.mxu0 %v137
    %160 = vmatprep.subr.bf16.mxu0 0
    %161 = vmatpush1.bf16.msra.mxu0 %v138
    %162 = vmatprep.subr.bf16.mxu0 0
    %163 = vmatpush1.bf16.msra.mxu0 %v139
    %164 = vmatprep.subr.bf16.mxu0 0
    %165 = vmatpush1.bf16.msra.mxu0 0
    %166 = vmatprep.subr.bf16.mxu0 0
    %167 = vmatpush1.bf16.msra.mxu0 0
    %168 = vmatprep.subr.bf16.mxu0 0
    %169 = vmatpush1.bf16.msra.mxu0 0
    %170 = vmatprep.subr.bf16.mxu0 0
    %171 = vmatpush1.bf16.msra.mxu0 0
    %172 = vmatprep.subr.bf16.mxu0 0
    %173 = vmatpush1.bf16.msra.mxu0 0
    %174 = vmatprep.subr.bf16.mxu0 0
    %175 = vmatpush1.bf16.msra.mxu0 0
    %176 = vmatprep.subr.bf16.mxu0 0
    %177 = vmatpush1.bf16.msra.mxu0 0
    %178 = vmatprep.subr.bf16.mxu0 0
    %179 = vmatpush1.bf16.msra.mxu0 0
    %180 = vmatprep.mubr.bf16.mxu0 0
    %181 = vmatmul.mubr.bf16.gmra.mrb[0].mxu0 %v92
    %v182 = vpop.f32.mrb[0].mxu0
    %v183 = vadd.f32 0.0, %v182
    %v184 = vpop.f32.mrb[0].mxu0
    %v185 = vpop.f32.mrb[0].mxu0
    %v186 = vadd.f32 0.0, %v185
    %v187 = vpop.f32.mrb[0].mxu0
    %188 = vmatprep.mubr.bf16.mxu0 0
    %189 = vmatmul.mubr.bf16.gmra.mrb[0].mxu0 %v93
    %v190 = vpop.f32.mrb[0].mxu0
    %v191 = vadd.f32 0.0, %v190
    %v192 = vpop.f32.mrb[0].mxu0
    %v193 = vpop.f32.mrb[0].mxu0
    %v194 = vadd.f32 0.0, %v193
    %v195 = vpop.f32.mrb[0].mxu0
    %196 = vmatprep.mubr.bf16.mxu0 0
    %197 = vmatmul.mubr.bf16.gmra.mrb[0].mxu0 %v94
    %v198 = vpop.f32.mrb[0].mxu0
    %v199 = vadd.f32 0.0, %v198
    %v200 = vpop.f32.mrb[0].mxu0
    %v201 = vpop.f32.mrb[0].mxu0
    %v202 = vadd.f32 0.0, %v201
    %v203 = vpop.f32.mrb[0].mxu0
    %204 = vmatprep.mubr.bf16.mxu0 0
    %205 = vmatmul.mubr.bf16.gmra.mrb[0].mxu0 %v95
    %v206 = vpop.f32.mrb[0].mxu0
    %v207 = vadd.f32 0.0, %v206
    %v208 = vpop.f32.mrb[0].mxu0
    %v209 = vpop.f32.mrb[0].mxu0
    %v210 = vadd.f32 0.0, %v209
    %v211 = vpop.f32.mrb[0].mxu0
    %212 = vdwg.mxu0
    %v213 = vld [vmem:[%s5] sm:$0x1]
    %v215 = vlaneseq
    %v216 = vshrl.u32 %v215, 7
    %v217 = vsub.s32 0, %v216
    %v218 = vrot.slane %v213, %v217
    %v220 = vadd.f32 %v183, %v218
    %v221 = vadd.f32 %v186, %v218
    %v222 = vadd.f32 %v191, %v218
    %v223 = vadd.f32 %v194, %v218
    %v224 = vadd.f32 %v199, %v218
    %v225 = vadd.f32 %v202, %v218
    %v226 = vadd.f32 %v207, %v218
    %v227 = vadd.f32 %v210, %v218
    %v228 = vld [vmem:[%s4] sm:$0xf]
    %v229 = vld [vmem:[%s4 + $0x4] sm:$0xf]
    %v230 = vld [vmem:[%s4 + $0x8] sm:$0xf]
    %v231 = vld [vmem:[%s4 + $0xc] sm:$0xf]
    %v232 = vld [vmem:[%s4 + $0x10] sm:$0xf]
    %v233 = vld [vmem:[%s4 + $0x14] sm:$0xf]
    %v234 = vld [vmem:[%s4 + $0x18] sm:$0xf]
    %v235 = vld [vmem:[%s4 + $0x1c] sm:$0xf]
    %v236 = vld [vmem:[%s4 + $0x20] sm:$0xf]
    %v237 = vld [vmem:[%s4 + $0x24] sm:$0xf]
    %v238 = vld [vmem:[%s4 + $0x28] sm:$0xf]
    %v239 = vld [vmem:[%s4 + $0x2c] sm:$0xf]
    %v240 = vld [vmem:[%s4 + $0x30] sm:$0xf]
    %v241 = vld [vmem:[%s4 + $0x34] sm:$0xf]
    %v242 = vld [vmem:[%s4 + $0x38] sm:$0xf]
    %v243 = vld [vmem:[%s4 + $0x3c] sm:$0xf]
    %v260 = vunpack.c.l.b16 %v228
    %v261 = vunpack.c.l.b16 %v229
    %v262 = vunpack.c.l.b16 %v230
    %v263 = vunpack.c.l.b16 %v231
    %v264 = vunpack.c.l.b16 %v232
    %v265 = vunpack.c.l.b16 %v233
    %v266 = vunpack.c.l.b16 %v234
    %v267 = vunpack.c.l.b16 %v235
    %v268 = vunpack.c.l.b16 %v236
    %v269 = vunpack.c.l.b16 %v237
    %v270 = vunpack.c.l.b16 %v238
    %v271 = vunpack.c.l.b16 %v239
    %v272 = vunpack.c.l.b16 %v240
    %v273 = vunpack.c.l.b16 %v241
    %v274 = vunpack.c.l.b16 %v242
    %v275 = vunpack.c.l.b16 %v243
    %v276 = vpack.c.b16 %v261, %v260
    %v277 = vpack.c.b16 %v263, %v262
    %v278 = vpack.c.b16 %v265, %v264
    %v279 = vpack.c.b16 %v267, %v266
    %v280 = vpack.c.b16 %v269, %v268
    %v281 = vpack.c.b16 %v271, %v270
    %v282 = vpack.c.b16 %v273, %v272
    %v283 = vpack.c.b16 %v275, %v274
    %292 = vmatprep.subr.bf16.mxu0 0
    %293 = vmatpush1.bf16.msra.mxu0 %v276
    %294 = vmatprep.subr.bf16.mxu0 0
    %295 = vmatpush1.bf16.msra.mxu0 %v277
    %296 = vmatprep.subr.bf16.mxu0 0
    %297 = vmatpush1.bf16.msra.mxu0 %v278
    %298 = vmatprep.subr.bf16.mxu0 0
    %299 = vmatpush1.bf16.msra.mxu0 %v279
    %300 = vmatprep.subr.bf16.mxu0 0
    %301 = vmatpush1.bf16.msra.mxu0 %v280
    %302 = vmatprep.subr.bf16.mxu0 0
    %303 = vmatpush1.bf16.msra.mxu0 %v281
    %304 = vmatprep.subr.bf16.mxu0 0
    %305 = vmatpush1.bf16.msra.mxu0 %v282
    %306 = vmatprep.subr.bf16.mxu0 0
    %307 = vmatpush1.bf16.msra.mxu0 %v283
    %308 = vmatprep.subr.bf16.mxu0 0
    %309 = vmatpush1.bf16.msra.mxu0 0
    %310 = vmatprep.subr.bf16.mxu0 0
    %311 = vmatpush1.bf16.msra.mxu0 0
    %312 = vmatprep.subr.bf16.mxu0 0
    %313 = vmatpush1.bf16.msra.mxu0 0
    %314 = vmatprep.subr.bf16.mxu0 0
    %315 = vmatpush1.bf16.msra.mxu0 0
    %316 = vmatprep.subr.bf16.mxu0 0
    %317 = vmatpush1.bf16.msra.mxu0 0
    %318 = vmatprep.subr.bf16.mxu0 0
    %319 = vmatpush1.bf16.msra.mxu0 0
    %320 = vmatprep.subr.bf16.mxu0 0
    %321 = vmatpush1.bf16.msra.mxu0 0
    %322 = vmatprep.subr.bf16.mxu0 0
    %323 = vmatpush1.bf16.msra.mxu0 0
    %324 = vmatprep.mubr.bf16.mxu0 0
    %325 = vmatmul.mubr.bf16.gmra.mrb[0].mxu0 0
    %v326 = vpop.f32.mrb[0].mxu0
    %v327 = vadd.f32 0.0, %v326
    %v328 = vpop.f32.mrb[0].mxu0
    %v329 = vpop.f32.mrb[0].mxu0
    %v330 = vpop.f32.mrb[0].mxu0
    %331 = vdwg.mxu0
    %v332 = vadd.f32 %v220, %v327
    %v333 = vtanh.pop %v332
    %vm334 = vcmp.gt.s32.totalorder %v51, 0
    %v335 = vsel %vm334, 1, 0
    %336 = vset.pattern.permute.xlu0 0
    %337 = vperm.xlu0 %336, %v335
    %v338 = vpop.permute.xlu0 %337
    %vm339 = vcmp.eq.s32.totalorder %v338, 1
    %v340 = vsel %vm339, %v333, 0.0
    %v341 = vpack.c.bf16 %v340, %v340
    %342 = vst [vmem:[#allocation2] sm:$0xf] %v341
    %v343 = vld [vmem:[%s4] sm:$0xf]
    %v344 = vld [vmem:[%s4 + $0x4] sm:$0xf]
    %v345 = vld [vmem:[%s4 + $0x8] sm:$0xf]
    %v346 = vld [vmem:[%s4 + $0xc] sm:$0xf]
    %v347 = vld [vmem:[%s4 + $0x10] sm:$0xf]
    %v348 = vld [vmem:[%s4 + $0x14] sm:$0xf]
    %v349 = vld [vmem:[%s4 + $0x18] sm:$0xf]
    %v350 = vld [vmem:[%s4 + $0x1c] sm:$0xf]
    %v351 = vld [vmem:[%s4 + $0x20] sm:$0xf]
    %v352 = vld [vmem:[%s4 + $0x24] sm:$0xf]
    %v353 = vld [vmem:[%s4 + $0x28] sm:$0xf]
    %v354 = vld [vmem:[%s4 + $0x2c] sm:$0xf]
    %v355 = vld [vmem:[%s4 + $0x30] sm:$0xf]
    %v356 = vld [vmem:[%s4 + $0x34] sm:$0xf]
    %v357 = vld [vmem:[%s4 + $0x38] sm:$0xf]
    %v358 = vld [vmem:[%s4 + $0x3c] sm:$0xf]
    %v375 = vunpack.c.l.b16 %v343
    %v376 = vunpack.c.l.b16 %v344
    %v377 = vunpack.c.l.b16 %v345
    %v378 = vunpack.c.l.b16 %v346
    %v379 = vunpack.c.l.b16 %v347
    %v380 = vunpack.c.l.b16 %v348
    %v381 = vunpack.c.l.b16 %v349
    %v382 = vunpack.c.l.b16 %v350
    %v383 = vunpack.c.l.b16 %v351
    %v384 = vunpack.c.l.b16 %v352
    %v385 = vunpack.c.l.b16 %v353
    %v386 = vunpack.c.l.b16 %v354
    %v387 = vunpack.c.l.b16 %v355
    %v388 = vunpack.c.l.b16 %v356
    %v389 = vunpack.c.l.b16 %v357
    %v390 = vunpack.c.l.b16 %v358
    %v391 = vpack.c.b16 %v376, %v375
    %v392 = vpack.c.b16 %v378, %v377
    %v393 = vpack.c.b16 %v380, %v379
    %v394 = vpack.c.b16 %v382, %v381
    %v395 = vpack.c.b16 %v384, %v383
    %v396 = vpack.c.b16 %v386, %v385
    %v397 = vpack.c.b16 %v388, %v387
    %v398 = vpack.c.b16 %v390, %v389
    %407 = vmatprep.subr.bf16.mxu0 0
    %408 = vmatpush1.bf16.msra.mxu0 %v391
    %409 = vmatprep.subr.bf16.mxu0 0
    %410 = vmatpush1.bf16.msra.mxu0 %v392
    %411 = vmatprep.subr.bf16.mxu0 0
    %412 = vmatpush1.bf16.msra.mxu0 %v393
    %413 = vmatprep.subr.bf16.mxu0 0
    %414 = vmatpush1.bf16.msra.mxu0 %v394
    %415 = vmatprep.subr.bf16.mxu0 0
    %416 = vmatpush1.bf16.msra.mxu0 %v395
    %417 = vmatprep.subr.bf16.mxu0 0
    %418 = vmatpush1.bf16.msra.mxu0 %v396
    %419 = vmatprep.subr.bf16.mxu0 0
    %420 = vmatpush1.bf16.msra.mxu0 %v397
    %421 = vmatprep.subr.bf16.mxu0 0
    %422 = vmatpush1.bf16.msra.mxu0 %v398
    %423 = vmatprep.subr.bf16.mxu0 0
    %424 = vmatpush1.bf16.msra.mxu0 0
    %425 = vmatprep.subr.bf16.mxu0 0
    %426 = vmatpush1.bf16.msra.mxu0 0
    %427 = vmatprep.subr.bf16.mxu0 0
    %428 = vmatpush1.bf16.msra.mxu0 0
    %429 = vmatprep.subr.bf16.mxu0 0
    %430 = vmatpush1.bf16.msra.mxu0 0
    %431 = vmatprep.subr.bf16.mxu0 0
    %432 = vmatpush1.bf16.msra.mxu0 0
    %433 = vmatprep.subr.bf16.mxu0 0
    %434 = vmatpush1.bf16.msra.mxu0 0
    %435 = vmatprep.subr.bf16.mxu0 0
    %436 = vmatpush1.bf16.msra.mxu0 0
    %437 = vmatprep.subr.bf16.mxu0 0
    %438 = vmatpush1.bf16.msra.mxu0 0
    %439 = vmatprep.mubr.bf16.mxu0 0
    %440 = vmatmul.mubr.bf16.gmra.mrb[0].mxu0 %v341
    %v441 = vpop.f32.mrb[0].mxu0
    %v442 = vadd.f32 0.0, %v441
    %v443 = vpop.f32.mrb[0].mxu0
    %v444 = vpop.f32.mrb[0].mxu0
    %v445 = vpop.f32.mrb[0].mxu0
    %446 = vdwg.mxu0
    %v447 = vadd.f32 %v221, %v442
    %v448 = vtanh.pop %v447
    %vm449 = vcmp.gt.s32.totalorder %v51, 1
    %v450 = vsel %vm449, 1, 0
    %451 = vset.pattern.permute.xlu0 0
    %452 = vperm.xlu0 %451, %v450
    %v453 = vpop.permute.xlu0 %452
    %vm454 = vcmp.eq.s32.totalorder %v453, 1
    %v455 = vsel %vm454, %v448, %v340
    %v456 = vsel %vm454, %v448, 0.0
    %v457 = vpack.c.bf16 %v456, %v456
    %s458 = scalar_lea.vmem [#allocation2], 4
    %459 = vst [vmem:[%s458] sm:$0xf] %v457
    %v460 = vpack.c.bf16 %v455, %v455
    %v461 = vld [vmem:[%s4] sm:$0xf]
    %v462 = vld [vmem:[%s4 + $0x4] sm:$0xf]
    %v463 = vld [vmem:[%s4 + $0x8] sm:$0xf]
    %v464 = vld [vmem:[%s4 + $0xc] sm:$0xf]
    %v465 = vld [vmem:[%s4 + $0x10] sm:$0xf]
    %v466 = vld [vmem:[%s4 + $0x14] sm:$0xf]
    %v467 = vld [vmem:[%s4 + $0x18] sm:$0xf]
    %v468 = vld [vmem:[%s4 + $0x1c] sm:$0xf]
    %v469 = vld [vmem:[%s4 + $0x20] sm:$0xf]
    %v470 = vld [vmem:[%s4 + $0x24] sm:$0xf]
    %v471 = vld [vmem:[%s4 + $0x28] sm:$0xf]
    %v472 = vld [vmem:[%s4 + $0x2c] sm:$0xf]
    %v473 = vld [vmem:[%s4 + $0x30] sm:$0xf]
    %v474 = vld [vmem:[%s4 + $0x34] sm:$0xf]
    %v475 = vld [vmem:[%s4 + $0x38] sm:$0xf]
    %v476 = vld [vmem:[%s4 + $0x3c] sm:$0xf]
    %v493 = vunpack.c.l.b16 %v461
    %v494 = vunpack.c.l.b16 %v462
    %v495 = vunpack.c.l.b16 %v463
    %v496 = vunpack.c.l.b16 %v464
    %v497 = vunpack.c.l.b16 %v465
    %v498 = vunpack.c.l.b16 %v466
    %v499 = vunpack.c.l.b16 %v467
    %v500 = vunpack.c.l.b16 %v468
    %v501 = vunpack.c.l.b16 %v469
    %v502 = vunpack.c.l.b16 %v470
    %v503 = vunpack.c.l.b16 %v471
    %v504 = vunpack.c.l.b16 %v472
    %v505 = vunpack.c.l.b16 %v473
    %v506 = vunpack.c.l.b16 %v474
    %v507 = vunpack.c.l.b16 %v475
    %v508 = vunpack.c.l.b16 %v476
    %v509 = vpack.c.b16 %v494, %v493
    %v510 = vpack.c.b16 %v496, %v495
    %v511 = vpack.c.b16 %v498, %v497
    %v512 = vpack.c.b16 %v500, %v499
    %v513 = vpack.c.b16 %v502, %v501
    %v514 = vpack.c.b16 %v504, %v503
    %v515 = vpack.c.b16 %v506, %v505
    %v516 = vpack.c.b16 %v508, %v507
    %525 = vmatprep.subr.bf16.mxu0 0
    %526 = vmatpush1.bf16.msra.mxu0 %v509
    %527 = vmatprep.subr.bf16.mxu0 0
    %528 = vmatpush1.bf16.msra.mxu0 %v510
    %529 = vmatprep.subr.bf16.mxu0 0
    %530 = vmatpush1.bf16.msra.mxu0 %v511
    %531 = vmatprep.subr.bf16.mxu0 0
    %532 = vmatpush1.bf16.msra.mxu0 %v512
    %533 = vmatprep.subr.bf16.mxu0 0
    %534 = vmatpush1.bf16.msra.mxu0 %v513
    %535 = vmatprep.subr.bf16.mxu0 0
    %536 = vmatpush1.bf16.msra.mxu0 %v514
    %537 = vmatprep.subr.bf16.mxu0 0
    %538 = vmatpush1.bf16.msra.mxu0 %v515
    %539 = vmatprep.subr.bf16.mxu0 0
    %540 = vmatpush1.bf16.msra.mxu0 %v516
    %541 = vmatprep.subr.bf16.mxu0 0
    %542 = vmatpush1.bf16.msra.mxu0 0
    %543 = vmatprep.subr.bf16.mxu0 0
    %544 = vmatpush1.bf16.msra.mxu0 0
    %545 = vmatprep.subr.bf16.mxu0 0
    %546 = vmatpush1.bf16.msra.mxu0 0
    %547 = vmatprep.subr.bf16.mxu0 0
    %548 = vmatpush1.bf16.msra.mxu0 0
    %549 = vmatprep.subr.bf16.mxu0 0
    %550 = vmatpush1.bf16.msra.mxu0 0
    %551 = vmatprep.subr.bf16.mxu0 0
    %552 = vmatpush1.bf16.msra.mxu0 0
    %553 = vmatprep.subr.bf16.mxu0 0
    %554 = vmatpush1.bf16.msra.mxu0 0
    %555 = vmatprep.subr.bf16.mxu0 0
    %556 = vmatpush1.bf16.msra.mxu0 0
    %557 = vmatprep.mubr.bf16.mxu0 0
    %558 = vmatmul.mubr.bf16.gmra.mrb[0].mxu0 %v460
    %v559 = vpop.f32.mrb[0].mxu0
    %v560 = vadd.f32 0.0, %v559
    %v561 = vpop.f32.mrb[0].mxu0
    %v562 = vpop.f32.mrb[0].mxu0
    %v563 = vpop.f32.mrb[0].mxu0
    %564 = vdwg.mxu0
    %v565 = vadd.f32 %v222, %v560
    %v566 = vtanh.pop %v565
    %vm567 = vcmp.gt.s32.totalorder %v51, 2
    %v568 = vsel %vm567, 1, 0
    %569 = vset.pattern.permute.xlu0 0
    %570 = vperm.xlu0 %569, %v568
    %v571 = vpop.permute.xlu0 %570
    %vm572 = vcmp.eq.s32.totalorder %v571, 1
    %v573 = vsel %vm572, %v566, %v455
    %v574 = vsel %vm572, %v566, 0.0
    %v575 = vpack.c.bf16 %v574, %v574
    %s576 = scalar_lea.vmem [#allocation2], 8
    %577 = vst [vmem:[%s576] sm:$0xf] %v575
    %v578 = vpack.c.bf16 %v573, %v573
    %v579 = vld [vmem:[%s4] sm:$0xf]
    %v580 = vld [vmem:[%s4 + $0x4] sm:$0xf]
    %v581 = vld [vmem:[%s4 + $0x8] sm:$0xf]
    %v582 = vld [vmem:[%s4 + $0xc] sm:$0xf]
    %v583 = vld [vmem:[%s4 + $0x10] sm:$0xf]
    %v584 = vld [vmem:[%s4 + $0x14] sm:$0xf]
    %v585 = vld [vmem:[%s4 + $0x18] sm:$0xf]
    %v586 = vld [vmem:[%s4 + $0x1c] sm:$0xf]
    %v587 = vld [vmem:[%s4 + $0x20] sm:$0xf]
    %v588 = vld [vmem:[%s4 + $0x24] sm:$0xf]
    %v589 = vld [vmem:[%s4 + $0x28] sm:$0xf]
    %v590 = vld [vmem:[%s4 + $0x2c] sm:$0xf]
    %v591 = vld [vmem:[%s4 + $0x30] sm:$0xf]
    %v592 = vld [vmem:[%s4 + $0x34] sm:$0xf]
    %v593 = vld [vmem:[%s4 + $0x38] sm:$0xf]
    %v594 = vld [vmem:[%s4 + $0x3c] sm:$0xf]
    %v611 = vunpack.c.l.b16 %v579
    %v612 = vunpack.c.l.b16 %v580
    %v613 = vunpack.c.l.b16 %v581
    %v614 = vunpack.c.l.b16 %v582
    %v615 = vunpack.c.l.b16 %v583
    %v616 = vunpack.c.l.b16 %v584
    %v617 = vunpack.c.l.b16 %v585
    %v618 = vunpack.c.l.b16 %v586
    %v619 = vunpack.c.l.b16 %v587
    %v620 = vunpack.c.l.b16 %v588
    %v621 = vunpack.c.l.b16 %v589
    %v622 = vunpack.c.l.b16 %v590
    %v623 = vunpack.c.l.b16 %v591
    %v624 = vunpack.c.l.b16 %v592
    %v625 = vunpack.c.l.b16 %v593
    %v626 = vunpack.c.l.b16 %v594
    %v627 = vpack.c.b16 %v612, %v611
    %v628 = vpack.c.b16 %v614, %v613
    %v629 = vpack.c.b16 %v616, %v615
    %v630 = vpack.c.b16 %v618, %v617
    %v631 = vpack.c.b16 %v620, %v619
    %v632 = vpack.c.b16 %v622, %v621
    %v633 = vpack.c.b16 %v624, %v623
    %v634 = vpack.c.b16 %v626, %v625
    %643 = vmatprep.subr.bf16.mxu0 0
    %644 = vmatpush1.bf16.msra.mxu0 %v627
    %645 = vmatprep.subr.bf16.mxu0 0
    %646 = vmatpush1.bf16.msra.mxu0 %v628
    %647 = vmatprep.subr.bf16.mxu0 0
    %648 = vmatpush1.bf16.msra.mxu0 %v629
    %649 = vmatprep.subr.bf16.mxu0 0
    %650 = vmatpush1.bf16.msra.mxu0 %v630
    %651 = vmatprep.subr.bf16.mxu0 0
    %652 = vmatpush1.bf16.msra.mxu0 %v631
    %653 = vmatprep.subr.bf16.mxu0 0
    %654 = vmatpush1.bf16.msra.mxu0 %v632
    %655 = vmatprep.subr.bf16.mxu0 0
    %656 = vmatpush1.bf16.msra.mxu0 %v633
    %657 = vmatprep.subr.bf16.mxu0 0
    %658 = vmatpush1.bf16.msra.mxu0 %v634
    %659 = vmatprep.subr.bf16.mxu0 0
    %660 = vmatpush1.bf16.msra.mxu0 0
    %661 = vmatprep.subr.bf16.mxu0 0
    %662 = vmatpush1.bf16.msra.mxu0 0
    %663 = vmatprep.subr.bf16.mxu0 0
    %664 = vmatpush1.bf16.msra.mxu0 0
    %665 = vmatprep.subr.bf16.mxu0 0
    %666 = vmatpush1.bf16.msra.mxu0 0
    %667 = vmatprep.subr.bf16.mxu0 0
    %668 = vmatpush1.bf16.msra.mxu0 0
    %669 = vmatprep.subr.bf16.mxu0 0
    %670 = vmatpush1.bf16.msra.mxu0 0
    %671 = vmatprep.subr.bf16.mxu0 0
    %672 = vmatpush1.bf16.msra.mxu0 0
    %673 = vmatprep.subr.bf16.mxu0 0
    %674 = vmatpush1.bf16.msra.mxu0 0
    %675 = vmatprep.mubr.bf16.mxu0 0
    %676 = vmatmul.mubr.bf16.gmra.mrb[0].mxu0 %v578
    %v677 = vpop.f32.mrb[0].mxu0
    %v678 = vadd.f32 0.0, %v677
    %v679 = vpop.f32.mrb[0].mxu0
    %v680 = vpop.f32.mrb[0].mxu0
    %v681 = vpop.f32.mrb[0].mxu0
    %682 = vdwg.mxu0
    %v683 = vadd.f32 %v223, %v678
    %v684 = vtanh.pop %v683
    %vm685 = vcmp.gt.s32.totalorder %v51, 3
    %v686 = vsel %vm685, 1, 0
    %687 = vset.pattern.permute.xlu0 0
    %688 = vperm.xlu0 %687, %v686
    %v689 = vpop.permute.xlu0 %688
    %vm690 = vcmp.eq.s32.totalorder %v689, 1
    %v691 = vsel %vm690, %v684, %v573
    %v692 = vsel %vm690, %v684, 0.0
    %v693 = vpack.c.bf16 %v692, %v692
    %s694 = scalar_lea.vmem [#allocation2], 12
    %695 = vst [vmem:[%s694] sm:$0xf] %v693
    %v696 = vpack.c.bf16 %v691, %v691
    %v697 = vld [vmem:[%s4] sm:$0xf]
    %v698 = vld [vmem:[%s4 + $0x4] sm:$0xf]
    %v699 = vld [vmem:[%s4 + $0x8] sm:$0xf]
    %v700 = vld [vmem:[%s4 + $0xc] sm:$0xf]
    %v701 = vld [vmem:[%s4 + $0x10] sm:$0xf]
    %v702 = vld [vmem:[%s4 + $0x14] sm:$0xf]
    %v703 = vld [vmem:[%s4 + $0x18] sm:$0xf]
    %v704 = vld [vmem:[%s4 + $0x1c] sm:$0xf]
    %v705 = vld [vmem:[%s4 + $0x20] sm:$0xf]
    %v706 = vld [vmem:[%s4 + $0x24] sm:$0xf]
    %v707 = vld [vmem:[%s4 + $0x28] sm:$0xf]
    %v708 = vld [vmem:[%s4 + $0x2c] sm:$0xf]
    %v709 = vld [vmem:[%s4 + $0x30] sm:$0xf]
    %v710 = vld [vmem:[%s4 + $0x34] sm:$0xf]
    %v711 = vld [vmem:[%s4 + $0x38] sm:$0xf]
    %v712 = vld [vmem:[%s4 + $0x3c] sm:$0xf]
    %v729 = vunpack.c.l.b16 %v697
    %v730 = vunpack.c.l.b16 %v698
    %v731 = vunpack.c.l.b16 %v699
    %v732 = vunpack.c.l.b16 %v700
    %v733 = vunpack.c.l.b16 %v701
    %v734 = vunpack.c.l.b16 %v702
    %v735 = vunpack.c.l.b16 %v703
    %v736 = vunpack.c.l.b16 %v704
    %v737 = vunpack.c.l.b16 %v705
    %v738 = vunpack.c.l.b16 %v706
    %v739 = vunpack.c.l.b16 %v707
    %v740 = vunpack.c.l.b16 %v708
    %v741 = vunpack.c.l.b16 %v709
    %v742 = vunpack.c.l.b16 %v710
    %v743 = vunpack.c.l.b16 %v711
    %v744 = vunpack.c.l.b16 %v712
    %v745 = vpack.c.b16 %v730, %v729
    %v746 = vpack.c.b16 %v732, %v731
    %v747 = vpack.c.b16 %v734, %v733
    %v748 = vpack.c.b16 %v736, %v735
    %v749 = vpack.c.b16 %v738, %v737
    %v750 = vpack.c.b16 %v740, %v739
    %v751 = vpack.c.b16 %v742, %v741
    %v752 = vpack.c.b16 %v744, %v743
    %761 = vmatprep.subr.bf16.mxu0 0
    %762 = vmatpush1.bf16.msra.mxu0 %v745
    %763 = vmatprep.subr.bf16.mxu0 0
    %764 = vmatpush1.bf16.msra.mxu0 %v746
    %765 = vmatprep.subr.bf16.mxu0 0
    %766 = vmatpush1.bf16.msra.mxu0 %v747
    %767 = vmatprep.subr.bf16.mxu0 0
    %768 = vmatpush1.bf16.msra.mxu0 %v748
    %769 = vmatprep.subr.bf16.mxu0 0
    %770 = vmatpush1.bf16.msra.mxu0 %v749
    %771 = vmatprep.subr.bf16.mxu0 0
    %772 = vmatpush1.bf16.msra.mxu0 %v750
    %773 = vmatprep.subr.bf16.mxu0 0
    %774 = vmatpush1.bf16.msra.mxu0 %v751
    %775 = vmatprep.subr.bf16.mxu0 0
    %776 = vmatpush1.bf16.msra.mxu0 %v752
    %777 = vmatprep.subr.bf16.mxu0 0
    %778 = vmatpush1.bf16.msra.mxu0 0
    %779 = vmatprep.subr.bf16.mxu0 0
    %780 = vmatpush1.bf16.msra.mxu0 0
    %781 = vmatprep.subr.bf16.mxu0 0
    %782 = vmatpush1.bf16.msra.mxu0 0
    %783 = vmatprep.subr.bf16.mxu0 0
    %784 = vmatpush1.bf16.msra.mxu0 0
    %785 = vmatprep.subr.bf16.mxu0 0
    %786 = vmatpush1.bf16.msra.mxu0 0
    %787 = vmatprep.subr.bf16.mxu0 0
    %788 = vmatpush1.bf16.msra.mxu0 0
    %789 = vmatprep.subr.bf16.mxu0 0
    %790 = vmatpush1.bf16.msra.mxu0 0
    %791 = vmatprep.subr.bf16.mxu0 0
    %792 = vmatpush1.bf16.msra.mxu0 0
    %793 = vmatprep.mubr.bf16.mxu0 0
    %794 = vmatmul.mubr.bf16.gmra.mrb[0].mxu0 %v696
    %v795 = vpop.f32.mrb[0].mxu0
    %v796 = vadd.f32 0.0, %v795
    %v797 = vpop.f32.mrb[0].mxu0
    %v798 = vpop.f32.mrb[0].mxu0
    %v799 = vpop.f32.mrb[0].mxu0
    %800 = vdwg.mxu0
    %v801 = vadd.f32 %v224, %v796
    %v802 = vtanh.pop %v801
    %vm803 = vcmp.gt.s32.totalorder %v51, 4
    %v804 = vsel %vm803, 1, 0
    %805 = vset.pattern.permute.xlu0 0
    %806 = vperm.xlu0 %805, %v804
    %v807 = vpop.permute.xlu0 %806
    %vm808 = vcmp.eq.s32.totalorder %v807, 1
    %v809 = vsel %vm808, %v802, %v691
    %v810 = vsel %vm808, %v802, 0.0
    %v811 = vpack.c.bf16 %v810, %v810
    %s812 = scalar_lea.vmem [#allocation2], 16
    %813 = vst [vmem:[%s812] sm:$0xf] %v811
    %v814 = vpack.c.bf16 %v809, %v809
    %v815 = vld [vmem:[%s4] sm:$0xf]
    %v816 = vld [vmem:[%s4 + $0x4] sm:$0xf]
    %v817 = vld [vmem:[%s4 + $0x8] sm:$0xf]
    %v818 = vld [vmem:[%s4 + $0xc] sm:$0xf]
    %v819 = vld [vmem:[%s4 + $0x10] sm:$0xf]
    %v820 = vld [vmem:[%s4 + $0x14] sm:$0xf]
    %v821 = vld [vmem:[%s4 + $0x18] sm:$0xf]
    %v822 = vld [vmem:[%s4 + $0x1c] sm:$0xf]
    %v823 = vld [vmem:[%s4 + $0x20] sm:$0xf]
    %v824 = vld [vmem:[%s4 + $0x24] sm:$0xf]
    %v825 = vld [vmem:[%s4 + $0x28] sm:$0xf]
    %v826 = vld [vmem:[%s4 + $0x2c] sm:$0xf]
    %v827 = vld [vmem:[%s4 + $0x30] sm:$0xf]
    %v828 = vld [vmem:[%s4 + $0x34] sm:$0xf]
    %v829 = vld [vmem:[%s4 + $0x38] sm:$0xf]
    %v830 = vld [vmem:[%s4 + $0x3c] sm:$0xf]
    %v847 = vunpack.c.l.b16 %v815
    %v848 = vunpack.c.l.b16 %v816
    %v849 = vunpack.c.l.b16 %v817
    %v850 = vunpack.c.l.b16 %v818
    %v851 = vunpack.c.l.b16 %v819
    %v852 = vunpack.c.l.b16 %v820
    %v853 = vunpack.c.l.b16 %v821
    %v854 = vunpack.c.l.b16 %v822
    %v855 = vunpack.c.l.b16 %v823
    %v856 = vunpack.c.l.b16 %v824
    %v857 = vunpack.c.l.b16 %v825
    %v858 = vunpack.c.l.b16 %v826
    %v859 = vunpack.c.l.b16 %v827
    %v860 = vunpack.c.l.b16 %v828
    %v861 = vunpack.c.l.b16 %v829
    %v862 = vunpack.c.l.b16 %v830
    %v863 = vpack.c.b16 %v848, %v847
    %v864 = vpack.c.b16 %v850, %v849
    %v865 = vpack.c.b16 %v852, %v851
    %v866 = vpack.c.b16 %v854, %v853
    %v867 = vpack.c.b16 %v856, %v855
    %v868 = vpack.c.b16 %v858, %v857
    %v869 = vpack.c.b16 %v860, %v859
    %v870 = vpack.c.b16 %v862, %v861
    %879 = vmatprep.subr.bf16.mxu0 0
    %880 = vmatpush1.bf16.msra.mxu0 %v863
    %881 = vmatprep.subr.bf16.mxu0 0
    %882 = vmatpush1.bf16.msra.mxu0 %v864
    %883 = vmatprep.subr.bf16.mxu0 0
    %884 = vmatpush1.bf16.msra.mxu0 %v865
    %885 = vmatprep.subr.bf16.mxu0 0
    %886 = vmatpush1.bf16.msra.mxu0 %v866
    %887 = vmatprep.subr.bf16.mxu0 0
    %888 = vmatpush1.bf16.msra.mxu0 %v867
    %889 = vmatprep.subr.bf16.mxu0 0
    %890 = vmatpush1.bf16.msra.mxu0 %v868
    %891 = vmatprep.subr.bf16.mxu0 0
    %892 = vmatpush1.bf16.msra.mxu0 %v869
    %893 = vmatprep.subr.bf16.mxu0 0
    %894 = vmatpush1.bf16.msra.mxu0 %v870
    %895 = vmatprep.subr.bf16.mxu0 0
    %896 = vmatpush1.bf16.msra.mxu0 0
    %897 = vmatprep.subr.bf16.mxu0 0
    %898 = vmatpush1.bf16.msra.mxu0 0
    %899 = vmatprep.subr.bf16.mxu0 0
    %900 = vmatpush1.bf16.msra.mxu0 0
    %901 = vmatprep.subr.bf16.mxu0 0
    %902 = vmatpush1.bf16.msra.mxu0 0
    %903 = vmatprep.subr.bf16.mxu0 0
    %904 = vmatpush1.bf16.msra.mxu0 0
    %905 = vmatprep.subr.bf16.mxu0 0
    %906 = vmatpush1.bf16.msra.mxu0 0
    %907 = vmatprep.subr.bf16.mxu0 0
    %908 = vmatpush1.bf16.msra.mxu0 0
    %909 = vmatprep.subr.bf16.mxu0 0
    %910 = vmatpush1.bf16.msra.mxu0 0
    %911 = vmatprep.mubr.bf16.mxu0 0
    %912 = vmatmul.mubr.bf16.gmra.mrb[0].mxu0 %v814
    %v913 = vpop.f32.mrb[0].mxu0
    %v914 = vadd.f32 0.0, %v913
    %v915 = vpop.f32.mrb[0].mxu0
    %v916 = vpop.f32.mrb[0].mxu0
    %v917 = vpop.f32.mrb[0].mxu0
    %918 = vdwg.mxu0
    %v919 = vadd.f32 %v225, %v914
    %v920 = vtanh.pop %v919
    %vm921 = vcmp.gt.s32.totalorder %v51, 5
    %v922 = vsel %vm921, 1, 0
    %923 = vset.pattern.permute.xlu0 0
    %924 = vperm.xlu0 %923, %v922
    %v925 = vpop.permute.xlu0 %924
    %vm926 = vcmp.eq.s32.totalorder %v925, 1
    %v927 = vsel %vm926, %v920, %v809
    %v928 = vsel %vm926, %v920, 0.0
    %v929 = vpack.c.bf16 %v928, %v928
    %s930 = scalar_lea.vmem [#allocation2], 20
    %931 = vst [vmem:[%s930] sm:$0xf] %v929
    %v932 = vpack.c.bf16 %v927, %v927
    %v933 = vld [vmem:[%s4] sm:$0xf]
    %v934 = vld [vmem:[%s4 + $0x4] sm:$0xf]
    %v935 = vld [vmem:[%s4 + $0x8] sm:$0xf]
    %v936 = vld [vmem:[%s4 + $0xc] sm:$0xf]
    %v937 = vld [vmem:[%s4 + $0x10] sm:$0xf]
    %v938 = vld [vmem:[%s4 + $0x14] sm:$0xf]
    %v939 = vld [vmem:[%s4 + $0x18] sm:$0xf]
    %v940 = vld [vmem:[%s4 + $0x1c] sm:$0xf]
    %v941 = vld [vmem:[%s4 + $0x20] sm:$0xf]
    %v942 = vld [vmem:[%s4 + $0x24] sm:$0xf]
    %v943 = vld [vmem:[%s4 + $0x28] sm:$0xf]
    %v944 = vld [vmem:[%s4 + $0x2c] sm:$0xf]
    %v945 = vld [vmem:[%s4 + $0x30] sm:$0xf]
    %v946 = vld [vmem:[%s4 + $0x34] sm:$0xf]
    %v947 = vld [vmem:[%s4 + $0x38] sm:$0xf]
    %v948 = vld [vmem:[%s4 + $0x3c] sm:$0xf]
    %v965 = vunpack.c.l.b16 %v933
    %v966 = vunpack.c.l.b16 %v934
    %v967 = vunpack.c.l.b16 %v935
    %v968 = vunpack.c.l.b16 %v936
    %v969 = vunpack.c.l.b16 %v937
    %v970 = vunpack.c.l.b16 %v938
    %v971 = vunpack.c.l.b16 %v939
    %v972 = vunpack.c.l.b16 %v940
    %v973 = vunpack.c.l.b16 %v941
    %v974 = vunpack.c.l.b16 %v942
    %v975 = vunpack.c.l.b16 %v943
    %v976 = vunpack.c.l.b16 %v944
    %v977 = vunpack.c.l.b16 %v945
    %v978 = vunpack.c.l.b16 %v946
    %v979 = vunpack.c.l.b16 %v947
    %v980 = vunpack.c.l.b16 %v948
    %v981 = vpack.c.b16 %v966, %v965
    %v982 = vpack.c.b16 %v968, %v967
    %v983 = vpack.c.b16 %v970, %v969
    %v984 = vpack.c.b16 %v972, %v971
    %v985 = vpack.c.b16 %v974, %v973
    %v986 = vpack.c.b16 %v976, %v975
    %v987 = vpack.c.b16 %v978, %v977
    %v988 = vpack.c.b16 %v980, %v979
    %997 = vmatprep.subr.bf16.mxu0 0
    %998 = vmatpush1.bf16.msra.mxu0 %v981
    %999 = vmatprep.subr.bf16.mxu0 0
    %1000 = vmatpush1.bf16.msra.mxu0 %v982
    %1001 = vmatprep.subr.bf16.mxu0 0
    %1002 = vmatpush1.bf16.msra.mxu0 %v983
    %1003 = vmatprep.subr.bf16.mxu0 0
    %1004 = vmatpush1.bf16.msra.mxu0 %v984
    %1005 = vmatprep.subr.bf16.mxu0 0
    %1006 = vmatpush1.bf16.msra.mxu0 %v985
    %1007 = vmatprep.subr.bf16.mxu0 0
    %1008 = vmatpush1.bf16.msra.mxu0 %v986
    %1009 = vmatprep.subr.bf16.mxu0 0
    %1010 = vmatpush1.bf16.msra.mxu0 %v987
    %1011 = vmatprep.subr.bf16.mxu0 0
    %1012 = vmatpush1.bf16.msra.mxu0 %v988
    %1013 = vmatprep.subr.bf16.mxu0 0
    %1014 = vmatpush1.bf16.msra.mxu0 0
    %1015 = vmatprep.subr.bf16.mxu0 0
    %1016 = vmatpush1.bf16.msra.mxu0 0
    %1017 = vmatprep.subr.bf16.mxu0 0
    %1018 = vmatpush1.bf16.msra.mxu0 0
    %1019 = vmatprep.subr.bf16.mxu0 0
    %1020 = vmatpush1.bf16.msra.mxu0 0
    %1021 = vmatprep.subr.bf16.mxu0 0
    %1022 = vmatpush1.bf16.msra.mxu0 0
    %1023 = vmatprep.subr.bf16.mxu0 0
    %1024 = vmatpush1.bf16.msra.mxu0 0
    %1025 = vmatprep.subr.bf16.mxu0 0
    %1026 = vmatpush1.bf16.msra.mxu0 0
    %1027 = vmatprep.subr.bf16.mxu0 0
    %1028 = vmatpush1.bf16.msra.mxu0 0
    %1029 = vmatprep.mubr.bf16.mxu0 0
    %1030 = vmatmul.mubr.bf16.gmra.mrb[0].mxu0 %v932
    %v1031 = vpop.f32.mrb[0].mxu0
    %v1032 = vadd.f32 0.0, %v1031
    %v1033 = vpop.f32.mrb[0].mxu0
    %v1034 = vpop.f32.mrb[0].mxu0
    %v1035 = vpop.f32.mrb[0].mxu0
    %1036 = vdwg.mxu0
    %v1037 = vadd.f32 %v226, %v1032
    %v1038 = vtanh.pop %v1037
    %vm1039 = vcmp.gt.s32.totalorder %v51, 6
    %v1040 = vsel %vm1039, 1, 0
    %1041 = vset.pattern.permute.xlu0 0
    %1042 = vperm.xlu0 %1041, %v1040
    %v1043 = vpop.permute.xlu0 %1042
    %vm1044 = vcmp.eq.s32.totalorder %v1043, 1
    %v1045 = vsel %vm1044, %v1038, %v927
    %v1046 = vsel %vm1044, %v1038, 0.0
    %v1047 = vpack.c.bf16 %v1046, %v1046
    %s1048 = scalar_lea.vmem [#allocation2], 24
    %1049 = vst [vmem:[%s1048] sm:$0xf] %v1047
    %v1050 = vpack.c.bf16 %v1045, %v1045
    %v1051 = vld [vmem:[%s4] sm:$0xf]
    %v1052 = vld [vmem:[%s4 + $0x4] sm:$0xf]
    %v1053 = vld [vmem:[%s4 + $0x8] sm:$0xf]
    %v1054 = vld [vmem:[%s4 + $0xc] sm:$0xf]
    %v1055 = vld [vmem:[%s4 + $0x10] sm:$0xf]
    %v1056 = vld [vmem:[%s4 + $0x14] sm:$0xf]
    %v1057 = vld [vmem:[%s4 + $0x18] sm:$0xf]
    %v1058 = vld [vmem:[%s4 + $0x1c] sm:$0xf]
    %v1059 = vld [vmem:[%s4 + $0x20] sm:$0xf]
    %v1060 = vld [vmem:[%s4 + $0x24] sm:$0xf]
    %v1061 = vld [vmem:[%s4 + $0x28] sm:$0xf]
    %v1062 = vld [vmem:[%s4 + $0x2c] sm:$0xf]
    %v1063 = vld [vmem:[%s4 + $0x30] sm:$0xf]
    %v1064 = vld [vmem:[%s4 + $0x34] sm:$0xf]
    %v1065 = vld [vmem:[%s4 + $0x38] sm:$0xf]
    %v1066 = vld [vmem:[%s4 + $0x3c] sm:$0xf]
    %v1083 = vunpack.c.l.b16 %v1051
    %v1084 = vunpack.c.l.b16 %v1052
    %v1085 = vunpack.c.l.b16 %v1053
    %v1086 = vunpack.c.l.b16 %v1054
    %v1087 = vunpack.c.l.b16 %v1055
    %v1088 = vunpack.c.l.b16 %v1056
    %v1089 = vunpack.c.l.b16 %v1057
    %v1090 = vunpack.c.l.b16 %v1058
    %v1091 = vunpack.c.l.b16 %v1059
    %v1092 = vunpack.c.l.b16 %v1060
    %v1093 = vunpack.c.l.b16 %v1061
    %v1094 = vunpack.c.l.b16 %v1062
    %v1095 = vunpack.c.l.b16 %v1063
    %v1096 = vunpack.c.l.b16 %v1064
    %v1097 = vunpack.c.l.b16 %v1065
    %v1098 = vunpack.c.l.b16 %v1066
    %v1099 = vpack.c.b16 %v1084, %v1083
    %v1100 = vpack.c.b16 %v1086, %v1085
    %v1101 = vpack.c.b16 %v1088, %v1087
    %v1102 = vpack.c.b16 %v1090, %v1089
    %v1103 = vpack.c.b16 %v1092, %v1091
    %v1104 = vpack.c.b16 %v1094, %v1093
    %v1105 = vpack.c.b16 %v1096, %v1095
    %v1106 = vpack.c.b16 %v1098, %v1097
    %1115 = vmatprep.subr.bf16.mxu0 0
    %1116 = vmatpush1.bf16.msra.mxu0 %v1099
    %1117 = vmatprep.subr.bf16.mxu0 0
    %1118 = vmatpush1.bf16.msra.mxu0 %v1100
    %1119 = vmatprep.subr.bf16.mxu0 0
    %1120 = vmatpush1.bf16.msra.mxu0 %v1101
    %1121 = vmatprep.subr.bf16.mxu0 0
    %1122 = vmatpush1.bf16.msra.mxu0 %v1102
    %1123 = vmatprep.subr.bf16.mxu0 0
    %1124 = vmatpush1.bf16.msra.mxu0 %v1103
    %1125 = vmatprep.subr.bf16.mxu0 0
    %1126 = vmatpush1.bf16.msra.mxu0 %v1104
    %1127 = vmatprep.subr.bf16.mxu0 0
    %1128 = vmatpush1.bf16.msra.mxu0 %v1105
    %1129 = vmatprep.subr.bf16.mxu0 0
    %1130 = vmatpush1.bf16.msra.mxu0 %v1106
    %1131 = vmatprep.subr.bf16.mxu0 0
    %1132 = vmatpush1.bf16.msra.mxu0 0
    %1133 = vmatprep.subr.bf16.mxu0 0
    %1134 = vmatpush1.bf16.msra.mxu0 0
    %1135 = vmatprep.subr.bf16.mxu0 0
    %1136 = vmatpush1.bf16.msra.mxu0 0
    %1137 = vmatprep.subr.bf16.mxu0 0
    %1138 = vmatpush1.bf16.msra.mxu0 0
    %1139 = vmatprep.subr.bf16.mxu0 0
    %1140 = vmatpush1.bf16.msra.mxu0 0
    %1141 = vmatprep.subr.bf16.mxu0 0
    %1142 = vmatpush1.bf16.msra.mxu0 0
    %1143 = vmatprep.subr.bf16.mxu0 0
    %1144 = vmatpush1.bf16.msra.mxu0 0
    %1145 = vmatprep.subr.bf16.mxu0 0
    %1146 = vmatpush1.bf16.msra.mxu0 0
    %1147 = vmatprep.mubr.bf16.mxu0 0
    %1148 = vmatmul.mubr.bf16.gmra.mrb[0].mxu0 %v1050
    %v1149 = vpop.f32.mrb[0].mxu0
    %v1150 = vadd.f32 0.0, %v1149
    %v1151 = vpop.f32.mrb[0].mxu0
    %v1152 = vpop.f32.mrb[0].mxu0
    %v1153 = vpop.f32.mrb[0].mxu0
    %1154 = vdwg.mxu0
    %v1155 = vadd.f32 %v227, %v1150
    %v1156 = vtanh.pop %v1155
    %vm1157 = vcmp.gt.s32.totalorder %v51, 7
    %v1158 = vsel %vm1157, 1, 0
    %1159 = vset.pattern.permute.xlu0 0
    %1160 = vperm.xlu0 %1159, %v1158
    %v1161 = vpop.permute.xlu0 %1160
    %vm1162 = vcmp.eq.s32.totalorder %v1161, 1
    %v1163 = vsel %vm1162, %v1156, %v1045
    %v1164 = vsel %vm1162, %v1156, 0.0
    %v1165 = vpack.c.bf16 %v1164, %v1164
    %s1166 = scalar_lea.vmem [#allocation2], 28
    %1167 = vst [vmem:[%s1166] sm:$0xf] %v1165
    %v1168 = vld [vmem:[%s1] sm:$0xf]
    %v1169 = vld [vmem:[%s1 + $0x4] sm:$0xf]
    %v1170 = vld [vmem:[%s1 + $0x8] sm:$0xf]
    %v1171 = vld [vmem:[%s1 + $0xc] sm:$0xf]
    %v1172 = vld [vmem:[%s1 + $0x10] sm:$0xf]
    %v1173 = vld [vmem:[%s1 + $0x14] sm:$0xf]
    %v1174 = vld [vmem:[%s1 + $0x18] sm:$0xf]
    %v1175 = vld [vmem:[%s1 + $0x1c] sm:$0xf]
    %v1176 = vld [vmem:[%s6] sm:$0xf]
    %v1177 = vld [vmem:[%s6 + $0x4] sm:$0xf]
    %v1178 = vld [vmem:[%s6 + $0x8] sm:$0xf]
    %v1179 = vld [vmem:[%s6 + $0xc] sm:$0xf]
    %v1180 = vld [vmem:[%s6 + $0x10] sm:$0xf]
    %v1181 = vld [vmem:[%s6 + $0x14] sm:$0xf]
    %v1182 = vld [vmem:[%s6 + $0x18] sm:$0xf]
    %v1183 = vld [vmem:[%s6 + $0x1c] sm:$0xf]
    %v1184 = vld [vmem:[%s6 + $0x20] sm:$0xf]
    %v1185 = vld [vmem:[%s6 + $0x24] sm:$0xf]
    %v1186 = vld [vmem:[%s6 + $0x28] sm:$0xf]
    %v1187 = vld [vmem:[%s6 + $0x2c] sm:$0xf]
    %v1188 = vld [vmem:[%s6 + $0x30] sm:$0xf]
    %v1189 = vld [vmem:[%s6 + $0x34] sm:$0xf]
    %v1190 = vld [vmem:[%s6 + $0x38] sm:$0xf]
    %v1191 = vld [vmem:[%s6 + $0x3c] sm:$0xf]
    %v1200 = vunpack.c.l.b16 %v1168
    %v1201 = vunpack.c.l.b16 %v1169
    %v1202 = vunpack.c.l.b16 %v1170
    %v1203 = vunpack.c.l.b16 %v1171
    %v1204 = vunpack.c.l.b16 %v1172
    %v1205 = vunpack.c.l.b16 %v1173
    %v1206 = vunpack.c.l.b16 %v1174
    %v1207 = vunpack.c.l.b16 %v1175
    %v1208 = vpack.c.b16 %v1201, %v1200
    %v1209 = vpack.c.b16 %v1203, %v1202
    %v1210 = vpack.c.b16 %v1205, %v1204
    %v1211 = vpack.c.b16 %v1207, %v1206
    %v1232 = vunpack.c.l.b16 %v1176
    %v1233 = vunpack.c.l.b16 %v1177
    %v1234 = vunpack.c.l.b16 %v1178
    %v1235 = vunpack.c.l.b16 %v1179
    %v1236 = vunpack.c.l.b16 %v1180
    %v1237 = vunpack.c.l.b16 %v1181
    %v1238 = vunpack.c.l.b16 %v1182
    %v1239 = vunpack.c.l.b16 %v1183
    %v1240 = vunpack.c.l.b16 %v1184
    %v1241 = vunpack.c.l.b16 %v1185
    %v1242 = vunpack.c.l.b16 %v1186
    %v1243 = vunpack.c.l.b16 %v1187
    %v1244 = vunpack.c.l.b16 %v1188
    %v1245 = vunpack.c.l.b16 %v1189
    %v1246 = vunpack.c.l.b16 %v1190
    %v1247 = vunpack.c.l.b16 %v1191
    %v1248 = vpack.c.b16 %v1233, %v1232
    %v1249 = vpack.c.b16 %v1235, %v1234
    %v1250 = vpack.c.b16 %v1237, %v1236
    %v1251 = vpack.c.b16 %v1239, %v1238
    %v1252 = vpack.c.b16 %v1241, %v1240
    %v1253 = vpack.c.b16 %v1243, %v1242
    %v1254 = vpack.c.b16 %v1245, %v1244
    %v1255 = vpack.c.b16 %v1247, %v1246
    %1264 = vmatprep.subr.bf16.mxu0 0
    %1265 = vmatpush1.bf16.msra.mxu0 %v1248
    %1266 = vmatprep.subr.bf16.mxu0 0
    %1267 = vmatpush1.bf16.msra.mxu0 %v1249
    %1268 = vmatprep.subr.bf16.mxu0 0
    %1269 = vmatpush1.bf16.msra.mxu0 %v1250
    %1270 = vmatprep.subr.bf16.mxu0 0
    %1271 = vmatpush1.bf16.msra.mxu0 %v1251
    %1272 = vmatprep.subr.bf16.mxu0 0
    %1273 = vmatpush1.bf16.msra.mxu0 %v1252
    %1274 = vmatprep.subr.bf16.mxu0 0
    %1275 = vmatpush1.bf16.msra.mxu0 %v1253
    %1276 = vmatprep.subr.bf16.mxu0 0
    %1277 = vmatpush1.bf16.msra.mxu0 %v1254
    %1278 = vmatprep.subr.bf16.mxu0 0
    %1279 = vmatpush1.bf16.msra.mxu0 %v1255
    %1280 = vmatprep.subr.bf16.mxu0 0
    %1281 = vmatpush1.bf16.msra.mxu0 0
    %1282 = vmatprep.subr.bf16.mxu0 0
    %1283 = vmatpush1.bf16.msra.mxu0 0
    %1284 = vmatprep.subr.bf16.mxu0 0
    %1285 = vmatpush1.bf16.msra.mxu0 0
    %1286 = vmatprep.subr.bf16.mxu0 0
    %1287 = vmatpush1.bf16.msra.mxu0 0
    %1288 = vmatprep.subr.bf16.mxu0 0
    %1289 = vmatpush1.bf16.msra.mxu0 0
    %1290 = vmatprep.subr.bf16.mxu0 0
    %1291 = vmatpush1.bf16.msra.mxu0 0
    %1292 = vmatprep.subr.bf16.mxu0 0
    %1293 = vmatpush1.bf16.msra.mxu0 0
    %1294 = vmatprep.subr.bf16.mxu0 0
    %1295 = vmatpush1.bf16.msra.mxu0 0
    %1296 = vmatprep.mubr.bf16.mxu0 0
    %1297 = vmatmul.mubr.bf16.gmra.mrb[0].mxu0 %v1208
    %v1298 = vpop.f32.mrb[0].mxu0
    %v1299 = vadd.f32 0.0, %v1298
    %v1300 = vpop.f32.mrb[0].mxu0
    %v1301 = vpop.f32.mrb[0].mxu0
    %v1302 = vadd.f32 0.0, %v1301
    %v1303 = vpop.f32.mrb[0].mxu0
    %1304 = vmatprep.mubr.bf16.mxu0 0
    %1305 = vmatmul.mubr.bf16.gmra.mrb[0].mxu0 %v1209
    %v1306 = vpop.f32.mrb[0].mxu0
    %v1307 = vadd.f32 0.0, %v1306
    %v1308 = vpop.f32.mrb[0].mxu0
    %v1309 = vpop.f32.mrb[0].mxu0
    %v1310 = vadd.f32 0.0, %v1309
    %v1311 = vpop.f32.mrb[0].mxu0
    %1312 = vmatprep.mubr.bf16.mxu0 0
    %1313 = vmatmul.mubr.bf16.gmra.mrb[0].mxu0 %v1210
    %v1314 = vpop.f32.mrb[0].mxu0
    %v1315 = vadd.f32 0.0, %v1314
    %v1316 = vpop.f32.mrb[0].mxu0
    %v1317 = vpop.f32.mrb[0].mxu0
    %v1318 = vadd.f32 0.0, %v1317
    %v1319 = vpop.f32.mrb[0].mxu0
    %1320 = vmatprep.mubr.bf16.mxu0 0
    %1321 = vmatmul.mubr.bf16.gmra.mrb[0].mxu0 %v1211
    %v1322 = vpop.f32.mrb[0].mxu0
    %v1323 = vadd.f32 0.0, %v1322
    %v1324 = vpop.f32.mrb[0].mxu0
    %v1325 = vpop.f32.mrb[0].mxu0
    %v1326 = vadd.f32 0.0, %v1325
    %v1327 = vpop.f32.mrb[0].mxu0
    %1328 = vdwg.mxu0
    %v1329 = vld [vmem:[%s9] sm:$0x1]
    %v1331 = vlaneseq
    %v1332 = vshrl.u32 %v1331, 7
    %v1333 = vsub.s32 0, %v1332
    %v1334 = vrot.slane %v1329, %v1333
    %v1336 = vadd.f32 %v1299, %v1334
    %v1337 = vadd.f32 %v1302, %v1334
    %v1338 = vadd.f32 %v1307, %v1334
    %v1339 = vadd.f32 %v1310, %v1334
    %v1340 = vadd.f32 %v1315, %v1334
    %v1341 = vadd.f32 %v1318, %v1334
    %v1342 = vadd.f32 %v1323, %v1334
    %v1343 = vadd.f32 %v1326, %v1334
    %1344 = vst [vmem:[#allocation3] sm:$0xff] %v1336
    %1345 = vst [vmem:[#allocation3 + $0x8] sm:$0xff] %v1337
    %1346 = vst [vmem:[#allocation3 + $0x10] sm:$0xff] %v1338
    %1347 = vst [vmem:[#allocation3 + $0x18] sm:$0xff] %v1339
    %1348 = vst [vmem:[#allocation3 + $0x20] sm:$0xff] %v1340
    %1349 = vst [vmem:[#allocation3 + $0x28] sm:$0xff] %v1341
    %1350 = vst [vmem:[#allocation3 + $0x30] sm:$0xff] %v1342
    %1351 = vst [vmem:[#allocation3 + $0x38] sm:$0xff] %v1343
    %vm1352 = vcmp.le.s32.totalorder %v51, 0
    %vm1353 = vcmp.le.s32.totalorder %v51, 1
    %vm1354 = vcmp.le.s32.totalorder %v51, 2
    %vm1355 = vcmp.le.s32.totalorder %v51, 3
    %vm1356 = vcmp.le.s32.totalorder %v51, 4
    %vm1357 = vcmp.le.s32.totalorder %v51, 5
    %vm1358 = vcmp.le.s32.totalorder %v51, 6
    %vm1359 = vcmp.le.s32.totalorder %v51, 7
    %v1360 = vsel %vm1352, -1e+09, 0.0
    %v1361 = vsel %vm1353, -1e+09, 0.0
    %v1362 = vsel %vm1354, -1e+09, 0.0
    %v1363 = vsel %vm1355, -1e+09, 0.0
    %v1364 = vsel %vm1356, -1e+09, 0.0
    %v1365 = vsel %vm1357, -1e+09, 0.0
    %v1366 = vsel %vm1358, -1e+09, 0.0
    %v1367 = vsel %vm1359, -1e+09, 0.0
    %v1368 = vld [vmem:[#allocation3] sm:$0xff]
    %v1369 = vld [vmem:[%s7] sm:$0xf]
    %v1370 = vld [vmem:[%s7 + $0x4] sm:$0xf]
    %v1371 = vld [vmem:[%s7 + $0x8] sm:$0xf]
    %v1372 = vld [vmem:[%s7 + $0xc] sm:$0xf]
    %v1373 = vld [vmem:[%s7 + $0x10] sm:$0xf]
    %v1374 = vld [vmem:[%s7 + $0x14] sm:$0xf]
    %v1375 = vld [vmem:[%s7 + $0x18] sm:$0xf]
    %v1376 = vld [vmem:[%s7 + $0x1c] sm:$0xf]
    %v1377 = vld [vmem:[%s7 + $0x20] sm:$0xf]
    %v1378 = vld [vmem:[%s7 + $0x24] sm:$0xf]
    %v1379 = vld [vmem:[%s7 + $0x28] sm:$0xf]
    %v1380 = vld [vmem:[%s7 + $0x2c] sm:$0xf]
    %v1381 = vld [vmem:[%s7 + $0x30] sm:$0xf]
    %v1382 = vld [vmem:[%s7 + $0x34] sm:$0xf]
    %v1383 = vld [vmem:[%s7 + $0x38] sm:$0xf]
    %v1384 = vld [vmem:[%s7 + $0x3c] sm:$0xf]
    %v1401 = vunpack.c.l.b16 %v1369
    %v1402 = vunpack.c.l.b16 %v1370
    %v1403 = vunpack.c.l.b16 %v1371
    %v1404 = vunpack.c.l.b16 %v1372
    %v1405 = vunpack.c.l.b16 %v1373
    %v1406 = vunpack.c.l.b16 %v1374
    %v1407 = vunpack.c.l.b16 %v1375
    %v1408 = vunpack.c.l.b16 %v1376
    %v1409 = vunpack.c.l.b16 %v1377
    %v1410 = vunpack.c.l.b16 %v1378
    %v1411 = vunpack.c.l.b16 %v1379
    %v1412 = vunpack.c.l.b16 %v1380
    %v1413 = vunpack.c.l.b16 %v1381
    %v1414 = vunpack.c.l.b16 %v1382
    %v1415 = vunpack.c.l.b16 %v1383
    %v1416 = vunpack.c.l.b16 %v1384
    %v1417 = vpack.c.b16 %v1402, %v1401
    %v1418 = vpack.c.b16 %v1404, %v1403
    %v1419 = vpack.c.b16 %v1406, %v1405
    %v1420 = vpack.c.b16 %v1408, %v1407
    %v1421 = vpack.c.b16 %v1410, %v1409
    %v1422 = vpack.c.b16 %v1412, %v1411
    %v1423 = vpack.c.b16 %v1414, %v1413
    %v1424 = vpack.c.b16 %v1416, %v1415
    %1433 = vmatprep.subr.bf16.mxu0 0
    %1434 = vmatpush1.bf16.msra.mxu0 %v1417
    %1435 = vmatprep.subr.bf16.mxu0 0
    %1436 = vmatpush1.bf16.msra.mxu0 %v1418
    %1437 = vmatprep.subr.bf16.mxu0 0
    %1438 = vmatpush1.bf16.msra.mxu0 %v1419
    %1439 = vmatprep.subr.bf16.mxu0 0
    %1440 = vmatpush1.bf16.msra.mxu0 %v1420
    %1441 = vmatprep.subr.bf16.mxu0 0
    %1442 = vmatpush1.bf16.msra.mxu0 %v1421
    %1443 = vmatprep.subr.bf16.mxu0 0
    %1444 = vmatpush1.bf16.msra.mxu0 %v1422
    %1445 = vmatprep.subr.bf16.mxu0 0
    %1446 = vmatpush1.bf16.msra.mxu0 %v1423
    %1447 = vmatprep.subr.bf16.mxu0 0
    %1448 = vmatpush1.bf16.msra.mxu0 %v1424
    %1449 = vmatprep.subr.bf16.mxu0 0
    %1450 = vmatpush1.bf16.msra.mxu0 0
    %1451 = vmatprep.subr.bf16.mxu0 0
    %1452 = vmatpush1.bf16.msra.mxu0 0
    %1453 = vmatprep.subr.bf16.mxu0 0
    %1454 = vmatpush1.bf16.msra.mxu0 0
    %1455 = vmatprep.subr.bf16.mxu0 0
    %1456 = vmatpush1.bf16.msra.mxu0 0
    %1457 = vmatprep.subr.bf16.mxu0 0
    %1458 = vmatpush1.bf16.msra.mxu0 0
    %1459 = vmatprep.subr.bf16.mxu0 0
    %1460 = vmatpush1.bf16.msra.mxu0 0
    %1461 = vmatprep.subr.bf16.mxu0 0
    %1462 = vmatpush1.bf16.msra.mxu0 0
    %1463 = vmatprep.subr.bf16.mxu0 0
    %1464 = vmatpush1.bf16.msra.mxu0 0
    %1465 = vmatprep.mubr.bf16.mxu0 0
    %1466 = vmatmul.mubr.bf16.gmra.mrb[0].mxu0 0
    %v1467 = vpop.f32.mrb[0].mxu0
    %v1468 = vadd.f32 0.0, %v1467
    %v1469 = vpop.f32.mrb[0].mxu0
    %v1470 = vpop.f32.mrb[0].mxu0
    %v1471 = vpop.f32.mrb[0].mxu0
    %1472 = vdwg.mxu0
    %v1473 = vadd.f32 %v1368, %v1468
    %v1474 = vpack.c.bf16 %v1163, %v1163
    %v1475 = vld [vmem:[%s8] sm:$0xf]
    %v1476 = vld [vmem:[%s8 + $0x4] sm:$0xf]
    %v1477 = vld [vmem:[%s8 + $0x8] sm:$0xf]
    %v1478 = vld [vmem:[%s8 + $0xc] sm:$0xf]
    %v1479 = vld [vmem:[%s8 + $0x10] sm:$0xf]
    %v1480 = vld [vmem:[%s8 + $0x14] sm:$0xf]
    %v1481 = vld [vmem:[%s8 + $0x18] sm:$0xf]
    %v1482 = vld [vmem:[%s8 + $0x1c] sm:$0xf]
    %v1483 = vld [vmem:[%s8 + $0x20] sm:$0xf]
    %v1484 = vld [vmem:[%s8 + $0x24] sm:$0xf]
    %v1485 = vld [vmem:[%s8 + $0x28] sm:$0xf]
    %v1486 = vld [vmem:[%s8 + $0x2c] sm:$0xf]
    %v1487 = vld [vmem:[%s8 + $0x30] sm:$0xf]
    %v1488 = vld [vmem:[%s8 + $0x34] sm:$0xf]
    %v1489 = vld [vmem:[%s8 + $0x38] sm:$0xf]
    %v1490 = vld [vmem:[%s8 + $0x3c] sm:$0xf]
    %v1507 = vunpack.c.l.b16 %v1475
    %v1508 = vunpack.c.l.b16 %v1476
    %v1509 = vunpack.c.l.b16 %v1477
    %v1510 = vunpack.c.l.b16 %v1478
    %v1511 = vunpack.c.l.b16 %v1479
    %v1512 = vunpack.c.l.b16 %v1480
    %v1513 = vunpack.c.l.b16 %v1481
    %v1514 = vunpack.c.l.b16 %v1482
    %v1515 = vunpack.c.l.b16 %v1483
    %v1516 = vunpack.c.l.b16 %v1484
    %v1517 = vunpack.c.l.b16 %v1485
    %v1518 = vunpack.c.l.b16 %v1486
    %v1519 = vunpack.c.l.b16 %v1487
    %v1520 = vunpack.c.l.b16 %v1488
    %v1521 = vunpack.c.l.b16 %v1489
    %v1522 = vunpack.c.l.b16 %v1490
    %v1523 = vpack.c.b16 %v1508, %v1507
    %v1524 = vpack.c.b16 %v1510, %v1509
    %v1525 = vpack.c.b16 %v1512, %v1511
    %v1526 = vpack.c.b16 %v1514, %v1513
    %v1527 = vpack.c.b16 %v1516, %v1515
    %v1528 = vpack.c.b16 %v1518, %v1517
    %v1529 = vpack.c.b16 %v1520, %v1519
    %v1530 = vpack.c.b16 %v1522, %v1521
    %1539 = vmatprep.subr.bf16.mxu0 0
    %1540 = vmatpush1.bf16.msra.mxu0 %v1523
    %1541 = vmatprep.subr.bf16.mxu0 0
    %1542 = vmatpush1.bf16.msra.mxu0 %v1524
    %1543 = vmatprep.subr.bf16.mxu0 0
    %1544 = vmatpush1.bf16.msra.mxu0 %v1525
    %1545 = vmatprep.subr.bf16.mxu0 0
    %1546 = vmatpush1.bf16.msra.mxu0 %v1526
    %1547 = vmatprep.subr.bf16.mxu0 0
    %1548 = vmatpush1.bf16.msra.mxu0 %v1527
    %1549 = vmatprep.subr.bf16.mxu0 0
    %1550 = vmatpush1.bf16.msra.mxu0 %v1528
    %1551 = vmatprep.subr.bf16.mxu0 0
    %1552 = vmatpush1.bf16.msra.mxu0 %v1529
    %1553 = vmatprep.subr.bf16.mxu0 0
    %1554 = vmatpush1.bf16.msra.mxu0 %v1530
    %1555 = vmatprep.subr.bf16.mxu0 0
    %1556 = vmatpush1.bf16.msra.mxu0 0
    %1557 = vmatprep.subr.bf16.mxu0 0
    %1558 = vmatpush1.bf16.msra.mxu0 0
    %1559 = vmatprep.subr.bf16.mxu0 0
    %1560 = vmatpush1.bf16.msra.mxu0 0
    %1561 = vmatprep.subr.bf16.mxu0 0
    %1562 = vmatpush1.bf16.msra.mxu0 0
    %1563 = vmatprep.subr.bf16.mxu0 0
    %1564 = vmatpush1.bf16.msra.mxu0 0
    %1565 = vmatprep.subr.bf16.mxu0 0
    %1566 = vmatpush1.bf16.msra.mxu0 0
    %1567 = vmatprep.subr.bf16.mxu0 0
    %1568 = vmatpush1.bf16.msra.mxu0 0
    %1569 = vmatprep.subr.bf16.mxu0 0
    %1570 = vmatpush1.bf16.msra.mxu0 0
    %1571 = vmatprep.mubr.bf16.mxu0 0
    %1572 = vmatmul.mubr.bf16.gmra.mrb[0].mxu0 %v1474
    %v1573 = vpop.f32.mrb[0].mxu0
    %v1574 = vadd.f32 0.0, %v1573
    %v1575 = vpop.f32.mrb[0].mxu0
    %v1576 = vpop.f32.mrb[0].mxu0
    %v1577 = vpop.f32.mrb[0].mxu0
    %1578 = vdwg.mxu0
    %v1579 = vadd.f32 %v1473, %v1574
    %v1580 = vtanh.pop %v1579
    %v1581 = vld [vmem:[#allocation2] sm:$0xf]
    %v1582 = vld [vmem:[#allocation2 + $0x4] sm:$0xf]
    %v1583 = vld [vmem:[#allocation2 + $0x8] sm:$0xf]
    %v1584 = vld [vmem:[#allocation2 + $0xc] sm:$0xf]
    %v1585 = vld [vmem:[#allocation2 + $0x10] sm:$0xf]
    %v1586 = vld [vmem:[#allocation2 + $0x14] sm:$0xf]
    %v1587 = vld [vmem:[#allocation2 + $0x18] sm:$0xf]
    %v1588 = vld [vmem:[#allocation2 + $0x1c] sm:$0xf]
    %v1589 = vunpack.c.l.bf16 %v1581
    %v1590 = vunpack.c.l.bf16 %v1582
    %v1591 = vunpack.c.l.bf16 %v1583
    %v1592 = vunpack.c.l.bf16 %v1584
    %v1593 = vunpack.c.l.bf16 %v1585
    %v1594 = vunpack.c.l.bf16 %v1586
    %v1595 = vunpack.c.l.bf16 %v1587
    %v1596 = vunpack.c.l.bf16 %v1588
    %v1597 = vmul.f32 %v1589, %v1580
    %v1598 = vmul.f32 %v1590, %v1580
    %v1599 = vmul.f32 %v1591, %v1580
    %v1600 = vmul.f32 %v1592, %v1580
    %v1601 = vmul.f32 %v1593, %v1580
    %v1602 = vmul.f32 %v1594, %v1580
    %v1603 = vmul.f32 %v1595, %v1580
    %v1604 = vmul.f32 %v1596, %v1580
    %1605 = vadd.xlane.f32.xlu0 %v1597
    %v1606 = vpop.xlane.xlu0 %1605
    %1607 = vadd.xlane.f32.xlu0 %v1598
    %v1608 = vpop.xlane.xlu0 %1607
    %1609 = vadd.xlane.f32.xlu0 %v1599
    %v1610 = vpop.xlane.xlu0 %1609
    %1611 = vadd.xlane.f32.xlu0 %v1600
    %v1612 = vpop.xlane.xlu0 %1611
    %1613 = vadd.xlane.f32.xlu0 %v1601
    %v1614 = vpop.xlane.xlu0 %1613
    %1615 = vadd.xlane.f32.xlu0 %v1602
    %v1616 = vpop.xlane.xlu0 %1615
    %1617 = vadd.xlane.f32.xlu0 %v1603
    %v1618 = vpop.xlane.xlu0 %1617
    %1619 = vadd.xlane.f32.xlu0 %v1604
    %v1620 = vpop.xlane.xlu0 %1619
    %v1621 = vadd.f32 %v1606, %v1360
    %v1622 = vadd.f32 %v1608, %v1361
    %v1623 = vadd.f32 %v1610, %v1362
    %v1624 = vadd.f32 %v1612, %v1363
    %v1625 = vadd.f32 %v1614, %v1364
    %v1626 = vadd.f32 %v1616, %v1365
    %v1627 = vadd.f32 %v1618, %v1366
    %v1628 = vadd.f32 %v1620, %v1367
    %vm1629 = vcmask 7168
    %v1630 = vsel %vm1629, %v1621, -inf
    %v1631 = vsel %vm1629, %v1622, -inf
    %v1632 = vsel %vm1629, %v1623, -inf
    %v1633 = vsel %vm1629, %v1624, -inf
    %v1634 = vsel %vm1629, %v1625, -inf
    %v1635 = vmax.f32 %v1630, %v1634
    %v1636 = vsel %vm1629, %v1626, -inf
    %v1637 = vmax.f32 %v1631, %v1636
    %v1638 = vsel %vm1629, %v1627, -inf
    %v1639 = vmax.f32 %v1632, %v1638
    %v1640 = vsel %vm1629, %v1628, -inf
    %v1641 = vmax.f32 %v1633, %v1640
    %v1642 = vmax.f32 %v1635, %v1637
    %v1643 = vmax.f32 %v1639, %v1641
    %v1644 = vmax.f32 %v1642, %v1643
    %v1645 = vsub.f32 %v1621, %v1644
    %v1646 = vsub.f32 %v1622, %v1644
    %v1647 = vsub.f32 %v1623, %v1644
    %v1648 = vsub.f32 %v1624, %v1644
    %v1649 = vsub.f32 %v1625, %v1644
    %v1650 = vsub.f32 %v1626, %v1644
    %v1651 = vsub.f32 %v1627, %v1644
    %v1652 = vsub.f32 %v1628, %v1644
    %v1653 = vmul.f32 %v1645, 1.442695
    %v1654 = vpow.pop %v1653
    %v1655 = vmul.f32 %v1646, 1.442695
    %v1656 = vpow.pop %v1655
    %v1657 = vmul.f32 %v1647, 1.442695
    %v1658 = vpow.pop %v1657
    %v1659 = vmul.f32 %v1648, 1.442695
    %v1660 = vpow.pop %v1659
    %v1661 = vmul.f32 %v1649, 1.442695
    %v1662 = vpow.pop %v1661
    %v1663 = vmul.f32 %v1650, 1.442695
    %v1664 = vpow.pop %v1663
    %v1665 = vmul.f32 %v1651, 1.442695
    %v1666 = vpow.pop %v1665
    %v1667 = vmul.f32 %v1652, 1.442695
    %v1668 = vpow.pop %v1667
    %v1669 = vsel %vm1629, %v1654, 0.0
    %v1670 = vsel %vm1629, %v1656, 0.0
    %v1671 = vadd.f32 %v1669, %v1670
    %v1672 = vsel %vm1629, %v1658, 0.0
    %v1673 = vadd.f32 %v1671, %v1672
    %v1674 = vsel %vm1629, %v1660, 0.0
    %v1675 = vadd.f32 %v1673, %v1674
    %v1676 = vsel %vm1629, %v1662, 0.0
    %v1677 = vadd.f32 %v1675, %v1676
    %v1678 = vsel %vm1629, %v1664, 0.0
    %v1679 = vadd.f32 %v1677, %v1678
    %v1680 = vsel %vm1629, %v1666, 0.0
    %v1681 = vadd.f32 %v1679, %v1680
    %v1682 = vsel %vm1629, %v1668, 0.0
    %v1683 = vadd.f32 %v1681, %v1682
    %v1684 = vrcp.pop %v1683
    %v1685 = vmul.f32 %v1654, %v1684
    %v1686 = vmul.f32 %v1656, %v1684
    %v1687 = vmul.f32 %v1658, %v1684
    %v1688 = vmul.f32 %v1660, %v1684
    %v1689 = vmul.f32 %v1662, %v1684
    %v1690 = vmul.f32 %v1664, %v1684
    %v1691 = vmul.f32 %v1666, %v1684
    %v1692 = vmul.f32 %v1668, %v1684
    %1694 = vset.pattern.permute.xlu0 0
    %1695 = vperm.xlu0 %1694, %v1685
    %v1696 = vpop.permute.xlu0 %1695
    %1699 = vset.pattern.permute.xlu0 0
    %1700 = vperm.xlu0 %1699, %v1686
    %v1701 = vpop.permute.xlu0 %1700
    %1704 = vset.pattern.permute.xlu0 0
    %1705 = vperm.xlu0 %1704, %v1687
    %v1706 = vpop.permute.xlu0 %1705
    %1709 = vset.pattern.permute.xlu0 0
    %1710 = vperm.xlu0 %1709, %v1688
    %v1711 = vpop.permute.xlu0 %1710
    %1714 = vset.pattern.permute.xlu0 0
    %1715 = vperm.xlu0 %1714, %v1689
    %v1716 = vpop.permute.xlu0 %1715
    %1719 = vset.pattern.permute.xlu0 0
    %1720 = vperm.xlu0 %1719, %v1690
    %v1721 = vpop.permute.xlu0 %1720
    %1724 = vset.pattern.permute.xlu0 0
    %1725 = vperm.xlu0 %1724, %v1691
    %v1726 = vpop.permute.xlu0 %1725
    %1729 = vset.pattern.permute.xlu0 0
    %1730 = vperm.xlu0 %1729, %v1692
    %v1731 = vpop.permute.xlu0 %1730
    %v1733 = vmul.f32 %v1696, %v1589
    %v1734 = vmul.f32 %v1701, %v1590
    %v1735 = vmul.f32 %v1706, %v1591
    %v1736 = vmul.f32 %v1711, %v1592
    %v1737 = vmul.f32 %v1716, %v1593
    %v1738 = vmul.f32 %v1721, %v1594
    %v1739 = vmul.f32 %v1726, %v1595
    %v1740 = vmul.f32 %v1731, %v1596
    %v1741 = vadd.f32 %v1733, %v1734
    %v1742 = vadd.f32 %v1741, %v1735
    %v1743 = vadd.f32 %v1742, %v1736
    %v1744 = vadd.f32 %v1743, %v1737
    %v1745 = vadd.f32 %v1744, %v1738
    %v1746 = vadd.f32 %v1745, %v1739
    %v1747 = vadd.f32 %v1746, %v1740
    %v1748 = vpack.c.bf16 %v1580, %v1580
    %v1749 = vld [vmem:[%s10] sm:$0xf]
    %v1750 = vld [vmem:[%s10 + $0x4] sm:$0xf]
    %v1751 = vld [vmem:[%s10 + $0x8] sm:$0xf]
    %v1752 = vld [vmem:[%s10 + $0xc] sm:$0xf]
    %v1753 = vld [vmem:[%s10 + $0x10] sm:$0xf]
    %v1754 = vld [vmem:[%s10 + $0x14] sm:$0xf]
    %v1755 = vld [vmem:[%s10 + $0x18] sm:$0xf]
    %v1756 = vld [vmem:[%s10 + $0x1c] sm:$0xf]
    %v1757 = vld [vmem:[%s10 + $0x20] sm:$0xf]
    %v1758 = vld [vmem:[%s10 + $0x24] sm:$0xf]
    %v1759 = vld [vmem:[%s10 + $0x28] sm:$0xf]
    %v1760 = vld [vmem:[%s10 + $0x2c] sm:$0xf]
    %v1761 = vld [vmem:[%s10 + $0x30] sm:$0xf]
    %v1762 = vld [vmem:[%s10 + $0x34] sm:$0xf]
    %v1763 = vld [vmem:[%s10 + $0x38] sm:$0xf]
    %v1764 = vld [vmem:[%s10 + $0x3c] sm:$0xf]
    %v1765 = vpack.c.bf16 %v1747, %v1747
    %v1766 = vld [vmem:[%s11] sm:$0xf]
    %v1767 = vld [vmem:[%s11 + $0x4] sm:$0xf]
    %v1768 = vld [vmem:[%s11 + $0x8] sm:$0xf]
    %v1769 = vld [vmem:[%s11 + $0xc] sm:$0xf]
    %v1770 = vld [vmem:[%s11 + $0x10] sm:$0xf]
    %v1771 = vld [vmem:[%s11 + $0x14] sm:$0xf]
    %v1772 = vld [vmem:[%s11 + $0x18] sm:$0xf]
    %v1773 = vld [vmem:[%s11 + $0x1c] sm:$0xf]
    %v1774 = vld [vmem:[%s11 + $0x20] sm:$0xf]
    %v1775 = vld [vmem:[%s11 + $0x24] sm:$0xf]
    %v1776 = vld [vmem:[%s11 + $0x28] sm:$0xf]
    %v1777 = vld [vmem:[%s11 + $0x2c] sm:$0xf]
    %v1778 = vld [vmem:[%s11 + $0x30] sm:$0xf]
    %v1779 = vld [vmem:[%s11 + $0x34] sm:$0xf]
    %v1780 = vld [vmem:[%s11 + $0x38] sm:$0xf]
    %v1781 = vld [vmem:[%s11 + $0x3c] sm:$0xf]
    %v1798 = vunpack.c.l.b16 %v1766
    %v1799 = vunpack.c.l.b16 %v1767
    %v1800 = vunpack.c.l.b16 %v1768
    %v1801 = vunpack.c.l.b16 %v1769
    %v1802 = vunpack.c.l.b16 %v1770
    %v1803 = vunpack.c.l.b16 %v1771
    %v1804 = vunpack.c.l.b16 %v1772
    %v1805 = vunpack.c.l.b16 %v1773
    %v1806 = vunpack.c.l.b16 %v1774
    %v1807 = vunpack.c.l.b16 %v1775
    %v1808 = vunpack.c.l.b16 %v1776
    %v1809 = vunpack.c.l.b16 %v1777
    %v1810 = vunpack.c.l.b16 %v1778
    %v1811 = vunpack.c.l.b16 %v1779
    %v1812 = vunpack.c.l.b16 %v1780
    %v1813 = vunpack.c.l.b16 %v1781
    %v1814 = vpack.c.b16 %v1799, %v1798
    %v1815 = vpack.c.b16 %v1801, %v1800
    %v1816 = vpack.c.b16 %v1803, %v1802
    %v1817 = vpack.c.b16 %v1805, %v1804
    %v1818 = vpack.c.b16 %v1807, %v1806
    %v1819 = vpack.c.b16 %v1809, %v1808
    %v1820 = vpack.c.b16 %v1811, %v1810
    %v1821 = vpack.c.b16 %v1813, %v1812
    %1830 = vmatprep.subr.bf16.mxu0 0
    %1831 = vmatpush1.bf16.msra.mxu0 %v1814
    %1832 = vmatprep.subr.bf16.mxu0 0
    %1833 = vmatpush1.bf16.msra.mxu0 %v1815
    %1834 = vmatprep.subr.bf16.mxu0 0
    %1835 = vmatpush1.bf16.msra.mxu0 %v1816
    %1836 = vmatprep.subr.bf16.mxu0 0
    %1837 = vmatpush1.bf16.msra.mxu0 %v1817
    %1838 = vmatprep.subr.bf16.mxu0 0
    %1839 = vmatpush1.bf16.msra.mxu0 %v1818
    %1840 = vmatprep.subr.bf16.mxu0 0
    %1841 = vmatpush1.bf16.msra.mxu0 %v1819
    %1842 = vmatprep.subr.bf16.mxu0 0
    %1843 = vmatpush1.bf16.msra.mxu0 %v1820
    %1844 = vmatprep.subr.bf16.mxu0 0
    %1845 = vmatpush1.bf16.msra.mxu0 %v1821
    %1846 = vmatprep.subr.bf16.mxu0 0
    %1847 = vmatpush1.bf16.msra.mxu0 0
    %1848 = vmatprep.subr.bf16.mxu0 0
    %1849 = vmatpush1.bf16.msra.mxu0 0
    %1850 = vmatprep.subr.bf16.mxu0 0
    %1851 = vmatpush1.bf16.msra.mxu0 0
    %1852 = vmatprep.subr.bf16.mxu0 0
    %1853 = vmatpush1.bf16.msra.mxu0 0
    %1854 = vmatprep.subr.bf16.mxu0 0
    %1855 = vmatpush1.bf16.msra.mxu0 0
    %1856 = vmatprep.subr.bf16.mxu0 0
    %1857 = vmatpush1.bf16.msra.mxu0 0
    %1858 = vmatprep.subr.bf16.mxu0 0
    %1859 = vmatpush1.bf16.msra.mxu0 0
    %1860 = vmatprep.subr.bf16.mxu0 0
    %1861 = vmatpush1.bf16.msra.mxu0 0
    %1862 = vmatprep.mubr.bf16.mxu0 0
    %1863 = vmatmul.mubr.bf16.gmra.mrb[0].mxu0 %v1765
    %v1864 = vpop.f32.mrb[0].mxu0
    %v1865 = vadd.f32 0.0, %v1864
    %v1866 = vpop.f32.mrb[0].mxu0
    %v1867 = vpop.f32.mrb[0].mxu0
    %v1868 = vpop.f32.mrb[0].mxu0
    %1869 = vdwg.mxu0
    %v1886 = vunpack.c.l.b16 %v1749
    %v1887 = vunpack.c.l.b16 %v1750
    %v1888 = vunpack.c.l.b16 %v1751
    %v1889 = vunpack.c.l.b16 %v1752
    %v1890 = vunpack.c.l.b16 %v1753
    %v1891 = vunpack.c.l.b16 %v1754
    %v1892 = vunpack.c.l.b16 %v1755
    %v1893 = vunpack.c.l.b16 %v1756
    %v1894 = vunpack.c.l.b16 %v1757
    %v1895 = vunpack.c.l.b16 %v1758
    %v1896 = vunpack.c.l.b16 %v1759
    %v1897 = vunpack.c.l.b16 %v1760
    %v1898 = vunpack.c.l.b16 %v1761
    %v1899 = vunpack.c.l.b16 %v1762
    %v1900 = vunpack.c.l.b16 %v1763
    %v1901 = vunpack.c.l.b16 %v1764
    %v1902 = vpack.c.b16 %v1887, %v1886
    %v1903 = vpack.c.b16 %v1889, %v1888
    %v1904 = vpack.c.b16 %v1891, %v1890
    %v1905 = vpack.c.b16 %v1893, %v1892
    %v1906 = vpack.c.b16 %v1895, %v1894
    %v1907 = vpack.c.b16 %v1897, %v1896
    %v1908 = vpack.c.b16 %v1899, %v1898
    %v1909 = vpack.c.b16 %v1901, %v1900
    %1918 = vmatprep.subr.bf16.mxu0 0
    %1919 = vmatpush1.bf16.msra.mxu0 %v1902
    %1920 = vmatprep.subr.bf16.mxu0 0
    %1921 = vmatpush1.bf16.msra.mxu0 %v1903
    %1922 = vmatprep.subr.bf16.mxu0 0
    %1923 = vmatpush1.bf16.msra.mxu0 %v1904
    %1924 = vmatprep.subr.bf16.mxu0 0
    %1925 = vmatpush1.bf16.msra.mxu0 %v1905
    %1926 = vmatprep.subr.bf16.mxu0 0
    %1927 = vmatpush1.bf16.msra.mxu0 %v1906
    %1928 = vmatprep.subr.bf16.mxu0 0
    %1929 = vmatpush1.bf16.msra.mxu0 %v1907
    %1930 = vmatprep.subr.bf16.mxu0 0
    %1931 = vmatpush1.bf16.msra.mxu0 %v1908
    %1932 = vmatprep.subr.bf16.mxu0 0
    %1933 = vmatpush1.bf16.msra.mxu0 %v1909
    %1934 = vmatprep.subr.bf16.mxu0 0
    %1935 = vmatpush1.bf16.msra.mxu0 0
    %1936 = vmatprep.subr.bf16.mxu0 0
    %1937 = vmatpush1.bf16.msra.mxu0 0
    %1938 = vmatprep.subr.bf16.mxu0 0
    %1939 = vmatpush1.bf16.msra.mxu0 0
    %1940 = vmatprep.subr.bf16.mxu0 0
    %1941 = vmatpush1.bf16.msra.mxu0 0
    %1942 = vmatprep.subr.bf16.mxu0 0
    %1943 = vmatpush1.bf16.msra.mxu0 0
    %1944 = vmatprep.subr.bf16.mxu0 0
    %1945 = vmatpush1.bf16.msra.mxu0 0
    %1946 = vmatprep.subr.bf16.mxu0 0
    %1947 = vmatpush1.bf16.msra.mxu0 0
    %1948 = vmatprep.subr.bf16.mxu0 0
    %1949 = vmatpush1.bf16.msra.mxu0 0
    %1950 = vmatprep.mubr.bf16.mxu0 0
    %1951 = vmatmul.mubr.bf16.gmra.mrb[0].mxu0 %v1748
    %v1952 = vpop.f32.mrb[0].mxu0
    %v1953 = vadd.f32 %v1865, %v1952
    %v1954 = vpop.f32.mrb[0].mxu0
    %v1955 = vpop.f32.mrb[0].mxu0
    %v1956 = vpop.f32.mrb[0].mxu0
    %1957 = vdwg.mxu0
    %v1958 = vld [vmem:[%s12] sm:$0x1]
    %v1960 = vlaneseq
    %v1961 = vshrl.u32 %v1960, 7
    %v1962 = vsub.s32 0, %v1961
    %v1963 = vrot.slane %v1958, %v1962
    %v1965 = vadd.f32 %v1953, %v1963
    %v1966 = vtanh.pop %v1965
    %1967 = vst [vmem:[#allocation4] sm:$0xff] %v1966
    %1968 = vst.msk [vmem:[%s14] sm:$0xff] %vm1629, %v1685
    %1969 = vst.msk [vmem:[%s14 + $0x8] sm:$0xff] %vm1629, %v1686
    %1970 = vst.msk [vmem:[%s14 + $0x10] sm:$0xff] %vm1629, %v1687
    %1971 = vst.msk [vmem:[%s14 + $0x18] sm:$0xff] %vm1629, %v1688
    %1972 = vst.msk [vmem:[%s14 + $0x20] sm:$0xff] %vm1629, %v1689
    %1973 = vst.msk [vmem:[%s14 + $0x28] sm:$0xff] %vm1629, %v1690
    %1974 = vst.msk [vmem:[%s14 + $0x30] sm:$0xff] %vm1629, %v1691
    %1975 = vst.msk [vmem:[%s14 + $0x38] sm:$0xff] %vm1629, %v1692
    %s1976 = scalar_lea.vmem [#allocation3], 8
    %v1977 = vld [vmem:[%s1976] sm:$0xff]
    %v1978 = vpack.c.bf16 %v1966, %v1966
    %v1979 = vld [vmem:[%s7] sm:$0xf]
    %v1980 = vld [vmem:[%s7 + $0x4] sm:$0xf]
    %v1981 = vld [vmem:[%s7 + $0x8] sm:$0xf]
    %v1982 = vld [vmem:[%s7 + $0xc] sm:$0xf]
    %v1983 = vld [vmem:[%s7 + $0x10] sm:$0xf]
    %v1984 = vld [vmem:[%s7 + $0x14] sm:$0xf]
    %v1985 = vld [vmem:[%s7 + $0x18] sm:$0xf]
    %v1986 = vld [vmem:[%s7 + $0x1c] sm:$0xf]
    %v1987 = vld [vmem:[%s7 + $0x20] sm:$0xf]
    %v1988 = vld [vmem:[%s7 + $0x24] sm:$0xf]
    %v1989 = vld [vmem:[%s7 + $0x28] sm:$0xf]
    %v1990 = vld [vmem:[%s7 + $0x2c] sm:$0xf]
    %v1991 = vld [vmem:[%s7 + $0x30] sm:$0xf]
    %v1992 = vld [vmem:[%s7 + $0x34] sm:$0xf]
    %v1993 = vld [vmem:[%s7 + $0x38] sm:$0xf]
    %v1994 = vld [vmem:[%s7 + $0x3c] sm:$0xf]
    %v2011 = vunpack.c.l.b16 %v1979
    %v2012 = vunpack.c.l.b16 %v1980
    %v2013 = vunpack.c.l.b16 %v1981
    %v2014 = vunpack.c.l.b16 %v1982
    %v2015 = vunpack.c.l.b16 %v1983
    %v2016 = vunpack.c.l.b16 %v1984
    %v2017 = vunpack.c.l.b16 %v1985
    %v2018 = vunpack.c.l.b16 %v1986
    %v2019 = vunpack.c.l.b16 %v1987
    %v2020 = vunpack.c.l.b16 %v1988
    %v2021 = vunpack.c.l.b16 %v1989
    %v2022 = vunpack.c.l.b16 %v1990
    %v2023 = vunpack.c.l.b16 %v1991
    %v2024 = vunpack.c.l.b16 %v1992
    %v2025 = vunpack.c.l.b16 %v1993
    %v2026 = vunpack.c.l.b16 %v1994
    %v2027 = vpack.c.b16 %v2012, %v2011
    %v2028 = vpack.c.b16 %v2014, %v2013
    %v2029 = vpack.c.b16 %v2016, %v2015
    %v2030 = vpack.c.b16 %v2018, %v2017
    %v2031 = vpack.c.b16 %v2020, %v2019
    %v2032 = vpack.c.b16 %v2022, %v2021
    %v2033 = vpack.c.b16 %v2024, %v2023
    %v2034 = vpack.c.b16 %v2026, %v2025
    %2043 = vmatprep.subr.bf16.mxu0 0
    %2044 = vmatpush1.bf16.msra.mxu0 %v2027
    %2045 = vmatprep.subr.bf16.mxu0 0
    %2046 = vmatpush1.bf16.msra.mxu0 %v2028
    %2047 = vmatprep.subr.bf16.mxu0 0
    %2048 = vmatpush1.bf16.msra.mxu0 %v2029
    %2049 = vmatprep.subr.bf16.mxu0 0
    %2050 = vmatpush1.bf16.msra.mxu0 %v2030
    %2051 = vmatprep.subr.bf16.mxu0 0
    %2052 = vmatpush1.bf16.msra.mxu0 %v2031
    %2053 = vmatprep.subr.bf16.mxu0 0
    %2054 = vmatpush1.bf16.msra.mxu0 %v2032
    %2055 = vmatprep.subr.bf16.mxu0 0
    %2056 = vmatpush1.bf16.msra.mxu0 %v2033
    %2057 = vmatprep.subr.bf16.mxu0 0
    %2058 = vmatpush1.bf16.msra.mxu0 %v2034
    %2059 = vmatprep.subr.bf16.mxu0 0
    %2060 = vmatpush1.bf16.msra.mxu0 0
    %2061 = vmatprep.subr.bf16.mxu0 0
    %2062 = vmatpush1.bf16.msra.mxu0 0
    %2063 = vmatprep.subr.bf16.mxu0 0
    %2064 = vmatpush1.bf16.msra.mxu0 0
    %2065 = vmatprep.subr.bf16.mxu0 0
    %2066 = vmatpush1.bf16.msra.mxu0 0
    %2067 = vmatprep.subr.bf16.mxu0 0
    %2068 = vmatpush1.bf16.msra.mxu0 0
    %2069 = vmatprep.subr.bf16.mxu0 0
    %2070 = vmatpush1.bf16.msra.mxu0 0
    %2071 = vmatprep.subr.bf16.mxu0 0
    %2072 = vmatpush1.bf16.msra.mxu0 0
    %2073 = vmatprep.subr.bf16.mxu0 0
    %2074 = vmatpush1.bf16.msra.mxu0 0
    %2075 = vmatprep.mubr.bf16.mxu0 0
    %2076 = vmatmul.mubr.bf16.gmra.mrb[0].mxu0 %v1978
    %v2077 = vpop.f32.mrb[0].mxu0
    %v2078 = vadd.f32 0.0, %v2077
    %v2079 = vpop.f32.mrb[0].mxu0
    %v2080 = vpop.f32.mrb[0].mxu0
    %v2081 = vpop.f32.mrb[0].mxu0
    %2082 = vdwg.mxu0
    %v2083 = vadd.f32 %v1977, %v2078
    %v2084 = vld [vmem:[%s8] sm:$0xf]
    %v2085 = vld [vmem:[%s8 + $0x4] sm:$0xf]
    %v2086 = vld [vmem:[%s8 + $0x8] sm:$0xf]
    %v2087 = vld [vmem:[%s8 + $0xc] sm:$0xf]
    %v2088 = vld [vmem:[%s8 + $0x10] sm:$0xf]
    %v2089 = vld [vmem:[%s8 + $0x14] sm:$0xf]
    %v2090 = vld [vmem:[%s8 + $0x18] sm:$0xf]
    %v2091 = vld [vmem:[%s8 + $0x1c] sm:$0xf]
    %v2092 = vld [vmem:[%s8 + $0x20] sm:$0xf]
    %v2093 = vld [vmem:[%s8 + $0x24] sm:$0xf]
    %v2094 = vld [vmem:[%s8 + $0x28] sm:$0xf]
    %v2095 = vld [vmem:[%s8 + $0x2c] sm:$0xf]
    %v2096 = vld [vmem:[%s8 + $0x30] sm:$0xf]
    %v2097 = vld [vmem:[%s8 + $0x34] sm:$0xf]
    %v2098 = vld [vmem:[%s8 + $0x38] sm:$0xf]
    %v2099 = vld [vmem:[%s8 + $0x3c] sm:$0xf]
    %v2116 = vunpack.c.l.b16 %v2084
    %v2117 = vunpack.c.l.b16 %v2085
    %v2118 = vunpack.c.l.b16 %v2086
    %v2119 = vunpack.c.l.b16 %v2087
    %v2120 = vunpack.c.l.b16 %v2088
    %v2121 = vunpack.c.l.b16 %v2089
    %v2122 = vunpack.c.l.b16 %v2090
    %v2123 = vunpack.c.l.b16 %v2091
    %v2124 = vunpack.c.l.b16 %v2092
    %v2125 = vunpack.c.l.b16 %v2093
    %v2126 = vunpack.c.l.b16 %v2094
    %v2127 = vunpack.c.l.b16 %v2095
    %v2128 = vunpack.c.l.b16 %v2096
    %v2129 = vunpack.c.l.b16 %v2097
    %v2130 = vunpack.c.l.b16 %v2098
    %v2131 = vunpack.c.l.b16 %v2099
    %v2132 = vpack.c.b16 %v2117, %v2116
    %v2133 = vpack.c.b16 %v2119, %v2118
    %v2134 = vpack.c.b16 %v2121, %v2120
    %v2135 = vpack.c.b16 %v2123, %v2122
    %v2136 = vpack.c.b16 %v2125, %v2124
    %v2137 = vpack.c.b16 %v2127, %v2126
    %v2138 = vpack.c.b16 %v2129, %v2128
    %v2139 = vpack.c.b16 %v2131, %v2130
    %2148 = vmatprep.subr.bf16.mxu0 0
    %2149 = vmatpush1.bf16.msra.mxu0 %v2132
    %2150 = vmatprep.subr.bf16.mxu0 0
    %2151 = vmatpush1.bf16.msra.mxu0 %v2133
    %2152 = vmatprep.subr.bf16.mxu0 0
    %2153 = vmatpush1.bf16.msra.mxu0 %v2134
    %2154 = vmatprep.subr.bf16.mxu0 0
    %2155 = vmatpush1.bf16.msra.mxu0 %v2135
    %2156 = vmatprep.subr.bf16.mxu0 0
    %2157 = vmatpush1.bf16.msra.mxu0 %v2136
    %2158 = vmatprep.subr.bf16.mxu0 0
    %2159 = vmatpush1.bf16.msra.mxu0 %v2137
    %2160 = vmatprep.subr.bf16.mxu0 0
    %2161 = vmatpush1.bf16.msra.mxu0 %v2138
    %2162 = vmatprep.subr.bf16.mxu0 0
    %2163 = vmatpush1.bf16.msra.mxu0 %v2139
    %2164 = vmatprep.subr.bf16.mxu0 0
    %2165 = vmatpush1.bf16.msra.mxu0 0
    %2166 = vmatprep.subr.bf16.mxu0 0
    %2167 = vmatpush1.bf16.msra.mxu0 0
    %2168 = vmatprep.subr.bf16.mxu0 0
    %2169 = vmatpush1.bf16.msra.mxu0 0
    %2170 = vmatprep.subr.bf16.mxu0 0
    %2171 = vmatpush1.bf16.msra.mxu0 0
    %2172 = vmatprep.subr.bf16.mxu0 0
    %2173 = vmatpush1.bf16.msra.mxu0 0
    %2174 = vmatprep.subr.bf16.mxu0 0
    %2175 = vmatpush1.bf16.msra.mxu0 0
    %2176 = vmatprep.subr.bf16.mxu0 0
    %2177 = vmatpush1.bf16.msra.mxu0 0
    %2178 = vmatprep.subr.bf16.mxu0 0
    %2179 = vmatpush1.bf16.msra.mxu0 0
    %2180 = vmatprep.mubr.bf16.mxu0 0
    %2181 = vmatmul.mubr.bf16.gmra.mrb[0].mxu0 %v1748
    %v2182 = vpop.f32.mrb[0].mxu0
    %v2183 = vadd.f32 0.0, %v2182
    %v2184 = vpop.f32.mrb[0].mxu0
    %v2185 = vpop.f32.mrb[0].mxu0
    %v2186 = vpop.f32.mrb[0].mxu0
    %2187 = vdwg.mxu0
    %v2188 = vadd.f32 %v2083, %v2183
    %v2189 = vtanh.pop %v2188
    %v2190 = vld [vmem:[#allocation2] sm:$0xf]
    %v2191 = vld [vmem:[#allocation2 + $0x4] sm:$0xf]
    %v2192 = vld [vmem:[#allocation2 + $0x8] sm:$0xf]
    %v2193 = vld [vmem:[#allocation2 + $0xc] sm:$0xf]
    %v2194 = vld [vmem:[#allocation2 + $0x10] sm:$0xf]
    %v2195 = vld [vmem:[#allocation2 + $0x14] sm:$0xf]
    %v2196 = vld [vmem:[#allocation2 + $0x18] sm:$0xf]
    %v2197 = vld [vmem:[#allocation2 + $0x1c] sm:$0xf]
    %v2198 = vunpack.c.l.bf16 %v2190
    %v2199 = vunpack.c.l.bf16 %v2191
    %v2200 = vunpack.c.l.bf16 %v2192
    %v2201 = vunpack.c.l.bf16 %v2193
    %v2202 = vunpack.c.l.bf16 %v2194
    %v2203 = vunpack.c.l.bf16 %v2195
    %v2204 = vunpack.c.l.bf16 %v2196
    %v2205 = vunpack.c.l.bf16 %v2197
    %v2206 = vmul.f32 %v2198, %v2189
    %v2207 = vmul.f32 %v2199, %v2189
    %v2208 = vmul.f32 %v2200, %v2189
    %v2209 = vmul.f32 %v2201, %v2189
    %v2210 = vmul.f32 %v2202, %v2189
    %v2211 = vmul.f32 %v2203, %v2189
    %v2212 = vmul.f32 %v2204, %v2189
    %v2213 = vmul.f32 %v2205, %v2189
    %2214 = vadd.xlane.f32.xlu0 %v2206
    %v2215 = vpop.xlane.xlu0 %2214
    %2216 = vadd.xlane.f32.xlu0 %v2207
    %v2217 = vpop.xlane.xlu0 %2216
    %2218 = vadd.xlane.f32.xlu0 %v2208
    %v2219 = vpop.xlane.xlu0 %2218
    %2220 = vadd.xlane.f32.xlu0 %v2209
    %v2221 = vpop.xlane.xlu0 %2220
    %2222 = vadd.xlane.f32.xlu0 %v2210
    %v2223 = vpop.xlane.xlu0 %2222
    %2224 = vadd.xlane.f32.xlu0 %v2211
    %v2225 = vpop.xlane.xlu0 %2224
    %2226 = vadd.xlane.f32.xlu0 %v2212
    %v2227 = vpop.xlane.xlu0 %2226
    %2228 = vadd.xlane.f32.xlu0 %v2213
    %v2229 = vpop.xlane.xlu0 %2228
    %v2230 = vadd.f32 %v2215, %v1360
    %v2231 = vadd.f32 %v2217, %v1361
    %v2232 = vadd.f32 %v2219, %v1362
    %v2233 = vadd.f32 %v2221, %v1363
    %v2234 = vadd.f32 %v2223, %v1364
    %v2235 = vadd.f32 %v2225, %v1365
    %v2236 = vadd.f32 %v2227, %v1366
    %v2237 = vadd.f32 %v2229, %v1367
    %v2238 = vsel %vm1629, %v2230, -inf
    %v2239 = vsel %vm1629, %v2231, -inf
    %v2240 = vsel %vm1629, %v2232, -inf
    %v2241 = vsel %vm1629, %v2233, -inf
    %v2242 = vsel %vm1629, %v2234, -inf
    %v2243 = vmax.f32 %v2238, %v2242
    %v2244 = vsel %vm1629, %v2235, -inf
    %v2245 = vmax.f32 %v2239, %v2244
    %v2246 = vsel %vm1629, %v2236, -inf
    %v2247 = vmax.f32 %v2240, %v2246
    %v2248 = vsel %vm1629, %v2237, -inf
    %v2249 = vmax.f32 %v2241, %v2248
    %v2250 = vmax.f32 %v2243, %v2245
    %v2251 = vmax.f32 %v2247, %v2249
    %v2252 = vmax.f32 %v2250, %v2251
    %v2253 = vsub.f32 %v2230, %v2252
    %v2254 = vsub.f32 %v2231, %v2252
    %v2255 = vsub.f32 %v2232, %v2252
    %v2256 = vsub.f32 %v2233, %v2252
    %v2257 = vsub.f32 %v2234, %v2252
    %v2258 = vsub.f32 %v2235, %v2252
    %v2259 = vsub.f32 %v2236, %v2252
    %v2260 = vsub.f32 %v2237, %v2252
    %v2261 = vmul.f32 %v2253, 1.442695
    %v2262 = vpow.pop %v2261
    %v2263 = vmul.f32 %v2254, 1.442695
    %v2264 = vpow.pop %v2263
    %v2265 = vmul.f32 %v2255, 1.442695
    %v2266 = vpow.pop %v2265
    %v2267 = vmul.f32 %v2256, 1.442695
    %v2268 = vpow.pop %v2267
    %v2269 = vmul.f32 %v2257, 1.442695
    %v2270 = vpow.pop %v2269
    %v2271 = vmul.f32 %v2258, 1.442695
    %v2272 = vpow.pop %v2271
    %v2273 = vmul.f32 %v2259, 1.442695
    %v2274 = vpow.pop %v2273
    %v2275 = vmul.f32 %v2260, 1.442695
    %v2276 = vpow.pop %v2275
    %v2277 = vsel %vm1629, %v2262, 0.0
    %v2278 = vsel %vm1629, %v2264, 0.0
    %v2279 = vadd.f32 %v2277, %v2278
    %v2280 = vsel %vm1629, %v2266, 0.0
    %v2281 = vadd.f32 %v2279, %v2280
    %v2282 = vsel %vm1629, %v2268, 0.0
    %v2283 = vadd.f32 %v2281, %v2282
    %v2284 = vsel %vm1629, %v2270, 0.0
    %v2285 = vadd.f32 %v2283, %v2284
    %v2286 = vsel %vm1629, %v2272, 0.0
    %v2287 = vadd.f32 %v2285, %v2286
    %v2288 = vsel %vm1629, %v2274, 0.0
    %v2289 = vadd.f32 %v2287, %v2288
    %v2290 = vsel %vm1629, %v2276, 0.0
    %v2291 = vadd.f32 %v2289, %v2290
    %v2292 = vrcp.pop %v2291
    %v2293 = vmul.f32 %v2262, %v2292
    %v2294 = vmul.f32 %v2264, %v2292
    %v2295 = vmul.f32 %v2266, %v2292
    %v2296 = vmul.f32 %v2268, %v2292
    %v2297 = vmul.f32 %v2270, %v2292
    %v2298 = vmul.f32 %v2272, %v2292
    %v2299 = vmul.f32 %v2274, %v2292
    %v2300 = vmul.f32 %v2276, %v2292
    %2302 = vset.pattern.permute.xlu0 0
    %2303 = vperm.xlu0 %2302, %v2293
    %v2304 = vpop.permute.xlu0 %2303
    %2307 = vset.pattern.permute.xlu0 0
    %2308 = vperm.xlu0 %2307, %v2294
    %v2309 = vpop.permute.xlu0 %2308
    %2312 = vset.pattern.permute.xlu0 0
    %2313 = vperm.xlu0 %2312, %v2295
    %v2314 = vpop.permute.xlu0 %2313
    %2317 = vset.pattern.permute.xlu0 0
    %2318 = vperm.xlu0 %2317, %v2296
    %v2319 = vpop.permute.xlu0 %2318
    %2322 = vset.pattern.permute.xlu0 0
    %2323 = vperm.xlu0 %2322, %v2297
    %v2324 = vpop.permute.xlu0 %2323
    %2327 = vset.pattern.permute.xlu0 0
    %2328 = vperm.xlu0 %2327, %v2298
    %v2329 = vpop.permute.xlu0 %2328
    %2332 = vset.pattern.permute.xlu0 0
    %2333 = vperm.xlu0 %2332, %v2299
    %v2334 = vpop.permute.xlu0 %2333
    %2337 = vset.pattern.permute.xlu0 0
    %2338 = vperm.xlu0 %2337, %v2300
    %v2339 = vpop.permute.xlu0 %2338
    %v2341 = vmul.f32 %v2304, %v2198
    %v2342 = vmul.f32 %v2309, %v2199
    %v2343 = vmul.f32 %v2314, %v2200
    %v2344 = vmul.f32 %v2319, %v2201
    %v2345 = vmul.f32 %v2324, %v2202
    %v2346 = vmul.f32 %v2329, %v2203
    %v2347 = vmul.f32 %v2334, %v2204
    %v2348 = vmul.f32 %v2339, %v2205
    %v2349 = vadd.f32 %v2341, %v2342
    %v2350 = vadd.f32 %v2349, %v2343
    %v2351 = vadd.f32 %v2350, %v2344
    %v2352 = vadd.f32 %v2351, %v2345
    %v2353 = vadd.f32 %v2352, %v2346
    %v2354 = vadd.f32 %v2353, %v2347
    %v2355 = vadd.f32 %v2354, %v2348
    %v2356 = vpack.c.bf16 %v2189, %v2189
    %v2357 = vld [vmem:[%s10] sm:$0xf]
    %v2358 = vld [vmem:[%s10 + $0x4] sm:$0xf]
    %v2359 = vld [vmem:[%s10 + $0x8] sm:$0xf]
    %v2360 = vld [vmem:[%s10 + $0xc] sm:$0xf]
    %v2361 = vld [vmem:[%s10 + $0x10] sm:$0xf]
    %v2362 = vld [vmem:[%s10 + $0x14] sm:$0xf]
    %v2363 = vld [vmem:[%s10 + $0x18] sm:$0xf]
    %v2364 = vld [vmem:[%s10 + $0x1c] sm:$0xf]
    %v2365 = vld [vmem:[%s10 + $0x20] sm:$0xf]
    %v2366 = vld [vmem:[%s10 + $0x24] sm:$0xf]
    %v2367 = vld [vmem:[%s10 + $0x28] sm:$0xf]
    %v2368 = vld [vmem:[%s10 + $0x2c] sm:$0xf]
    %v2369 = vld [vmem:[%s10 + $0x30] sm:$0xf]
    %v2370 = vld [vmem:[%s10 + $0x34] sm:$0xf]
    %v2371 = vld [vmem:[%s10 + $0x38] sm:$0xf]
    %v2372 = vld [vmem:[%s10 + $0x3c] sm:$0xf]
    %v2373 = vpack.c.bf16 %v2355, %v2355
    %v2374 = vld [vmem:[%s11] sm:$0xf]
    %v2375 = vld [vmem:[%s11 + $0x4] sm:$0xf]
    %v2376 = vld [vmem:[%s11 + $0x8] sm:$0xf]
    %v2377 = vld [vmem:[%s11 + $0xc] sm:$0xf]
    %v2378 = vld [vmem:[%s11 + $0x10] sm:$0xf]
    %v2379 = vld [vmem:[%s11 + $0x14] sm:$0xf]
    %v2380 = vld [vmem:[%s11 + $0x18] sm:$0xf]
    %v2381 = vld [vmem:[%s11 + $0x1c] sm:$0xf]
    %v2382 = vld [vmem:[%s11 + $0x20] sm:$0xf]
    %v2383 = vld [vmem:[%s11 + $0x24] sm:$0xf]
    %v2384 = vld [vmem:[%s11 + $0x28] sm:$0xf]
    %v2385 = vld [vmem:[%s11 + $0x2c] sm:$0xf]
    %v2386 = vld [vmem:[%s11 + $0x30] sm:$0xf]
    %v2387 = vld [vmem:[%s11 + $0x34] sm:$0xf]
    %v2388 = vld [vmem:[%s11 + $0x38] sm:$0xf]
    %v2389 = vld [vmem:[%s11 + $0x3c] sm:$0xf]
    %v2406 = vunpack.c.l.b16 %v2374
    %v2407 = vunpack.c.l.b16 %v2375
    %v2408 = vunpack.c.l.b16 %v2376
    %v2409 = vunpack.c.l.b16 %v2377
    %v2410 = vunpack.c.l.b16 %v2378
    %v2411 = vunpack.c.l.b16 %v2379
    %v2412 = vunpack.c.l.b16 %v2380
    %v2413 = vunpack.c.l.b16 %v2381
    %v2414 = vunpack.c.l.b16 %v2382
    %v2415 = vunpack.c.l.b16 %v2383
    %v2416 = vunpack.c.l.b16 %v2384
    %v2417 = vunpack.c.l.b16 %v2385
    %v2418 = vunpack.c.l.b16 %v2386
    %v2419 = vunpack.c.l.b16 %v2387
    %v2420 = vunpack.c.l.b16 %v2388
    %v2421 = vunpack.c.l.b16 %v2389
    %v2422 = vpack.c.b16 %v2407, %v2406
    %v2423 = vpack.c.b16 %v2409, %v2408
    %v2424 = vpack.c.b16 %v2411, %v2410
    %v2425 = vpack.c.b16 %v2413, %v2412
    %v2426 = vpack.c.b16 %v2415, %v2414
    %v2427 = vpack.c.b16 %v2417, %v2416
    %v2428 = vpack.c.b16 %v2419, %v2418
    %v2429 = vpack.c.b16 %v2421, %v2420
    %2438 = vmatprep.subr.bf16.mxu0 0
    %2439 = vmatpush1.bf16.msra.mxu0 %v2422
    %2440 = vmatprep.subr.bf16.mxu0 0
    %2441 = vmatpush1.bf16.msra.mxu0 %v2423
    %2442 = vmatprep.subr.bf16.mxu0 0
    %2443 = vmatpush1.bf16.msra.mxu0 %v2424
    %2444 = vmatprep.subr.bf16.mxu0 0
    %2445 = vmatpush1.bf16.msra.mxu0 %v2425
    %2446 = vmatprep.subr.bf16.mxu0 0
    %2447 = vmatpush1.bf16.msra.mxu0 %v2426
    %2448 = vmatprep.subr.bf16.mxu0 0
    %2449 = vmatpush1.bf16.msra.mxu0 %v2427
    %2450 = vmatprep.subr.bf16.mxu0 0
    %2451 = vmatpush1.bf16.msra.mxu0 %v2428
    %2452 = vmatprep.subr.bf16.mxu0 0
    %2453 = vmatpush1.bf16.msra.mxu0 %v2429
    %2454 = vmatprep.subr.bf16.mxu0 0
    %2455 = vmatpush1.bf16.msra.mxu0 0
    %2456 = vmatprep.subr.bf16.mxu0 0
    %2457 = vmatpush1.bf16.msra.mxu0 0
    %2458 = vmatprep.subr.bf16.mxu0 0
    %2459 = vmatpush1.bf16.msra.mxu0 0
    %2460 = vmatprep.subr.bf16.mxu0 0
    %2461 = vmatpush1.bf16.msra.mxu0 0
    %2462 = vmatprep.subr.bf16.mxu0 0
    %2463 = vmatpush1.bf16.msra.mxu0 0
    %2464 = vmatprep.subr.bf16.mxu0 0
    %2465 = vmatpush1.bf16.msra.mxu0 0
    %2466 = vmatprep.subr.bf16.mxu0 0
    %2467 = vmatpush1.bf16.msra.mxu0 0
    %2468 = vmatprep.subr.bf16.mxu0 0
    %2469 = vmatpush1.bf16.msra.mxu0 0
    %2470 = vmatprep.mubr.bf16.mxu0 0
    %2471 = vmatmul.mubr.bf16.gmra.mrb[0].mxu0 %v2373
    %v2472 = vpop.f32.mrb[0].mxu0
    %v2473 = vadd.f32 0.0, %v2472
    %v2474 = vpop.f32.mrb[0].mxu0
    %v2475 = vpop.f32.mrb[0].mxu0
    %v2476 = vpop.f32.mrb[0].mxu0
    %2477 = vdwg.mxu0
    %v2494 = vunpack.c.l.b16 %v2357
    %v2495 = vunpack.c.l.b16 %v2358
    %v2496 = vunpack.c.l.b16 %v2359
    %v2497 = vunpack.c.l.b16 %v2360
    %v2498 = vunpack.c.l.b16 %v2361
    %v2499 = vunpack.c.l.b16 %v2362
    %v2500 = vunpack.c.l.b16 %v2363
    %v2501 = vunpack.c.l.b16 %v2364
    %v2502 = vunpack.c.l.b16 %v2365
    %v2503 = vunpack.c.l.b16 %v2366
    %v2504 = vunpack.c.l.b16 %v2367
    %v2505 = vunpack.c.l.b16 %v2368
    %v2506 = vunpack.c.l.b16 %v2369
    %v2507 = vunpack.c.l.b16 %v2370
    %v2508 = vunpack.c.l.b16 %v2371
    %v2509 = vunpack.c.l.b16 %v2372
    %v2510 = vpack.c.b16 %v2495, %v2494
    %v2511 = vpack.c.b16 %v2497, %v2496
    %v2512 = vpack.c.b16 %v2499, %v2498
    %v2513 = vpack.c.b16 %v2501, %v2500
    %v2514 = vpack.c.b16 %v2503, %v2502
    %v2515 = vpack.c.b16 %v2505, %v2504
    %v2516 = vpack.c.b16 %v2507, %v2506
    %v2517 = vpack.c.b16 %v2509, %v2508
    %2526 = vmatprep.subr.bf16.mxu0 0
    %2527 = vmatpush1.bf16.msra.mxu0 %v2510
    %2528 = vmatprep.subr.bf16.mxu0 0
    %2529 = vmatpush1.bf16.msra.mxu0 %v2511
    %2530 = vmatprep.subr.bf16.mxu0 0
    %2531 = vmatpush1.bf16.msra.mxu0 %v2512
    %2532 = vmatprep.subr.bf16.mxu0 0
    %2533 = vmatpush1.bf16.msra.mxu0 %v2513
    %2534 = vmatprep.subr.bf16.mxu0 0
    %2535 = vmatpush1.bf16.msra.mxu0 %v2514
    %2536 = vmatprep.subr.bf16.mxu0 0
    %2537 = vmatpush1.bf16.msra.mxu0 %v2515
    %2538 = vmatprep.subr.bf16.mxu0 0
    %2539 = vmatpush1.bf16.msra.mxu0 %v2516
    %2540 = vmatprep.subr.bf16.mxu0 0
    %2541 = vmatpush1.bf16.msra.mxu0 %v2517
    %2542 = vmatprep.subr.bf16.mxu0 0
    %2543 = vmatpush1.bf16.msra.mxu0 0
    %2544 = vmatprep.subr.bf16.mxu0 0
    %2545 = vmatpush1.bf16.msra.mxu0 0
    %2546 = vmatprep.subr.bf16.mxu0 0
    %2547 = vmatpush1.bf16.msra.mxu0 0
    %2548 = vmatprep.subr.bf16.mxu0 0
    %2549 = vmatpush1.bf16.msra.mxu0 0
    %2550 = vmatprep.subr.bf16.mxu0 0
    %2551 = vmatpush1.bf16.msra.mxu0 0
    %2552 = vmatprep.subr.bf16.mxu0 0
    %2553 = vmatpush1.bf16.msra.mxu0 0
    %2554 = vmatprep.subr.bf16.mxu0 0
    %2555 = vmatpush1.bf16.msra.mxu0 0
    %2556 = vmatprep.subr.bf16.mxu0 0
    %2557 = vmatpush1.bf16.msra.mxu0 0
    %2558 = vmatprep.mubr.bf16.mxu0 0
    %2559 = vmatmul.mubr.bf16.gmra.mrb[0].mxu0 %v2356
    %v2560 = vpop.f32.mrb[0].mxu0
    %v2561 = vadd.f32 %v2473, %v2560
    %v2562 = vpop.f32.mrb[0].mxu0
    %v2563 = vpop.f32.mrb[0].mxu0
    %v2564 = vpop.f32.mrb[0].mxu0
    %2565 = vdwg.mxu0
    %v2566 = vld [vmem:[%s12] sm:$0x1]
    %v2568 = vlaneseq
    %v2569 = vshrl.u32 %v2568, 7
    %v2570 = vsub.s32 0, %v2569
    %v2571 = vrot.slane %v2566, %v2570
    %v2573 = vadd.f32 %v2561, %v2571
    %v2574 = vtanh.pop %v2573
    %s2575 = scalar_lea.vmem [#allocation4], 8
    %2576 = vst [vmem:[%s2575] sm:$0xff] %v2574
    %s2577 = scalar_lea.vmem %s14, 64
    %2578 = vst.msk [vmem:[%s2577] sm:$0xff] %vm1629, %v2293
    %2579 = vst.msk [vmem:[%s2577 + $0x8] sm:$0xff] %vm1629, %v2294
    %2580 = vst.msk [vmem:[%s2577 + $0x10] sm:$0xff] %vm1629, %v2295
    %2581 = vst.msk [vmem:[%s2577 + $0x18] sm:$0xff] %vm1629, %v2296
    %2582 = vst.msk [vmem:[%s2577 + $0x20] sm:$0xff] %vm1629, %v2297
    %2583 = vst.msk [vmem:[%s2577 + $0x28] sm:$0xff] %vm1629, %v2298
    %2584 = vst.msk [vmem:[%s2577 + $0x30] sm:$0xff] %vm1629, %v2299
    %2585 = vst.msk [vmem:[%s2577 + $0x38] sm:$0xff] %vm1629, %v2300
    %s2586 = scalar_lea.vmem [#allocation3], 16
    %v2587 = vld [vmem:[%s2586] sm:$0xff]
    %v2588 = vpack.c.bf16 %v2574, %v2574
    %v2589 = vld [vmem:[%s7] sm:$0xf]
    %v2590 = vld [vmem:[%s7 + $0x4] sm:$0xf]
    %v2591 = vld [vmem:[%s7 + $0x8] sm:$0xf]
    %v2592 = vld [vmem:[%s7 + $0xc] sm:$0xf]
    %v2593 = vld [vmem:[%s7 + $0x10] sm:$0xf]
    %v2594 = vld [vmem:[%s7 + $0x14] sm:$0xf]
    %v2595 = vld [vmem:[%s7 + $0x18] sm:$0xf]
    %v2596 = vld [vmem:[%s7 + $0x1c] sm:$0xf]
    %v2597 = vld [vmem:[%s7 + $0x20] sm:$0xf]
    %v2598 = vld [vmem:[%s7 + $0x24] sm:$0xf]
    %v2599 = vld [vmem:[%s7 + $0x28] sm:$0xf]
    %v2600 = vld [vmem:[%s7 + $0x2c] sm:$0xf]
    %v2601 = vld [vmem:[%s7 + $0x30] sm:$0xf]
    %v2602 = vld [vmem:[%s7 + $0x34] sm:$0xf]
    %v2603 = vld [vmem:[%s7 + $0x38] sm:$0xf]
    %v2604 = vld [vmem:[%s7 + $0x3c] sm:$0xf]
    %v2621 = vunpack.c.l.b16 %v2589
    %v2622 = vunpack.c.l.b16 %v2590
    %v2623 = vunpack.c.l.b16 %v2591
    %v2624 = vunpack.c.l.b16 %v2592
    %v2625 = vunpack.c.l.b16 %v2593
    %v2626 = vunpack.c.l.b16 %v2594
    %v2627 = vunpack.c.l.b16 %v2595
    %v2628 = vunpack.c.l.b16 %v2596
    %v2629 = vunpack.c.l.b16 %v2597
    %v2630 = vunpack.c.l.b16 %v2598
    %v2631 = vunpack.c.l.b16 %v2599
    %v2632 = vunpack.c.l.b16 %v2600
    %v2633 = vunpack.c.l.b16 %v2601
    %v2634 = vunpack.c.l.b16 %v2602
    %v2635 = vunpack.c.l.b16 %v2603
    %v2636 = vunpack.c.l.b16 %v2604
    %v2637 = vpack.c.b16 %v2622, %v2621
    %v2638 = vpack.c.b16 %v2624, %v2623
    %v2639 = vpack.c.b16 %v2626, %v2625
    %v2640 = vpack.c.b16 %v2628, %v2627
    %v2641 = vpack.c.b16 %v2630, %v2629
    %v2642 = vpack.c.b16 %v2632, %v2631
    %v2643 = vpack.c.b16 %v2634, %v2633
    %v2644 = vpack.c.b16 %v2636, %v2635
    %2653 = vmatprep.subr.bf16.mxu0 0
    %2654 = vmatpush1.bf16.msra.mxu0 %v2637
    %2655 = vmatprep.subr.bf16.mxu0 0
    %2656 = vmatpush1.bf16.msra.mxu0 %v2638
    %2657 = vmatprep.subr.bf16.mxu0 0
    %2658 = vmatpush1.bf16.msra.mxu0 %v2639
    %2659 = vmatprep.subr.bf16.mxu0 0
    %2660 = vmatpush1.bf16.msra.mxu0 %v2640
    %2661 = vmatprep.subr.bf16.mxu0 0
    %2662 = vmatpush1.bf16.msra.mxu0 %v2641
    %2663 = vmatprep.subr.bf16.mxu0 0
    %2664 = vmatpush1.bf16.msra.mxu0 %v2642
    %2665 = vmatprep.subr.bf16.mxu0 0
    %2666 = vmatpush1.bf16.msra.mxu0 %v2643
    %2667 = vmatprep.subr.bf16.mxu0 0
    %2668 = vmatpush1.bf16.msra.mxu0 %v2644
    %2669 = vmatprep.subr.bf16.mxu0 0
    %2670 = vmatpush1.bf16.msra.mxu0 0
    %2671 = vmatprep.subr.bf16.mxu0 0
    %2672 = vmatpush1.bf16.msra.mxu0 0
    %2673 = vmatprep.subr.bf16.mxu0 0
    %2674 = vmatpush1.bf16.msra.mxu0 0
    %2675 = vmatprep.subr.bf16.mxu0 0
    %2676 = vmatpush1.bf16.msra.mxu0 0
    %2677 = vmatprep.subr.bf16.mxu0 0
    %2678 = vmatpush1.bf16.msra.mxu0 0
    %2679 = vmatprep.subr.bf16.mxu0 0
    %2680 = vmatpush1.bf16.msra.mxu0 0
    %2681 = vmatprep.subr.bf16.mxu0 0
    %2682 = vmatpush1.bf16.msra.mxu0 0
    %2683 = vmatprep.subr.bf16.mxu0 0
    %2684 = vmatpush1.bf16.msra.mxu0 0
    %2685 = vmatprep.mubr.bf16.mxu0 0
    %2686 = vmatmul.mubr.bf16.gmra.mrb[0].mxu0 %v2588
    %v2687 = vpop.f32.mrb[0].mxu0
    %v2688 = vadd.f32 0.0, %v2687
    %v2689 = vpop.f32.mrb[0].mxu0
    %v2690 = vpop.f32.mrb[0].mxu0
    %v2691 = vpop.f32.mrb[0].mxu0
    %2692 = vdwg.mxu0
    %v2693 = vadd.f32 %v2587, %v2688
    %v2694 = vld [vmem:[%s8] sm:$0xf]
    %v2695 = vld [vmem:[%s8 + $0x4] sm:$0xf]
    %v2696 = vld [vmem:[%s8 + $0x8] sm:$0xf]
    %v2697 = vld [vmem:[%s8 + $0xc] sm:$0xf]
    %v2698 = vld [vmem:[%s8 + $0x10] sm:$0xf]
    %v2699 = vld [vmem:[%s8 + $0x14] sm:$0xf]
    %v2700 = vld [vmem:[%s8 + $0x18] sm:$0xf]
    %v2701 = vld [vmem:[%s8 + $0x1c] sm:$0xf]
    %v2702 = vld [vmem:[%s8 + $0x20] sm:$0xf]
    %v2703 = vld [vmem:[%s8 + $0x24] sm:$0xf]
    %v2704 = vld [vmem:[%s8 + $0x28] sm:$0xf]
    %v2705 = vld [vmem:[%s8 + $0x2c] sm:$0xf]
    %v2706 = vld [vmem:[%s8 + $0x30] sm:$0xf]
    %v2707 = vld [vmem:[%s8 + $0x34] sm:$0xf]
    %v2708 = vld [vmem:[%s8 + $0x38] sm:$0xf]
    %v2709 = vld [vmem:[%s8 + $0x3c] sm:$0xf]
    %v2726 = vunpack.c.l.b16 %v2694
    %v2727 = vunpack.c.l.b16 %v2695
    %v2728 = vunpack.c.l.b16 %v2696
    %v2729 = vunpack.c.l.b16 %v2697
    %v2730 = vunpack.c.l.b16 %v2698
    %v2731 = vunpack.c.l.b16 %v2699
    %v2732 = vunpack.c.l.b16 %v2700
    %v2733 = vunpack.c.l.b16 %v2701
    %v2734 = vunpack.c.l.b16 %v2702
    %v2735 = vunpack.c.l.b16 %v2703
    %v2736 = vunpack.c.l.b16 %v2704
    %v2737 = vunpack.c.l.b16 %v2705
    %v2738 = vunpack.c.l.b16 %v2706
    %v2739 = vunpack.c.l.b16 %v2707
    %v2740 = vunpack.c.l.b16 %v2708
    %v2741 = vunpack.c.l.b16 %v2709
    %v2742 = vpack.c.b16 %v2727, %v2726
    %v2743 = vpack.c.b16 %v2729, %v2728
    %v2744 = vpack.c.b16 %v2731, %v2730
    %v2745 = vpack.c.b16 %v2733, %v2732
    %v2746 = vpack.c.b16 %v2735, %v2734
    %v2747 = vpack.c.b16 %v2737, %v2736
    %v2748 = vpack.c.b16 %v2739, %v2738
    %v2749 = vpack.c.b16 %v2741, %v2740
    %2758 = vmatprep.subr.bf16.mxu0 0
    %2759 = vmatpush1.bf16.msra.mxu0 %v2742
    %2760 = vmatprep.subr.bf16.mxu0 0
    %2761 = vmatpush1.bf16.msra.mxu0 %v2743
    %2762 = vmatprep.subr.bf16.mxu0 0
    %2763 = vmatpush1.bf16.msra.mxu0 %v2744
    %2764 = vmatprep.subr.bf16.mxu0 0
    %2765 = vmatpush1.bf16.msra.mxu0 %v2745
    %2766 = vmatprep.subr.bf16.mxu0 0
    %2767 = vmatpush1.bf16.msra.mxu0 %v2746
    %2768 = vmatprep.subr.bf16.mxu0 0
    %2769 = vmatpush1.bf16.msra.mxu0 %v2747
    %2770 = vmatprep.subr.bf16.mxu0 0
    %2771 = vmatpush1.bf16.msra.mxu0 %v2748
    %2772 = vmatprep.subr.bf16.mxu0 0
    %2773 = vmatpush1.bf16.msra.mxu0 %v2749
    %2774 = vmatprep.subr.bf16.mxu0 0
    %2775 = vmatpush1.bf16.msra.mxu0 0
    %2776 = vmatprep.subr.bf16.mxu0 0
    %2777 = vmatpush1.bf16.msra.mxu0 0
    %2778 = vmatprep.subr.bf16.mxu0 0
    %2779 = vmatpush1.bf16.msra.mxu0 0
    %2780 = vmatprep.subr.bf16.mxu0 0
    %2781 = vmatpush1.bf16.msra.mxu0 0
    %2782 = vmatprep.subr.bf16.mxu0 0
    %2783 = vmatpush1.bf16.msra.mxu0 0
    %2784 = vmatprep.subr.bf16.mxu0 0
    %2785 = vmatpush1.bf16.msra.mxu0 0
    %2786 = vmatprep.subr.bf16.mxu0 0
    %2787 = vmatpush1.bf16.msra.mxu0 0
    %2788 = vmatprep.subr.bf16.mxu0 0
    %2789 = vmatpush1.bf16.msra.mxu0 0
    %2790 = vmatprep.mubr.bf16.mxu0 0
    %2791 = vmatmul.mubr.bf16.gmra.mrb[0].mxu0 %v2356
    %v2792 = vpop.f32.mrb[0].mxu0
    %v2793 = vadd.f32 0.0, %v2792
    %v2794 = vpop.f32.mrb[0].mxu0
    %v2795 = vpop.f32.mrb[0].mxu0
    %v2796 = vpop.f32.mrb[0].mxu0
    %2797 = vdwg.mxu0
    %v2798 = vadd.f32 %v2693, %v2793
    %v2799 = vtanh.pop %v2798
    %v2800 = vld [vmem:[#allocation2] sm:$0xf]
    %v2801 = vld [vmem:[#allocation2 + $0x4] sm:$0xf]
    %v2802 = vld [vmem:[#allocation2 + $0x8] sm:$0xf]
    %v2803 = vld [vmem:[#allocation2 + $0xc] sm:$0xf]
    %v2804 = vld [vmem:[#allocation2 + $0x10] sm:$0xf]
    %v2805 = vld [vmem:[#allocation2 + $0x14] sm:$0xf]
    %v2806 = vld [vmem:[#allocation2 + $0x18] sm:$0xf]
    %v2807 = vld [vmem:[#allocation2 + $0x1c] sm:$0xf]
    %v2808 = vunpack.c.l.bf16 %v2800
    %v2809 = vunpack.c.l.bf16 %v2801
    %v2810 = vunpack.c.l.bf16 %v2802
    %v2811 = vunpack.c.l.bf16 %v2803
    %v2812 = vunpack.c.l.bf16 %v2804
    %v2813 = vunpack.c.l.bf16 %v2805
    %v2814 = vunpack.c.l.bf16 %v2806
    %v2815 = vunpack.c.l.bf16 %v2807
    %v2816 = vmul.f32 %v2808, %v2799
    %v2817 = vmul.f32 %v2809, %v2799
    %v2818 = vmul.f32 %v2810, %v2799
    %v2819 = vmul.f32 %v2811, %v2799
    %v2820 = vmul.f32 %v2812, %v2799
    %v2821 = vmul.f32 %v2813, %v2799
    %v2822 = vmul.f32 %v2814, %v2799
    %v2823 = vmul.f32 %v2815, %v2799
    %2824 = vadd.xlane.f32.xlu0 %v2816
    %v2825 = vpop.xlane.xlu0 %2824
    %2826 = vadd.xlane.f32.xlu0 %v2817
    %v2827 = vpop.xlane.xlu0 %2826
    %2828 = vadd.xlane.f32.xlu0 %v2818
    %v2829 = vpop.xlane.xlu0 %2828
    %2830 = vadd.xlane.f32.xlu0 %v2819
    %v2831 = vpop.xlane.xlu0 %2830
    %2832 = vadd.xlane.f32.xlu0 %v2820
    %v2833 = vpop.xlane.xlu0 %2832
    %2834 = vadd.xlane.f32.xlu0 %v2821
    %v2835 = vpop.xlane.xlu0 %2834
    %2836 = vadd.xlane.f32.xlu0 %v2822
    %v2837 = vpop.xlane.xlu0 %2836
    %2838 = vadd.xlane.f32.xlu0 %v2823
    %v2839 = vpop.xlane.xlu0 %2838
    %v2840 = vadd.f32 %v2825, %v1360
    %v2841 = vadd.f32 %v2827, %v1361
    %v2842 = vadd.f32 %v2829, %v1362
    %v2843 = vadd.f32 %v2831, %v1363
    %v2844 = vadd.f32 %v2833, %v1364
    %v2845 = vadd.f32 %v2835, %v1365
    %v2846 = vadd.f32 %v2837, %v1366
    %v2847 = vadd.f32 %v2839, %v1367
    %v2848 = vsel %vm1629, %v2840, -inf
    %v2849 = vsel %vm1629, %v2841, -inf
    %v2850 = vsel %vm1629, %v2842, -inf
    %v2851 = vsel %vm1629, %v2843, -inf
    %v2852 = vsel %vm1629, %v2844, -inf
    %v2853 = vmax.f32 %v2848, %v2852
    %v2854 = vsel %vm1629, %v2845, -inf
    %v2855 = vmax.f32 %v2849, %v2854
    %v2856 = vsel %vm1629, %v2846, -inf
    %v2857 = vmax.f32 %v2850, %v2856
    %v2858 = vsel %vm1629, %v2847, -inf
    %v2859 = vmax.f32 %v2851, %v2858
    %v2860 = vmax.f32 %v2853, %v2855
    %v2861 = vmax.f32 %v2857, %v2859
    %v2862 = vmax.f32 %v2860, %v2861
    %v2863 = vsub.f32 %v2840, %v2862
    %v2864 = vsub.f32 %v2841, %v2862
    %v2865 = vsub.f32 %v2842, %v2862
    %v2866 = vsub.f32 %v2843, %v2862
    %v2867 = vsub.f32 %v2844, %v2862
    %v2868 = vsub.f32 %v2845, %v2862
    %v2869 = vsub.f32 %v2846, %v2862
    %v2870 = vsub.f32 %v2847, %v2862
    %v2871 = vmul.f32 %v2863, 1.442695
    %v2872 = vpow.pop %v2871
    %v2873 = vmul.f32 %v2864, 1.442695
    %v2874 = vpow.pop %v2873
    %v2875 = vmul.f32 %v2865, 1.442695
    %v2876 = vpow.pop %v2875
    %v2877 = vmul.f32 %v2866, 1.442695
    %v2878 = vpow.pop %v2877
    %v2879 = vmul.f32 %v2867, 1.442695
    %v2880 = vpow.pop %v2879
    %v2881 = vmul.f32 %v2868, 1.442695
    %v2882 = vpow.pop %v2881
    %v2883 = vmul.f32 %v2869, 1.442695
    %v2884 = vpow.pop %v2883
    %v2885 = vmul.f32 %v2870, 1.442695
    %v2886 = vpow.pop %v2885
    %v2887 = vsel %vm1629, %v2872, 0.0
    %v2888 = vsel %vm1629, %v2874, 0.0
    %v2889 = vadd.f32 %v2887, %v2888
    %v2890 = vsel %vm1629, %v2876, 0.0
    %v2891 = vadd.f32 %v2889, %v2890
    %v2892 = vsel %vm1629, %v2878, 0.0
    %v2893 = vadd.f32 %v2891, %v2892
    %v2894 = vsel %vm1629, %v2880, 0.0
    %v2895 = vadd.f32 %v2893, %v2894
    %v2896 = vsel %vm1629, %v2882, 0.0
    %v2897 = vadd.f32 %v2895, %v2896
    %v2898 = vsel %vm1629, %v2884, 0.0
    %v2899 = vadd.f32 %v2897, %v2898
    %v2900 = vsel %vm1629, %v2886, 0.0
    %v2901 = vadd.f32 %v2899, %v2900
    %v2902 = vrcp.pop %v2901
    %v2903 = vmul.f32 %v2872, %v2902
    %v2904 = vmul.f32 %v2874, %v2902
    %v2905 = vmul.f32 %v2876, %v2902
    %v2906 = vmul.f32 %v2878, %v2902
    %v2907 = vmul.f32 %v2880, %v2902
    %v2908 = vmul.f32 %v2882, %v2902
    %v2909 = vmul.f32 %v2884, %v2902
    %v2910 = vmul.f32 %v2886, %v2902
    %2912 = vset.pattern.permute.xlu0 0
    %2913 = vperm.xlu0 %2912, %v2903
    %v2914 = vpop.permute.xlu0 %2913
    %2917 = vset.pattern.permute.xlu0 0
    %2918 = vperm.xlu0 %2917, %v2904
    %v2919 = vpop.permute.xlu0 %2918
    %2922 = vset.pattern.permute.xlu0 0
    %2923 = vperm.xlu0 %2922, %v2905
    %v2924 = vpop.permute.xlu0 %2923
    %2927 = vset.pattern.permute.xlu0 0
    %2928 = vperm.xlu0 %2927, %v2906
    %v2929 = vpop.permute.xlu0 %2928
    %2932 = vset.pattern.permute.xlu0 0
    %2933 = vperm.xlu0 %2932, %v2907
    %v2934 = vpop.permute.xlu0 %2933
    %2937 = vset.pattern.permute.xlu0 0
    %2938 = vperm.xlu0 %2937, %v2908
    %v2939 = vpop.permute.xlu0 %2938
    %2942 = vset.pattern.permute.xlu0 0
    %2943 = vperm.xlu0 %2942, %v2909
    %v2944 = vpop.permute.xlu0 %2943
    %2947 = vset.pattern.permute.xlu0 0
    %2948 = vperm.xlu0 %2947, %v2910
    %v2949 = vpop.permute.xlu0 %2948
    %v2951 = vmul.f32 %v2914, %v2808
    %v2952 = vmul.f32 %v2919, %v2809
    %v2953 = vmul.f32 %v2924, %v2810
    %v2954 = vmul.f32 %v2929, %v2811
    %v2955 = vmul.f32 %v2934, %v2812
    %v2956 = vmul.f32 %v2939, %v2813
    %v2957 = vmul.f32 %v2944, %v2814
    %v2958 = vmul.f32 %v2949, %v2815
    %v2959 = vadd.f32 %v2951, %v2952
    %v2960 = vadd.f32 %v2959, %v2953
    %v2961 = vadd.f32 %v2960, %v2954
    %v2962 = vadd.f32 %v2961, %v2955
    %v2963 = vadd.f32 %v2962, %v2956
    %v2964 = vadd.f32 %v2963, %v2957
    %v2965 = vadd.f32 %v2964, %v2958
    %v2966 = vpack.c.bf16 %v2799, %v2799
    %v2967 = vld [vmem:[%s10] sm:$0xf]
    %v2968 = vld [vmem:[%s10 + $0x4] sm:$0xf]
    %v2969 = vld [vmem:[%s10 + $0x8] sm:$0xf]
    %v2970 = vld [vmem:[%s10 + $0xc] sm:$0xf]
    %v2971 = vld [vmem:[%s10 + $0x10] sm:$0xf]
    %v2972 = vld [vmem:[%s10 + $0x14] sm:$0xf]
    %v2973 = vld [vmem:[%s10 + $0x18] sm:$0xf]
    %v2974 = vld [vmem:[%s10 + $0x1c] sm:$0xf]
    %v2975 = vld [vmem:[%s10 + $0x20] sm:$0xf]
    %v2976 = vld [vmem:[%s10 + $0x24] sm:$0xf]
    %v2977 = vld [vmem:[%s10 + $0x28] sm:$0xf]
    %v2978 = vld [vmem:[%s10 + $0x2c] sm:$0xf]
    %v2979 = vld [vmem:[%s10 + $0x30] sm:$0xf]
    %v2980 = vld [vmem:[%s10 + $0x34] sm:$0xf]
    %v2981 = vld [vmem:[%s10 + $0x38] sm:$0xf]
    %v2982 = vld [vmem:[%s10 + $0x3c] sm:$0xf]
    %v2983 = vpack.c.bf16 %v2965, %v2965
    %v2984 = vld [vmem:[%s11] sm:$0xf]
    %v2985 = vld [vmem:[%s11 + $0x4] sm:$0xf]
    %v2986 = vld [vmem:[%s11 + $0x8] sm:$0xf]
    %v2987 = vld [vmem:[%s11 + $0xc] sm:$0xf]
    %v2988 = vld [vmem:[%s11 + $0x10] sm:$0xf]
    %v2989 = vld [vmem:[%s11 + $0x14] sm:$0xf]
    %v2990 = vld [vmem:[%s11 + $0x18] sm:$0xf]
    %v2991 = vld [vmem:[%s11 + $0x1c] sm:$0xf]
    %v2992 = vld [vmem:[%s11 + $0x20] sm:$0xf]
    %v2993 = vld [vmem:[%s11 + $0x24] sm:$0xf]
    %v2994 = vld [vmem:[%s11 + $0x28] sm:$0xf]
    %v2995 = vld [vmem:[%s11 + $0x2c] sm:$0xf]
    %v2996 = vld [vmem:[%s11 + $0x30] sm:$0xf]
    %v2997 = vld [vmem:[%s11 + $0x34] sm:$0xf]
    %v2998 = vld [vmem:[%s11 + $0x38] sm:$0xf]
    %v2999 = vld [vmem:[%s11 + $0x3c] sm:$0xf]
    %v3016 = vunpack.c.l.b16 %v2984
    %v3017 = vunpack.c.l.b16 %v2985
    %v3018 = vunpack.c.l.b16 %v2986
    %v3019 = vunpack.c.l.b16 %v2987
    %v3020 = vunpack.c.l.b16 %v2988
    %v3021 = vunpack.c.l.b16 %v2989
    %v3022 = vunpack.c.l.b16 %v2990
    %v3023 = vunpack.c.l.b16 %v2991
    %v3024 = vunpack.c.l.b16 %v2992
    %v3025 = vunpack.c.l.b16 %v2993
    %v3026 = vunpack.c.l.b16 %v2994
    %v3027 = vunpack.c.l.b16 %v2995
    %v3028 = vunpack.c.l.b16 %v2996
    %v3029 = vunpack.c.l.b16 %v2997
    %v3030 = vunpack.c.l.b16 %v2998
    %v3031 = vunpack.c.l.b16 %v2999
    %v3032 = vpack.c.b16 %v3017, %v3016
    %v3033 = vpack.c.b16 %v3019, %v3018
    %v3034 = vpack.c.b16 %v3021, %v3020
    %v3035 = vpack.c.b16 %v3023, %v3022
    %v3036 = vpack.c.b16 %v3025, %v3024
    %v3037 = vpack.c.b16 %v3027, %v3026
    %v3038 = vpack.c.b16 %v3029, %v3028
    %v3039 = vpack.c.b16 %v3031, %v3030
    %3048 = vmatprep.subr.bf16.mxu0 0
    %3049 = vmatpush1.bf16.msra.mxu0 %v3032
    %3050 = vmatprep.subr.bf16.mxu0 0
    %3051 = vmatpush1.bf16.msra.mxu0 %v3033
    %3052 = vmatprep.subr.bf16.mxu0 0
    %3053 = vmatpush1.bf16.msra.mxu0 %v3034
    %3054 = vmatprep.subr.bf16.mxu0 0
    %3055 = vmatpush1.bf16.msra.mxu0 %v3035
    %3056 = vmatprep.subr.bf16.mxu0 0
    %3057 = vmatpush1.bf16.msra.mxu0 %v3036
    %3058 = vmatprep.subr.bf16.mxu0 0
    %3059 = vmatpush1.bf16.msra.mxu0 %v3037
    %3060 = vmatprep.subr.bf16.mxu0 0
    %3061 = vmatpush1.bf16.msra.mxu0 %v3038
    %3062 = vmatprep.subr.bf16.mxu0 0
    %3063 = vmatpush1.bf16.msra.mxu0 %v3039
    %3064 = vmatprep.subr.bf16.mxu0 0
    %3065 = vmatpush1.bf16.msra.mxu0 0
    %3066 = vmatprep.subr.bf16.mxu0 0
    %3067 = vmatpush1.bf16.msra.mxu0 0
    %3068 = vmatprep.subr.bf16.mxu0 0
    %3069 = vmatpush1.bf16.msra.mxu0 0
    %3070 = vmatprep.subr.bf16.mxu0 0
    %3071 = vmatpush1.bf16.msra.mxu0 0
    %3072 = vmatprep.subr.bf16.mxu0 0
    %3073 = vmatpush1.bf16.msra.mxu0 0
    %3074 = vmatprep.subr.bf16.mxu0 0
    %3075 = vmatpush1.bf16.msra.mxu0 0
    %3076 = vmatprep.subr.bf16.mxu0 0
    %3077 = vmatpush1.bf16.msra.mxu0 0
    %3078 = vmatprep.subr.bf16.mxu0 0
    %3079 = vmatpush1.bf16.msra.mxu0 0
    %3080 = vmatprep.mubr.bf16.mxu0 0
    %3081 = vmatmul.mubr.bf16.gmra.mrb[0].mxu0 %v2983
    %v3082 = vpop.f32.mrb[0].mxu0
    %v3083 = vadd.f32 0.0, %v3082
    %v3084 = vpop.f32.mrb[0].mxu0
    %v3085 = vpop.f32.mrb[0].mxu0
    %v3086 = vpop.f32.mrb[0].mxu0
    %3087 = vdwg.mxu0
    %v3104 = vunpack.c.l.b16 %v2967
    %v3105 = vunpack.c.l.b16 %v2968
    %v3106 = vunpack.c.l.b16 %v2969
    %v3107 = vunpack.c.l.b16 %v2970
    %v3108 = vunpack.c.l.b16 %v2971
    %v3109 = vunpack.c.l.b16 %v2972
    %v3110 = vunpack.c.l.b16 %v2973
    %v3111 = vunpack.c.l.b16 %v2974
    %v3112 = vunpack.c.l.b16 %v2975
    %v3113 = vunpack.c.l.b16 %v2976
    %v3114 = vunpack.c.l.b16 %v2977
    %v3115 = vunpack.c.l.b16 %v2978
    %v3116 = vunpack.c.l.b16 %v2979
    %v3117 = vunpack.c.l.b16 %v2980
    %v3118 = vunpack.c.l.b16 %v2981
    %v3119 = vunpack.c.l.b16 %v2982
    %v3120 = vpack.c.b16 %v3105, %v3104
    %v3121 = vpack.c.b16 %v3107, %v3106
    %v3122 = vpack.c.b16 %v3109, %v3108
    %v3123 = vpack.c.b16 %v3111, %v3110
    %v3124 = vpack.c.b16 %v3113, %v3112
    %v3125 = vpack.c.b16 %v3115, %v3114
    %v3126 = vpack.c.b16 %v3117, %v3116
    %v3127 = vpack.c.b16 %v3119, %v3118
    %3136 = vmatprep.subr.bf16.mxu0 0
    %3137 = vmatpush1.bf16.msra.mxu0 %v3120
    %3138 = vmatprep.subr.bf16.mxu0 0
    %3139 = vmatpush1.bf16.msra.mxu0 %v3121
    %3140 = vmatprep.subr.bf16.mxu0 0
    %3141 = vmatpush1.bf16.msra.mxu0 %v3122
    %3142 = vmatprep.subr.bf16.mxu0 0
    %3143 = vmatpush1.bf16.msra.mxu0 %v3123
    %3144 = vmatprep.subr.bf16.mxu0 0
    %3145 = vmatpush1.bf16.msra.mxu0 %v3124
    %3146 = vmatprep.subr.bf16.mxu0 0
    %3147 = vmatpush1.bf16.msra.mxu0 %v3125
    %3148 = vmatprep.subr.bf16.mxu0 0
    %3149 = vmatpush1.bf16.msra.mxu0 %v3126
    %3150 = vmatprep.subr.bf16.mxu0 0
    %3151 = vmatpush1.bf16.msra.mxu0 %v3127
    %3152 = vmatprep.subr.bf16.mxu0 0
    %3153 = vmatpush1.bf16.msra.mxu0 0
    %3154 = vmatprep.subr.bf16.mxu0 0
    %3155 = vmatpush1.bf16.msra.mxu0 0
    %3156 = vmatprep.subr.bf16.mxu0 0
    %3157 = vmatpush1.bf16.msra.mxu0 0
    %3158 = vmatprep.subr.bf16.mxu0 0
    %3159 = vmatpush1.bf16.msra.mxu0 0
    %3160 = vmatprep.subr.bf16.mxu0 0
    %3161 = vmatpush1.bf16.msra.mxu0 0
    %3162 = vmatprep.subr.bf16.mxu0 0
    %3163 = vmatpush1.bf16.msra.mxu0 0
    %3164 = vmatprep.subr.bf16.mxu0 0
    %3165 = vmatpush1.bf16.msra.mxu0 0
    %3166 = vmatprep.subr.bf16.mxu0 0
    %3167 = vmatpush1.bf16.msra.mxu0 0
    %3168 = vmatprep.mubr.bf16.mxu0 0
    %3169 = vmatmul.mubr.bf16.gmra.mrb[0].mxu0 %v2966
    %v3170 = vpop.f32.mrb[0].mxu0
    %v3171 = vadd.f32 %v3083, %v3170
    %v3172 = vpop.f32.mrb[0].mxu0
    %v3173 = vpop.f32.mrb[0].mxu0
    %v3174 = vpop.f32.mrb[0].mxu0
    %3175 = vdwg.mxu0
    %v3176 = vld [vmem:[%s12] sm:$0x1]
    %v3178 = vlaneseq
    %v3179 = vshrl.u32 %v3178, 7
    %v3180 = vsub.s32 0, %v3179
    %v3181 = vrot.slane %v3176, %v3180
    %v3183 = vadd.f32 %v3171, %v3181
    %v3184 = vtanh.pop %v3183
    %s3185 = scalar_lea.vmem [#allocation4], 16
    %3186 = vst [vmem:[%s3185] sm:$0xff] %v3184
    %s3187 = scalar_lea.vmem %s14, 128
    %3188 = vst.msk [vmem:[%s3187] sm:$0xff] %vm1629, %v2903
    %3189 = vst.msk [vmem:[%s3187 + $0x8] sm:$0xff] %vm1629, %v2904
    %3190 = vst.msk [vmem:[%s3187 + $0x10] sm:$0xff] %vm1629, %v2905
    %3191 = vst.msk [vmem:[%s3187 + $0x18] sm:$0xff] %vm1629, %v2906
    %3192 = vst.msk [vmem:[%s3187 + $0x20] sm:$0xff] %vm1629, %v2907
    %3193 = vst.msk [vmem:[%s3187 + $0x28] sm:$0xff] %vm1629, %v2908
    %3194 = vst.msk [vmem:[%s3187 + $0x30] sm:$0xff] %vm1629, %v2909
    %3195 = vst.msk [vmem:[%s3187 + $0x38] sm:$0xff] %vm1629, %v2910
    %s3196 = scalar_lea.vmem [#allocation3], 24
    %v3197 = vld [vmem:[%s3196] sm:$0xff]
    %v3198 = vpack.c.bf16 %v3184, %v3184
    %v3199 = vld [vmem:[%s7] sm:$0xf]
    %v3200 = vld [vmem:[%s7 + $0x4] sm:$0xf]
    %v3201 = vld [vmem:[%s7 + $0x8] sm:$0xf]
    %v3202 = vld [vmem:[%s7 + $0xc] sm:$0xf]
    %v3203 = vld [vmem:[%s7 + $0x10] sm:$0xf]
    %v3204 = vld [vmem:[%s7 + $0x14] sm:$0xf]
    %v3205 = vld [vmem:[%s7 + $0x18] sm:$0xf]
    %v3206 = vld [vmem:[%s7 + $0x1c] sm:$0xf]
    %v3207 = vld [vmem:[%s7 + $0x20] sm:$0xf]
    %v3208 = vld [vmem:[%s7 + $0x24] sm:$0xf]
    %v3209 = vld [vmem:[%s7 + $0x28] sm:$0xf]
    %v3210 = vld [vmem:[%s7 + $0x2c] sm:$0xf]
    %v3211 = vld [vmem:[%s7 + $0x30] sm:$0xf]
    %v3212 = vld [vmem:[%s7 + $0x34] sm:$0xf]
    %v3213 = vld [vmem:[%s7 + $0x38] sm:$0xf]
    %v3214 = vld [vmem:[%s7 + $0x3c] sm:$0xf]
    %v3231 = vunpack.c.l.b16 %v3199
    %v3232 = vunpack.c.l.b16 %v3200
    %v3233 = vunpack.c.l.b16 %v3201
    %v3234 = vunpack.c.l.b16 %v3202
    %v3235 = vunpack.c.l.b16 %v3203
    %v3236 = vunpack.c.l.b16 %v3204
    %v3237 = vunpack.c.l.b16 %v3205
    %v3238 = vunpack.c.l.b16 %v3206
    %v3239 = vunpack.c.l.b16 %v3207
    %v3240 = vunpack.c.l.b16 %v3208
    %v3241 = vunpack.c.l.b16 %v3209
    %v3242 = vunpack.c.l.b16 %v3210
    %v3243 = vunpack.c.l.b16 %v3211
    %v3244 = vunpack.c.l.b16 %v3212
    %v3245 = vunpack.c.l.b16 %v3213
    %v3246 = vunpack.c.l.b16 %v3214
    %v3247 = vpack.c.b16 %v3232, %v3231
    %v3248 = vpack.c.b16 %v3234, %v3233
    %v3249 = vpack.c.b16 %v3236, %v3235
    %v3250 = vpack.c.b16 %v3238, %v3237
    %v3251 = vpack.c.b16 %v3240, %v3239
    %v3252 = vpack.c.b16 %v3242, %v3241
    %v3253 = vpack.c.b16 %v3244, %v3243
    %v3254 = vpack.c.b16 %v3246, %v3245
    %3263 = vmatprep.subr.bf16.mxu0 0
    %3264 = vmatpush1.bf16.msra.mxu0 %v3247
    %3265 = vmatprep.subr.bf16.mxu0 0
    %3266 = vmatpush1.bf16.msra.mxu0 %v3248
    %3267 = vmatprep.subr.bf16.mxu0 0
    %3268 = vmatpush1.bf16.msra.mxu0 %v3249
    %3269 = vmatprep.subr.bf16.mxu0 0
    %3270 = vmatpush1.bf16.msra.mxu0 %v3250
    %3271 = vmatprep.subr.bf16.mxu0 0
    %3272 = vmatpush1.bf16.msra.mxu0 %v3251
    %3273 = vmatprep.subr.bf16.mxu0 0
    %3274 = vmatpush1.bf16.msra.mxu0 %v3252
    %3275 = vmatprep.subr.bf16.mxu0 0
    %3276 = vmatpush1.bf16.msra.mxu0 %v3253
    %3277 = vmatprep.subr.bf16.mxu0 0
    %3278 = vmatpush1.bf16.msra.mxu0 %v3254
    %3279 = vmatprep.subr.bf16.mxu0 0
    %3280 = vmatpush1.bf16.msra.mxu0 0
    %3281 = vmatprep.subr.bf16.mxu0 0
    %3282 = vmatpush1.bf16.msra.mxu0 0
    %3283 = vmatprep.subr.bf16.mxu0 0
    %3284 = vmatpush1.bf16.msra.mxu0 0
    %3285 = vmatprep.subr.bf16.mxu0 0
    %3286 = vmatpush1.bf16.msra.mxu0 0
    %3287 = vmatprep.subr.bf16.mxu0 0
    %3288 = vmatpush1.bf16.msra.mxu0 0
    %3289 = vmatprep.subr.bf16.mxu0 0
    %3290 = vmatpush1.bf16.msra.mxu0 0
    %3291 = vmatprep.subr.bf16.mxu0 0
    %3292 = vmatpush1.bf16.msra.mxu0 0
    %3293 = vmatprep.subr.bf16.mxu0 0
    %3294 = vmatpush1.bf16.msra.mxu0 0
    %3295 = vmatprep.mubr.bf16.mxu0 0
    %3296 = vmatmul.mubr.bf16.gmra.mrb[0].mxu0 %v3198
    %v3297 = vpop.f32.mrb[0].mxu0
    %v3298 = vadd.f32 0.0, %v3297
    %v3299 = vpop.f32.mrb[0].mxu0
    %v3300 = vpop.f32.mrb[0].mxu0
    %v3301 = vpop.f32.mrb[0].mxu0
    %3302 = vdwg.mxu0
    %v3303 = vadd.f32 %v3197, %v3298
    %v3304 = vld [vmem:[%s8] sm:$0xf]
    %v3305 = vld [vmem:[%s8 + $0x4] sm:$0xf]
    %v3306 = vld [vmem:[%s8 + $0x8] sm:$0xf]
    %v3307 = vld [vmem:[%s8 + $0xc] sm:$0xf]
    %v3308 = vld [vmem:[%s8 + $0x10] sm:$0xf]
    %v3309 = vld [vmem:[%s8 + $0x14] sm:$0xf]
    %v3310 = vld [vmem:[%s8 + $0x18] sm:$0xf]
    %v3311 = vld [vmem:[%s8 + $0x1c] sm:$0xf]
    %v3312 = vld [vmem:[%s8 + $0x20] sm:$0xf]
    %v3313 = vld [vmem:[%s8 + $0x24] sm:$0xf]
    %v3314 = vld [vmem:[%s8 + $0x28] sm:$0xf]
    %v3315 = vld [vmem:[%s8 + $0x2c] sm:$0xf]
    %v3316 = vld [vmem:[%s8 + $0x30] sm:$0xf]
    %v3317 = vld [vmem:[%s8 + $0x34] sm:$0xf]
    %v3318 = vld [vmem:[%s8 + $0x38] sm:$0xf]
    %v3319 = vld [vmem:[%s8 + $0x3c] sm:$0xf]
    %v3336 = vunpack.c.l.b16 %v3304
    %v3337 = vunpack.c.l.b16 %v3305
    %v3338 = vunpack.c.l.b16 %v3306
    %v3339 = vunpack.c.l.b16 %v3307
    %v3340 = vunpack.c.l.b16 %v3308
    %v3341 = vunpack.c.l.b16 %v3309
    %v3342 = vunpack.c.l.b16 %v3310
    %v3343 = vunpack.c.l.b16 %v3311
    %v3344 = vunpack.c.l.b16 %v3312
    %v3345 = vunpack.c.l.b16 %v3313
    %v3346 = vunpack.c.l.b16 %v3314
    %v3347 = vunpack.c.l.b16 %v3315
    %v3348 = vunpack.c.l.b16 %v3316
    %v3349 = vunpack.c.l.b16 %v3317
    %v3350 = vunpack.c.l.b16 %v3318
    %v3351 = vunpack.c.l.b16 %v3319
    %v3352 = vpack.c.b16 %v3337, %v3336
    %v3353 = vpack.c.b16 %v3339, %v3338
    %v3354 = vpack.c.b16 %v3341, %v3340
    %v3355 = vpack.c.b16 %v3343, %v3342
    %v3356 = vpack.c.b16 %v3345, %v3344
    %v3357 = vpack.c.b16 %v3347, %v3346
    %v3358 = vpack.c.b16 %v3349, %v3348
    %v3359 = vpack.c.b16 %v3351, %v3350
    %3368 = vmatprep.subr.bf16.mxu0 0
    %3369 = vmatpush1.bf16.msra.mxu0 %v3352
    %3370 = vmatprep.subr.bf16.mxu0 0
    %3371 = vmatpush1.bf16.msra.mxu0 %v3353
    %3372 = vmatprep.subr.bf16.mxu0 0
    %3373 = vmatpush1.bf16.msra.mxu0 %v3354
    %3374 = vmatprep.subr.bf16.mxu0 0
    %3375 = vmatpush1.bf16.msra.mxu0 %v3355
    %3376 = vmatprep.subr.bf16.mxu0 0
    %3377 = vmatpush1.bf16.msra.mxu0 %v3356
    %3378 = vmatprep.subr.bf16.mxu0 0
    %3379 = vmatpush1.bf16.msra.mxu0 %v3357
    %3380 = vmatprep.subr.bf16.mxu0 0
    %3381 = vmatpush1.bf16.msra.mxu0 %v3358
    %3382 = vmatprep.subr.bf16.mxu0 0
    %3383 = vmatpush1.bf16.msra.mxu0 %v3359
    %3384 = vmatprep.subr.bf16.mxu0 0
    %3385 = vmatpush1.bf16.msra.mxu0 0
    %3386 = vmatprep.subr.bf16.mxu0 0
    %3387 = vmatpush1.bf16.msra.mxu0 0
    %3388 = vmatprep.subr.bf16.mxu0 0
    %3389 = vmatpush1.bf16.msra.mxu0 0
    %3390 = vmatprep.subr.bf16.mxu0 0
    %3391 = vmatpush1.bf16.msra.mxu0 0
    %3392 = vmatprep.subr.bf16.mxu0 0
    %3393 = vmatpush1.bf16.msra.mxu0 0
    %3394 = vmatprep.subr.bf16.mxu0 0
    %3395 = vmatpush1.bf16.msra.mxu0 0
    %3396 = vmatprep.subr.bf16.mxu0 0
    %3397 = vmatpush1.bf16.msra.mxu0 0
    %3398 = vmatprep.subr.bf16.mxu0 0
    %3399 = vmatpush1.bf16.msra.mxu0 0
    %3400 = vmatprep.mubr.bf16.mxu0 0
    %3401 = vmatmul.mubr.bf16.gmra.mrb[0].mxu0 %v2966
    %v3402 = vpop.f32.mrb[0].mxu0
    %v3403 = vadd.f32 0.0, %v3402
    %v3404 = vpop.f32.mrb[0].mxu0
    %v3405 = vpop.f32.mrb[0].mxu0
    %v3406 = vpop.f32.mrb[0].mxu0
    %3407 = vdwg.mxu0
    %v3408 = vadd.f32 %v3303, %v3403
    %v3409 = vtanh.pop %v3408
    %v3410 = vld [vmem:[#allocation2] sm:$0xf]
    %v3411 = vld [vmem:[#allocation2 + $0x4] sm:$0xf]
    %v3412 = vld [vmem:[#allocation2 + $0x8] sm:$0xf]
    %v3413 = vld [vmem:[#allocation2 + $0xc] sm:$0xf]
    %v3414 = vld [vmem:[#allocation2 + $0x10] sm:$0xf]
    %v3415 = vld [vmem:[#allocation2 + $0x14] sm:$0xf]
    %v3416 = vld [vmem:[#allocation2 + $0x18] sm:$0xf]
    %v3417 = vld [vmem:[#allocation2 + $0x1c] sm:$0xf]
    %v3418 = vunpack.c.l.bf16 %v3410
    %v3419 = vunpack.c.l.bf16 %v3411
    %v3420 = vunpack.c.l.bf16 %v3412
    %v3421 = vunpack.c.l.bf16 %v3413
    %v3422 = vunpack.c.l.bf16 %v3414
    %v3423 = vunpack.c.l.bf16 %v3415
    %v3424 = vunpack.c.l.bf16 %v3416
    %v3425 = vunpack.c.l.bf16 %v3417
    %v3426 = vmul.f32 %v3418, %v3409
    %v3427 = vmul.f32 %v3419, %v3409
    %v3428 = vmul.f32 %v3420, %v3409
    %v3429 = vmul.f32 %v3421, %v3409
    %v3430 = vmul.f32 %v3422, %v3409
    %v3431 = vmul.f32 %v3423, %v3409
    %v3432 = vmul.f32 %v3424, %v3409
    %v3433 = vmul.f32 %v3425, %v3409
    %3434 = vadd.xlane.f32.xlu0 %v3426
    %v3435 = vpop.xlane.xlu0 %3434
    %3436 = vadd.xlane.f32.xlu0 %v3427
    %v3437 = vpop.xlane.xlu0 %3436
    %3438 = vadd.xlane.f32.xlu0 %v3428
    %v3439 = vpop.xlane.xlu0 %3438
    %3440 = vadd.xlane.f32.xlu0 %v3429
    %v3441 = vpop.xlane.xlu0 %3440
    %3442 = vadd.xlane.f32.xlu0 %v3430
    %v3443 = vpop.xlane.xlu0 %3442
    %3444 = vadd.xlane.f32.xlu0 %v3431
    %v3445 = vpop.xlane.xlu0 %3444
    %3446 = vadd.xlane.f32.xlu0 %v3432
    %v3447 = vpop.xlane.xlu0 %3446
    %3448 = vadd.xlane.f32.xlu0 %v3433
    %v3449 = vpop.xlane.xlu0 %3448
    %v3450 = vadd.f32 %v3435, %v1360
    %v3451 = vadd.f32 %v3437, %v1361
    %v3452 = vadd.f32 %v3439, %v1362
    %v3453 = vadd.f32 %v3441, %v1363
    %v3454 = vadd.f32 %v3443, %v1364
    %v3455 = vadd.f32 %v3445, %v1365
    %v3456 = vadd.f32 %v3447, %v1366
    %v3457 = vadd.f32 %v3449, %v1367
    %v3458 = vsel %vm1629, %v3450, -inf
    %v3459 = vsel %vm1629, %v3451, -inf
    %v3460 = vsel %vm1629, %v3452, -inf
    %v3461 = vsel %vm1629, %v3453, -inf
    %v3462 = vsel %vm1629, %v3454, -inf
    %v3463 = vmax.f32 %v3458, %v3462
    %v3464 = vsel %vm1629, %v3455, -inf
    %v3465 = vmax.f32 %v3459, %v3464
    %v3466 = vsel %vm1629, %v3456, -inf
    %v3467 = vmax.f32 %v3460, %v3466
    %v3468 = vsel %vm1629, %v3457, -inf
    %v3469 = vmax.f32 %v3461, %v3468
    %v3470 = vmax.f32 %v3463, %v3465
    %v3471 = vmax.f32 %v3467, %v3469
    %v3472 = vmax.f32 %v3470, %v3471
    %v3473 = vsub.f32 %v3450, %v3472
    %v3474 = vsub.f32 %v3451, %v3472
    %v3475 = vsub.f32 %v3452, %v3472
    %v3476 = vsub.f32 %v3453, %v3472
    %v3477 = vsub.f32 %v3454, %v3472
    %v3478 = vsub.f32 %v3455, %v3472
    %v3479 = vsub.f32 %v3456, %v3472
    %v3480 = vsub.f32 %v3457, %v3472
    %v3481 = vmul.f32 %v3473, 1.442695
    %v3482 = vpow.pop %v3481
    %v3483 = vmul.f32 %v3474, 1.442695
    %v3484 = vpow.pop %v3483
    %v3485 = vmul.f32 %v3475, 1.442695
    %v3486 = vpow.pop %v3485
    %v3487 = vmul.f32 %v3476, 1.442695
    %v3488 = vpow.pop %v3487
    %v3489 = vmul.f32 %v3477, 1.442695
    %v3490 = vpow.pop %v3489
    %v3491 = vmul.f32 %v3478, 1.442695
    %v3492 = vpow.pop %v3491
    %v3493 = vmul.f32 %v3479, 1.442695
    %v3494 = vpow.pop %v3493
    %v3495 = vmul.f32 %v3480, 1.442695
    %v3496 = vpow.pop %v3495
    %v3497 = vsel %vm1629, %v3482, 0.0
    %v3498 = vsel %vm1629, %v3484, 0.0
    %v3499 = vadd.f32 %v3497, %v3498
    %v3500 = vsel %vm1629, %v3486, 0.0
    %v3501 = vadd.f32 %v3499, %v3500
    %v3502 = vsel %vm1629, %v3488, 0.0
    %v3503 = vadd.f32 %v3501, %v3502
    %v3504 = vsel %vm1629, %v3490, 0.0
    %v3505 = vadd.f32 %v3503, %v3504
    %v3506 = vsel %vm1629, %v3492, 0.0
    %v3507 = vadd.f32 %v3505, %v3506
    %v3508 = vsel %vm1629, %v3494, 0.0
    %v3509 = vadd.f32 %v3507, %v3508
    %v3510 = vsel %vm1629, %v3496, 0.0
    %v3511 = vadd.f32 %v3509, %v3510
    %v3512 = vrcp.pop %v3511
    %v3513 = vmul.f32 %v3482, %v3512
    %v3514 = vmul.f32 %v3484, %v3512
    %v3515 = vmul.f32 %v3486, %v3512
    %v3516 = vmul.f32 %v3488, %v3512
    %v3517 = vmul.f32 %v3490, %v3512
    %v3518 = vmul.f32 %v3492, %v3512
    %v3519 = vmul.f32 %v3494, %v3512
    %v3520 = vmul.f32 %v3496, %v3512
    %3522 = vset.pattern.permute.xlu0 0
    %3523 = vperm.xlu0 %3522, %v3513
    %v3524 = vpop.permute.xlu0 %3523
    %3527 = vset.pattern.permute.xlu0 0
    %3528 = vperm.xlu0 %3527, %v3514
    %v3529 = vpop.permute.xlu0 %3528
    %3532 = vset.pattern.permute.xlu0 0
    %3533 = vperm.xlu0 %3532, %v3515
    %v3534 = vpop.permute.xlu0 %3533
    %3537 = vset.pattern.permute.xlu0 0
    %3538 = vperm.xlu0 %3537, %v3516
    %v3539 = vpop.permute.xlu0 %3538
    %3542 = vset.pattern.permute.xlu0 0
    %3543 = vperm.xlu0 %3542, %v3517
    %v3544 = vpop.permute.xlu0 %3543
    %3547 = vset.pattern.permute.xlu0 0
    %3548 = vperm.xlu0 %3547, %v3518
    %v3549 = vpop.permute.xlu0 %3548
    %3552 = vset.pattern.permute.xlu0 0
    %3553 = vperm.xlu0 %3552, %v3519
    %v3554 = vpop.permute.xlu0 %3553
    %3557 = vset.pattern.permute.xlu0 0
    %3558 = vperm.xlu0 %3557, %v3520
    %v3559 = vpop.permute.xlu0 %3558
    %v3561 = vmul.f32 %v3524, %v3418
    %v3562 = vmul.f32 %v3529, %v3419
    %v3563 = vmul.f32 %v3534, %v3420
    %v3564 = vmul.f32 %v3539, %v3421
    %v3565 = vmul.f32 %v3544, %v3422
    %v3566 = vmul.f32 %v3549, %v3423
    %v3567 = vmul.f32 %v3554, %v3424
    %v3568 = vmul.f32 %v3559, %v3425
    %v3569 = vadd.f32 %v3561, %v3562
    %v3570 = vadd.f32 %v3569, %v3563
    %v3571 = vadd.f32 %v3570, %v3564
    %v3572 = vadd.f32 %v3571, %v3565
    %v3573 = vadd.f32 %v3572, %v3566
    %v3574 = vadd.f32 %v3573, %v3567
    %v3575 = vadd.f32 %v3574, %v3568
    %v3576 = vpack.c.bf16 %v3409, %v3409
    %v3577 = vld [vmem:[%s10] sm:$0xf]
    %v3578 = vld [vmem:[%s10 + $0x4] sm:$0xf]
    %v3579 = vld [vmem:[%s10 + $0x8] sm:$0xf]
    %v3580 = vld [vmem:[%s10 + $0xc] sm:$0xf]
    %v3581 = vld [vmem:[%s10 + $0x10] sm:$0xf]
    %v3582 = vld [vmem:[%s10 + $0x14] sm:$0xf]
    %v3583 = vld [vmem:[%s10 + $0x18] sm:$0xf]
    %v3584 = vld [vmem:[%s10 + $0x1c] sm:$0xf]
    %v3585 = vld [vmem:[%s10 + $0x20] sm:$0xf]
    %v3586 = vld [vmem:[%s10 + $0x24] sm:$0xf]
    %v3587 = vld [vmem:[%s10 + $0x28] sm:$0xf]
    %v3588 = vld [vmem:[%s10 + $0x2c] sm:$0xf]
    %v3589 = vld [vmem:[%s10 + $0x30] sm:$0xf]
    %v3590 = vld [vmem:[%s10 + $0x34] sm:$0xf]
    %v3591 = vld [vmem:[%s10 + $0x38] sm:$0xf]
    %v3592 = vld [vmem:[%s10 + $0x3c] sm:$0xf]
    %v3593 = vpack.c.bf16 %v3575, %v3575
    %v3594 = vld [vmem:[%s11] sm:$0xf]
    %v3595 = vld [vmem:[%s11 + $0x4] sm:$0xf]
    %v3596 = vld [vmem:[%s11 + $0x8] sm:$0xf]
    %v3597 = vld [vmem:[%s11 + $0xc] sm:$0xf]
    %v3598 = vld [vmem:[%s11 + $0x10] sm:$0xf]
    %v3599 = vld [vmem:[%s11 + $0x14] sm:$0xf]
    %v3600 = vld [vmem:[%s11 + $0x18] sm:$0xf]
    %v3601 = vld [vmem:[%s11 + $0x1c] sm:$0xf]
    %v3602 = vld [vmem:[%s11 + $0x20] sm:$0xf]
    %v3603 = vld [vmem:[%s11 + $0x24] sm:$0xf]
    %v3604 = vld [vmem:[%s11 + $0x28] sm:$0xf]
    %v3605 = vld [vmem:[%s11 + $0x2c] sm:$0xf]
    %v3606 = vld [vmem:[%s11 + $0x30] sm:$0xf]
    %v3607 = vld [vmem:[%s11 + $0x34] sm:$0xf]
    %v3608 = vld [vmem:[%s11 + $0x38] sm:$0xf]
    %v3609 = vld [vmem:[%s11 + $0x3c] sm:$0xf]
    %v3626 = vunpack.c.l.b16 %v3594
    %v3627 = vunpack.c.l.b16 %v3595
    %v3628 = vunpack.c.l.b16 %v3596
    %v3629 = vunpack.c.l.b16 %v3597
    %v3630 = vunpack.c.l.b16 %v3598
    %v3631 = vunpack.c.l.b16 %v3599
    %v3632 = vunpack.c.l.b16 %v3600
    %v3633 = vunpack.c.l.b16 %v3601
    %v3634 = vunpack.c.l.b16 %v3602
    %v3635 = vunpack.c.l.b16 %v3603
    %v3636 = vunpack.c.l.b16 %v3604
    %v3637 = vunpack.c.l.b16 %v3605
    %v3638 = vunpack.c.l.b16 %v3606
    %v3639 = vunpack.c.l.b16 %v3607
    %v3640 = vunpack.c.l.b16 %v3608
    %v3641 = vunpack.c.l.b16 %v3609
    %v3642 = vpack.c.b16 %v3627, %v3626
    %v3643 = vpack.c.b16 %v3629, %v3628
    %v3644 = vpack.c.b16 %v3631, %v3630
    %v3645 = vpack.c.b16 %v3633, %v3632
    %v3646 = vpack.c.b16 %v3635, %v3634
    %v3647 = vpack.c.b16 %v3637, %v3636
    %v3648 = vpack.c.b16 %v3639, %v3638
    %v3649 = vpack.c.b16 %v3641, %v3640
    %3658 = vmatprep.subr.bf16.mxu0 0
    %3659 = vmatpush1.bf16.msra.mxu0 %v3642
    %3660 = vmatprep.subr.bf16.mxu0 0
    %3661 = vmatpush1.bf16.msra.mxu0 %v3643
    %3662 = vmatprep.subr.bf16.mxu0 0
    %3663 = vmatpush1.bf16.msra.mxu0 %v3644
    %3664 = vmatprep.subr.bf16.mxu0 0
    %3665 = vmatpush1.bf16.msra.mxu0 %v3645
    %3666 = vmatprep.subr.bf16.mxu0 0
    %3667 = vmatpush1.bf16.msra.mxu0 %v3646
    %3668 = vmatprep.subr.bf16.mxu0 0
    %3669 = vmatpush1.bf16.msra.mxu0 %v3647
    %3670 = vmatprep.subr.bf16.mxu0 0
    %3671 = vmatpush1.bf16.msra.mxu0 %v3648
    %3672 = vmatprep.subr.bf16.mxu0 0
    %3673 = vmatpush1.bf16.msra.mxu0 %v3649
    %3674 = vmatprep.subr.bf16.mxu0 0
    %3675 = vmatpush1.bf16.msra.mxu0 0
    %3676 = vmatprep.subr.bf16.mxu0 0
    %3677 = vmatpush1.bf16.msra.mxu0 0
    %3678 = vmatprep.subr.bf16.mxu0 0
    %3679 = vmatpush1.bf16.msra.mxu0 0
    %3680 = vmatprep.subr.bf16.mxu0 0
    %3681 = vmatpush1.bf16.msra.mxu0 0
    %3682 = vmatprep.subr.bf16.mxu0 0
    %3683 = vmatpush1.bf16.msra.mxu0 0
    %3684 = vmatprep.subr.bf16.mxu0 0
    %3685 = vmatpush1.bf16.msra.mxu0 0
    %3686 = vmatprep.subr.bf16.mxu0 0
    %3687 = vmatpush1.bf16.msra.mxu0 0
    %3688 = vmatprep.subr.bf16.mxu0 0
    %3689 = vmatpush1.bf16.msra.mxu0 0
    %3690 = vmatprep.mubr.bf16.mxu0 0
    %3691 = vmatmul.mubr.bf16.gmra.mrb[0].mxu0 %v3593
    %v3692 = vpop.f32.mrb[0].mxu0
    %v3693 = vadd.f32 0.0, %v3692
    %v3694 = vpop.f32.mrb[0].mxu0
    %v3695 = vpop.f32.mrb[0].mxu0
    %v3696 = vpop.f32.mrb[0].mxu0
    %3697 = vdwg.mxu0
    %v3714 = vunpack.c.l.b16 %v3577
    %v3715 = vunpack.c.l.b16 %v3578
    %v3716 = vunpack.c.l.b16 %v3579
    %v3717 = vunpack.c.l.b16 %v3580
    %v3718 = vunpack.c.l.b16 %v3581
    %v3719 = vunpack.c.l.b16 %v3582
    %v3720 = vunpack.c.l.b16 %v3583
    %v3721 = vunpack.c.l.b16 %v3584
    %v3722 = vunpack.c.l.b16 %v3585
    %v3723 = vunpack.c.l.b16 %v3586
    %v3724 = vunpack.c.l.b16 %v3587
    %v3725 = vunpack.c.l.b16 %v3588
    %v3726 = vunpack.c.l.b16 %v3589
    %v3727 = vunpack.c.l.b16 %v3590
    %v3728 = vunpack.c.l.b16 %v3591
    %v3729 = vunpack.c.l.b16 %v3592
    %v3730 = vpack.c.b16 %v3715, %v3714
    %v3731 = vpack.c.b16 %v3717, %v3716
    %v3732 = vpack.c.b16 %v3719, %v3718
    %v3733 = vpack.c.b16 %v3721, %v3720
    %v3734 = vpack.c.b16 %v3723, %v3722
    %v3735 = vpack.c.b16 %v3725, %v3724
    %v3736 = vpack.c.b16 %v3727, %v3726
    %v3737 = vpack.c.b16 %v3729, %v3728
    %3746 = vmatprep.subr.bf16.mxu0 0
    %3747 = vmatpush1.bf16.msra.mxu0 %v3730
    %3748 = vmatprep.subr.bf16.mxu0 0
    %3749 = vmatpush1.bf16.msra.mxu0 %v3731
    %3750 = vmatprep.subr.bf16.mxu0 0
    %3751 = vmatpush1.bf16.msra.mxu0 %v3732
    %3752 = vmatprep.subr.bf16.mxu0 0
    %3753 = vmatpush1.bf16.msra.mxu0 %v3733
    %3754 = vmatprep.subr.bf16.mxu0 0
    %3755 = vmatpush1.bf16.msra.mxu0 %v3734
    %3756 = vmatprep.subr.bf16.mxu0 0
    %3757 = vmatpush1.bf16.msra.mxu0 %v3735
    %3758 = vmatprep.subr.bf16.mxu0 0
    %3759 = vmatpush1.bf16.msra.mxu0 %v3736
    %3760 = vmatprep.subr.bf16.mxu0 0
    %3761 = vmatpush1.bf16.msra.mxu0 %v3737
    %3762 = vmatprep.subr.bf16.mxu0 0
    %3763 = vmatpush1.bf16.msra.mxu0 0
    %3764 = vmatprep.subr.bf16.mxu0 0
    %3765 = vmatpush1.bf16.msra.mxu0 0
    %3766 = vmatprep.subr.bf16.mxu0 0
    %3767 = vmatpush1.bf16.msra.mxu0 0
    %3768 = vmatprep.subr.bf16.mxu0 0
    %3769 = vmatpush1.bf16.msra.mxu0 0
    %3770 = vmatprep.subr.bf16.mxu0 0
    %3771 = vmatpush1.bf16.msra.mxu0 0
    %3772 = vmatprep.subr.bf16.mxu0 0
    %3773 = vmatpush1.bf16.msra.mxu0 0
    %3774 = vmatprep.subr.bf16.mxu0 0
    %3775 = vmatpush1.bf16.msra.mxu0 0
    %3776 = vmatprep.subr.bf16.mxu0 0
    %3777 = vmatpush1.bf16.msra.mxu0 0
    %3778 = vmatprep.mubr.bf16.mxu0 0
    %3779 = vmatmul.mubr.bf16.gmra.mrb[0].mxu0 %v3576
    %v3780 = vpop.f32.mrb[0].mxu0
    %v3781 = vadd.f32 %v3693, %v3780
    %v3782 = vpop.f32.mrb[0].mxu0
    %v3783 = vpop.f32.mrb[0].mxu0
    %v3784 = vpop.f32.mrb[0].mxu0
    %3785 = vdwg.mxu0
    %v3786 = vld [vmem:[%s12] sm:$0x1]
    %v3788 = vlaneseq
    %v3789 = vshrl.u32 %v3788, 7
    %v3790 = vsub.s32 0, %v3789
    %v3791 = vrot.slane %v3786, %v3790
    %v3793 = vadd.f32 %v3781, %v3791
    %v3794 = vtanh.pop %v3793
    %s3795 = scalar_lea.vmem [#allocation4], 24
    %3796 = vst [vmem:[%s3795] sm:$0xff] %v3794
    %s3797 = scalar_lea.vmem %s14, 192
    %3798 = vst.msk [vmem:[%s3797] sm:$0xff] %vm1629, %v3513
    %3799 = vst.msk [vmem:[%s3797 + $0x8] sm:$0xff] %vm1629, %v3514
    %3800 = vst.msk [vmem:[%s3797 + $0x10] sm:$0xff] %vm1629, %v3515
    %3801 = vst.msk [vmem:[%s3797 + $0x18] sm:$0xff] %vm1629, %v3516
    %3802 = vst.msk [vmem:[%s3797 + $0x20] sm:$0xff] %vm1629, %v3517
    %3803 = vst.msk [vmem:[%s3797 + $0x28] sm:$0xff] %vm1629, %v3518
    %3804 = vst.msk [vmem:[%s3797 + $0x30] sm:$0xff] %vm1629, %v3519
    %3805 = vst.msk [vmem:[%s3797 + $0x38] sm:$0xff] %vm1629, %v3520
    %s3806 = scalar_lea.vmem [#allocation3], 32
    %v3807 = vld [vmem:[%s3806] sm:$0xff]
    %v3808 = vpack.c.bf16 %v3794, %v3794
    %v3809 = vld [vmem:[%s7] sm:$0xf]
    %v3810 = vld [vmem:[%s7 + $0x4] sm:$0xf]
    %v3811 = vld [vmem:[%s7 + $0x8] sm:$0xf]
    %v3812 = vld [vmem:[%s7 + $0xc] sm:$0xf]
    %v3813 = vld [vmem:[%s7 + $0x10] sm:$0xf]
    %v3814 = vld [vmem:[%s7 + $0x14] sm:$0xf]
    %v3815 = vld [vmem:[%s7 + $0x18] sm:$0xf]
    %v3816 = vld [vmem:[%s7 + $0x1c] sm:$0xf]
    %v3817 = vld [vmem:[%s7 + $0x20] sm:$0xf]
    %v3818 = vld [vmem:[%s7 + $0x24] sm:$0xf]
    %v3819 = vld [vmem:[%s7 + $0x28] sm:$0xf]
    %v3820 = vld [vmem:[%s7 + $0x2c] sm:$0xf]
    %v3821 = vld [vmem:[%s7 + $0x30] sm:$0xf]
    %v3822 = vld [vmem:[%s7 + $0x34] sm:$0xf]
    %v3823 = vld [vmem:[%s7 + $0x38] sm:$0xf]
    %v3824 = vld [vmem:[%s7 + $0x3c] sm:$0xf]
    %v3841 = vunpack.c.l.b16 %v3809
    %v3842 = vunpack.c.l.b16 %v3810
    %v3843 = vunpack.c.l.b16 %v3811
    %v3844 = vunpack.c.l.b16 %v3812
    %v3845 = vunpack.c.l.b16 %v3813
    %v3846 = vunpack.c.l.b16 %v3814
    %v3847 = vunpack.c.l.b16 %v3815
    %v3848 = vunpack.c.l.b16 %v3816
    %v3849 = vunpack.c.l.b16 %v3817
    %v3850 = vunpack.c.l.b16 %v3818
    %v3851 = vunpack.c.l.b16 %v3819
    %v3852 = vunpack.c.l.b16 %v3820
    %v3853 = vunpack.c.l.b16 %v3821
    %v3854 = vunpack.c.l.b16 %v3822
    %v3855 = vunpack.c.l.b16 %v3823
    %v3856 = vunpack.c.l.b16 %v3824
    %v3857 = vpack.c.b16 %v3842, %v3841
    %v3858 = vpack.c.b16 %v3844, %v3843
    %v3859 = vpack.c.b16 %v3846, %v3845
    %v3860 = vpack.c.b16 %v3848, %v3847
    %v3861 = vpack.c.b16 %v3850, %v3849
    %v3862 = vpack.c.b16 %v3852, %v3851
    %v3863 = vpack.c.b16 %v3854, %v3853
    %v3864 = vpack.c.b16 %v3856, %v3855
    %3873 = vmatprep.subr.bf16.mxu0 0
    %3874 = vmatpush1.bf16.msra.mxu0 %v3857
    %3875 = vmatprep.subr.bf16.mxu0 0
    %3876 = vmatpush1.bf16.msra.mxu0 %v3858
    %3877 = vmatprep.subr.bf16.mxu0 0
    %3878 = vmatpush1.bf16.msra.mxu0 %v3859
    %3879 = vmatprep.subr.bf16.mxu0 0
    %3880 = vmatpush1.bf16.msra.mxu0 %v3860
    %3881 = vmatprep.subr.bf16.mxu0 0
    %3882 = vmatpush1.bf16.msra.mxu0 %v3861
    %3883 = vmatprep.subr.bf16.mxu0 0
    %3884 = vmatpush1.bf16.msra.mxu0 %v3862
    %3885 = vmatprep.subr.bf16.mxu0 0
    %3886 = vmatpush1.bf16.msra.mxu0 %v3863
    %3887 = vmatprep.subr.bf16.mxu0 0
    %3888 = vmatpush1.bf16.msra.mxu0 %v3864
    %3889 = vmatprep.subr.bf16.mxu0 0
    %3890 = vmatpush1.bf16.msra.mxu0 0
    %3891 = vmatprep.subr.bf16.mxu0 0
    %3892 = vmatpush1.bf16.msra.mxu0 0
    %3893 = vmatprep.subr.bf16.mxu0 0
    %3894 = vmatpush1.bf16.msra.mxu0 0
    %3895 = vmatprep.subr.bf16.mxu0 0
    %3896 = vmatpush1.bf16.msra.mxu0 0
    %3897 = vmatprep.subr.bf16.mxu0 0
    %3898 = vmatpush1.bf16.msra.mxu0 0
    %3899 = vmatprep.subr.bf16.mxu0 0
    %3900 = vmatpush1.bf16.msra.mxu0 0
    %3901 = vmatprep.subr.bf16.mxu0 0
    %3902 = vmatpush1.bf16.msra.mxu0 0
    %3903 = vmatprep.subr.bf16.mxu0 0
    %3904 = vmatpush1.bf16.msra.mxu0 0
    %3905 = vmatprep.mubr.bf16.mxu0 0
    %3906 = vmatmul.mubr.bf16.gmra.mrb[0].mxu0 %v3808
    %v3907 = vpop.f32.mrb[0].mxu0
    %v3908 = vadd.f32 0.0, %v3907
    %v3909 = vpop.f32.mrb[0].mxu0
    %v3910 = vpop.f32.mrb[0].mxu0
    %v3911 = vpop.f32.mrb[0].mxu0
    %3912 = vdwg.mxu0
    %v3913 = vadd.f32 %v3807, %v3908
    %v3914 = vld [vmem:[%s8] sm:$0xf]
    %v3915 = vld [vmem:[%s8 + $0x4] sm:$0xf]
    %v3916 = vld [vmem:[%s8 + $0x8] sm:$0xf]
    %v3917 = vld [vmem:[%s8 + $0xc] sm:$0xf]
    %v3918 = vld [vmem:[%s8 + $0x10] sm:$0xf]
    %v3919 = vld [vmem:[%s8 + $0x14] sm:$0xf]
    %v3920 = vld [vmem:[%s8 + $0x18] sm:$0xf]
    %v3921 = vld [vmem:[%s8 + $0x1c] sm:$0xf]
    %v3922 = vld [vmem:[%s8 + $0x20] sm:$0xf]
    %v3923 = vld [vmem:[%s8 + $0x24] sm:$0xf]
    %v3924 = vld [vmem:[%s8 + $0x28] sm:$0xf]
    %v3925 = vld [vmem:[%s8 + $0x2c] sm:$0xf]
    %v3926 = vld [vmem:[%s8 + $0x30] sm:$0xf]
    %v3927 = vld [vmem:[%s8 + $0x34] sm:$0xf]
    %v3928 = vld [vmem:[%s8 + $0x38] sm:$0xf]
    %v3929 = vld [vmem:[%s8 + $0x3c] sm:$0xf]
    %v3946 = vunpack.c.l.b16 %v3914
    %v3947 = vunpack.c.l.b16 %v3915
    %v3948 = vunpack.c.l.b16 %v3916
    %v3949 = vunpack.c.l.b16 %v3917
    %v3950 = vunpack.c.l.b16 %v3918
    %v3951 = vunpack.c.l.b16 %v3919
    %v3952 = vunpack.c.l.b16 %v3920
    %v3953 = vunpack.c.l.b16 %v3921
    %v3954 = vunpack.c.l.b16 %v3922
    %v3955 = vunpack.c.l.b16 %v3923
    %v3956 = vunpack.c.l.b16 %v3924
    %v3957 = vunpack.c.l.b16 %v3925
    %v3958 = vunpack.c.l.b16 %v3926
    %v3959 = vunpack.c.l.b16 %v3927
    %v3960 = vunpack.c.l.b16 %v3928
    %v3961 = vunpack.c.l.b16 %v3929
    %v3962 = vpack.c.b16 %v3947, %v3946
    %v3963 = vpack.c.b16 %v3949, %v3948
    %v3964 = vpack.c.b16 %v3951, %v3950
    %v3965 = vpack.c.b16 %v3953, %v3952
    %v3966 = vpack.c.b16 %v3955, %v3954
    %v3967 = vpack.c.b16 %v3957, %v3956
    %v3968 = vpack.c.b16 %v3959, %v3958
    %v3969 = vpack.c.b16 %v3961, %v3960
    %3978 = vmatprep.subr.bf16.mxu0 0
    %3979 = vmatpush1.bf16.msra.mxu0 %v3962
    %3980 = vmatprep.subr.bf16.mxu0 0
    %3981 = vmatpush1.bf16.msra.mxu0 %v3963
    %3982 = vmatprep.subr.bf16.mxu0 0
    %3983 = vmatpush1.bf16.msra.mxu0 %v3964
    %3984 = vmatprep.subr.bf16.mxu0 0
    %3985 = vmatpush1.bf16.msra.mxu0 %v3965
    %3986 = vmatprep.subr.bf16.mxu0 0
    %3987 = vmatpush1.bf16.msra.mxu0 %v3966
    %3988 = vmatprep.subr.bf16.mxu0 0
    %3989 = vmatpush1.bf16.msra.mxu0 %v3967
    %3990 = vmatprep.subr.bf16.mxu0 0
    %3991 = vmatpush1.bf16.msra.mxu0 %v3968
    %3992 = vmatprep.subr.bf16.mxu0 0
    %3993 = vmatpush1.bf16.msra.mxu0 %v3969
    %3994 = vmatprep.subr.bf16.mxu0 0
    %3995 = vmatpush1.bf16.msra.mxu0 0
    %3996 = vmatprep.subr.bf16.mxu0 0
    %3997 = vmatpush1.bf16.msra.mxu0 0
    %3998 = vmatprep.subr.bf16.mxu0 0
    %3999 = vmatpush1.bf16.msra.mxu0 0
    %4000 = vmatprep.subr.bf16.mxu0 0
    %4001 = vmatpush1.bf16.msra.mxu0 0
    %4002 = vmatprep.subr.bf16.mxu0 0
    %4003 = vmatpush1.bf16.msra.mxu0 0
    %4004 = vmatprep.subr.bf16.mxu0 0
    %4005 = vmatpush1.bf16.msra.mxu0 0
    %4006 = vmatprep.subr.bf16.mxu0 0
    %4007 = vmatpush1.bf16.msra.mxu0 0
    %4008 = vmatprep.subr.bf16.mxu0 0
    %4009 = vmatpush1.bf16.msra.mxu0 0
    %4010 = vmatprep.mubr.bf16.mxu0 0
    %4011 = vmatmul.mubr.bf16.gmra.mrb[0].mxu0 %v3576
    %v4012 = vpop.f32.mrb[0].mxu0
    %v4013 = vadd.f32 0.0, %v4012
    %v4014 = vpop.f32.mrb[0].mxu0
    %v4015 = vpop.f32.mrb[0].mxu0
    %v4016 = vpop.f32.mrb[0].mxu0
    %4017 = vdwg.mxu0
    %v4018 = vadd.f32 %v3913, %v4013
    %v4019 = vtanh.pop %v4018
    %v4020 = vld [vmem:[#allocation2] sm:$0xf]
    %v4021 = vld [vmem:[#allocation2 + $0x4] sm:$0xf]
    %v4022 = vld [vmem:[#allocation2 + $0x8] sm:$0xf]
    %v4023 = vld [vmem:[#allocation2 + $0xc] sm:$0xf]
    %v4024 = vld [vmem:[#allocation2 + $0x10] sm:$0xf]
    %v4025 = vld [vmem:[#allocation2 + $0x14] sm:$0xf]
    %v4026 = vld [vmem:[#allocation2 + $0x18] sm:$0xf]
    %v4027 = vld [vmem:[#allocation2 + $0x1c] sm:$0xf]
    %v4028 = vunpack.c.l.bf16 %v4020
    %v4029 = vunpack.c.l.bf16 %v4021
    %v4030 = vunpack.c.l.bf16 %v4022
    %v4031 = vunpack.c.l.bf16 %v4023
    %v4032 = vunpack.c.l.bf16 %v4024
    %v4033 = vunpack.c.l.bf16 %v4025
    %v4034 = vunpack.c.l.bf16 %v4026
    %v4035 = vunpack.c.l.bf16 %v4027
    %v4036 = vmul.f32 %v4028, %v4019
    %v4037 = vmul.f32 %v4029, %v4019
    %v4038 = vmul.f32 %v4030, %v4019
    %v4039 = vmul.f32 %v4031, %v4019
    %v4040 = vmul.f32 %v4032, %v4019
    %v4041 = vmul.f32 %v4033, %v4019
    %v4042 = vmul.f32 %v4034, %v4019
    %v4043 = vmul.f32 %v4035, %v4019
    %4044 = vadd.xlane.f32.xlu0 %v4036
    %v4045 = vpop.xlane.xlu0 %4044
    %4046 = vadd.xlane.f32.xlu0 %v4037
    %v4047 = vpop.xlane.xlu0 %4046
    %4048 = vadd.xlane.f32.xlu0 %v4038
    %v4049 = vpop.xlane.xlu0 %4048
    %4050 = vadd.xlane.f32.xlu0 %v4039
    %v4051 = vpop.xlane.xlu0 %4050
    %4052 = vadd.xlane.f32.xlu0 %v4040
    %v4053 = vpop.xlane.xlu0 %4052
    %4054 = vadd.xlane.f32.xlu0 %v4041
    %v4055 = vpop.xlane.xlu0 %4054
    %4056 = vadd.xlane.f32.xlu0 %v4042
    %v4057 = vpop.xlane.xlu0 %4056
    %4058 = vadd.xlane.f32.xlu0 %v4043
    %v4059 = vpop.xlane.xlu0 %4058
    %v4060 = vadd.f32 %v4045, %v1360
    %v4061 = vadd.f32 %v4047, %v1361
    %v4062 = vadd.f32 %v4049, %v1362
    %v4063 = vadd.f32 %v4051, %v1363
    %v4064 = vadd.f32 %v4053, %v1364
    %v4065 = vadd.f32 %v4055, %v1365
    %v4066 = vadd.f32 %v4057, %v1366
    %v4067 = vadd.f32 %v4059, %v1367
    %v4068 = vsel %vm1629, %v4060, -inf
    %v4069 = vsel %vm1629, %v4061, -inf
    %v4070 = vsel %vm1629, %v4062, -inf
    %v4071 = vsel %vm1629, %v4063, -inf
    %v4072 = vsel %vm1629, %v4064, -inf
    %v4073 = vmax.f32 %v4068, %v4072
    %v4074 = vsel %vm1629, %v4065, -inf
    %v4075 = vmax.f32 %v4069, %v4074
    %v4076 = vsel %vm1629, %v4066, -inf
    %v4077 = vmax.f32 %v4070, %v4076
    %v4078 = vsel %vm1629, %v4067, -inf
    %v4079 = vmax.f32 %v4071, %v4078
    %v4080 = vmax.f32 %v4073, %v4075
    %v4081 = vmax.f32 %v4077, %v4079
    %v4082 = vmax.f32 %v4080, %v4081
    %v4083 = vsub.f32 %v4060, %v4082
    %v4084 = vsub.f32 %v4061, %v4082
    %v4085 = vsub.f32 %v4062, %v4082
    %v4086 = vsub.f32 %v4063, %v4082
    %v4087 = vsub.f32 %v4064, %v4082
    %v4088 = vsub.f32 %v4065, %v4082
    %v4089 = vsub.f32 %v4066, %v4082
    %v4090 = vsub.f32 %v4067, %v4082
    %v4091 = vmul.f32 %v4083, 1.442695
    %v4092 = vpow.pop %v4091
    %v4093 = vmul.f32 %v4084, 1.442695
    %v4094 = vpow.pop %v4093
    %v4095 = vmul.f32 %v4085, 1.442695
    %v4096 = vpow.pop %v4095
    %v4097 = vmul.f32 %v4086, 1.442695
    %v4098 = vpow.pop %v4097
    %v4099 = vmul.f32 %v4087, 1.442695
    %v4100 = vpow.pop %v4099
    %v4101 = vmul.f32 %v4088, 1.442695
    %v4102 = vpow.pop %v4101
    %v4103 = vmul.f32 %v4089, 1.442695
    %v4104 = vpow.pop %v4103
    %v4105 = vmul.f32 %v4090, 1.442695
    %v4106 = vpow.pop %v4105
    %v4107 = vsel %vm1629, %v4092, 0.0
    %v4108 = vsel %vm1629, %v4094, 0.0
    %v4109 = vadd.f32 %v4107, %v4108
    %v4110 = vsel %vm1629, %v4096, 0.0
    %v4111 = vadd.f32 %v4109, %v4110
    %v4112 = vsel %vm1629, %v4098, 0.0
    %v4113 = vadd.f32 %v4111, %v4112
    %v4114 = vsel %vm1629, %v4100, 0.0
    %v4115 = vadd.f32 %v4113, %v4114
    %v4116 = vsel %vm1629, %v4102, 0.0
    %v4117 = vadd.f32 %v4115, %v4116
    %v4118 = vsel %vm1629, %v4104, 0.0
    %v4119 = vadd.f32 %v4117, %v4118
    %v4120 = vsel %vm1629, %v4106, 0.0
    %v4121 = vadd.f32 %v4119, %v4120
    %v4122 = vrcp.pop %v4121
    %v4123 = vmul.f32 %v4092, %v4122
    %v4124 = vmul.f32 %v4094, %v4122
    %v4125 = vmul.f32 %v4096, %v4122
    %v4126 = vmul.f32 %v4098, %v4122
    %v4127 = vmul.f32 %v4100, %v4122
    %v4128 = vmul.f32 %v4102, %v4122
    %v4129 = vmul.f32 %v4104, %v4122
    %v4130 = vmul.f32 %v4106, %v4122
    %4132 = vset.pattern.permute.xlu0 0
    %4133 = vperm.xlu0 %4132, %v4123
    %v4134 = vpop.permute.xlu0 %4133
    %4137 = vset.pattern.permute.xlu0 0
    %4138 = vperm.xlu0 %4137, %v4124
    %v4139 = vpop.permute.xlu0 %4138
    %4142 = vset.pattern.permute.xlu0 0
    %4143 = vperm.xlu0 %4142, %v4125
    %v4144 = vpop.permute.xlu0 %4143
    %4147 = vset.pattern.permute.xlu0 0
    %4148 = vperm.xlu0 %4147, %v4126
    %v4149 = vpop.permute.xlu0 %4148
    %4152 = vset.pattern.permute.xlu0 0
    %4153 = vperm.xlu0 %4152, %v4127
    %v4154 = vpop.permute.xlu0 %4153
    %4157 = vset.pattern.permute.xlu0 0
    %4158 = vperm.xlu0 %4157, %v4128
    %v4159 = vpop.permute.xlu0 %4158
    %4162 = vset.pattern.permute.xlu0 0
    %4163 = vperm.xlu0 %4162, %v4129
    %v4164 = vpop.permute.xlu0 %4163
    %4167 = vset.pattern.permute.xlu0 0
    %4168 = vperm.xlu0 %4167, %v4130
    %v4169 = vpop.permute.xlu0 %4168
    %v4171 = vmul.f32 %v4134, %v4028
    %v4172 = vmul.f32 %v4139, %v4029
    %v4173 = vmul.f32 %v4144, %v4030
    %v4174 = vmul.f32 %v4149, %v4031
    %v4175 = vmul.f32 %v4154, %v4032
    %v4176 = vmul.f32 %v4159, %v4033
    %v4177 = vmul.f32 %v4164, %v4034
    %v4178 = vmul.f32 %v4169, %v4035
    %v4179 = vadd.f32 %v4171, %v4172
    %v4180 = vadd.f32 %v4179, %v4173
    %v4181 = vadd.f32 %v4180, %v4174
    %v4182 = vadd.f32 %v4181, %v4175
    %v4183 = vadd.f32 %v4182, %v4176
    %v4184 = vadd.f32 %v4183, %v4177
    %v4185 = vadd.f32 %v4184, %v4178
    %v4186 = vpack.c.bf16 %v4019, %v4019
    %v4187 = vld [vmem:[%s10] sm:$0xf]
    %v4188 = vld [vmem:[%s10 + $0x4] sm:$0xf]
    %v4189 = vld [vmem:[%s10 + $0x8] sm:$0xf]
    %v4190 = vld [vmem:[%s10 + $0xc] sm:$0xf]
    %v4191 = vld [vmem:[%s10 + $0x10] sm:$0xf]
    %v4192 = vld [vmem:[%s10 + $0x14] sm:$0xf]
    %v4193 = vld [vmem:[%s10 + $0x18] sm:$0xf]
    %v4194 = vld [vmem:[%s10 + $0x1c] sm:$0xf]
    %v4195 = vld [vmem:[%s10 + $0x20] sm:$0xf]
    %v4196 = vld [vmem:[%s10 + $0x24] sm:$0xf]
    %v4197 = vld [vmem:[%s10 + $0x28] sm:$0xf]
    %v4198 = vld [vmem:[%s10 + $0x2c] sm:$0xf]
    %v4199 = vld [vmem:[%s10 + $0x30] sm:$0xf]
    %v4200 = vld [vmem:[%s10 + $0x34] sm:$0xf]
    %v4201 = vld [vmem:[%s10 + $0x38] sm:$0xf]
    %v4202 = vld [vmem:[%s10 + $0x3c] sm:$0xf]
    %v4203 = vpack.c.bf16 %v4185, %v4185
    %v4204 = vld [vmem:[%s11] sm:$0xf]
    %v4205 = vld [vmem:[%s11 + $0x4] sm:$0xf]
    %v4206 = vld [vmem:[%s11 + $0x8] sm:$0xf]
    %v4207 = vld [vmem:[%s11 + $0xc] sm:$0xf]
    %v4208 = vld [vmem:[%s11 + $0x10] sm:$0xf]
    %v4209 = vld [vmem:[%s11 + $0x14] sm:$0xf]
    %v4210 = vld [vmem:[%s11 + $0x18] sm:$0xf]
    %v4211 = vld [vmem:[%s11 + $0x1c] sm:$0xf]
    %v4212 = vld [vmem:[%s11 + $0x20] sm:$0xf]
    %v4213 = vld [vmem:[%s11 + $0x24] sm:$0xf]
    %v4214 = vld [vmem:[%s11 + $0x28] sm:$0xf]
    %v4215 = vld [vmem:[%s11 + $0x2c] sm:$0xf]
    %v4216 = vld [vmem:[%s11 + $0x30] sm:$0xf]
    %v4217 = vld [vmem:[%s11 + $0x34] sm:$0xf]
    %v4218 = vld [vmem:[%s11 + $0x38] sm:$0xf]
    %v4219 = vld [vmem:[%s11 + $0x3c] sm:$0xf]
    %v4236 = vunpack.c.l.b16 %v4204
    %v4237 = vunpack.c.l.b16 %v4205
    %v4238 = vunpack.c.l.b16 %v4206
    %v4239 = vunpack.c.l.b16 %v4207
    %v4240 = vunpack.c.l.b16 %v4208
    %v4241 = vunpack.c.l.b16 %v4209
    %v4242 = vunpack.c.l.b16 %v4210
    %v4243 = vunpack.c.l.b16 %v4211
    %v4244 = vunpack.c.l.b16 %v4212
    %v4245 = vunpack.c.l.b16 %v4213
    %v4246 = vunpack.c.l.b16 %v4214
    %v4247 = vunpack.c.l.b16 %v4215
    %v4248 = vunpack.c.l.b16 %v4216
    %v4249 = vunpack.c.l.b16 %v4217
    %v4250 = vunpack.c.l.b16 %v4218
    %v4251 = vunpack.c.l.b16 %v4219
    %v4252 = vpack.c.b16 %v4237, %v4236
    %v4253 = vpack.c.b16 %v4239, %v4238
    %v4254 = vpack.c.b16 %v4241, %v4240
    %v4255 = vpack.c.b16 %v4243, %v4242
    %v4256 = vpack.c.b16 %v4245, %v4244
    %v4257 = vpack.c.b16 %v4247, %v4246
    %v4258 = vpack.c.b16 %v4249, %v4248
    %v4259 = vpack.c.b16 %v4251, %v4250
    %4268 = vmatprep.subr.bf16.mxu0 0
    %4269 = vmatpush1.bf16.msra.mxu0 %v4252
    %4270 = vmatprep.subr.bf16.mxu0 0
    %4271 = vmatpush1.bf16.msra.mxu0 %v4253
    %4272 = vmatprep.subr.bf16.mxu0 0
    %4273 = vmatpush1.bf16.msra.mxu0 %v4254
    %4274 = vmatprep.subr.bf16.mxu0 0
    %4275 = vmatpush1.bf16.msra.mxu0 %v4255
    %4276 = vmatprep.subr.bf16.mxu0 0
    %4277 = vmatpush1.bf16.msra.mxu0 %v4256
    %4278 = vmatprep.subr.bf16.mxu0 0
    %4279 = vmatpush1.bf16.msra.mxu0 %v4257
    %4280 = vmatprep.subr.bf16.mxu0 0
    %4281 = vmatpush1.bf16.msra.mxu0 %v4258
    %4282 = vmatprep.subr.bf16.mxu0 0
    %4283 = vmatpush1.bf16.msra.mxu0 %v4259
    %4284 = vmatprep.subr.bf16.mxu0 0
    %4285 = vmatpush1.bf16.msra.mxu0 0
    %4286 = vmatprep.subr.bf16.mxu0 0
    %4287 = vmatpush1.bf16.msra.mxu0 0
    %4288 = vmatprep.subr.bf16.mxu0 0
    %4289 = vmatpush1.bf16.msra.mxu0 0
    %4290 = vmatprep.subr.bf16.mxu0 0
    %4291 = vmatpush1.bf16.msra.mxu0 0
    %4292 = vmatprep.subr.bf16.mxu0 0
    %4293 = vmatpush1.bf16.msra.mxu0 0
    %4294 = vmatprep.subr.bf16.mxu0 0
    %4295 = vmatpush1.bf16.msra.mxu0 0
    %4296 = vmatprep.subr.bf16.mxu0 0
    %4297 = vmatpush1.bf16.msra.mxu0 0
    %4298 = vmatprep.subr.bf16.mxu0 0
    %4299 = vmatpush1.bf16.msra.mxu0 0
    %4300 = vmatprep.mubr.bf16.mxu0 0
    %4301 = vmatmul.mubr.bf16.gmra.mrb[0].mxu0 %v4203
    %v4302 = vpop.f32.mrb[0].mxu0
    %v4303 = vadd.f32 0.0, %v4302
    %v4304 = vpop.f32.mrb[0].mxu0
    %v4305 = vpop.f32.mrb[0].mxu0
    %v4306 = vpop.f32.mrb[0].mxu0
    %4307 = vdwg.mxu0
    %v4324 = vunpack.c.l.b16 %v4187
    %v4325 = vunpack.c.l.b16 %v4188
    %v4326 = vunpack.c.l.b16 %v4189
    %v4327 = vunpack.c.l.b16 %v4190
    %v4328 = vunpack.c.l.b16 %v4191
    %v4329 = vunpack.c.l.b16 %v4192
    %v4330 = vunpack.c.l.b16 %v4193
    %v4331 = vunpack.c.l.b16 %v4194
    %v4332 = vunpack.c.l.b16 %v4195
    %v4333 = vunpack.c.l.b16 %v4196
    %v4334 = vunpack.c.l.b16 %v4197
    %v4335 = vunpack.c.l.b16 %v4198
    %v4336 = vunpack.c.l.b16 %v4199
    %v4337 = vunpack.c.l.b16 %v4200
    %v4338 = vunpack.c.l.b16 %v4201
    %v4339 = vunpack.c.l.b16 %v4202
    %v4340 = vpack.c.b16 %v4325, %v4324
    %v4341 = vpack.c.b16 %v4327, %v4326
    %v4342 = vpack.c.b16 %v4329, %v4328
    %v4343 = vpack.c.b16 %v4331, %v4330
    %v4344 = vpack.c.b16 %v4333, %v4332
    %v4345 = vpack.c.b16 %v4335, %v4334
    %v4346 = vpack.c.b16 %v4337, %v4336
    %v4347 = vpack.c.b16 %v4339, %v4338
    %4356 = vmatprep.subr.bf16.mxu0 0
    %4357 = vmatpush1.bf16.msra.mxu0 %v4340
    %4358 = vmatprep.subr.bf16.mxu0 0
    %4359 = vmatpush1.bf16.msra.mxu0 %v4341
    %4360 = vmatprep.subr.bf16.mxu0 0
    %4361 = vmatpush1.bf16.msra.mxu0 %v4342
    %4362 = vmatprep.subr.bf16.mxu0 0
    %4363 = vmatpush1.bf16.msra.mxu0 %v4343
    %4364 = vmatprep.subr.bf16.mxu0 0
    %4365 = vmatpush1.bf16.msra.mxu0 %v4344
    %4366 = vmatprep.subr.bf16.mxu0 0
    %4367 = vmatpush1.bf16.msra.mxu0 %v4345
    %4368 = vmatprep.subr.bf16.mxu0 0
    %4369 = vmatpush1.bf16.msra.mxu0 %v4346
    %4370 = vmatprep.subr.bf16.mxu0 0
    %4371 = vmatpush1.bf16.msra.mxu0 %v4347
    %4372 = vmatprep.subr.bf16.mxu0 0
    %4373 = vmatpush1.bf16.msra.mxu0 0
    %4374 = vmatprep.subr.bf16.mxu0 0
    %4375 = vmatpush1.bf16.msra.mxu0 0
    %4376 = vmatprep.subr.bf16.mxu0 0
    %4377 = vmatpush1.bf16.msra.mxu0 0
    %4378 = vmatprep.subr.bf16.mxu0 0
    %4379 = vmatpush1.bf16.msra.mxu0 0
    %4380 = vmatprep.subr.bf16.mxu0 0
    %4381 = vmatpush1.bf16.msra.mxu0 0
    %4382 = vmatprep.subr.bf16.mxu0 0
    %4383 = vmatpush1.bf16.msra.mxu0 0
    %4384 = vmatprep.subr.bf16.mxu0 0
    %4385 = vmatpush1.bf16.msra.mxu0 0
    %4386 = vmatprep.subr.bf16.mxu0 0
    %4387 = vmatpush1.bf16.msra.mxu0 0
    %4388 = vmatprep.mubr.bf16.mxu0 0
    %4389 = vmatmul.mubr.bf16.gmra.mrb[0].mxu0 %v4186
    %v4390 = vpop.f32.mrb[0].mxu0
    %v4391 = vadd.f32 %v4303, %v4390
    %v4392 = vpop.f32.mrb[0].mxu0
    %v4393 = vpop.f32.mrb[0].mxu0
    %v4394 = vpop.f32.mrb[0].mxu0
    %4395 = vdwg.mxu0
    %v4396 = vld [vmem:[%s12] sm:$0x1]
    %v4398 = vlaneseq
    %v4399 = vshrl.u32 %v4398, 7
    %v4400 = vsub.s32 0, %v4399
    %v4401 = vrot.slane %v4396, %v4400
    %v4403 = vadd.f32 %v4391, %v4401
    %v4404 = vtanh.pop %v4403
    %s4405 = scalar_lea.vmem [#allocation4], 32
    %4406 = vst [vmem:[%s4405] sm:$0xff] %v4404
    %s4407 = scalar_lea.vmem %s14, 256
    %4408 = vst.msk [vmem:[%s4407] sm:$0xff] %vm1629, %v4123
    %4409 = vst.msk [vmem:[%s4407 + $0x8] sm:$0xff] %vm1629, %v4124
    %4410 = vst.msk [vmem:[%s4407 + $0x10] sm:$0xff] %vm1629, %v4125
    %4411 = vst.msk [vmem:[%s4407 + $0x18] sm:$0xff] %vm1629, %v4126
    %4412 = vst.msk [vmem:[%s4407 + $0x20] sm:$0xff] %vm1629, %v4127
    %4413 = vst.msk [vmem:[%s4407 + $0x28] sm:$0xff] %vm1629, %v4128
    %4414 = vst.msk [vmem:[%s4407 + $0x30] sm:$0xff] %vm1629, %v4129
    %4415 = vst.msk [vmem:[%s4407 + $0x38] sm:$0xff] %vm1629, %v4130
    %s4416 = scalar_lea.vmem [#allocation3], 40
    %v4417 = vld [vmem:[%s4416] sm:$0xff]
    %v4418 = vpack.c.bf16 %v4404, %v4404
    %v4419 = vld [vmem:[%s7] sm:$0xf]
    %v4420 = vld [vmem:[%s7 + $0x4] sm:$0xf]
    %v4421 = vld [vmem:[%s7 + $0x8] sm:$0xf]
    %v4422 = vld [vmem:[%s7 + $0xc] sm:$0xf]
    %v4423 = vld [vmem:[%s7 + $0x10] sm:$0xf]
    %v4424 = vld [vmem:[%s7 + $0x14] sm:$0xf]
    %v4425 = vld [vmem:[%s7 + $0x18] sm:$0xf]
    %v4426 = vld [vmem:[%s7 + $0x1c] sm:$0xf]
    %v4427 = vld [vmem:[%s7 + $0x20] sm:$0xf]
    %v4428 = vld [vmem:[%s7 + $0x24] sm:$0xf]
    %v4429 = vld [vmem:[%s7 + $0x28] sm:$0xf]
    %v4430 = vld [vmem:[%s7 + $0x2c] sm:$0xf]
    %v4431 = vld [vmem:[%s7 + $0x30] sm:$0xf]
    %v4432 = vld [vmem:[%s7 + $0x34] sm:$0xf]
    %v4433 = vld [vmem:[%s7 + $0x38] sm:$0xf]
    %v4434 = vld [vmem:[%s7 + $0x3c] sm:$0xf]
    %v4451 = vunpack.c.l.b16 %v4419
    %v4452 = vunpack.c.l.b16 %v4420
    %v4453 = vunpack.c.l.b16 %v4421
    %v4454 = vunpack.c.l.b16 %v4422
    %v4455 = vunpack.c.l.b16 %v4423
    %v4456 = vunpack.c.l.b16 %v4424
    %v4457 = vunpack.c.l.b16 %v4425
    %v4458 = vunpack.c.l.b16 %v4426
    %v4459 = vunpack.c.l.b16 %v4427
    %v4460 = vunpack.c.l.b16 %v4428
    %v4461 = vunpack.c.l.b16 %v4429
    %v4462 = vunpack.c.l.b16 %v4430
    %v4463 = vunpack.c.l.b16 %v4431
    %v4464 = vunpack.c.l.b16 %v4432
    %v4465 = vunpack.c.l.b16 %v4433
    %v4466 = vunpack.c.l.b16 %v4434
    %v4467 = vpack.c.b16 %v4452, %v4451
    %v4468 = vpack.c.b16 %v4454, %v4453
    %v4469 = vpack.c.b16 %v4456, %v4455
    %v4470 = vpack.c.b16 %v4458, %v4457
    %v4471 = vpack.c.b16 %v4460, %v4459
    %v4472 = vpack.c.b16 %v4462, %v4461
    %v4473 = vpack.c.b16 %v4464, %v4463
    %v4474 = vpack.c.b16 %v4466, %v4465
    %4483 = vmatprep.subr.bf16.mxu0 0
    %4484 = vmatpush1.bf16.msra.mxu0 %v4467
    %4485 = vmatprep.subr.bf16.mxu0 0
    %4486 = vmatpush1.bf16.msra.mxu0 %v4468
    %4487 = vmatprep.subr.bf16.mxu0 0
    %4488 = vmatpush1.bf16.msra.mxu0 %v4469
    %4489 = vmatprep.subr.bf16.mxu0 0
    %4490 = vmatpush1.bf16.msra.mxu0 %v4470
    %4491 = vmatprep.subr.bf16.mxu0 0
    %4492 = vmatpush1.bf16.msra.mxu0 %v4471
    %4493 = vmatprep.subr.bf16.mxu0 0
    %4494 = vmatpush1.bf16.msra.mxu0 %v4472
    %4495 = vmatprep.subr.bf16.mxu0 0
    %4496 = vmatpush1.bf16.msra.mxu0 %v4473
    %4497 = vmatprep.subr.bf16.mxu0 0
    %4498 = vmatpush1.bf16.msra.mxu0 %v4474
    %4499 = vmatprep.subr.bf16.mxu0 0
    %4500 = vmatpush1.bf16.msra.mxu0 0
    %4501 = vmatprep.subr.bf16.mxu0 0
    %4502 = vmatpush1.bf16.msra.mxu0 0
    %4503 = vmatprep.subr.bf16.mxu0 0
    %4504 = vmatpush1.bf16.msra.mxu0 0
    %4505 = vmatprep.subr.bf16.mxu0 0
    %4506 = vmatpush1.bf16.msra.mxu0 0
    %4507 = vmatprep.subr.bf16.mxu0 0
    %4508 = vmatpush1.bf16.msra.mxu0 0
    %4509 = vmatprep.subr.bf16.mxu0 0
    %4510 = vmatpush1.bf16.msra.mxu0 0
    %4511 = vmatprep.subr.bf16.mxu0 0
    %4512 = vmatpush1.bf16.msra.mxu0 0
    %4513 = vmatprep.subr.bf16.mxu0 0
    %4514 = vmatpush1.bf16.msra.mxu0 0
    %4515 = vmatprep.mubr.bf16.mxu0 0
    %4516 = vmatmul.mubr.bf16.gmra.mrb[0].mxu0 %v4418
    %v4517 = vpop.f32.mrb[0].mxu0
    %v4518 = vadd.f32 0.0, %v4517
    %v4519 = vpop.f32.mrb[0].mxu0
    %v4520 = vpop.f32.mrb[0].mxu0
    %v4521 = vpop.f32.mrb[0].mxu0
    %4522 = vdwg.mxu0
    %v4523 = vadd.f32 %v4417, %v4518
    %v4524 = vld [vmem:[%s8] sm:$0xf]
    %v4525 = vld [vmem:[%s8 + $0x4] sm:$0xf]
    %v4526 = vld [vmem:[%s8 + $0x8] sm:$0xf]
    %v4527 = vld [vmem:[%s8 + $0xc] sm:$0xf]
    %v4528 = vld [vmem:[%s8 + $0x10] sm:$0xf]
    %v4529 = vld [vmem:[%s8 + $0x14] sm:$0xf]
    %v4530 = vld [vmem:[%s8 + $0x18] sm:$0xf]
    %v4531 = vld [vmem:[%s8 + $0x1c] sm:$0xf]
    %v4532 = vld [vmem:[%s8 + $0x20] sm:$0xf]
    %v4533 = vld [vmem:[%s8 + $0x24] sm:$0xf]
    %v4534 = vld [vmem:[%s8 + $0x28] sm:$0xf]
    %v4535 = vld [vmem:[%s8 + $0x2c] sm:$0xf]
    %v4536 = vld [vmem:[%s8 + $0x30] sm:$0xf]
    %v4537 = vld [vmem:[%s8 + $0x34] sm:$0xf]
    %v4538 = vld [vmem:[%s8 + $0x38] sm:$0xf]
    %v4539 = vld [vmem:[%s8 + $0x3c] sm:$0xf]
    %v4556 = vunpack.c.l.b16 %v4524
    %v4557 = vunpack.c.l.b16 %v4525
    %v4558 = vunpack.c.l.b16 %v4526
    %v4559 = vunpack.c.l.b16 %v4527
    %v4560 = vunpack.c.l.b16 %v4528
    %v4561 = vunpack.c.l.b16 %v4529
    %v4562 = vunpack.c.l.b16 %v4530
    %v4563 = vunpack.c.l.b16 %v4531
    %v4564 = vunpack.c.l.b16 %v4532
    %v4565 = vunpack.c.l.b16 %v4533
    %v4566 = vunpack.c.l.b16 %v4534
    %v4567 = vunpack.c.l.b16 %v4535
    %v4568 = vunpack.c.l.b16 %v4536
    %v4569 = vunpack.c.l.b16 %v4537
    %v4570 = vunpack.c.l.b16 %v4538
    %v4571 = vunpack.c.l.b16 %v4539
    %v4572 = vpack.c.b16 %v4557, %v4556
    %v4573 = vpack.c.b16 %v4559, %v4558
    %v4574 = vpack.c.b16 %v4561, %v4560
    %v4575 = vpack.c.b16 %v4563, %v4562
    %v4576 = vpack.c.b16 %v4565, %v4564
    %v4577 = vpack.c.b16 %v4567, %v4566
    %v4578 = vpack.c.b16 %v4569, %v4568
    %v4579 = vpack.c.b16 %v4571, %v4570
    %4588 = vmatprep.subr.bf16.mxu0 0
    %4589 = vmatpush1.bf16.msra.mxu0 %v4572
    %4590 = vmatprep.subr.bf16.mxu0 0
    %4591 = vmatpush1.bf16.msra.mxu0 %v4573
    %4592 = vmatprep.subr.bf16.mxu0 0
    %4593 = vmatpush1.bf16.msra.mxu0 %v4574
    %4594 = vmatprep.subr.bf16.mxu0 0
    %4595 = vmatpush1.bf16.msra.mxu0 %v4575
    %4596 = vmatprep.subr.bf16.mxu0 0
    %4597 = vmatpush1.bf16.msra.mxu0 %v4576
    %4598 = vmatprep.subr.bf16.mxu0 0
    %4599 = vmatpush1.bf16.msra.mxu0 %v4577
    %4600 = vmatprep.subr.bf16.mxu0 0
    %4601 = vmatpush1.bf16.msra.mxu0 %v4578
    %4602 = vmatprep.subr.bf16.mxu0 0
    %4603 = vmatpush1.bf16.msra.mxu0 %v4579
    %4604 = vmatprep.subr.bf16.mxu0 0
    %4605 = vmatpush1.bf16.msra.mxu0 0
    %4606 = vmatprep.subr.bf16.mxu0 0
    %4607 = vmatpush1.bf16.msra.mxu0 0
    %4608 = vmatprep.subr.bf16.mxu0 0
    %4609 = vmatpush1.bf16.msra.mxu0 0
    %4610 = vmatprep.subr.bf16.mxu0 0
    %4611 = vmatpush1.bf16.msra.mxu0 0
    %4612 = vmatprep.subr.bf16.mxu0 0
    %4613 = vmatpush1.bf16.msra.mxu0 0
    %4614 = vmatprep.subr.bf16.mxu0 0
    %4615 = vmatpush1.bf16.msra.mxu0 0
    %4616 = vmatprep.subr.bf16.mxu0 0
    %4617 = vmatpush1.bf16.msra.mxu0 0
    %4618 = vmatprep.subr.bf16.mxu0 0
    %4619 = vmatpush1.bf16.msra.mxu0 0
    %4620 = vmatprep.mubr.bf16.mxu0 0
    %4621 = vmatmul.mubr.bf16.gmra.mrb[0].mxu0 %v4186
    %v4622 = vpop.f32.mrb[0].mxu0
    %v4623 = vadd.f32 0.0, %v4622
    %v4624 = vpop.f32.mrb[0].mxu0
    %v4625 = vpop.f32.mrb[0].mxu0
    %v4626 = vpop.f32.mrb[0].mxu0
    %4627 = vdwg.mxu0
    %v4628 = vadd.f32 %v4523, %v4623
    %v4629 = vtanh.pop %v4628
    %v4630 = vld [vmem:[#allocation2] sm:$0xf]
    %v4631 = vld [vmem:[#allocation2 + $0x4] sm:$0xf]
    %v4632 = vld [vmem:[#allocation2 + $0x8] sm:$0xf]
    %v4633 = vld [vmem:[#allocation2 + $0xc] sm:$0xf]
    %v4634 = vld [vmem:[#allocation2 + $0x10] sm:$0xf]
    %v4635 = vld [vmem:[#allocation2 + $0x14] sm:$0xf]
    %v4636 = vld [vmem:[#allocation2 + $0x18] sm:$0xf]
    %v4637 = vld [vmem:[#allocation2 + $0x1c] sm:$0xf]
    %v4638 = vunpack.c.l.bf16 %v4630
    %v4639 = vunpack.c.l.bf16 %v4631
    %v4640 = vunpack.c.l.bf16 %v4632
    %v4641 = vunpack.c.l.bf16 %v4633
    %v4642 = vunpack.c.l.bf16 %v4634
    %v4643 = vunpack.c.l.bf16 %v4635
    %v4644 = vunpack.c.l.bf16 %v4636
    %v4645 = vunpack.c.l.bf16 %v4637
    %v4646 = vmul.f32 %v4638, %v4629
    %v4647 = vmul.f32 %v4639, %v4629
    %v4648 = vmul.f32 %v4640, %v4629
    %v4649 = vmul.f32 %v4641, %v4629
    %v4650 = vmul.f32 %v4642, %v4629
    %v4651 = vmul.f32 %v4643, %v4629
    %v4652 = vmul.f32 %v4644, %v4629
    %v4653 = vmul.f32 %v4645, %v4629
    %4654 = vadd.xlane.f32.xlu0 %v4646
    %v4655 = vpop.xlane.xlu0 %4654
    %4656 = vadd.xlane.f32.xlu0 %v4647
    %v4657 = vpop.xlane.xlu0 %4656
    %4658 = vadd.xlane.f32.xlu0 %v4648
    %v4659 = vpop.xlane.xlu0 %4658
    %4660 = vadd.xlane.f32.xlu0 %v4649
    %v4661 = vpop.xlane.xlu0 %4660
    %4662 = vadd.xlane.f32.xlu0 %v4650
    %v4663 = vpop.xlane.xlu0 %4662
    %4664 = vadd.xlane.f32.xlu0 %v4651
    %v4665 = vpop.xlane.xlu0 %4664
    %4666 = vadd.xlane.f32.xlu0 %v4652
    %v4667 = vpop.xlane.xlu0 %4666
    %4668 = vadd.xlane.f32.xlu0 %v4653
    %v4669 = vpop.xlane.xlu0 %4668
    %v4670 = vadd.f32 %v4655, %v1360
    %v4671 = vadd.f32 %v4657, %v1361
    %v4672 = vadd.f32 %v4659, %v1362
    %v4673 = vadd.f32 %v4661, %v1363
    %v4674 = vadd.f32 %v4663, %v1364
    %v4675 = vadd.f32 %v4665, %v1365
    %v4676 = vadd.f32 %v4667, %v1366
    %v4677 = vadd.f32 %v4669, %v1367
    %v4678 = vsel %vm1629, %v4670, -inf
    %v4679 = vsel %vm1629, %v4671, -inf
    %v4680 = vsel %vm1629, %v4672, -inf
    %v4681 = vsel %vm1629, %v4673, -inf
    %v4682 = vsel %vm1629, %v4674, -inf
    %v4683 = vmax.f32 %v4678, %v4682
    %v4684 = vsel %vm1629, %v4675, -inf
    %v4685 = vmax.f32 %v4679, %v4684
    %v4686 = vsel %vm1629, %v4676, -inf
    %v4687 = vmax.f32 %v4680, %v4686
    %v4688 = vsel %vm1629, %v4677, -inf
    %v4689 = vmax.f32 %v4681, %v4688
    %v4690 = vmax.f32 %v4683, %v4685
    %v4691 = vmax.f32 %v4687, %v4689
    %v4692 = vmax.f32 %v4690, %v4691
    %v4693 = vsub.f32 %v4670, %v4692
    %v4694 = vsub.f32 %v4671, %v4692
    %v4695 = vsub.f32 %v4672, %v4692
    %v4696 = vsub.f32 %v4673, %v4692
    %v4697 = vsub.f32 %v4674, %v4692
    %v4698 = vsub.f32 %v4675, %v4692
    %v4699 = vsub.f32 %v4676, %v4692
    %v4700 = vsub.f32 %v4677, %v4692
    %v4701 = vmul.f32 %v4693, 1.442695
    %v4702 = vpow.pop %v4701
    %v4703 = vmul.f32 %v4694, 1.442695
    %v4704 = vpow.pop %v4703
    %v4705 = vmul.f32 %v4695, 1.442695
    %v4706 = vpow.pop %v4705
    %v4707 = vmul.f32 %v4696, 1.442695
    %v4708 = vpow.pop %v4707
    %v4709 = vmul.f32 %v4697, 1.442695
    %v4710 = vpow.pop %v4709
    %v4711 = vmul.f32 %v4698, 1.442695
    %v4712 = vpow.pop %v4711
    %v4713 = vmul.f32 %v4699, 1.442695
    %v4714 = vpow.pop %v4713
    %v4715 = vmul.f32 %v4700, 1.442695
    %v4716 = vpow.pop %v4715
    %v4717 = vsel %vm1629, %v4702, 0.0
    %v4718 = vsel %vm1629, %v4704, 0.0
    %v4719 = vadd.f32 %v4717, %v4718
    %v4720 = vsel %vm1629, %v4706, 0.0
    %v4721 = vadd.f32 %v4719, %v4720
    %v4722 = vsel %vm1629, %v4708, 0.0
    %v4723 = vadd.f32 %v4721, %v4722
    %v4724 = vsel %vm1629, %v4710, 0.0
    %v4725 = vadd.f32 %v4723, %v4724
    %v4726 = vsel %vm1629, %v4712, 0.0
    %v4727 = vadd.f32 %v4725, %v4726
    %v4728 = vsel %vm1629, %v4714, 0.0
    %v4729 = vadd.f32 %v4727, %v4728
    %v4730 = vsel %vm1629, %v4716, 0.0
    %v4731 = vadd.f32 %v4729, %v4730
    %v4732 = vrcp.pop %v4731
    %v4733 = vmul.f32 %v4702, %v4732
    %v4734 = vmul.f32 %v4704, %v4732
    %v4735 = vmul.f32 %v4706, %v4732
    %v4736 = vmul.f32 %v4708, %v4732
    %v4737 = vmul.f32 %v4710, %v4732
    %v4738 = vmul.f32 %v4712, %v4732
    %v4739 = vmul.f32 %v4714, %v4732
    %v4740 = vmul.f32 %v4716, %v4732
    %4742 = vset.pattern.permute.xlu0 0
    %4743 = vperm.xlu0 %4742, %v4733
    %v4744 = vpop.permute.xlu0 %4743
    %4747 = vset.pattern.permute.xlu0 0
    %4748 = vperm.xlu0 %4747, %v4734
    %v4749 = vpop.permute.xlu0 %4748
    %4752 = vset.pattern.permute.xlu0 0
    %4753 = vperm.xlu0 %4752, %v4735
    %v4754 = vpop.permute.xlu0 %4753
    %4757 = vset.pattern.permute.xlu0 0
    %4758 = vperm.xlu0 %4757, %v4736
    %v4759 = vpop.permute.xlu0 %4758
    %4762 = vset.pattern.permute.xlu0 0
    %4763 = vperm.xlu0 %4762, %v4737
    %v4764 = vpop.permute.xlu0 %4763
    %4767 = vset.pattern.permute.xlu0 0
    %4768 = vperm.xlu0 %4767, %v4738
    %v4769 = vpop.permute.xlu0 %4768
    %4772 = vset.pattern.permute.xlu0 0
    %4773 = vperm.xlu0 %4772, %v4739
    %v4774 = vpop.permute.xlu0 %4773
    %4777 = vset.pattern.permute.xlu0 0
    %4778 = vperm.xlu0 %4777, %v4740
    %v4779 = vpop.permute.xlu0 %4778
    %v4781 = vmul.f32 %v4744, %v4638
    %v4782 = vmul.f32 %v4749, %v4639
    %v4783 = vmul.f32 %v4754, %v4640
    %v4784 = vmul.f32 %v4759, %v4641
    %v4785 = vmul.f32 %v4764, %v4642
    %v4786 = vmul.f32 %v4769, %v4643
    %v4787 = vmul.f32 %v4774, %v4644
    %v4788 = vmul.f32 %v4779, %v4645
    %v4789 = vadd.f32 %v4781, %v4782
    %v4790 = vadd.f32 %v4789, %v4783
    %v4791 = vadd.f32 %v4790, %v4784
    %v4792 = vadd.f32 %v4791, %v4785
    %v4793 = vadd.f32 %v4792, %v4786
    %v4794 = vadd.f32 %v4793, %v4787
    %v4795 = vadd.f32 %v4794, %v4788
    %v4796 = vpack.c.bf16 %v4629, %v4629
    %v4797 = vld [vmem:[%s10] sm:$0xf]
    %v4798 = vld [vmem:[%s10 + $0x4] sm:$0xf]
    %v4799 = vld [vmem:[%s10 + $0x8] sm:$0xf]
    %v4800 = vld [vmem:[%s10 + $0xc] sm:$0xf]
    %v4801 = vld [vmem:[%s10 + $0x10] sm:$0xf]
    %v4802 = vld [vmem:[%s10 + $0x14] sm:$0xf]
    %v4803 = vld [vmem:[%s10 + $0x18] sm:$0xf]
    %v4804 = vld [vmem:[%s10 + $0x1c] sm:$0xf]
    %v4805 = vld [vmem:[%s10 + $0x20] sm:$0xf]
    %v4806 = vld [vmem:[%s10 + $0x24] sm:$0xf]
    %v4807 = vld [vmem:[%s10 + $0x28] sm:$0xf]
    %v4808 = vld [vmem:[%s10 + $0x2c] sm:$0xf]
    %v4809 = vld [vmem:[%s10 + $0x30] sm:$0xf]
    %v4810 = vld [vmem:[%s10 + $0x34] sm:$0xf]
    %v4811 = vld [vmem:[%s10 + $0x38] sm:$0xf]
    %v4812 = vld [vmem:[%s10 + $0x3c] sm:$0xf]
    %v4813 = vpack.c.bf16 %v4795, %v4795
    %v4814 = vld [vmem:[%s11] sm:$0xf]
    %v4815 = vld [vmem:[%s11 + $0x4] sm:$0xf]
    %v4816 = vld [vmem:[%s11 + $0x8] sm:$0xf]
    %v4817 = vld [vmem:[%s11 + $0xc] sm:$0xf]
    %v4818 = vld [vmem:[%s11 + $0x10] sm:$0xf]
    %v4819 = vld [vmem:[%s11 + $0x14] sm:$0xf]
    %v4820 = vld [vmem:[%s11 + $0x18] sm:$0xf]
    %v4821 = vld [vmem:[%s11 + $0x1c] sm:$0xf]
    %v4822 = vld [vmem:[%s11 + $0x20] sm:$0xf]
    %v4823 = vld [vmem:[%s11 + $0x24] sm:$0xf]
    %v4824 = vld [vmem:[%s11 + $0x28] sm:$0xf]
    %v4825 = vld [vmem:[%s11 + $0x2c] sm:$0xf]
    %v4826 = vld [vmem:[%s11 + $0x30] sm:$0xf]
    %v4827 = vld [vmem:[%s11 + $0x34] sm:$0xf]
    %v4828 = vld [vmem:[%s11 + $0x38] sm:$0xf]
    %v4829 = vld [vmem:[%s11 + $0x3c] sm:$0xf]
    %v4846 = vunpack.c.l.b16 %v4814
    %v4847 = vunpack.c.l.b16 %v4815
    %v4848 = vunpack.c.l.b16 %v4816
    %v4849 = vunpack.c.l.b16 %v4817
    %v4850 = vunpack.c.l.b16 %v4818
    %v4851 = vunpack.c.l.b16 %v4819
    %v4852 = vunpack.c.l.b16 %v4820
    %v4853 = vunpack.c.l.b16 %v4821
    %v4854 = vunpack.c.l.b16 %v4822
    %v4855 = vunpack.c.l.b16 %v4823
    %v4856 = vunpack.c.l.b16 %v4824
    %v4857 = vunpack.c.l.b16 %v4825
    %v4858 = vunpack.c.l.b16 %v4826
    %v4859 = vunpack.c.l.b16 %v4827
    %v4860 = vunpack.c.l.b16 %v4828
    %v4861 = vunpack.c.l.b16 %v4829
    %v4862 = vpack.c.b16 %v4847, %v4846
    %v4863 = vpack.c.b16 %v4849, %v4848
    %v4864 = vpack.c.b16 %v4851, %v4850
    %v4865 = vpack.c.b16 %v4853, %v4852
    %v4866 = vpack.c.b16 %v4855, %v4854
    %v4867 = vpack.c.b16 %v4857, %v4856
    %v4868 = vpack.c.b16 %v4859, %v4858
    %v4869 = vpack.c.b16 %v4861, %v4860
    %4878 = vmatprep.subr.bf16.mxu0 0
    %4879 = vmatpush1.bf16.msra.mxu0 %v4862
    %4880 = vmatprep.subr.bf16.mxu0 0
    %4881 = vmatpush1.bf16.msra.mxu0 %v4863
    %4882 = vmatprep.subr.bf16.mxu0 0
    %4883 = vmatpush1.bf16.msra.mxu0 %v4864
    %4884 = vmatprep.subr.bf16.mxu0 0
    %4885 = vmatpush1.bf16.msra.mxu0 %v4865
    %4886 = vmatprep.subr.bf16.mxu0 0
    %4887 = vmatpush1.bf16.msra.mxu0 %v4866
    %4888 = vmatprep.subr.bf16.mxu0 0
    %4889 = vmatpush1.bf16.msra.mxu0 %v4867
    %4890 = vmatprep.subr.bf16.mxu0 0
    %4891 = vmatpush1.bf16.msra.mxu0 %v4868
    %4892 = vmatprep.subr.bf16.mxu0 0
    %4893 = vmatpush1.bf16.msra.mxu0 %v4869
    %4894 = vmatprep.subr.bf16.mxu0 0
    %4895 = vmatpush1.bf16.msra.mxu0 0
    %4896 = vmatprep.subr.bf16.mxu0 0
    %4897 = vmatpush1.bf16.msra.mxu0 0
    %4898 = vmatprep.subr.bf16.mxu0 0
    %4899 = vmatpush1.bf16.msra.mxu0 0
    %4900 = vmatprep.subr.bf16.mxu0 0
    %4901 = vmatpush1.bf16.msra.mxu0 0
    %4902 = vmatprep.subr.bf16.mxu0 0
    %4903 = vmatpush1.bf16.msra.mxu0 0
    %4904 = vmatprep.subr.bf16.mxu0 0
    %4905 = vmatpush1.bf16.msra.mxu0 0
    %4906 = vmatprep.subr.bf16.mxu0 0
    %4907 = vmatpush1.bf16.msra.mxu0 0
    %4908 = vmatprep.subr.bf16.mxu0 0
    %4909 = vmatpush1.bf16.msra.mxu0 0
    %4910 = vmatprep.mubr.bf16.mxu0 0
    %4911 = vmatmul.mubr.bf16.gmra.mrb[0].mxu0 %v4813
    %v4912 = vpop.f32.mrb[0].mxu0
    %v4913 = vadd.f32 0.0, %v4912
    %v4914 = vpop.f32.mrb[0].mxu0
    %v4915 = vpop.f32.mrb[0].mxu0
    %v4916 = vpop.f32.mrb[0].mxu0
    %4917 = vdwg.mxu0
    %v4934 = vunpack.c.l.b16 %v4797
    %v4935 = vunpack.c.l.b16 %v4798
    %v4936 = vunpack.c.l.b16 %v4799
    %v4937 = vunpack.c.l.b16 %v4800
    %v4938 = vunpack.c.l.b16 %v4801
    %v4939 = vunpack.c.l.b16 %v4802
    %v4940 = vunpack.c.l.b16 %v4803
    %v4941 = vunpack.c.l.b16 %v4804
    %v4942 = vunpack.c.l.b16 %v4805
    %v4943 = vunpack.c.l.b16 %v4806
    %v4944 = vunpack.c.l.b16 %v4807
    %v4945 = vunpack.c.l.b16 %v4808
    %v4946 = vunpack.c.l.b16 %v4809
    %v4947 = vunpack.c.l.b16 %v4810
    %v4948 = vunpack.c.l.b16 %v4811
    %v4949 = vunpack.c.l.b16 %v4812
    %v4950 = vpack.c.b16 %v4935, %v4934
    %v4951 = vpack.c.b16 %v4937, %v4936
    %v4952 = vpack.c.b16 %v4939, %v4938
    %v4953 = vpack.c.b16 %v4941, %v4940
    %v4954 = vpack.c.b16 %v4943, %v4942
    %v4955 = vpack.c.b16 %v4945, %v4944
    %v4956 = vpack.c.b16 %v4947, %v4946
    %v4957 = vpack.c.b16 %v4949, %v4948
    %4966 = vmatprep.subr.bf16.mxu0 0
    %4967 = vmatpush1.bf16.msra.mxu0 %v4950
    %4968 = vmatprep.subr.bf16.mxu0 0
    %4969 = vmatpush1.bf16.msra.mxu0 %v4951
    %4970 = vmatprep.subr.bf16.mxu0 0
    %4971 = vmatpush1.bf16.msra.mxu0 %v4952
    %4972 = vmatprep.subr.bf16.mxu0 0
    %4973 = vmatpush1.bf16.msra.mxu0 %v4953
    %4974 = vmatprep.subr.bf16.mxu0 0
    %4975 = vmatpush1.bf16.msra.mxu0 %v4954
    %4976 = vmatprep.subr.bf16.mxu0 0
    %4977 = vmatpush1.bf16.msra.mxu0 %v4955
    %4978 = vmatprep.subr.bf16.mxu0 0
    %4979 = vmatpush1.bf16.msra.mxu0 %v4956
    %4980 = vmatprep.subr.bf16.mxu0 0
    %4981 = vmatpush1.bf16.msra.mxu0 %v4957
    %4982 = vmatprep.subr.bf16.mxu0 0
    %4983 = vmatpush1.bf16.msra.mxu0 0
    %4984 = vmatprep.subr.bf16.mxu0 0
    %4985 = vmatpush1.bf16.msra.mxu0 0
    %4986 = vmatprep.subr.bf16.mxu0 0
    %4987 = vmatpush1.bf16.msra.mxu0 0
    %4988 = vmatprep.subr.bf16.mxu0 0
    %4989 = vmatpush1.bf16.msra.mxu0 0
    %4990 = vmatprep.subr.bf16.mxu0 0
    %4991 = vmatpush1.bf16.msra.mxu0 0
    %4992 = vmatprep.subr.bf16.mxu0 0
    %4993 = vmatpush1.bf16.msra.mxu0 0
    %4994 = vmatprep.subr.bf16.mxu0 0
    %4995 = vmatpush1.bf16.msra.mxu0 0
    %4996 = vmatprep.subr.bf16.mxu0 0
    %4997 = vmatpush1.bf16.msra.mxu0 0
    %4998 = vmatprep.mubr.bf16.mxu0 0
    %4999 = vmatmul.mubr.bf16.gmra.mrb[0].mxu0 %v4796
    %v5000 = vpop.f32.mrb[0].mxu0
    %v5001 = vadd.f32 %v4913, %v5000
    %v5002 = vpop.f32.mrb[0].mxu0
    %v5003 = vpop.f32.mrb[0].mxu0
    %v5004 = vpop.f32.mrb[0].mxu0
    %5005 = vdwg.mxu0
    %v5006 = vld [vmem:[%s12] sm:$0x1]
    %v5008 = vlaneseq
    %v5009 = vshrl.u32 %v5008, 7
    %v5010 = vsub.s32 0, %v5009
    %v5011 = vrot.slane %v5006, %v5010
    %v5013 = vadd.f32 %v5001, %v5011
    %v5014 = vtanh.pop %v5013
    %s5015 = scalar_lea.vmem [#allocation4], 40
    %5016 = vst [vmem:[%s5015] sm:$0xff] %v5014
    %s5017 = scalar_lea.vmem %s14, 320
    %5018 = vst.msk [vmem:[%s5017] sm:$0xff] %vm1629, %v4733
    %5019 = vst.msk [vmem:[%s5017 + $0x8] sm:$0xff] %vm1629, %v4734
    %5020 = vst.msk [vmem:[%s5017 + $0x10] sm:$0xff] %vm1629, %v4735
    %5021 = vst.msk [vmem:[%s5017 + $0x18] sm:$0xff] %vm1629, %v4736
    %5022 = vst.msk [vmem:[%s5017 + $0x20] sm:$0xff] %vm1629, %v4737
    %5023 = vst.msk [vmem:[%s5017 + $0x28] sm:$0xff] %vm1629, %v4738
    %5024 = vst.msk [vmem:[%s5017 + $0x30] sm:$0xff] %vm1629, %v4739
    %5025 = vst.msk [vmem:[%s5017 + $0x38] sm:$0xff] %vm1629, %v4740
    %s5026 = scalar_lea.vmem [#allocation3], 48
    %v5027 = vld [vmem:[%s5026] sm:$0xff]
    %v5028 = vpack.c.bf16 %v5014, %v5014
    %v5029 = vld [vmem:[%s7] sm:$0xf]
    %v5030 = vld [vmem:[%s7 + $0x4] sm:$0xf]
    %v5031 = vld [vmem:[%s7 + $0x8] sm:$0xf]
    %v5032 = vld [vmem:[%s7 + $0xc] sm:$0xf]
    %v5033 = vld [vmem:[%s7 + $0x10] sm:$0xf]
    %v5034 = vld [vmem:[%s7 + $0x14] sm:$0xf]
    %v5035 = vld [vmem:[%s7 + $0x18] sm:$0xf]
    %v5036 = vld [vmem:[%s7 + $0x1c] sm:$0xf]
    %v5037 = vld [vmem:[%s7 + $0x20] sm:$0xf]
    %v5038 = vld [vmem:[%s7 + $0x24] sm:$0xf]
    %v5039 = vld [vmem:[%s7 + $0x28] sm:$0xf]
    %v5040 = vld [vmem:[%s7 + $0x2c] sm:$0xf]
    %v5041 = vld [vmem:[%s7 + $0x30] sm:$0xf]
    %v5042 = vld [vmem:[%s7 + $0x34] sm:$0xf]
    %v5043 = vld [vmem:[%s7 + $0x38] sm:$0xf]
    %v5044 = vld [vmem:[%s7 + $0x3c] sm:$0xf]
    %v5061 = vunpack.c.l.b16 %v5029
    %v5062 = vunpack.c.l.b16 %v5030
    %v5063 = vunpack.c.l.b16 %v5031
    %v5064 = vunpack.c.l.b16 %v5032
    %v5065 = vunpack.c.l.b16 %v5033
    %v5066 = vunpack.c.l.b16 %v5034
    %v5067 = vunpack.c.l.b16 %v5035
    %v5068 = vunpack.c.l.b16 %v5036
    %v5069 = vunpack.c.l.b16 %v5037
    %v5070 = vunpack.c.l.b16 %v5038
    %v5071 = vunpack.c.l.b16 %v5039
    %v5072 = vunpack.c.l.b16 %v5040
    %v5073 = vunpack.c.l.b16 %v5041
    %v5074 = vunpack.c.l.b16 %v5042
    %v5075 = vunpack.c.l.b16 %v5043
    %v5076 = vunpack.c.l.b16 %v5044
    %v5077 = vpack.c.b16 %v5062, %v5061
    %v5078 = vpack.c.b16 %v5064, %v5063
    %v5079 = vpack.c.b16 %v5066, %v5065
    %v5080 = vpack.c.b16 %v5068, %v5067
    %v5081 = vpack.c.b16 %v5070, %v5069
    %v5082 = vpack.c.b16 %v5072, %v5071
    %v5083 = vpack.c.b16 %v5074, %v5073
    %v5084 = vpack.c.b16 %v5076, %v5075
    %5093 = vmatprep.subr.bf16.mxu0 0
    %5094 = vmatpush1.bf16.msra.mxu0 %v5077
    %5095 = vmatprep.subr.bf16.mxu0 0
    %5096 = vmatpush1.bf16.msra.mxu0 %v5078
    %5097 = vmatprep.subr.bf16.mxu0 0
    %5098 = vmatpush1.bf16.msra.mxu0 %v5079
    %5099 = vmatprep.subr.bf16.mxu0 0
    %5100 = vmatpush1.bf16.msra.mxu0 %v5080
    %5101 = vmatprep.subr.bf16.mxu0 0
    %5102 = vmatpush1.bf16.msra.mxu0 %v5081
    %5103 = vmatprep.subr.bf16.mxu0 0
    %5104 = vmatpush1.bf16.msra.mxu0 %v5082
    %5105 = vmatprep.subr.bf16.mxu0 0
    %5106 = vmatpush1.bf16.msra.mxu0 %v5083
    %5107 = vmatprep.subr.bf16.mxu0 0
    %5108 = vmatpush1.bf16.msra.mxu0 %v5084
    %5109 = vmatprep.subr.bf16.mxu0 0
    %5110 = vmatpush1.bf16.msra.mxu0 0
    %5111 = vmatprep.subr.bf16.mxu0 0
    %5112 = vmatpush1.bf16.msra.mxu0 0
    %5113 = vmatprep.subr.bf16.mxu0 0
    %5114 = vmatpush1.bf16.msra.mxu0 0
    %5115 = vmatprep.subr.bf16.mxu0 0
    %5116 = vmatpush1.bf16.msra.mxu0 0
    %5117 = vmatprep.subr.bf16.mxu0 0
    %5118 = vmatpush1.bf16.msra.mxu0 0
    %5119 = vmatprep.subr.bf16.mxu0 0
    %5120 = vmatpush1.bf16.msra.mxu0 0
    %5121 = vmatprep.subr.bf16.mxu0 0
    %5122 = vmatpush1.bf16.msra.mxu0 0
    %5123 = vmatprep.subr.bf16.mxu0 0
    %5124 = vmatpush1.bf16.msra.mxu0 0
    %5125 = vmatprep.mubr.bf16.mxu0 0
    %5126 = vmatmul.mubr.bf16.gmra.mrb[0].mxu0 %v5028
    %v5127 = vpop.f32.mrb[0].mxu0
    %v5128 = vadd.f32 0.0, %v5127
    %v5129 = vpop.f32.mrb[0].mxu0
    %v5130 = vpop.f32.mrb[0].mxu0
    %v5131 = vpop.f32.mrb[0].mxu0
    %5132 = vdwg.mxu0
    %v5133 = vadd.f32 %v5027, %v5128
    %v5134 = vld [vmem:[%s8] sm:$0xf]
    %v5135 = vld [vmem:[%s8 + $0x4] sm:$0xf]
    %v5136 = vld [vmem:[%s8 + $0x8] sm:$0xf]
    %v5137 = vld [vmem:[%s8 + $0xc] sm:$0xf]
    %v5138 = vld [vmem:[%s8 + $0x10] sm:$0xf]
    %v5139 = vld [vmem:[%s8 + $0x14] sm:$0xf]
    %v5140 = vld [vmem:[%s8 + $0x18] sm:$0xf]
    %v5141 = vld [vmem:[%s8 + $0x1c] sm:$0xf]
    %v5142 = vld [vmem:[%s8 + $0x20] sm:$0xf]
    %v5143 = vld [vmem:[%s8 + $0x24] sm:$0xf]
    %v5144 = vld [vmem:[%s8 + $0x28] sm:$0xf]
    %v5145 = vld [vmem:[%s8 + $0x2c] sm:$0xf]
    %v5146 = vld [vmem:[%s8 + $0x30] sm:$0xf]
    %v5147 = vld [vmem:[%s8 + $0x34] sm:$0xf]
    %v5148 = vld [vmem:[%s8 + $0x38] sm:$0xf]
    %v5149 = vld [vmem:[%s8 + $0x3c] sm:$0xf]
    %v5166 = vunpack.c.l.b16 %v5134
    %v5167 = vunpack.c.l.b16 %v5135
    %v5168 = vunpack.c.l.b16 %v5136
    %v5169 = vunpack.c.l.b16 %v5137
    %v5170 = vunpack.c.l.b16 %v5138
    %v5171 = vunpack.c.l.b16 %v5139
    %v5172 = vunpack.c.l.b16 %v5140
    %v5173 = vunpack.c.l.b16 %v5141
    %v5174 = vunpack.c.l.b16 %v5142
    %v5175 = vunpack.c.l.b16 %v5143
    %v5176 = vunpack.c.l.b16 %v5144
    %v5177 = vunpack.c.l.b16 %v5145
    %v5178 = vunpack.c.l.b16 %v5146
    %v5179 = vunpack.c.l.b16 %v5147
    %v5180 = vunpack.c.l.b16 %v5148
    %v5181 = vunpack.c.l.b16 %v5149
    %v5182 = vpack.c.b16 %v5167, %v5166
    %v5183 = vpack.c.b16 %v5169, %v5168
    %v5184 = vpack.c.b16 %v5171, %v5170
    %v5185 = vpack.c.b16 %v5173, %v5172
    %v5186 = vpack.c.b16 %v5175, %v5174
    %v5187 = vpack.c.b16 %v5177, %v5176
    %v5188 = vpack.c.b16 %v5179, %v5178
    %v5189 = vpack.c.b16 %v5181, %v5180
    %5198 = vmatprep.subr.bf16.mxu0 0
    %5199 = vmatpush1.bf16.msra.mxu0 %v5182
    %5200 = vmatprep.subr.bf16.mxu0 0
    %5201 = vmatpush1.bf16.msra.mxu0 %v5183
    %5202 = vmatprep.subr.bf16.mxu0 0
    %5203 = vmatpush1.bf16.msra.mxu0 %v5184
    %5204 = vmatprep.subr.bf16.mxu0 0
    %5205 = vmatpush1.bf16.msra.mxu0 %v5185
    %5206 = vmatprep.subr.bf16.mxu0 0
    %5207 = vmatpush1.bf16.msra.mxu0 %v5186
    %5208 = vmatprep.subr.bf16.mxu0 0
    %5209 = vmatpush1.bf16.msra.mxu0 %v5187
    %5210 = vmatprep.subr.bf16.mxu0 0
    %5211 = vmatpush1.bf16.msra.mxu0 %v5188
    %5212 = vmatprep.subr.bf16.mxu0 0
    %5213 = vmatpush1.bf16.msra.mxu0 %v5189
    %5214 = vmatprep.subr.bf16.mxu0 0
    %5215 = vmatpush1.bf16.msra.mxu0 0
    %5216 = vmatprep.subr.bf16.mxu0 0
    %5217 = vmatpush1.bf16.msra.mxu0 0
    %5218 = vmatprep.subr.bf16.mxu0 0
    %5219 = vmatpush1.bf16.msra.mxu0 0
    %5220 = vmatprep.subr.bf16.mxu0 0
    %5221 = vmatpush1.bf16.msra.mxu0 0
    %5222 = vmatprep.subr.bf16.mxu0 0
    %5223 = vmatpush1.bf16.msra.mxu0 0
    %5224 = vmatprep.subr.bf16.mxu0 0
    %5225 = vmatpush1.bf16.msra.mxu0 0
    %5226 = vmatprep.subr.bf16.mxu0 0
    %5227 = vmatpush1.bf16.msra.mxu0 0
    %5228 = vmatprep.subr.bf16.mxu0 0
    %5229 = vmatpush1.bf16.msra.mxu0 0
    %5230 = vmatprep.mubr.bf16.mxu0 0
    %5231 = vmatmul.mubr.bf16.gmra.mrb[0].mxu0 %v4796
    %v5232 = vpop.f32.mrb[0].mxu0
    %v5233 = vadd.f32 0.0, %v5232
    %v5234 = vpop.f32.mrb[0].mxu0
    %v5235 = vpop.f32.mrb[0].mxu0
    %v5236 = vpop.f32.mrb[0].mxu0
    %5237 = vdwg.mxu0
    %v5238 = vadd.f32 %v5133, %v5233
    %v5239 = vtanh.pop %v5238
    %v5240 = vld [vmem:[#allocation2] sm:$0xf]
    %v5241 = vld [vmem:[#allocation2 + $0x4] sm:$0xf]
    %v5242 = vld [vmem:[#allocation2 + $0x8] sm:$0xf]
    %v5243 = vld [vmem:[#allocation2 + $0xc] sm:$0xf]
    %v5244 = vld [vmem:[#allocation2 + $0x10] sm:$0xf]
    %v5245 = vld [vmem:[#allocation2 + $0x14] sm:$0xf]
    %v5246 = vld [vmem:[#allocation2 + $0x18] sm:$0xf]
    %v5247 = vld [vmem:[#allocation2 + $0x1c] sm:$0xf]
    %v5248 = vunpack.c.l.bf16 %v5240
    %v5249 = vunpack.c.l.bf16 %v5241
    %v5250 = vunpack.c.l.bf16 %v5242
    %v5251 = vunpack.c.l.bf16 %v5243
    %v5252 = vunpack.c.l.bf16 %v5244
    %v5253 = vunpack.c.l.bf16 %v5245
    %v5254 = vunpack.c.l.bf16 %v5246
    %v5255 = vunpack.c.l.bf16 %v5247
    %v5256 = vmul.f32 %v5248, %v5239
    %v5257 = vmul.f32 %v5249, %v5239
    %v5258 = vmul.f32 %v5250, %v5239
    %v5259 = vmul.f32 %v5251, %v5239
    %v5260 = vmul.f32 %v5252, %v5239
    %v5261 = vmul.f32 %v5253, %v5239
    %v5262 = vmul.f32 %v5254, %v5239
    %v5263 = vmul.f32 %v5255, %v5239
    %5264 = vadd.xlane.f32.xlu0 %v5256
    %v5265 = vpop.xlane.xlu0 %5264
    %5266 = vadd.xlane.f32.xlu0 %v5257
    %v5267 = vpop.xlane.xlu0 %5266
    %5268 = vadd.xlane.f32.xlu0 %v5258
    %v5269 = vpop.xlane.xlu0 %5268
    %5270 = vadd.xlane.f32.xlu0 %v5259
    %v5271 = vpop.xlane.xlu0 %5270
    %5272 = vadd.xlane.f32.xlu0 %v5260
    %v5273 = vpop.xlane.xlu0 %5272
    %5274 = vadd.xlane.f32.xlu0 %v5261
    %v5275 = vpop.xlane.xlu0 %5274
    %5276 = vadd.xlane.f32.xlu0 %v5262
    %v5277 = vpop.xlane.xlu0 %5276
    %5278 = vadd.xlane.f32.xlu0 %v5263
    %v5279 = vpop.xlane.xlu0 %5278
    %v5280 = vadd.f32 %v5265, %v1360
    %v5281 = vadd.f32 %v5267, %v1361
    %v5282 = vadd.f32 %v5269, %v1362
    %v5283 = vadd.f32 %v5271, %v1363
    %v5284 = vadd.f32 %v5273, %v1364
    %v5285 = vadd.f32 %v5275, %v1365
    %v5286 = vadd.f32 %v5277, %v1366
    %v5287 = vadd.f32 %v5279, %v1367
    %v5288 = vsel %vm1629, %v5280, -inf
    %v5289 = vsel %vm1629, %v5281, -inf
    %v5290 = vsel %vm1629, %v5282, -inf
    %v5291 = vsel %vm1629, %v5283, -inf
    %v5292 = vsel %vm1629, %v5284, -inf
    %v5293 = vmax.f32 %v5288, %v5292
    %v5294 = vsel %vm1629, %v5285, -inf
    %v5295 = vmax.f32 %v5289, %v5294
    %v5296 = vsel %vm1629, %v5286, -inf
    %v5297 = vmax.f32 %v5290, %v5296
    %v5298 = vsel %vm1629, %v5287, -inf
    %v5299 = vmax.f32 %v5291, %v5298
    %v5300 = vmax.f32 %v5293, %v5295
    %v5301 = vmax.f32 %v5297, %v5299
    %v5302 = vmax.f32 %v5300, %v5301
    %v5303 = vsub.f32 %v5280, %v5302
    %v5304 = vsub.f32 %v5281, %v5302
    %v5305 = vsub.f32 %v5282, %v5302
    %v5306 = vsub.f32 %v5283, %v5302
    %v5307 = vsub.f32 %v5284, %v5302
    %v5308 = vsub.f32 %v5285, %v5302
    %v5309 = vsub.f32 %v5286, %v5302
    %v5310 = vsub.f32 %v5287, %v5302
    %v5311 = vmul.f32 %v5303, 1.442695
    %v5312 = vpow.pop %v5311
    %v5313 = vmul.f32 %v5304, 1.442695
    %v5314 = vpow.pop %v5313
    %v5315 = vmul.f32 %v5305, 1.442695
    %v5316 = vpow.pop %v5315
    %v5317 = vmul.f32 %v5306, 1.442695
    %v5318 = vpow.pop %v5317
    %v5319 = vmul.f32 %v5307, 1.442695
    %v5320 = vpow.pop %v5319
    %v5321 = vmul.f32 %v5308, 1.442695
    %v5322 = vpow.pop %v5321
    %v5323 = vmul.f32 %v5309, 1.442695
    %v5324 = vpow.pop %v5323
    %v5325 = vmul.f32 %v5310, 1.442695
    %v5326 = vpow.pop %v5325
    %v5327 = vsel %vm1629, %v5312, 0.0
    %v5328 = vsel %vm1629, %v5314, 0.0
    %v5329 = vadd.f32 %v5327, %v5328
    %v5330 = vsel %vm1629, %v5316, 0.0
    %v5331 = vadd.f32 %v5329, %v5330
    %v5332 = vsel %vm1629, %v5318, 0.0
    %v5333 = vadd.f32 %v5331, %v5332
    %v5334 = vsel %vm1629, %v5320, 0.0
    %v5335 = vadd.f32 %v5333, %v5334
    %v5336 = vsel %vm1629, %v5322, 0.0
    %v5337 = vadd.f32 %v5335, %v5336
    %v5338 = vsel %vm1629, %v5324, 0.0
    %v5339 = vadd.f32 %v5337, %v5338
    %v5340 = vsel %vm1629, %v5326, 0.0
    %v5341 = vadd.f32 %v5339, %v5340
    %v5342 = vrcp.pop %v5341
    %v5343 = vmul.f32 %v5312, %v5342
    %v5344 = vmul.f32 %v5314, %v5342
    %v5345 = vmul.f32 %v5316, %v5342
    %v5346 = vmul.f32 %v5318, %v5342
    %v5347 = vmul.f32 %v5320, %v5342
    %v5348 = vmul.f32 %v5322, %v5342
    %v5349 = vmul.f32 %v5324, %v5342
    %v5350 = vmul.f32 %v5326, %v5342
    %5352 = vset.pattern.permute.xlu0 0
    %5353 = vperm.xlu0 %5352, %v5343
    %v5354 = vpop.permute.xlu0 %5353
    %5357 = vset.pattern.permute.xlu0 0
    %5358 = vperm.xlu0 %5357, %v5344
    %v5359 = vpop.permute.xlu0 %5358
    %5362 = vset.pattern.permute.xlu0 0
    %5363 = vperm.xlu0 %5362, %v5345
    %v5364 = vpop.permute.xlu0 %5363
    %5367 = vset.pattern.permute.xlu0 0
    %5368 = vperm.xlu0 %5367, %v5346
    %v5369 = vpop.permute.xlu0 %5368
    %5372 = vset.pattern.permute.xlu0 0
    %5373 = vperm.xlu0 %5372, %v5347
    %v5374 = vpop.permute.xlu0 %5373
    %5377 = vset.pattern.permute.xlu0 0
    %5378 = vperm.xlu0 %5377, %v5348
    %v5379 = vpop.permute.xlu0 %5378
    %5382 = vset.pattern.permute.xlu0 0
    %5383 = vperm.xlu0 %5382, %v5349
    %v5384 = vpop.permute.xlu0 %5383
    %5387 = vset.pattern.permute.xlu0 0
    %5388 = vperm.xlu0 %5387, %v5350
    %v5389 = vpop.permute.xlu0 %5388
    %v5391 = vmul.f32 %v5354, %v5248
    %v5392 = vmul.f32 %v5359, %v5249
    %v5393 = vmul.f32 %v5364, %v5250
    %v5394 = vmul.f32 %v5369, %v5251
    %v5395 = vmul.f32 %v5374, %v5252
    %v5396 = vmul.f32 %v5379, %v5253
    %v5397 = vmul.f32 %v5384, %v5254
    %v5398 = vmul.f32 %v5389, %v5255
    %v5399 = vadd.f32 %v5391, %v5392
    %v5400 = vadd.f32 %v5399, %v5393
    %v5401 = vadd.f32 %v5400, %v5394
    %v5402 = vadd.f32 %v5401, %v5395
    %v5403 = vadd.f32 %v5402, %v5396
    %v5404 = vadd.f32 %v5403, %v5397
    %v5405 = vadd.f32 %v5404, %v5398
    %v5406 = vpack.c.bf16 %v5239, %v5239
    %v5407 = vld [vmem:[%s10] sm:$0xf]
    %v5408 = vld [vmem:[%s10 + $0x4] sm:$0xf]
    %v5409 = vld [vmem:[%s10 + $0x8] sm:$0xf]
    %v5410 = vld [vmem:[%s10 + $0xc] sm:$0xf]
    %v5411 = vld [vmem:[%s10 + $0x10] sm:$0xf]
    %v5412 = vld [vmem:[%s10 + $0x14] sm:$0xf]
    %v5413 = vld [vmem:[%s10 + $0x18] sm:$0xf]
    %v5414 = vld [vmem:[%s10 + $0x1c] sm:$0xf]
    %v5415 = vld [vmem:[%s10 + $0x20] sm:$0xf]
    %v5416 = vld [vmem:[%s10 + $0x24] sm:$0xf]
    %v5417 = vld [vmem:[%s10 + $0x28] sm:$0xf]
    %v5418 = vld [vmem:[%s10 + $0x2c] sm:$0xf]
    %v5419 = vld [vmem:[%s10 + $0x30] sm:$0xf]
    %v5420 = vld [vmem:[%s10 + $0x34] sm:$0xf]
    %v5421 = vld [vmem:[%s10 + $0x38] sm:$0xf]
    %v5422 = vld [vmem:[%s10 + $0x3c] sm:$0xf]
    %v5423 = vpack.c.bf16 %v5405, %v5405
    %v5424 = vld [vmem:[%s11] sm:$0xf]
    %v5425 = vld [vmem:[%s11 + $0x4] sm:$0xf]
    %v5426 = vld [vmem:[%s11 + $0x8] sm:$0xf]
    %v5427 = vld [vmem:[%s11 + $0xc] sm:$0xf]
    %v5428 = vld [vmem:[%s11 + $0x10] sm:$0xf]
    %v5429 = vld [vmem:[%s11 + $0x14] sm:$0xf]
    %v5430 = vld [vmem:[%s11 + $0x18] sm:$0xf]
    %v5431 = vld [vmem:[%s11 + $0x1c] sm:$0xf]
    %v5432 = vld [vmem:[%s11 + $0x20] sm:$0xf]
    %v5433 = vld [vmem:[%s11 + $0x24] sm:$0xf]
    %v5434 = vld [vmem:[%s11 + $0x28] sm:$0xf]
    %v5435 = vld [vmem:[%s11 + $0x2c] sm:$0xf]
    %v5436 = vld [vmem:[%s11 + $0x30] sm:$0xf]
    %v5437 = vld [vmem:[%s11 + $0x34] sm:$0xf]
    %v5438 = vld [vmem:[%s11 + $0x38] sm:$0xf]
    %v5439 = vld [vmem:[%s11 + $0x3c] sm:$0xf]
    %v5456 = vunpack.c.l.b16 %v5424
    %v5457 = vunpack.c.l.b16 %v5425
    %v5458 = vunpack.c.l.b16 %v5426
    %v5459 = vunpack.c.l.b16 %v5427
    %v5460 = vunpack.c.l.b16 %v5428
    %v5461 = vunpack.c.l.b16 %v5429
    %v5462 = vunpack.c.l.b16 %v5430
    %v5463 = vunpack.c.l.b16 %v5431
    %v5464 = vunpack.c.l.b16 %v5432
    %v5465 = vunpack.c.l.b16 %v5433
    %v5466 = vunpack.c.l.b16 %v5434
    %v5467 = vunpack.c.l.b16 %v5435
    %v5468 = vunpack.c.l.b16 %v5436
    %v5469 = vunpack.c.l.b16 %v5437
    %v5470 = vunpack.c.l.b16 %v5438
    %v5471 = vunpack.c.l.b16 %v5439
    %v5472 = vpack.c.b16 %v5457, %v5456
    %v5473 = vpack.c.b16 %v5459, %v5458
    %v5474 = vpack.c.b16 %v5461, %v5460
    %v5475 = vpack.c.b16 %v5463, %v5462
    %v5476 = vpack.c.b16 %v5465, %v5464
    %v5477 = vpack.c.b16 %v5467, %v5466
    %v5478 = vpack.c.b16 %v5469, %v5468
    %v5479 = vpack.c.b16 %v5471, %v5470
    %5488 = vmatprep.subr.bf16.mxu0 0
    %5489 = vmatpush1.bf16.msra.mxu0 %v5472
    %5490 = vmatprep.subr.bf16.mxu0 0
    %5491 = vmatpush1.bf16.msra.mxu0 %v5473
    %5492 = vmatprep.subr.bf16.mxu0 0
    %5493 = vmatpush1.bf16.msra.mxu0 %v5474
    %5494 = vmatprep.subr.bf16.mxu0 0
    %5495 = vmatpush1.bf16.msra.mxu0 %v5475
    %5496 = vmatprep.subr.bf16.mxu0 0
    %5497 = vmatpush1.bf16.msra.mxu0 %v5476
    %5498 = vmatprep.subr.bf16.mxu0 0
    %5499 = vmatpush1.bf16.msra.mxu0 %v5477
    %5500 = vmatprep.subr.bf16.mxu0 0
    %5501 = vmatpush1.bf16.msra.mxu0 %v5478
    %5502 = vmatprep.subr.bf16.mxu0 0
    %5503 = vmatpush1.bf16.msra.mxu0 %v5479
    %5504 = vmatprep.subr.bf16.mxu0 0
    %5505 = vmatpush1.bf16.msra.mxu0 0
    %5506 = vmatprep.subr.bf16.mxu0 0
    %5507 = vmatpush1.bf16.msra.mxu0 0
    %5508 = vmatprep.subr.bf16.mxu0 0
    %5509 = vmatpush1.bf16.msra.mxu0 0
    %5510 = vmatprep.subr.bf16.mxu0 0
    %5511 = vmatpush1.bf16.msra.mxu0 0
    %5512 = vmatprep.subr.bf16.mxu0 0
    %5513 = vmatpush1.bf16.msra.mxu0 0
    %5514 = vmatprep.subr.bf16.mxu0 0
    %5515 = vmatpush1.bf16.msra.mxu0 0
    %5516 = vmatprep.subr.bf16.mxu0 0
    %5517 = vmatpush1.bf16.msra.mxu0 0
    %5518 = vmatprep.subr.bf16.mxu0 0
    %5519 = vmatpush1.bf16.msra.mxu0 0
    %5520 = vmatprep.mubr.bf16.mxu0 0
    %5521 = vmatmul.mubr.bf16.gmra.mrb[0].mxu0 %v5423
    %v5522 = vpop.f32.mrb[0].mxu0
    %v5523 = vadd.f32 0.0, %v5522
    %v5524 = vpop.f32.mrb[0].mxu0
    %v5525 = vpop.f32.mrb[0].mxu0
    %v5526 = vpop.f32.mrb[0].mxu0
    %5527 = vdwg.mxu0
    %v5544 = vunpack.c.l.b16 %v5407
    %v5545 = vunpack.c.l.b16 %v5408
    %v5546 = vunpack.c.l.b16 %v5409
    %v5547 = vunpack.c.l.b16 %v5410
    %v5548 = vunpack.c.l.b16 %v5411
    %v5549 = vunpack.c.l.b16 %v5412
    %v5550 = vunpack.c.l.b16 %v5413
    %v5551 = vunpack.c.l.b16 %v5414
    %v5552 = vunpack.c.l.b16 %v5415
    %v5553 = vunpack.c.l.b16 %v5416
    %v5554 = vunpack.c.l.b16 %v5417
    %v5555 = vunpack.c.l.b16 %v5418
    %v5556 = vunpack.c.l.b16 %v5419
    %v5557 = vunpack.c.l.b16 %v5420
    %v5558 = vunpack.c.l.b16 %v5421
    %v5559 = vunpack.c.l.b16 %v5422
    %v5560 = vpack.c.b16 %v5545, %v5544
    %v5561 = vpack.c.b16 %v5547, %v5546
    %v5562 = vpack.c.b16 %v5549, %v5548
    %v5563 = vpack.c.b16 %v5551, %v5550
    %v5564 = vpack.c.b16 %v5553, %v5552
    %v5565 = vpack.c.b16 %v5555, %v5554
    %v5566 = vpack.c.b16 %v5557, %v5556
    %v5567 = vpack.c.b16 %v5559, %v5558
    %5576 = vmatprep.subr.bf16.mxu0 0
    %5577 = vmatpush1.bf16.msra.mxu0 %v5560
    %5578 = vmatprep.subr.bf16.mxu0 0
    %5579 = vmatpush1.bf16.msra.mxu0 %v5561
    %5580 = vmatprep.subr.bf16.mxu0 0
    %5581 = vmatpush1.bf16.msra.mxu0 %v5562
    %5582 = vmatprep.subr.bf16.mxu0 0
    %5583 = vmatpush1.bf16.msra.mxu0 %v5563
    %5584 = vmatprep.subr.bf16.mxu0 0
    %5585 = vmatpush1.bf16.msra.mxu0 %v5564
    %5586 = vmatprep.subr.bf16.mxu0 0
    %5587 = vmatpush1.bf16.msra.mxu0 %v5565
    %5588 = vmatprep.subr.bf16.mxu0 0
    %5589 = vmatpush1.bf16.msra.mxu0 %v5566
    %5590 = vmatprep.subr.bf16.mxu0 0
    %5591 = vmatpush1.bf16.msra.mxu0 %v5567
    %5592 = vmatprep.subr.bf16.mxu0 0
    %5593 = vmatpush1.bf16.msra.mxu0 0
    %5594 = vmatprep.subr.bf16.mxu0 0
    %5595 = vmatpush1.bf16.msra.mxu0 0
    %5596 = vmatprep.subr.bf16.mxu0 0
    %5597 = vmatpush1.bf16.msra.mxu0 0
    %5598 = vmatprep.subr.bf16.mxu0 0
    %5599 = vmatpush1.bf16.msra.mxu0 0
    %5600 = vmatprep.subr.bf16.mxu0 0
    %5601 = vmatpush1.bf16.msra.mxu0 0
    %5602 = vmatprep.subr.bf16.mxu0 0
    %5603 = vmatpush1.bf16.msra.mxu0 0
    %5604 = vmatprep.subr.bf16.mxu0 0
    %5605 = vmatpush1.bf16.msra.mxu0 0
    %5606 = vmatprep.subr.bf16.mxu0 0
    %5607 = vmatpush1.bf16.msra.mxu0 0
    %5608 = vmatprep.mubr.bf16.mxu0 0
    %5609 = vmatmul.mubr.bf16.gmra.mrb[0].mxu0 %v5406
    %v5610 = vpop.f32.mrb[0].mxu0
    %v5611 = vadd.f32 %v5523, %v5610
    %v5612 = vpop.f32.mrb[0].mxu0
    %v5613 = vpop.f32.mrb[0].mxu0
    %v5614 = vpop.f32.mrb[0].mxu0
    %5615 = vdwg.mxu0
    %v5616 = vld [vmem:[%s12] sm:$0x1]
    %v5618 = vlaneseq
    %v5619 = vshrl.u32 %v5618, 7
    %v5620 = vsub.s32 0, %v5619
    %v5621 = vrot.slane %v5616, %v5620
    %v5623 = vadd.f32 %v5611, %v5621
    %v5624 = vtanh.pop %v5623
    %s5625 = scalar_lea.vmem [#allocation4], 48
    %5626 = vst [vmem:[%s5625] sm:$0xff] %v5624
    %s5627 = scalar_lea.vmem %s14, 384
    %5628 = vst.msk [vmem:[%s5627] sm:$0xff] %vm1629, %v5343
    %5629 = vst.msk [vmem:[%s5627 + $0x8] sm:$0xff] %vm1629, %v5344
    %5630 = vst.msk [vmem:[%s5627 + $0x10] sm:$0xff] %vm1629, %v5345
    %5631 = vst.msk [vmem:[%s5627 + $0x18] sm:$0xff] %vm1629, %v5346
    %5632 = vst.msk [vmem:[%s5627 + $0x20] sm:$0xff] %vm1629, %v5347
    %5633 = vst.msk [vmem:[%s5627 + $0x28] sm:$0xff] %vm1629, %v5348
    %5634 = vst.msk [vmem:[%s5627 + $0x30] sm:$0xff] %vm1629, %v5349
    %5635 = vst.msk [vmem:[%s5627 + $0x38] sm:$0xff] %vm1629, %v5350
    %s5636 = scalar_lea.vmem [#allocation3], 56
    %v5637 = vld [vmem:[%s5636] sm:$0xff]
    %v5638 = vpack.c.bf16 %v5624, %v5624
    %v5639 = vld [vmem:[%s7] sm:$0xf]
    %v5640 = vld [vmem:[%s7 + $0x4] sm:$0xf]
    %v5641 = vld [vmem:[%s7 + $0x8] sm:$0xf]
    %v5642 = vld [vmem:[%s7 + $0xc] sm:$0xf]
    %v5643 = vld [vmem:[%s7 + $0x10] sm:$0xf]
    %v5644 = vld [vmem:[%s7 + $0x14] sm:$0xf]
    %v5645 = vld [vmem:[%s7 + $0x18] sm:$0xf]
    %v5646 = vld [vmem:[%s7 + $0x1c] sm:$0xf]
    %v5647 = vld [vmem:[%s7 + $0x20] sm:$0xf]
    %v5648 = vld [vmem:[%s7 + $0x24] sm:$0xf]
    %v5649 = vld [vmem:[%s7 + $0x28] sm:$0xf]
    %v5650 = vld [vmem:[%s7 + $0x2c] sm:$0xf]
    %v5651 = vld [vmem:[%s7 + $0x30] sm:$0xf]
    %v5652 = vld [vmem:[%s7 + $0x34] sm:$0xf]
    %v5653 = vld [vmem:[%s7 + $0x38] sm:$0xf]
    %v5654 = vld [vmem:[%s7 + $0x3c] sm:$0xf]
    %v5671 = vunpack.c.l.b16 %v5639
    %v5672 = vunpack.c.l.b16 %v5640
    %v5673 = vunpack.c.l.b16 %v5641
    %v5674 = vunpack.c.l.b16 %v5642
    %v5675 = vunpack.c.l.b16 %v5643
    %v5676 = vunpack.c.l.b16 %v5644
    %v5677 = vunpack.c.l.b16 %v5645
    %v5678 = vunpack.c.l.b16 %v5646
    %v5679 = vunpack.c.l.b16 %v5647
    %v5680 = vunpack.c.l.b16 %v5648
    %v5681 = vunpack.c.l.b16 %v5649
    %v5682 = vunpack.c.l.b16 %v5650
    %v5683 = vunpack.c.l.b16 %v5651
    %v5684 = vunpack.c.l.b16 %v5652
    %v5685 = vunpack.c.l.b16 %v5653
    %v5686 = vunpack.c.l.b16 %v5654
    %v5687 = vpack.c.b16 %v5672, %v5671
    %v5688 = vpack.c.b16 %v5674, %v5673
    %v5689 = vpack.c.b16 %v5676, %v5675
    %v5690 = vpack.c.b16 %v5678, %v5677
    %v5691 = vpack.c.b16 %v5680, %v5679
    %v5692 = vpack.c.b16 %v5682, %v5681
    %v5693 = vpack.c.b16 %v5684, %v5683
    %v5694 = vpack.c.b16 %v5686, %v5685
    %5703 = vmatprep.subr.bf16.mxu0 0
    %5704 = vmatpush1.bf16.msra.mxu0 %v5687
    %5705 = vmatprep.subr.bf16.mxu0 0
    %5706 = vmatpush1.bf16.msra.mxu0 %v5688
    %5707 = vmatprep.subr.bf16.mxu0 0
    %5708 = vmatpush1.bf16.msra.mxu0 %v5689
    %5709 = vmatprep.subr.bf16.mxu0 0
    %5710 = vmatpush1.bf16.msra.mxu0 %v5690
    %5711 = vmatprep.subr.bf16.mxu0 0
    %5712 = vmatpush1.bf16.msra.mxu0 %v5691
    %5713 = vmatprep.subr.bf16.mxu0 0
    %5714 = vmatpush1.bf16.msra.mxu0 %v5692
    %5715 = vmatprep.subr.bf16.mxu0 0
    %5716 = vmatpush1.bf16.msra.mxu0 %v5693
    %5717 = vmatprep.subr.bf16.mxu0 0
    %5718 = vmatpush1.bf16.msra.mxu0 %v5694
    %5719 = vmatprep.subr.bf16.mxu0 0
    %5720 = vmatpush1.bf16.msra.mxu0 0
    %5721 = vmatprep.subr.bf16.mxu0 0
    %5722 = vmatpush1.bf16.msra.mxu0 0
    %5723 = vmatprep.subr.bf16.mxu0 0
    %5724 = vmatpush1.bf16.msra.mxu0 0
    %5725 = vmatprep.subr.bf16.mxu0 0
    %5726 = vmatpush1.bf16.msra.mxu0 0
    %5727 = vmatprep.subr.bf16.mxu0 0
    %5728 = vmatpush1.bf16.msra.mxu0 0
    %5729 = vmatprep.subr.bf16.mxu0 0
    %5730 = vmatpush1.bf16.msra.mxu0 0
    %5731 = vmatprep.subr.bf16.mxu0 0
    %5732 = vmatpush1.bf16.msra.mxu0 0
    %5733 = vmatprep.subr.bf16.mxu0 0
    %5734 = vmatpush1.bf16.msra.mxu0 0
    %5735 = vmatprep.mubr.bf16.mxu0 0
    %5736 = vmatmul.mubr.bf16.gmra.mrb[0].mxu0 %v5638
    %v5737 = vpop.f32.mrb[0].mxu0
    %v5738 = vadd.f32 0.0, %v5737
    %v5739 = vpop.f32.mrb[0].mxu0
    %v5740 = vpop.f32.mrb[0].mxu0
    %v5741 = vpop.f32.mrb[0].mxu0
    %5742 = vdwg.mxu0
    %v5743 = vadd.f32 %v5637, %v5738
    %v5744 = vld [vmem:[%s8] sm:$0xf]
    %v5745 = vld [vmem:[%s8 + $0x4] sm:$0xf]
    %v5746 = vld [vmem:[%s8 + $0x8] sm:$0xf]
    %v5747 = vld [vmem:[%s8 + $0xc] sm:$0xf]
    %v5748 = vld [vmem:[%s8 + $0x10] sm:$0xf]
    %v5749 = vld [vmem:[%s8 + $0x14] sm:$0xf]
    %v5750 = vld [vmem:[%s8 + $0x18] sm:$0xf]
    %v5751 = vld [vmem:[%s8 + $0x1c] sm:$0xf]
    %v5752 = vld [vmem:[%s8 + $0x20] sm:$0xf]
    %v5753 = vld [vmem:[%s8 + $0x24] sm:$0xf]
    %v5754 = vld [vmem:[%s8 + $0x28] sm:$0xf]
    %v5755 = vld [vmem:[%s8 + $0x2c] sm:$0xf]
    %v5756 = vld [vmem:[%s8 + $0x30] sm:$0xf]
    %v5757 = vld [vmem:[%s8 + $0x34] sm:$0xf]
    %v5758 = vld [vmem:[%s8 + $0x38] sm:$0xf]
    %v5759 = vld [vmem:[%s8 + $0x3c] sm:$0xf]
    %v5776 = vunpack.c.l.b16 %v5744
    %v5777 = vunpack.c.l.b16 %v5745
    %v5778 = vunpack.c.l.b16 %v5746
    %v5779 = vunpack.c.l.b16 %v5747
    %v5780 = vunpack.c.l.b16 %v5748
    %v5781 = vunpack.c.l.b16 %v5749
    %v5782 = vunpack.c.l.b16 %v5750
    %v5783 = vunpack.c.l.b16 %v5751
    %v5784 = vunpack.c.l.b16 %v5752
    %v5785 = vunpack.c.l.b16 %v5753
    %v5786 = vunpack.c.l.b16 %v5754
    %v5787 = vunpack.c.l.b16 %v5755
    %v5788 = vunpack.c.l.b16 %v5756
    %v5789 = vunpack.c.l.b16 %v5757
    %v5790 = vunpack.c.l.b16 %v5758
    %v5791 = vunpack.c.l.b16 %v5759
    %v5792 = vpack.c.b16 %v5777, %v5776
    %v5793 = vpack.c.b16 %v5779, %v5778
    %v5794 = vpack.c.b16 %v5781, %v5780
    %v5795 = vpack.c.b16 %v5783, %v5782
    %v5796 = vpack.c.b16 %v5785, %v5784
    %v5797 = vpack.c.b16 %v5787, %v5786
    %v5798 = vpack.c.b16 %v5789, %v5788
    %v5799 = vpack.c.b16 %v5791, %v5790
    %5808 = vmatprep.subr.bf16.mxu0 0
    %5809 = vmatpush1.bf16.msra.mxu0 %v5792
    %5810 = vmatprep.subr.bf16.mxu0 0
    %5811 = vmatpush1.bf16.msra.mxu0 %v5793
    %5812 = vmatprep.subr.bf16.mxu0 0
    %5813 = vmatpush1.bf16.msra.mxu0 %v5794
    %5814 = vmatprep.subr.bf16.mxu0 0
    %5815 = vmatpush1.bf16.msra.mxu0 %v5795
    %5816 = vmatprep.subr.bf16.mxu0 0
    %5817 = vmatpush1.bf16.msra.mxu0 %v5796
    %5818 = vmatprep.subr.bf16.mxu0 0
    %5819 = vmatpush1.bf16.msra.mxu0 %v5797
    %5820 = vmatprep.subr.bf16.mxu0 0
    %5821 = vmatpush1.bf16.msra.mxu0 %v5798
    %5822 = vmatprep.subr.bf16.mxu0 0
    %5823 = vmatpush1.bf16.msra.mxu0 %v5799
    %5824 = vmatprep.subr.bf16.mxu0 0
    %5825 = vmatpush1.bf16.msra.mxu0 0
    %5826 = vmatprep.subr.bf16.mxu0 0
    %5827 = vmatpush1.bf16.msra.mxu0 0
    %5828 = vmatprep.subr.bf16.mxu0 0
    %5829 = vmatpush1.bf16.msra.mxu0 0
    %5830 = vmatprep.subr.bf16.mxu0 0
    %5831 = vmatpush1.bf16.msra.mxu0 0
    %5832 = vmatprep.subr.bf16.mxu0 0
    %5833 = vmatpush1.bf16.msra.mxu0 0
    %5834 = vmatprep.subr.bf16.mxu0 0
    %5835 = vmatpush1.bf16.msra.mxu0 0
    %5836 = vmatprep.subr.bf16.mxu0 0
    %5837 = vmatpush1.bf16.msra.mxu0 0
    %5838 = vmatprep.subr.bf16.mxu0 0
    %5839 = vmatpush1.bf16.msra.mxu0 0
    %5840 = vmatprep.mubr.bf16.mxu0 0
    %5841 = vmatmul.mubr.bf16.gmra.mrb[0].mxu0 %v5406
    %v5842 = vpop.f32.mrb[0].mxu0
    %v5843 = vadd.f32 0.0, %v5842
    %v5844 = vpop.f32.mrb[0].mxu0
    %v5845 = vpop.f32.mrb[0].mxu0
    %v5846 = vpop.f32.mrb[0].mxu0
    %5847 = vdwg.mxu0
    %v5848 = vadd.f32 %v5743, %v5843
    %v5849 = vtanh.pop %v5848
    %v5850 = vld [vmem:[#allocation2] sm:$0xf]
    %v5851 = vld [vmem:[#allocation2 + $0x4] sm:$0xf]
    %v5852 = vld [vmem:[#allocation2 + $0x8] sm:$0xf]
    %v5853 = vld [vmem:[#allocation2 + $0xc] sm:$0xf]
    %v5854 = vld [vmem:[#allocation2 + $0x10] sm:$0xf]
    %v5855 = vld [vmem:[#allocation2 + $0x14] sm:$0xf]
    %v5856 = vld [vmem:[#allocation2 + $0x18] sm:$0xf]
    %v5857 = vld [vmem:[#allocation2 + $0x1c] sm:$0xf]
    %v5858 = vunpack.c.l.bf16 %v5850
    %v5859 = vunpack.c.l.bf16 %v5851
    %v5860 = vunpack.c.l.bf16 %v5852
    %v5861 = vunpack.c.l.bf16 %v5853
    %v5862 = vunpack.c.l.bf16 %v5854
    %v5863 = vunpack.c.l.bf16 %v5855
    %v5864 = vunpack.c.l.bf16 %v5856
    %v5865 = vunpack.c.l.bf16 %v5857
    %v5866 = vmul.f32 %v5858, %v5849
    %v5867 = vmul.f32 %v5859, %v5849
    %v5868 = vmul.f32 %v5860, %v5849
    %v5869 = vmul.f32 %v5861, %v5849
    %v5870 = vmul.f32 %v5862, %v5849
    %v5871 = vmul.f32 %v5863, %v5849
    %v5872 = vmul.f32 %v5864, %v5849
    %v5873 = vmul.f32 %v5865, %v5849
    %5874 = vadd.xlane.f32.xlu0 %v5866
    %v5875 = vpop.xlane.xlu0 %5874
    %5876 = vadd.xlane.f32.xlu0 %v5867
    %v5877 = vpop.xlane.xlu0 %5876
    %5878 = vadd.xlane.f32.xlu0 %v5868
    %v5879 = vpop.xlane.xlu0 %5878
    %5880 = vadd.xlane.f32.xlu0 %v5869
    %v5881 = vpop.xlane.xlu0 %5880
    %5882 = vadd.xlane.f32.xlu0 %v5870
    %v5883 = vpop.xlane.xlu0 %5882
    %5884 = vadd.xlane.f32.xlu0 %v5871
    %v5885 = vpop.xlane.xlu0 %5884
    %5886 = vadd.xlane.f32.xlu0 %v5872
    %v5887 = vpop.xlane.xlu0 %5886
    %5888 = vadd.xlane.f32.xlu0 %v5873
    %v5889 = vpop.xlane.xlu0 %5888
    %v5890 = vadd.f32 %v5875, %v1360
    %v5891 = vadd.f32 %v5877, %v1361
    %v5892 = vadd.f32 %v5879, %v1362
    %v5893 = vadd.f32 %v5881, %v1363
    %v5894 = vadd.f32 %v5883, %v1364
    %v5895 = vadd.f32 %v5885, %v1365
    %v5896 = vadd.f32 %v5887, %v1366
    %v5897 = vadd.f32 %v5889, %v1367
    %v5898 = vsel %vm1629, %v5890, -inf
    %v5899 = vsel %vm1629, %v5891, -inf
    %v5900 = vsel %vm1629, %v5892, -inf
    %v5901 = vsel %vm1629, %v5893, -inf
    %v5902 = vsel %vm1629, %v5894, -inf
    %v5903 = vmax.f32 %v5898, %v5902
    %v5904 = vsel %vm1629, %v5895, -inf
    %v5905 = vmax.f32 %v5899, %v5904
    %v5906 = vsel %vm1629, %v5896, -inf
    %v5907 = vmax.f32 %v5900, %v5906
    %v5908 = vsel %vm1629, %v5897, -inf
    %v5909 = vmax.f32 %v5901, %v5908
    %v5910 = vmax.f32 %v5903, %v5905
    %v5911 = vmax.f32 %v5907, %v5909
    %v5912 = vmax.f32 %v5910, %v5911
    %v5913 = vsub.f32 %v5890, %v5912
    %v5914 = vsub.f32 %v5891, %v5912
    %v5915 = vsub.f32 %v5892, %v5912
    %v5916 = vsub.f32 %v5893, %v5912
    %v5917 = vsub.f32 %v5894, %v5912
    %v5918 = vsub.f32 %v5895, %v5912
    %v5919 = vsub.f32 %v5896, %v5912
    %v5920 = vsub.f32 %v5897, %v5912
    %v5921 = vmul.f32 %v5913, 1.442695
    %v5922 = vpow.pop %v5921
    %v5923 = vmul.f32 %v5914, 1.442695
    %v5924 = vpow.pop %v5923
    %v5925 = vmul.f32 %v5915, 1.442695
    %v5926 = vpow.pop %v5925
    %v5927 = vmul.f32 %v5916, 1.442695
    %v5928 = vpow.pop %v5927
    %v5929 = vmul.f32 %v5917, 1.442695
    %v5930 = vpow.pop %v5929
    %v5931 = vmul.f32 %v5918, 1.442695
    %v5932 = vpow.pop %v5931
    %v5933 = vmul.f32 %v5919, 1.442695
    %v5934 = vpow.pop %v5933
    %v5935 = vmul.f32 %v5920, 1.442695
    %v5936 = vpow.pop %v5935
    %v5937 = vsel %vm1629, %v5922, 0.0
    %v5938 = vsel %vm1629, %v5924, 0.0
    %v5939 = vadd.f32 %v5937, %v5938
    %v5940 = vsel %vm1629, %v5926, 0.0
    %v5941 = vadd.f32 %v5939, %v5940
    %v5942 = vsel %vm1629, %v5928, 0.0
    %v5943 = vadd.f32 %v5941, %v5942
    %v5944 = vsel %vm1629, %v5930, 0.0
    %v5945 = vadd.f32 %v5943, %v5944
    %v5946 = vsel %vm1629, %v5932, 0.0
    %v5947 = vadd.f32 %v5945, %v5946
    %v5948 = vsel %vm1629, %v5934, 0.0
    %v5949 = vadd.f32 %v5947, %v5948
    %v5950 = vsel %vm1629, %v5936, 0.0
    %v5951 = vadd.f32 %v5949, %v5950
    %v5952 = vrcp.pop %v5951
    %v5953 = vmul.f32 %v5922, %v5952
    %v5954 = vmul.f32 %v5924, %v5952
    %v5955 = vmul.f32 %v5926, %v5952
    %v5956 = vmul.f32 %v5928, %v5952
    %v5957 = vmul.f32 %v5930, %v5952
    %v5958 = vmul.f32 %v5932, %v5952
    %v5959 = vmul.f32 %v5934, %v5952
    %v5960 = vmul.f32 %v5936, %v5952
    %5962 = vset.pattern.permute.xlu0 0
    %5963 = vperm.xlu0 %5962, %v5953
    %v5964 = vpop.permute.xlu0 %5963
    %5967 = vset.pattern.permute.xlu0 0
    %5968 = vperm.xlu0 %5967, %v5954
    %v5969 = vpop.permute.xlu0 %5968
    %5972 = vset.pattern.permute.xlu0 0
    %5973 = vperm.xlu0 %5972, %v5955
    %v5974 = vpop.permute.xlu0 %5973
    %5977 = vset.pattern.permute.xlu0 0
    %5978 = vperm.xlu0 %5977, %v5956
    %v5979 = vpop.permute.xlu0 %5978
    %5982 = vset.pattern.permute.xlu0 0
    %5983 = vperm.xlu0 %5982, %v5957
    %v5984 = vpop.permute.xlu0 %5983
    %5987 = vset.pattern.permute.xlu0 0
    %5988 = vperm.xlu0 %5987, %v5958
    %v5989 = vpop.permute.xlu0 %5988
    %5992 = vset.pattern.permute.xlu0 0
    %5993 = vperm.xlu0 %5992, %v5959
    %v5994 = vpop.permute.xlu0 %5993
    %5997 = vset.pattern.permute.xlu0 0
    %5998 = vperm.xlu0 %5997, %v5960
    %v5999 = vpop.permute.xlu0 %5998
    %v6001 = vmul.f32 %v5964, %v5858
    %v6002 = vmul.f32 %v5969, %v5859
    %v6003 = vmul.f32 %v5974, %v5860
    %v6004 = vmul.f32 %v5979, %v5861
    %v6005 = vmul.f32 %v5984, %v5862
    %v6006 = vmul.f32 %v5989, %v5863
    %v6007 = vmul.f32 %v5994, %v5864
    %v6008 = vmul.f32 %v5999, %v5865
    %v6009 = vadd.f32 %v6001, %v6002
    %v6010 = vadd.f32 %v6009, %v6003
    %v6011 = vadd.f32 %v6010, %v6004
    %v6012 = vadd.f32 %v6011, %v6005
    %v6013 = vadd.f32 %v6012, %v6006
    %v6014 = vadd.f32 %v6013, %v6007
    %v6015 = vadd.f32 %v6014, %v6008
    %v6016 = vpack.c.bf16 %v5849, %v5849
    %v6017 = vld [vmem:[%s10] sm:$0xf]
    %v6018 = vld [vmem:[%s10 + $0x4] sm:$0xf]
    %v6019 = vld [vmem:[%s10 + $0x8] sm:$0xf]
    %v6020 = vld [vmem:[%s10 + $0xc] sm:$0xf]
    %v6021 = vld [vmem:[%s10 + $0x10] sm:$0xf]
    %v6022 = vld [vmem:[%s10 + $0x14] sm:$0xf]
    %v6023 = vld [vmem:[%s10 + $0x18] sm:$0xf]
    %v6024 = vld [vmem:[%s10 + $0x1c] sm:$0xf]
    %v6025 = vld [vmem:[%s10 + $0x20] sm:$0xf]
    %v6026 = vld [vmem:[%s10 + $0x24] sm:$0xf]
    %v6027 = vld [vmem:[%s10 + $0x28] sm:$0xf]
    %v6028 = vld [vmem:[%s10 + $0x2c] sm:$0xf]
    %v6029 = vld [vmem:[%s10 + $0x30] sm:$0xf]
    %v6030 = vld [vmem:[%s10 + $0x34] sm:$0xf]
    %v6031 = vld [vmem:[%s10 + $0x38] sm:$0xf]
    %v6032 = vld [vmem:[%s10 + $0x3c] sm:$0xf]
    %v6033 = vpack.c.bf16 %v6015, %v6015
    %v6034 = vld [vmem:[%s11] sm:$0xf]
    %v6035 = vld [vmem:[%s11 + $0x4] sm:$0xf]
    %v6036 = vld [vmem:[%s11 + $0x8] sm:$0xf]
    %v6037 = vld [vmem:[%s11 + $0xc] sm:$0xf]
    %v6038 = vld [vmem:[%s11 + $0x10] sm:$0xf]
    %v6039 = vld [vmem:[%s11 + $0x14] sm:$0xf]
    %v6040 = vld [vmem:[%s11 + $0x18] sm:$0xf]
    %v6041 = vld [vmem:[%s11 + $0x1c] sm:$0xf]
    %v6042 = vld [vmem:[%s11 + $0x20] sm:$0xf]
    %v6043 = vld [vmem:[%s11 + $0x24] sm:$0xf]
    %v6044 = vld [vmem:[%s11 + $0x28] sm:$0xf]
    %v6045 = vld [vmem:[%s11 + $0x2c] sm:$0xf]
    %v6046 = vld [vmem:[%s11 + $0x30] sm:$0xf]
    %v6047 = vld [vmem:[%s11 + $0x34] sm:$0xf]
    %v6048 = vld [vmem:[%s11 + $0x38] sm:$0xf]
    %v6049 = vld [vmem:[%s11 + $0x3c] sm:$0xf]
    %v6066 = vunpack.c.l.b16 %v6034
    %v6067 = vunpack.c.l.b16 %v6035
    %v6068 = vunpack.c.l.b16 %v6036
    %v6069 = vunpack.c.l.b16 %v6037
    %v6070 = vunpack.c.l.b16 %v6038
    %v6071 = vunpack.c.l.b16 %v6039
    %v6072 = vunpack.c.l.b16 %v6040
    %v6073 = vunpack.c.l.b16 %v6041
    %v6074 = vunpack.c.l.b16 %v6042
    %v6075 = vunpack.c.l.b16 %v6043
    %v6076 = vunpack.c.l.b16 %v6044
    %v6077 = vunpack.c.l.b16 %v6045
    %v6078 = vunpack.c.l.b16 %v6046
    %v6079 = vunpack.c.l.b16 %v6047
    %v6080 = vunpack.c.l.b16 %v6048
    %v6081 = vunpack.c.l.b16 %v6049
    %v6082 = vpack.c.b16 %v6067, %v6066
    %v6083 = vpack.c.b16 %v6069, %v6068
    %v6084 = vpack.c.b16 %v6071, %v6070
    %v6085 = vpack.c.b16 %v6073, %v6072
    %v6086 = vpack.c.b16 %v6075, %v6074
    %v6087 = vpack.c.b16 %v6077, %v6076
    %v6088 = vpack.c.b16 %v6079, %v6078
    %v6089 = vpack.c.b16 %v6081, %v6080
    %6098 = vmatprep.subr.bf16.mxu0 0
    %6099 = vmatpush1.bf16.msra.mxu0 %v6082
    %6100 = vmatprep.subr.bf16.mxu0 0
    %6101 = vmatpush1.bf16.msra.mxu0 %v6083
    %6102 = vmatprep.subr.bf16.mxu0 0
    %6103 = vmatpush1.bf16.msra.mxu0 %v6084
    %6104 = vmatprep.subr.bf16.mxu0 0
    %6105 = vmatpush1.bf16.msra.mxu0 %v6085
    %6106 = vmatprep.subr.bf16.mxu0 0
    %6107 = vmatpush1.bf16.msra.mxu0 %v6086
    %6108 = vmatprep.subr.bf16.mxu0 0
    %6109 = vmatpush1.bf16.msra.mxu0 %v6087
    %6110 = vmatprep.subr.bf16.mxu0 0
    %6111 = vmatpush1.bf16.msra.mxu0 %v6088
    %6112 = vmatprep.subr.bf16.mxu0 0
    %6113 = vmatpush1.bf16.msra.mxu0 %v6089
    %6114 = vmatprep.subr.bf16.mxu0 0
    %6115 = vmatpush1.bf16.msra.mxu0 0
    %6116 = vmatprep.subr.bf16.mxu0 0
    %6117 = vmatpush1.bf16.msra.mxu0 0
    %6118 = vmatprep.subr.bf16.mxu0 0
    %6119 = vmatpush1.bf16.msra.mxu0 0
    %6120 = vmatprep.subr.bf16.mxu0 0
    %6121 = vmatpush1.bf16.msra.mxu0 0
    %6122 = vmatprep.subr.bf16.mxu0 0
    %6123 = vmatpush1.bf16.msra.mxu0 0
    %6124 = vmatprep.subr.bf16.mxu0 0
    %6125 = vmatpush1.bf16.msra.mxu0 0
    %6126 = vmatprep.subr.bf16.mxu0 0
    %6127 = vmatpush1.bf16.msra.mxu0 0
    %6128 = vmatprep.subr.bf16.mxu0 0
    %6129 = vmatpush1.bf16.msra.mxu0 0
    %6130 = vmatprep.mubr.bf16.mxu0 0
    %6131 = vmatmul.mubr.bf16.gmra.mrb[0].mxu0 %v6033
    %v6132 = vpop.f32.mrb[0].mxu0
    %v6133 = vadd.f32 0.0, %v6132
    %v6134 = vpop.f32.mrb[0].mxu0
    %v6135 = vpop.f32.mrb[0].mxu0
    %v6136 = vpop.f32.mrb[0].mxu0
    %6137 = vdwg.mxu0
    %v6154 = vunpack.c.l.b16 %v6017
    %v6155 = vunpack.c.l.b16 %v6018
    %v6156 = vunpack.c.l.b16 %v6019
    %v6157 = vunpack.c.l.b16 %v6020
    %v6158 = vunpack.c.l.b16 %v6021
    %v6159 = vunpack.c.l.b16 %v6022
    %v6160 = vunpack.c.l.b16 %v6023
    %v6161 = vunpack.c.l.b16 %v6024
    %v6162 = vunpack.c.l.b16 %v6025
    %v6163 = vunpack.c.l.b16 %v6026
    %v6164 = vunpack.c.l.b16 %v6027
    %v6165 = vunpack.c.l.b16 %v6028
    %v6166 = vunpack.c.l.b16 %v6029
    %v6167 = vunpack.c.l.b16 %v6030
    %v6168 = vunpack.c.l.b16 %v6031
    %v6169 = vunpack.c.l.b16 %v6032
    %v6170 = vpack.c.b16 %v6155, %v6154
    %v6171 = vpack.c.b16 %v6157, %v6156
    %v6172 = vpack.c.b16 %v6159, %v6158
    %v6173 = vpack.c.b16 %v6161, %v6160
    %v6174 = vpack.c.b16 %v6163, %v6162
    %v6175 = vpack.c.b16 %v6165, %v6164
    %v6176 = vpack.c.b16 %v6167, %v6166
    %v6177 = vpack.c.b16 %v6169, %v6168
    %6186 = vmatprep.subr.bf16.mxu0 0
    %6187 = vmatpush1.bf16.msra.mxu0 %v6170
    %6188 = vmatprep.subr.bf16.mxu0 0
    %6189 = vmatpush1.bf16.msra.mxu0 %v6171
    %6190 = vmatprep.subr.bf16.mxu0 0
    %6191 = vmatpush1.bf16.msra.mxu0 %v6172
    %6192 = vmatprep.subr.bf16.mxu0 0
    %6193 = vmatpush1.bf16.msra.mxu0 %v6173
    %6194 = vmatprep.subr.bf16.mxu0 0
    %6195 = vmatpush1.bf16.msra.mxu0 %v6174
    %6196 = vmatprep.subr.bf16.mxu0 0
    %6197 = vmatpush1.bf16.msra.mxu0 %v6175
    %6198 = vmatprep.subr.bf16.mxu0 0
    %6199 = vmatpush1.bf16.msra.mxu0 %v6176
    %6200 = vmatprep.subr.bf16.mxu0 0
    %6201 = vmatpush1.bf16.msra.mxu0 %v6177
    %6202 = vmatprep.subr.bf16.mxu0 0
    %6203 = vmatpush1.bf16.msra.mxu0 0
    %6204 = vmatprep.subr.bf16.mxu0 0
    %6205 = vmatpush1.bf16.msra.mxu0 0
    %6206 = vmatprep.subr.bf16.mxu0 0
    %6207 = vmatpush1.bf16.msra.mxu0 0
    %6208 = vmatprep.subr.bf16.mxu0 0
    %6209 = vmatpush1.bf16.msra.mxu0 0
    %6210 = vmatprep.subr.bf16.mxu0 0
    %6211 = vmatpush1.bf16.msra.mxu0 0
    %6212 = vmatprep.subr.bf16.mxu0 0
    %6213 = vmatpush1.bf16.msra.mxu0 0
    %6214 = vmatprep.subr.bf16.mxu0 0
    %6215 = vmatpush1.bf16.msra.mxu0 0
    %6216 = vmatprep.subr.bf16.mxu0 0
    %6217 = vmatpush1.bf16.msra.mxu0 0
    %6218 = vmatprep.mubr.bf16.mxu0 0
    %6219 = vmatmul.mubr.bf16.gmra.mrb[0].mxu0 %v6016
    %v6220 = vpop.f32.mrb[0].mxu0
    %v6221 = vadd.f32 %v6133, %v6220
    %v6222 = vpop.f32.mrb[0].mxu0
    %v6223 = vpop.f32.mrb[0].mxu0
    %v6224 = vpop.f32.mrb[0].mxu0
    %6225 = vdwg.mxu0
    %v6226 = vld [vmem:[%s12] sm:$0x1]
    %v6228 = vlaneseq
    %v6229 = vshrl.u32 %v6228, 7
    %v6230 = vsub.s32 0, %v6229
    %v6231 = vrot.slane %v6226, %v6230
    %v6233 = vadd.f32 %v6221, %v6231
    %v6234 = vtanh.pop %v6233
    %s6235 = scalar_lea.vmem [#allocation4], 56
    %6236 = vst [vmem:[%s6235] sm:$0xff] %v6234
    %s6237 = scalar_lea.vmem %s14, 448
    %6238 = vst.msk [vmem:[%s6237] sm:$0xff] %vm1629, %v5953
    %6239 = vst.msk [vmem:[%s6237 + $0x8] sm:$0xff] %vm1629, %v5954
    %6240 = vst.msk [vmem:[%s6237 + $0x10] sm:$0xff] %vm1629, %v5955
    %6241 = vst.msk [vmem:[%s6237 + $0x18] sm:$0xff] %vm1629, %v5956
    %6242 = vst.msk [vmem:[%s6237 + $0x20] sm:$0xff] %vm1629, %v5957
    %6243 = vst.msk [vmem:[%s6237 + $0x28] sm:$0xff] %vm1629, %v5958
    %6244 = vst.msk [vmem:[%s6237 + $0x30] sm:$0xff] %vm1629, %v5959
    %6245 = vst.msk [vmem:[%s6237 + $0x38] sm:$0xff] %vm1629, %v5960
    %6246 = vst [vmem:[#allocation6] sm:$0xff] %v5849
    %6247 = vst [vmem:[#allocation8] sm:$0xff] %v6234
    // Predicated region
    $region54: #{nmt_forward.1} parent=1 // pred_check
      _
    $region55: #{nmt_forward.1} parent=1 // pred_check_branch
      %6249 = sbr.rel (0) target = $region57
    $region56: #{nmt_forward.1} parent=1 // pred_region
      %s6251 = ssub.s32 1024, 1024
      %6252 = vsyncadd [#allocation5], %s6251
      %s6253 = sshll.u32 [#allocation4], 4
      %s6254 = int_to_ptr.vmem [resolvable:$true] %s6253
      %6259 = dma.vmem_to_hbm [thread:$0]  %s6254, 1024, %s13, [#allocation5], 128, 128, 8
    $region57: #{nmt_forward.1} parent=1 // pred_fallthru
      _
    // Predicated region
    $region58: #{nmt_forward.1} parent=1 // pred_check
      _
    $region59: #{nmt_forward.1} parent=1 // pred_check_branch
      %6261 = sbr.rel (0) target = $region61
    $region60: #{nmt_forward.1} parent=1 // pred_region
      _
    $region61: #{nmt_forward.1} parent=1 // pred_fallthru
      _
    // Predicated region
    $region62: #{nmt_forward.1} parent=1 // pred_check
      _
    $region63: #{nmt_forward.1} parent=1 // pred_check_branch
      %6263 = sbr.rel (0) target = $region65
    $region64: #{nmt_forward.1} parent=1 // pred_region
      %s6265 = ssub.s32 128, 128
      %6266 = vsyncadd [#allocation7], %s6265
      %s6268 = sshll.u32 [#allocation6], 4
      %s6269 = int_to_ptr.vmem [resolvable:$true] %s6268
      %6271 = dma.vmem_to_hbm [thread:$0]  %s6269, 128, %s15, [#allocation7]
    $region65: #{nmt_forward.1} parent=1 // pred_fallthru
      _
    // Predicated region
    $region66: #{nmt_forward.1} parent=1 // pred_check
      _
    $region67: #{nmt_forward.1} parent=1 // pred_check_branch
      %6273 = sbr.rel (0) target = $region69
    $region68: #{nmt_forward.1} parent=1 // pred_region
      %s6275 = ssub.s32 128, 128
      %6276 = vsyncadd [#allocation7], %s6275
      %s6278 = sshll.u32 [#allocation8], 4
      %s6279 = int_to_ptr.vmem [resolvable:$true] %s6278
      %6281 = dma.vmem_to_hbm [thread:$0]  %s6279, 128, %s16, [#allocation7]
    $region69: #{nmt_forward.1} parent=1 // pred_fallthru
      _
    // Predicated region
    $region70: #{nmt_forward.1} parent=1 // pred_check
      _
    $region71: #{nmt_forward.1} parent=1 // pred_check_branch
      %6283 = sbr.rel (0) target = $region73
    $region72: #{nmt_forward.1} parent=1 // pred_region
      %6284 = dma.done [#allocation5], 1024
    $region73: #{nmt_forward.1} parent=1 // pred_fallthru
      _
    // Predicated region
    $region74: #{nmt_forward.1} parent=1 // pred_check
      _
    $region75: #{nmt_forward.1} parent=1 // pred_check_branch
      %6286 = sbr.rel (0) target = $region77
    $region76: #{nmt_forward.1} parent=1 // pred_region
      _
    $region77: #{nmt_forward.1} parent=1 // pred_fallthru
      _
    // Predicated region
    $region78: #{nmt_forward.1} parent=1 // pred_check
      _
    $region79: #{nmt_forward.1} parent=1 // pred_check_branch
      %6288 = sbr.rel (0) target = $region81
    $region80: #{nmt_forward.1} parent=1 // pred_region
      %6289 = dma.done [#allocation7], 128
    $region81: #{nmt_forward.1} parent=1 // pred_fallthru
      _
    // Predicated region
    $region82: #{nmt_forward.1} parent=1 // pred_check
      _
    $region83: #{nmt_forward.1} parent=1 // pred_check_branch
      %6291 = sbr.rel (0) target = $region85
    $region84: #{nmt_forward.1} parent=1 // pred_region
      %6292 = dma.done [#allocation7], 128
    $region85: #{nmt_forward.1} parent=1 // pred_fallthru
      _
    %6293 = vsyncpa [#allocation5], 1
    %6294 = vsyncpa [#allocation7], 1

</llo_original>
